<compile_context>
chip_gen: v5e
topology: v5e:2x2
jax: 0.10.0
libtpu: 0.0.40
codegen_flags: <defaults>
</compile_context>

<pallas_src>
import numpy as np
import jax
import jax.numpy as jnp
from jax.experimental import pallas as pl
from jax.experimental.pallas import tpu as pltpu


# ----------------------------------------------------------------------------- #
# Graph (synthetic deterministic stand-in for net.utils.graph.Graph)
# ----------------------------------------------------------------------------- #
def build_graph_A(V, K=3):
    eye = jnp.eye(V, dtype=jnp.float32)
    fwd = jnp.zeros((V, V), jnp.float32).at[jnp.arange(V - 1), jnp.arange(1, V)].set(1.0)
    bwd = fwd.T

    def norm(a):
        d = a.sum(axis=0)
        inv = jnp.where(d > 0, 1.0 / jnp.maximum(d, 1e-6), 0.0)
        return a * inv[None, :]

    assert K == 3
    return jnp.stack([eye, norm(fwd), norm(bwd)], axis=0)  # (K, V, V)


# ----------------------------------------------------------------------------- #
# Deterministic parameter init (shapes match the PyTorch module)
# ----------------------------------------------------------------------------- #
def init_params(key, C_in, num_class, T, V, K=3):
    keys = iter(jax.random.split(key, 64))

    def nrm(shape, scale):
        return (scale * jax.random.normal(next(keys), shape)).astype(jnp.float32)

    def bn_params(c):
        g = (1.0 + 0.1 * jax.random.normal(next(keys), (c,))).astype(jnp.float32)
        b = (0.1 * jax.random.normal(next(keys), (c,))).astype(jnp.float32)
        rm = (0.1 * jax.random.normal(next(keys), (c,))).astype(jnp.float32)
        rv = (1.0 + 0.1 * jax.random.uniform(next(keys), (c,))).astype(jnp.float32)
        return (g, b, rm, rv)

    params = {"A": build_graph_A(V, K), "data_bn": bn_params(V * C_in)}
    channels = [C_in, 64, 128, 128]
    blocks = []
    for i in range(3):
        Ci, Co = channels[i], channels[i + 1]
        p = {
            "gcn_w": nrm((K * Co, Ci), 1.0 / (Ci ** 0.5)),          # Conv2d(Ci, K*Co, 1).weight
            "gcn_b": nrm((K * Co,), 0.05),
            "bn1": bn_params(Co),
            "tcn_w": nrm((Co, Co, 9, 1), 1.0 / ((Co * 9) ** 0.5)),  # Conv2d(Co, Co, (9,1))
            "tcn_b": nrm((Co,), 0.05),
            "bn2": bn_params(Co),
        }
        if Ci != Co:
            p["res_w"] = nrm((Co, Ci), 1.0 / (Ci ** 0.5))           # residual 1x1 conv
            p["res_b"] = nrm((Co,), 0.05)
            p["res_bn"] = bn_params(Co)
        else:
            p["res_w"] = None
        blocks.append(p)
    params["blocks"] = blocks
    params["zmean_w"] = nrm((num_class, 128), 1.0 / (128 ** 0.5))
    params["zmean_b"] = nrm((num_class,), 0.05)
    params["zlogvar_w"] = nrm((num_class, 128), 1.0 / (128 ** 0.5))
    params["zlogvar_b"] = nrm((num_class,), 0.05)
    return params


def fold_bn(bn, eps=1e-5):
    g, b, rm, rv = bn
    scale = g / jnp.sqrt(rv + eps)
    shift = b - rm * scale
    return scale, shift


# ----------------------------------------------------------------------------- #
# Per-step batch selection
# ----------------------------------------------------------------------------- #
def _pick_B(NM, TV, max_b=16):
    cands = [b for b in range(1, min(NM, max_b) + 1)
             if NM % b == 0 and (b * TV) % 128 == 0]
    assert cands, "need a per-step batch B with 128 | B*T*V"
    best = max(cands)
    alt = [b for b in cands if NM // b >= 2]              # keep >= 2 grid steps (megacore)
    if alt and max(alt) >= 2:
        best = max(alt)
    alt4 = [b for b in cands if NM // b >= 4 and b >= 8]  # v7x: >= 2 steps per TensorCore
    if alt4:
        best = max(alt4)
    return best


# ----------------------------------------------------------------------------- #
# Fused Pallas kernel: 3 x st_gcn blocks + global (T, V) average pool
# ----------------------------------------------------------------------------- #
def _fused_stgcn_pool(xk, Mbd, dbn_scale, dbn_shift, block_weights, *, T, V, K, B):
    NM, TV, C = xk.shape
    assert TV == T * V and NM % B == 0
    R = 128                                    # node-mix row block (== f32 lane width)
    assert R % V == 0 and (B * TV) % R == 0
    G = NM // B
    Gb = (B * TV) // R
    cos = [bw["Co"] for bw in block_weights]
    C_last = cos[-1]
    scratch_cos = sorted(set(cos))

    def kernel(*refs):
        it = iter(refs)
        x_ref = next(it)
        mbd_ref = next(it)
        ds_ref = next(it)
        dt_ref = next(it)
        blk_refs = []
        for bw in block_weights:
            r = {"wg": next(it), "beff": next(it), "wt": next(it), "bt": next(it)}
            if bw["has_res"]:
                r["wr"] = next(it)
                r["br"] = next(it)
            blk_refs.append(r)
        out_ref = next(it)
        pads = {co: next(it) for co in scratch_cos}

        # folded data_bn, per (v, c)
        x3 = x_ref[...].astype(jnp.float32).reshape(B * T, V, C)
        x3 = x3 * ds_ref[...][None, :, :] + dt_ref[...][None, :, :]
        h = x3.reshape(B, TV, C)                           # f32, lives in VMEM across blocks

        mlist = [mbd_ref[k] for k in range(K)]             # K x (R, R) bf16 block-diag mixes
        zeroed = set()

        for bw, r in zip(block_weights, blk_refs):
            Ci, Co = bw["Ci"], bw["Co"]
            hmm = h.reshape(B * TV, Ci).astype(jnp.bfloat16)

            # residual branch: folded 1x1 conv + BN, or identity (kept f32)
            if bw["has_res"]:
                res = jnp.dot(hmm, r["wr"][...],
                              preferred_element_type=jnp.float32) + r["br"][...]
            else:
                res = h.reshape(B * TV, Co)

            # graph conv (1): fused 1x1 conv over all K partitions -> one MXU matmul
            y = jnp.dot(hmm, r["wg"][...], preferred_element_type=jnp.float32)  # (B*TV, K*Co)
            ybf = y.astype(jnp.bfloat16)

            # graph conv (2): node mix as (128,128) block-diag kron(I, A_k^T) matmuls
            z_parts = []
            for g in range(Gb):
                rows = slice(g * R, (g + 1) * R)
                zg = jnp.dot(mlist[0], ybf[rows, 0:Co],
                             preferred_element_type=jnp.float32)
                for k in range(1, K):
                    zg = zg + jnp.dot(mlist[k], ybf[rows, k * Co:(k + 1) * Co],
                                      preferred_element_type=jnp.float32)
                z_parts.append(zg)
            z = jnp.concatenate(z_parts, axis=0)                         # (B*TV, Co) f32

            # conv bias propagated through A + BN1 (folded) + ReLU
            z = z.reshape(B * T, V, Co) + r["beff"][...][None, :, :]
            h3 = jnp.maximum(z, 0.0).reshape(B, TV, Co)

            # temporal 9x1 conv: padded scratch + 9 accumulated per-tap matmuls
            hp = pads[Co]
            if Co not in zeroed:                     # pads stay zero on later reuse this step
                zpad = jnp.zeros((B, 4 * V, Co), jnp.float32)
                hp[:, :4 * V, :] = zpad
                hp[:, 4 * V + TV:, :] = zpad
                zeroed.add(Co)
            hp[:, 4 * V:4 * V + TV, :] = h3
            acc = jnp.zeros((B * TV, Co), jnp.float32)
            for kt in range(9):
                sl = hp[:, kt * V:kt * V + TV, :].reshape(B * TV, Co).astype(jnp.bfloat16)
                acc = acc + jnp.dot(sl, r["wt"][kt * Co:(kt + 1) * Co, :],
                                    preferred_element_type=jnp.float32)
            tout = acc + r["bt"][...]                # conv bias + BN2 (folded)

            h = jnp.maximum(tout + res, 0.0).reshape(B, TV, Co)

        # fused global (T, V) average pool -> feature map never hits HBM
        pooled = jnp.mean(h, axis=1)                 # (B, C_last)
        out_ref[0] = pooled.astype(out_ref.dtype)

    in_specs = [
        pl.BlockSpec((B, TV, C), lambda n: (n, 0, 0)),
        pl.BlockSpec((K, R, R), lambda n: (0, 0, 0)),
        pl.BlockSpec((V, C), lambda n: (0, 0)),
        pl.BlockSpec((V, C), lambda n: (0, 0)),
    ]
    args = [xk, Mbd, dbn_scale, dbn_shift]
    for bw in block_weights:
        Ci, Co = bw["Ci"], bw["Co"]
        in_specs += [pl.BlockSpec((Ci, K * Co), lambda n: (0, 0)),
                     pl.BlockSpec((V, Co), lambda n: (0, 0)),
                     pl.BlockSpec((9 * Co, Co), lambda n: (0, 0)),
                     pl.BlockSpec((1, Co), lambda n: (0, 0))]
        args += [bw["wg"], bw["beff"], bw["wt"], bw["bt"]]
        if bw["has_res"]:
            in_specs += [pl.BlockSpec((Ci, Co), lambda n: (0, 0)),
                         pl.BlockSpec((1, Co), lambda n: (0, 0))]
            args += [bw["wr"], bw["br"]]

    pooled = pl.pallas_call(
        kernel,
        out_shape=jax.ShapeDtypeStruct((G, B, C_last), jnp.float32),
        grid=(G,),
        in_specs=in_specs,
        out_specs=pl.BlockSpec((1, B, C_last), lambda n: (n, 0, 0)),
        scratch_shapes=[pltpu.VMEM((B, TV + 8 * V, co), jnp.float32) for co in scratch_cos],
        compiler_params=pltpu.CompilerParams(
            dimension_semantics=("parallel",),
            vmem_limit_bytes=48 * 1024 * 1024),
    )(*args)
    return pooled.reshape(NM, C_last)


# ----------------------------------------------------------------------------- #
# Encoder forward (Pallas)
# ----------------------------------------------------------------------------- #
def encoder_forward_pallas(x, params):
    N, C, T, V, M = x.shape
    A = params["A"]
    K = A.shape[0]
    NM, TV = N * M, T * V
    B = _pick_B(NM, TV)

    # glue: NCTVM -> (N*M, T*V, C), rows (t, v) with v innermost, channels on lanes
    xk = jnp.transpose(x, (0, 4, 2, 3, 1)).reshape(NM, TV, C).astype(jnp.float32)

    At = jnp.transpose(A, (0, 2, 1)).astype(jnp.float32)   # At[k] = A[k]^T
    Asum = A.sum(axis=1)                                   # (K, V): sum_v A[k, v, w]

    # Node-mix operators: kron(I_{128/V}, A_k^T) so the per-t (V, V) mix becomes a
    # full 128-row block-diagonal matmul.
    R = 128
    eyeq = jnp.eye(R // V, dtype=jnp.float32)
    Mbd = jnp.stack([jnp.kron(eyeq, At[k]) for k in range(K)], axis=0).astype(jnp.bfloat16)

    sd, td = fold_bn(params["data_bn"])
    dbn_scale = sd.reshape(V, C)
    dbn_shift = td.reshape(V, C)

    block_weights = []
    for p in params["blocks"]:
        Co = p["gcn_w"].shape[0] // K
        Ci = p["gcn_w"].shape[1]

        s1, t1 = fold_bn(p["bn1"])
        wg = p["gcn_w"].reshape(K, Co, Ci)
        wg_all = jnp.transpose(wg, (2, 0, 1)).reshape(Ci, K * Co) * jnp.tile(s1, K)[None, :]
        beff = jnp.einsum("kw,kc->wc", Asum, p["gcn_b"].reshape(K, Co)) * s1[None, :] + t1[None, :]

        s2, t2 = fold_bn(p["bn2"])
        wt2 = jnp.transpose(p["tcn_w"][:, :, :, 0], (2, 1, 0)).reshape(9 * Co, Co) * s2[None, :]
        bt_eff = (p["tcn_b"] * s2 + t2).reshape(1, Co)

        bw = {"Ci": Ci, "Co": Co,
              "wg": wg_all.astype(jnp.bfloat16), "beff": beff,
              "wt": wt2.astype(jnp.bfloat16), "bt": bt_eff,
              "has_res": p["res_w"] is not None}
        if p["res_w"] is not None:
            sr, tr = fold_bn(p["res_bn"])
            bw["wr"] = (p["res_w"].T * sr[None, :]).astype(jnp.bfloat16)
            bw["br"] = (p["res_b"] * sr + tr).reshape(1, Co)
        else:
            assert Ci == Co                                # identity residual
        block_weights.append(bw)

    pooled = _fused_stgcn_pool(xk, Mbd, dbn_scale, dbn_shift, block_weights,
                               T=T, V=V, K=K, B=B)         # (NM, 128) f32

    # Heads: tiny matmuls -> plain XLA (no extra pallas_call launch, no masked stores)
    hp = jax.lax.Precision.HIGHEST
    pooled_n = pooled.reshape(N, M, -1).mean(axis=1)
    mean = jnp.dot(pooled_n, params["zmean_w"].T, precision=hp) + params["zmean_b"]
    logvar = jnp.dot(pooled, params["zlogvar_w"].T, precision=hp) + params["zlogvar_b"]
    return mean, logvar


# ----------------------------------------------------------------------------- #
# Pure-JAX reference (mirrors the PyTorch forward, eval-mode BN)
# ----------------------------------------------------------------------------- #
def bn_eval(x, g, b, rm, rv, axis, eps=1e-5):
    shp = [1] * x.ndim
    shp[axis] = -1
    return (x - rm.reshape(shp)) / jnp.sqrt(rv.reshape(shp) + eps) * g.reshape(shp) + b.reshape(shp)


def st_gcn_ref(x, A, p):
    NM, Ci, T, V = x.shape
    K = A.shape[0]
    Wg, bg = p["gcn_w"], p["gcn_b"]
    Co = Wg.shape[0] // K
    if p["res_w"] is None:
        res = x
    else:
        r = jnp.einsum("nctv,dc->ndtv", x, p["res_w"]) + p["res_b"][None, :, None, None]
        res = bn_eval(r, *p["res_bn"], axis=1)
    xc = jnp.einsum("nctv,dc->ndtv", x, Wg) + bg[None, :, None, None]
    xc = xc.reshape(NM, K, Co, T, V)
    y = jnp.einsum("nkctv,kvw->nctw", xc, A)
    y = jnp.maximum(bn_eval(y, *p["bn1"], axis=1), 0.0)
    Wt, bt = p["tcn_w"], p["tcn_b"]
    yp = jnp.pad(y, ((0, 0), (0, 0), (4, 4), (0, 0)))
    out = jnp.zeros((NM, Co, T, V), jnp.float32)
    for kt in range(9):
        out = out + jnp.einsum("nctv,dc->ndtv", yp[:, :, kt:kt + T, :], Wt[:, :, kt, 0])
    out = bn_eval(out + bt[None, :, None, None], *p["bn2"], axis=1)
    return jnp.maximum(out + res, 0.0)


def encoder_ref(x, params):
    N, C, T, V, M = x.shape
    A = params["A"]
    xp = jnp.transpose(x, (0, 4, 3, 1, 2)).reshape(N * M, V * C, T)
    xp = bn_eval(xp, *params["data_bn"], axis=1)
    xp = xp.reshape(N, M, V, C, T)
    xp = jnp.transpose(xp, (0, 1, 3, 4, 2)).reshape(N * M, C, T, V)
    h = xp
    for p in params["blocks"]:
        h = st_gcn_ref(h, A, p)
    pooled = h.mean(axis=(2, 3))                       # (NM, 128)
    pg = pooled.reshape(N, M, -1).mean(axis=1)         # (N, 128)
    mean = pg @ params["zmean_w"].T + params["zmean_b"]
    logvar = pooled @ params["zlogvar_w"].T + params["zlogvar_b"]
    return mean, logvar


# ----------------------------------------------------------------------------- #
if __name__ == "__main__":
    N, C, T, V, M = 2, 4, 16, 8, 2     # -> N*M = 4 samples, T*V = 128 rows per slab
    num_class = 16
    K = 3

    key = jax.random.PRNGKey(0)
    kx, kp = jax.random.split(key)
    x = jax.random.normal(kx, (N, C, T, V, M), dtype=jnp.float32)
    params = init_params(kp, C, num_class, T, V, K)

    fwd = jax.jit(encoder_forward_pallas)
    mean, logvar = fwd(x, params)
    jax.block_until_ready((mean, logvar))

    @jax.jit
    def ref_fn(xx, pp):
        with jax.default_matmul_precision("float32"):
            return encoder_ref(xx, pp)

    mean_ref, logvar_ref = ref_fn(x, params)
    # Tolerance covers bf16 MXU operands vs the f32 reference.
    np.testing.assert_allclose(np.asarray(mean), np.asarray(mean_ref), rtol=5e-2, atol=5e-2)
    np.testing.assert_allclose(np.asarray(logvar), np.asarray(logvar_ref), rtol=5e-2, atol=5e-2)
    assert mean.shape == (N, num_class) and logvar.shape == (N * M, num_class)
    print("KERNEL_OK")
</pallas_src>

<mosaic_0001>
module attributes {stable_mosaic.version = 11 : i64} {
  func.func @kernel(%arg0: i32, %arg1: memref<2x128x4xf32, #tpu.memory_space<vmem>>, %arg2: memref<3x128x128xbf16, #tpu.memory_space<vmem>>, %arg3: memref<8x4xf32, #tpu.memory_space<vmem>>, %arg4: memref<8x4xf32, #tpu.memory_space<vmem>>, %arg5: memref<4x192xbf16, #tpu.memory_space<vmem>>, %arg6: memref<8x64xf32, #tpu.memory_space<vmem>>, %arg7: memref<576x64xbf16, #tpu.memory_space<vmem>>, %arg8: memref<1x64xf32, #tpu.memory_space<vmem>>, %arg9: memref<4x64xbf16, #tpu.memory_space<vmem>>, %arg10: memref<1x64xf32, #tpu.memory_space<vmem>>, %arg11: memref<64x384xbf16, #tpu.memory_space<vmem>>, %arg12: memref<8x128xf32, #tpu.memory_space<vmem>>, %arg13: memref<1152x128xbf16, #tpu.memory_space<vmem>>, %arg14: memref<1x128xf32, #tpu.memory_space<vmem>>, %arg15: memref<64x128xbf16, #tpu.memory_space<vmem>>, %arg16: memref<1x128xf32, #tpu.memory_space<vmem>>, %arg17: memref<128x384xbf16, #tpu.memory_space<vmem>>, %arg18: memref<8x128xf32, #tpu.memory_space<vmem>>, %arg19: memref<1152x128xbf16, #tpu.memory_space<vmem>>, %arg20: memref<1x128xf32, #tpu.memory_space<vmem>>, %arg21: memref<1x2x128xf32, #tpu.memory_space<vmem>>, %arg22: memref<2x192x64xf32, #tpu.memory_space<vmem>>, %arg23: memref<2x192x128xf32, #tpu.memory_space<vmem>>) attributes {dimension_semantics = [#tpu.dimension_semantics<parallel>], iteration_bounds = array<i64: 2>, scalar_prefetch = 0 : i64, scratch_operands = 2 : i64, tpu.core_type = #tpu.core_type<tc>, window_params = [{transform_indices = @transform_0, window_bounds = array<i64: 2, 128, 4>}, {pipeline_mode = #tpu.pipeline_mode<synchronous>, transform_indices = @transform_1, window_bounds = array<i64: 3, 128, 128>}, {pipeline_mode = #tpu.pipeline_mode<synchronous>, transform_indices = @transform_2, window_bounds = array<i64: 8, 4>}, {pipeline_mode = #tpu.pipeline_mode<synchronous>, transform_indices = @transform_3, window_bounds = array<i64: 8, 4>}, {pipeline_mode = #tpu.pipeline_mode<synchronous>, transform_indices = @transform_4, window_bounds = array<i64: 4, 192>}, {pipeline_mode = #tpu.pipeline_mode<synchronous>, transform_indices = @transform_5, window_bounds = array<i64: 8, 64>}, {pipeline_mode = #tpu.pipeline_mode<synchronous>, transform_indices = @transform_6, window_bounds = array<i64: 576, 64>}, {pipeline_mode = #tpu.pipeline_mode<synchronous>, transform_indices = @transform_7, window_bounds = array<i64: 1, 64>}, {pipeline_mode = #tpu.pipeline_mode<synchronous>, transform_indices = @transform_8, window_bounds = array<i64: 4, 64>}, {pipeline_mode = #tpu.pipeline_mode<synchronous>, transform_indices = @transform_9, window_bounds = array<i64: 1, 64>}, {pipeline_mode = #tpu.pipeline_mode<synchronous>, transform_indices = @transform_10, window_bounds = array<i64: 64, 384>}, {pipeline_mode = #tpu.pipeline_mode<synchronous>, transform_indices = @transform_11, window_bounds = array<i64: 8, 128>}, {pipeline_mode = #tpu.pipeline_mode<synchronous>, transform_indices = @transform_12, window_bounds = array<i64: 1152, 128>}, {pipeline_mode = #tpu.pipeline_mode<synchronous>, transform_indices = @transform_13, window_bounds = array<i64: 1, 128>}, {pipeline_mode = #tpu.pipeline_mode<synchronous>, transform_indices = @transform_14, window_bounds = array<i64: 64, 128>}, {pipeline_mode = #tpu.pipeline_mode<synchronous>, transform_indices = @transform_15, window_bounds = array<i64: 1, 128>}, {pipeline_mode = #tpu.pipeline_mode<synchronous>, transform_indices = @transform_16, window_bounds = array<i64: 128, 384>}, {pipeline_mode = #tpu.pipeline_mode<synchronous>, transform_indices = @transform_17, window_bounds = array<i64: 8, 128>}, {pipeline_mode = #tpu.pipeline_mode<synchronous>, transform_indices = @transform_18, window_bounds = array<i64: 1152, 128>}, {pipeline_mode = #tpu.pipeline_mode<synchronous>, transform_indices = @transform_19, window_bounds = array<i64: 1, 128>}, {transform_indices = @transform_20, window_bounds = array<i64: 1, 2, 128>}]} {
    %c0 = arith.constant 0 : index
    %c0_0 = arith.constant 0 : index
    %c0_1 = arith.constant 0 : index
    %0 = vector.load %arg1[%c0, %c0_0, %c0_1] : memref<2x128x4xf32, #tpu.memory_space<vmem>>, vector<2x128x4xf32>
    %1 = vector.shape_cast %0 : vector<2x128x4xf32> to vector<32x8x4xf32>
    %c0_2 = arith.constant 0 : index
    %c0_3 = arith.constant 0 : index
    %2 = vector.load %arg3[%c0_2, %c0_3] : memref<8x4xf32, #tpu.memory_space<vmem>>, vector<8x4xf32>
    %3 = vector.shape_cast %2 : vector<8x4xf32> to vector<1x8x4xf32>
    %4 = vector.broadcast %3 : vector<1x8x4xf32> to vector<32x8x4xf32>
    %5 = arith.mulf %1, %4 : vector<32x8x4xf32>
    %c0_4 = arith.constant 0 : index
    %c0_5 = arith.constant 0 : index
    %6 = vector.load %arg4[%c0_4, %c0_5] : memref<8x4xf32, #tpu.memory_space<vmem>>, vector<8x4xf32>
    %7 = vector.shape_cast %6 : vector<8x4xf32> to vector<1x8x4xf32>
    %8 = vector.broadcast %7 : vector<1x8x4xf32> to vector<32x8x4xf32>
    %9 = arith.addf %5, %8 : vector<32x8x4xf32>
    %10 = vector.shape_cast %9 : vector<32x8x4xf32> to vector<2x128x4xf32>
    %c0_6 = arith.constant 0 : index
    %c0_7 = arith.constant 0 : index
    %c0_8 = arith.constant 0 : index
    %11 = vector.load %arg2[%c0_6, %c0_7, %c0_8] : memref<3x128x128xbf16, #tpu.memory_space<vmem>>, vector<1x128x128xbf16>
    %12 = vector.shape_cast %11 : vector<1x128x128xbf16> to vector<128x128xbf16>
    %c1 = arith.constant 1 : index
    %c0_9 = arith.constant 0 : index
    %c0_10 = arith.constant 0 : index
    %13 = vector.load %arg2[%c1, %c0_9, %c0_10] : memref<3x128x128xbf16, #tpu.memory_space<vmem>>, vector<1x128x128xbf16>
    %14 = vector.shape_cast %13 : vector<1x128x128xbf16> to vector<128x128xbf16>
    %c2 = arith.constant 2 : index
    %c0_11 = arith.constant 0 : index
    %c0_12 = arith.constant 0 : index
    %15 = vector.load %arg2[%c2, %c0_11, %c0_12] : memref<3x128x128xbf16, #tpu.memory_space<vmem>>, vector<1x128x128xbf16>
    %16 = vector.shape_cast %15 : vector<1x128x128xbf16> to vector<128x128xbf16>
    %17 = vector.shape_cast %10 : vector<2x128x4xf32> to vector<256x4xf32>
    %18 = arith.truncf %17 : vector<256x4xf32> to vector<256x4xbf16>
    %c0_13 = arith.constant 0 : index
    %c0_14 = arith.constant 0 : index
    %19 = vector.load %arg9[%c0_13, %c0_14] : memref<4x64xbf16, #tpu.memory_space<vmem>>, vector<4x64xbf16>
    %cst = arith.constant dense<0.000000e+00> : vector<256x64xf32>
    %20 = tpu.matmul %18, %19, %cst {dimension_numbers = #tpu.dot_dimension_numbers<[1], [0], [0], [1], [0, 0, 1, 1], [], []>} : vector<256x4xbf16>, vector<4x64xbf16>, vector<256x64xf32> -> vector<256x64xf32>
    %c0_15 = arith.constant 0 : index
    %c0_16 = arith.constant 0 : index
    %21 = vector.load %arg10[%c0_15, %c0_16] : memref<1x64xf32, #tpu.memory_space<vmem>>, vector<1x64xf32>
    %22 = vector.broadcast %21 : vector<1x64xf32> to vector<256x64xf32>
    %23 = arith.addf %20, %22 : vector<256x64xf32>
    %c0_17 = arith.constant 0 : index
    %c0_18 = arith.constant 0 : index
    %24 = vector.load %arg5[%c0_17, %c0_18] : memref<4x192xbf16, #tpu.memory_space<vmem>>, vector<4x192xbf16>
    %cst_19 = arith.constant dense<0.000000e+00> : vector<256x192xf32>
    %25 = tpu.matmul %18, %24, %cst_19 {dimension_numbers = #tpu.dot_dimension_numbers<[1], [0], [0], [1], [0, 0, 1, 1], [], []>} : vector<256x4xbf16>, vector<4x192xbf16>, vector<256x192xf32> -> vector<256x192xf32>
    %26 = arith.truncf %25 : vector<256x192xf32> to vector<256x192xbf16>
    %27 = vector.extract_strided_slice %26 {offsets = [0, 0], sizes = [128, 64], strides = [1, 1]} : vector<256x192xbf16> to vector<128x64xbf16>
    %cst_20 = arith.constant dense<0.000000e+00> : vector<128x64xf32>
    %28 = tpu.matmul %12, %27, %cst_20 {dimension_numbers = #tpu.dot_dimension_numbers<[1], [0], [0], [1], [0, 0, 1, 1], [], []>} : vector<128x128xbf16>, vector<128x64xbf16>, vector<128x64xf32> -> vector<128x64xf32>
    %29 = vector.extract_strided_slice %26 {offsets = [0, 64], sizes = [128, 64], strides = [1, 1]} : vector<256x192xbf16> to vector<128x64xbf16>
    %cst_21 = arith.constant dense<0.000000e+00> : vector<128x64xf32>
    %30 = tpu.matmul %14, %29, %cst_21 {dimension_numbers = #tpu.dot_dimension_numbers<[1], [0], [0], [1], [0, 0, 1, 1], [], []>} : vector<128x128xbf16>, vector<128x64xbf16>, vector<128x64xf32> -> vector<128x64xf32>
    %31 = arith.addf %28, %30 : vector<128x64xf32>
    %32 = vector.extract_strided_slice %26 {offsets = [0, 128], sizes = [128, 64], strides = [1, 1]} : vector<256x192xbf16> to vector<128x64xbf16>
    %cst_22 = arith.constant dense<0.000000e+00> : vector<128x64xf32>
    %33 = tpu.matmul %16, %32, %cst_22 {dimension_numbers = #tpu.dot_dimension_numbers<[1], [0], [0], [1], [0, 0, 1, 1], [], []>} : vector<128x128xbf16>, vector<128x64xbf16>, vector<128x64xf32> -> vector<128x64xf32>
    %34 = arith.addf %31, %33 : vector<128x64xf32>
    %35 = vector.extract_strided_slice %26 {offsets = [128, 0], sizes = [128, 64], strides = [1, 1]} : vector<256x192xbf16> to vector<128x64xbf16>
    %cst_23 = arith.constant dense<0.000000e+00> : vector<128x64xf32>
    %36 = tpu.matmul %12, %35, %cst_23 {dimension_numbers = #tpu.dot_dimension_numbers<[1], [0], [0], [1], [0, 0, 1, 1], [], []>} : vector<128x128xbf16>, vector<128x64xbf16>, vector<128x64xf32> -> vector<128x64xf32>
    %37 = vector.extract_strided_slice %26 {offsets = [128, 64], sizes = [128, 64], strides = [1, 1]} : vector<256x192xbf16> to vector<128x64xbf16>
    %cst_24 = arith.constant dense<0.000000e+00> : vector<128x64xf32>
    %38 = tpu.matmul %14, %37, %cst_24 {dimension_numbers = #tpu.dot_dimension_numbers<[1], [0], [0], [1], [0, 0, 1, 1], [], []>} : vector<128x128xbf16>, vector<128x64xbf16>, vector<128x64xf32> -> vector<128x64xf32>
    %39 = arith.addf %36, %38 : vector<128x64xf32>
    %40 = vector.extract_strided_slice %26 {offsets = [128, 128], sizes = [128, 64], strides = [1, 1]} : vector<256x192xbf16> to vector<128x64xbf16>
    %cst_25 = arith.constant dense<0.000000e+00> : vector<128x64xf32>
    %41 = tpu.matmul %16, %40, %cst_25 {dimension_numbers = #tpu.dot_dimension_numbers<[1], [0], [0], [1], [0, 0, 1, 1], [], []>} : vector<128x128xbf16>, vector<128x64xbf16>, vector<128x64xf32> -> vector<128x64xf32>
    %42 = arith.addf %39, %41 : vector<128x64xf32>
    %43 = tpu.concatenate %34, %42 in 0 : vector<128x64xf32>, vector<128x64xf32> -> vector<256x64xf32>
    %44 = vector.shape_cast %43 : vector<256x64xf32> to vector<32x8x64xf32>
    %c0_26 = arith.constant 0 : index
    %c0_27 = arith.constant 0 : index
    %45 = vector.load %arg6[%c0_26, %c0_27] : memref<8x64xf32, #tpu.memory_space<vmem>>, vector<8x64xf32>
    %46 = vector.shape_cast %45 : vector<8x64xf32> to vector<1x8x64xf32>
    %47 = vector.broadcast %46 : vector<1x8x64xf32> to vector<32x8x64xf32>
    %48 = arith.addf %44, %47 : vector<32x8x64xf32>
    %cst_28 = arith.constant 0.000000e+00 : f32
    %49 = vector.broadcast %cst_28 : f32 to vector<32x8x64xf32>
    %50 = arith.maximumf %48, %49 : vector<32x8x64xf32>
    %51 = vector.shape_cast %50 : vector<32x8x64xf32> to vector<2x128x64xf32>
    %cst_29 = arith.constant 0.000000e+00 : f32
    %52 = vector.broadcast %cst_29 : f32 to vector<2x32x64xf32>
    %c0_30 = arith.constant 0 : index
    %c0_31 = arith.constant 0 : index
    %c0_32 = arith.constant 0 : index
    %53 = vector.load %arg22[%c0_30, %c0_31, %c0_32] : memref<2x192x64xf32, #tpu.memory_space<vmem>>, vector<2x32x64xf32>
    tpu.vector_store %arg22[%c0_30, %c0_31, %c0_32], %52 {strides = array<i32>} : memref<2x192x64xf32, #tpu.memory_space<vmem>>, vector<2x32x64xf32>,
    %c0_33 = arith.constant 0 : index
    %c160 = arith.constant 160 : index
    %c0_34 = arith.constant 0 : index
    %54 = vector.load %arg22[%c0_33, %c160, %c0_34] : memref<2x192x64xf32, #tpu.memory_space<vmem>>, vector<2x32x64xf32>
    tpu.vector_store %arg22[%c0_33, %c160, %c0_34], %52 {strides = array<i32>} : memref<2x192x64xf32, #tpu.memory_space<vmem>>, vector<2x32x64xf32>,
    %c0_35 = arith.constant 0 : index
    %c32 = arith.constant 32 : index
    %c0_36 = arith.constant 0 : index
    %55 = vector.load %arg22[%c0_35, %c32, %c0_36] : memref<2x192x64xf32, #tpu.memory_space<vmem>>, vector<2x128x64xf32>
    tpu.vector_store %arg22[%c0_35, %c32, %c0_36], %51 {strides = array<i32>} : memref<2x192x64xf32, #tpu.memory_space<vmem>>, vector<2x128x64xf32>,
    %cst_37 = arith.constant 0.000000e+00 : f32
    %56 = vector.broadcast %cst_37 : f32 to vector<256x64xf32>
    %c0_38 = arith.constant 0 : index
    %c0_39 = arith.constant 0 : index
    %c0_40 = arith.constant 0 : index
    %57 = vector.load %arg22[%c0_38, %c0_39, %c0_40] : memref<2x192x64xf32, #tpu.memory_space<vmem>>, vector<2x128x64xf32>
    %58 = vector.shape_cast %57 : vector<2x128x64xf32> to vector<256x64xf32>
    %59 = arith.truncf %58 : vector<256x64xf32> to vector<256x64xbf16>
    %c0_41 = arith.constant 0 : index
    %c0_42 = arith.constant 0 : index
    %60 = vector.load %arg7[%c0_41, %c0_42] : memref<576x64xbf16, #tpu.memory_space<vmem>>, vector<64x64xbf16>
    %cst_43 = arith.constant dense<0.000000e+00> : vector<256x64xf32>
    %61 = tpu.matmul %59, %60, %cst_43 {dimension_numbers = #tpu.dot_dimension_numbers<[1], [0], [0], [1], [0, 0, 1, 1], [], []>} : vector<256x64xbf16>, vector<64x64xbf16>, vector<256x64xf32> -> vector<256x64xf32>
    %62 = arith.addf %56, %61 : vector<256x64xf32>
    %c0_44 = arith.constant 0 : index
    %c8 = arith.constant 8 : index
    %c0_45 = arith.constant 0 : index
    %63 = vector.load %arg22[%c0_44, %c8, %c0_45] : memref<2x192x64xf32, #tpu.memory_space<vmem>>, vector<2x128x64xf32>
    %64 = vector.shape_cast %63 : vector<2x128x64xf32> to vector<256x64xf32>
    %65 = arith.truncf %64 : vector<256x64xf32> to vector<256x64xbf16>
    %c64 = arith.constant 64 : index
    %c0_46 = arith.constant 0 : index
    %66 = vector.load %arg7[%c64, %c0_46] : memref<576x64xbf16, #tpu.memory_space<vmem>>, vector<64x64xbf16>
    %cst_47 = arith.constant dense<0.000000e+00> : vector<256x64xf32>
    %67 = tpu.matmul %65, %66, %cst_47 {dimension_numbers = #tpu.dot_dimension_numbers<[1], [0], [0], [1], [0, 0, 1, 1], [], []>} : vector<256x64xbf16>, vector<64x64xbf16>, vector<256x64xf32> -> vector<256x64xf32>
    %68 = arith.addf %62, %67 : vector<256x64xf32>
    %c0_48 = arith.constant 0 : index
    %c16 = arith.constant 16 : index
    %c0_49 = arith.constant 0 : index
    %69 = vector.load %arg22[%c0_48, %c16, %c0_49] : memref<2x192x64xf32, #tpu.memory_space<vmem>>, vector<2x128x64xf32>
    %70 = vector.shape_cast %69 : vector<2x128x64xf32> to vector<256x64xf32>
    %71 = arith.truncf %70 : vector<256x64xf32> to vector<256x64xbf16>
    %c128 = arith.constant 128 : index
    %c0_50 = arith.constant 0 : index
    %72 = vector.load %arg7[%c128, %c0_50] : memref<576x64xbf16, #tpu.memory_space<vmem>>, vector<64x64xbf16>
    %cst_51 = arith.constant dense<0.000000e+00> : vector<256x64xf32>
    %73 = tpu.matmul %71, %72, %cst_51 {dimension_numbers = #tpu.dot_dimension_numbers<[1], [0], [0], [1], [0, 0, 1, 1], [], []>} : vector<256x64xbf16>, vector<64x64xbf16>, vector<256x64xf32> -> vector<256x64xf32>
    %74 = arith.addf %68, %73 : vector<256x64xf32>
    %c0_52 = arith.constant 0 : index
    %c24 = arith.constant 24 : index
    %c0_53 = arith.constant 0 : index
    %75 = vector.load %arg22[%c0_52, %c24, %c0_53] : memref<2x192x64xf32, #tpu.memory_space<vmem>>, vector<2x128x64xf32>
    %76 = vector.shape_cast %75 : vector<2x128x64xf32> to vector<256x64xf32>
    %77 = arith.truncf %76 : vector<256x64xf32> to vector<256x64xbf16>
    %c192 = arith.constant 192 : index
    %c0_54 = arith.constant 0 : index
    %78 = vector.load %arg7[%c192, %c0_54] : memref<576x64xbf16, #tpu.memory_space<vmem>>, vector<64x64xbf16>
    %cst_55 = arith.constant dense<0.000000e+00> : vector<256x64xf32>
    %79 = tpu.matmul %77, %78, %cst_55 {dimension_numbers = #tpu.dot_dimension_numbers<[1], [0], [0], [1], [0, 0, 1, 1], [], []>} : vector<256x64xbf16>, vector<64x64xbf16>, vector<256x64xf32> -> vector<256x64xf32>
    %80 = arith.addf %74, %79 : vector<256x64xf32>
    %c0_56 = arith.constant 0 : index
    %c32_57 = arith.constant 32 : index
    %c0_58 = arith.constant 0 : index
    %81 = vector.load %arg22[%c0_56, %c32_57, %c0_58] : memref<2x192x64xf32, #tpu.memory_space<vmem>>, vector<2x128x64xf32>
    %82 = vector.shape_cast %81 : vector<2x128x64xf32> to vector<256x64xf32>
    %83 = arith.truncf %82 : vector<256x64xf32> to vector<256x64xbf16>
    %c256 = arith.constant 256 : index
    %c0_59 = arith.constant 0 : index
    %84 = vector.load %arg7[%c256, %c0_59] : memref<576x64xbf16, #tpu.memory_space<vmem>>, vector<64x64xbf16>
    %cst_60 = arith.constant dense<0.000000e+00> : vector<256x64xf32>
    %85 = tpu.matmul %83, %84, %cst_60 {dimension_numbers = #tpu.dot_dimension_numbers<[1], [0], [0], [1], [0, 0, 1, 1], [], []>} : vector<256x64xbf16>, vector<64x64xbf16>, vector<256x64xf32> -> vector<256x64xf32>
    %86 = arith.addf %80, %85 : vector<256x64xf32>
    %c0_61 = arith.constant 0 : index
    %c40 = arith.constant 40 : index
    %c0_62 = arith.constant 0 : index
    %87 = vector.load %arg22[%c0_61, %c40, %c0_62] : memref<2x192x64xf32, #tpu.memory_space<vmem>>, vector<2x128x64xf32>
    %88 = vector.shape_cast %87 : vector<2x128x64xf32> to vector<256x64xf32>
    %89 = arith.truncf %88 : vector<256x64xf32> to vector<256x64xbf16>
    %c320 = arith.constant 320 : index
    %c0_63 = arith.constant 0 : index
    %90 = vector.load %arg7[%c320, %c0_63] : memref<576x64xbf16, #tpu.memory_space<vmem>>, vector<64x64xbf16>
    %cst_64 = arith.constant dense<0.000000e+00> : vector<256x64xf32>
    %91 = tpu.matmul %89, %90, %cst_64 {dimension_numbers = #tpu.dot_dimension_numbers<[1], [0], [0], [1], [0, 0, 1, 1], [], []>} : vector<256x64xbf16>, vector<64x64xbf16>, vector<256x64xf32> -> vector<256x64xf32>
    %92 = arith.addf %86, %91 : vector<256x64xf32>
    %c0_65 = arith.constant 0 : index
    %c48 = arith.constant 48 : index
    %c0_66 = arith.constant 0 : index
    %93 = vector.load %arg22[%c0_65, %c48, %c0_66] : memref<2x192x64xf32, #tpu.memory_space<vmem>>, vector<2x128x64xf32>
    %94 = vector.shape_cast %93 : vector<2x128x64xf32> to vector<256x64xf32>
    %95 = arith.truncf %94 : vector<256x64xf32> to vector<256x64xbf16>
    %c384 = arith.constant 384 : index
    %c0_67 = arith.constant 0 : index
    %96 = vector.load %arg7[%c384, %c0_67] : memref<576x64xbf16, #tpu.memory_space<vmem>>, vector<64x64xbf16>
    %cst_68 = arith.constant dense<0.000000e+00> : vector<256x64xf32>
    %97 = tpu.matmul %95, %96, %cst_68 {dimension_numbers = #tpu.dot_dimension_numbers<[1], [0], [0], [1], [0, 0, 1, 1], [], []>} : vector<256x64xbf16>, vector<64x64xbf16>, vector<256x64xf32> -> vector<256x64xf32>
    %98 = arith.addf %92, %97 : vector<256x64xf32>
    %c0_69 = arith.constant 0 : index
    %c56 = arith.constant 56 : index
    %c0_70 = arith.constant 0 : index
    %99 = vector.load %arg22[%c0_69, %c56, %c0_70] : memref<2x192x64xf32, #tpu.memory_space<vmem>>, vector<2x128x64xf32>
    %100 = vector.shape_cast %99 : vector<2x128x64xf32> to vector<256x64xf32>
    %101 = arith.truncf %100 : vector<256x64xf32> to vector<256x64xbf16>
    %c448 = arith.constant 448 : index
    %c0_71 = arith.constant 0 : index
    %102 = vector.load %arg7[%c448, %c0_71] : memref<576x64xbf16, #tpu.memory_space<vmem>>, vector<64x64xbf16>
    %cst_72 = arith.constant dense<0.000000e+00> : vector<256x64xf32>
    %103 = tpu.matmul %101, %102, %cst_72 {dimension_numbers = #tpu.dot_dimension_numbers<[1], [0], [0], [1], [0, 0, 1, 1], [], []>} : vector<256x64xbf16>, vector<64x64xbf16>, vector<256x64xf32> -> vector<256x64xf32>
    %104 = arith.addf %98, %103 : vector<256x64xf32>
    %c0_73 = arith.constant 0 : index
    %c64_74 = arith.constant 64 : index
    %c0_75 = arith.constant 0 : index
    %105 = vector.load %arg22[%c0_73, %c64_74, %c0_75] : memref<2x192x64xf32, #tpu.memory_space<vmem>>, vector<2x128x64xf32>
    %106 = vector.shape_cast %105 : vector<2x128x64xf32> to vector<256x64xf32>
    %107 = arith.truncf %106 : vector<256x64xf32> to vector<256x64xbf16>
    %c512 = arith.constant 512 : index
    %c0_76 = arith.constant 0 : index
    %108 = vector.load %arg7[%c512, %c0_76] : memref<576x64xbf16, #tpu.memory_space<vmem>>, vector<64x64xbf16>
    %cst_77 = arith.constant dense<0.000000e+00> : vector<256x64xf32>
    %109 = tpu.matmul %107, %108, %cst_77 {dimension_numbers = #tpu.dot_dimension_numbers<[1], [0], [0], [1], [0, 0, 1, 1], [], []>} : vector<256x64xbf16>, vector<64x64xbf16>, vector<256x64xf32> -> vector<256x64xf32>
    %110 = arith.addf %104, %109 : vector<256x64xf32>
    %c0_78 = arith.constant 0 : index
    %c0_79 = arith.constant 0 : index
    %111 = vector.load %arg8[%c0_78, %c0_79] : memref<1x64xf32, #tpu.memory_space<vmem>>, vector<1x64xf32>
    %112 = vector.broadcast %111 : vector<1x64xf32> to vector<256x64xf32>
    %113 = arith.addf %110, %112 : vector<256x64xf32>
    %114 = arith.addf %113, %23 : vector<256x64xf32>
    %cst_80 = arith.constant 0.000000e+00 : f32
    %115 = vector.broadcast %cst_80 : f32 to vector<256x64xf32>
    %116 = arith.maximumf %114, %115 : vector<256x64xf32>
    %117 = vector.shape_cast %116 : vector<256x64xf32> to vector<2x128x64xf32>
    %118 = vector.shape_cast %117 : vector<2x128x64xf32> to vector<256x64xf32>
    %119 = arith.truncf %118 : vector<256x64xf32> to vector<256x64xbf16>
    %c0_81 = arith.constant 0 : index
    %c0_82 = arith.constant 0 : index
    %120 = vector.load %arg15[%c0_81, %c0_82] : memref<64x128xbf16, #tpu.memory_space<vmem>>, vector<64x128xbf16>
    %cst_83 = arith.constant dense<0.000000e+00> : vector<256x128xf32>
    %121 = tpu.matmul %119, %120, %cst_83 {dimension_numbers = #tpu.dot_dimension_numbers<[1], [0], [0], [1], [0, 0, 1, 1], [], []>} : vector<256x64xbf16>, vector<64x128xbf16>, vector<256x128xf32> -> vector<256x128xf32>
    %c0_84 = arith.constant 0 : index
    %c0_85 = arith.constant 0 : index
    %122 = vector.load %arg16[%c0_84, %c0_85] : memref<1x128xf32, #tpu.memory_space<vmem>>, vector<1x128xf32>
    %123 = vector.broadcast %122 : vector<1x128xf32> to vector<256x128xf32>
    %124 = arith.addf %121, %123 : vector<256x128xf32>
    %c0_86 = arith.constant 0 : index
    %c0_87 = arith.constant 0 : index
    %125 = vector.load %arg11[%c0_86, %c0_87] : memref<64x384xbf16, #tpu.memory_space<vmem>>, vector<64x384xbf16>
    %cst_88 = arith.constant dense<0.000000e+00> : vector<256x384xf32>
    %126 = tpu.matmul %119, %125, %cst_88 {dimension_numbers = #tpu.dot_dimension_numbers<[1], [0], [0], [1], [0, 0, 1, 1], [], []>} : vector<256x64xbf16>, vector<64x384xbf16>, vector<256x384xf32> -> vector<256x384xf32>
    %127 = arith.truncf %126 : vector<256x384xf32> to vector<256x384xbf16>
    %128 = vector.extract_strided_slice %127 {offsets = [0, 0], sizes = [128, 128], strides = [1, 1]} : vector<256x384xbf16> to vector<128x128xbf16>
    %cst_89 = arith.constant dense<0.000000e+00> : vector<128x128xf32>
    %129 = tpu.matmul %12, %128, %cst_89 {dimension_numbers = #tpu.dot_dimension_numbers<[1], [0], [0], [1], [0, 0, 1, 1], [], []>} : vector<128x128xbf16>, vector<128x128xbf16>, vector<128x128xf32> -> vector<128x128xf32>
    %130 = vector.extract_strided_slice %127 {offsets = [0, 128], sizes = [128, 128], strides = [1, 1]} : vector<256x384xbf16> to vector<128x128xbf16>
    %cst_90 = arith.constant dense<0.000000e+00> : vector<128x128xf32>
    %131 = tpu.matmul %14, %130, %cst_90 {dimension_numbers = #tpu.dot_dimension_numbers<[1], [0], [0], [1], [0, 0, 1, 1], [], []>} : vector<128x128xbf16>, vector<128x128xbf16>, vector<128x128xf32> -> vector<128x128xf32>
    %132 = arith.addf %129, %131 : vector<128x128xf32>
    %133 = vector.extract_strided_slice %127 {offsets = [0, 256], sizes = [128, 128], strides = [1, 1]} : vector<256x384xbf16> to vector<128x128xbf16>
    %cst_91 = arith.constant dense<0.000000e+00> : vector<128x128xf32>
    %134 = tpu.matmul %16, %133, %cst_91 {dimension_numbers = #tpu.dot_dimension_numbers<[1], [0], [0], [1], [0, 0, 1, 1], [], []>} : vector<128x128xbf16>, vector<128x128xbf16>, vector<128x128xf32> -> vector<128x128xf32>
    %135 = arith.addf %132, %134 : vector<128x128xf32>
    %136 = vector.extract_strided_slice %127 {offsets = [128, 0], sizes = [128, 128], strides = [1, 1]} : vector<256x384xbf16> to vector<128x128xbf16>
    %cst_92 = arith.constant dense<0.000000e+00> : vector<128x128xf32>
    %137 = tpu.matmul %12, %136, %cst_92 {dimension_numbers = #tpu.dot_dimension_numbers<[1], [0], [0], [1], [0, 0, 1, 1], [], []>} : vector<128x128xbf16>, vector<128x128xbf16>, vector<128x128xf32> -> vector<128x128xf32>
    %138 = vector.extract_strided_slice %127 {offsets = [128, 128], sizes = [128, 128], strides = [1, 1]} : vector<256x384xbf16> to vector<128x128xbf16>
    %cst_93 = arith.constant dense<0.000000e+00> : vector<128x128xf32>
    %139 = tpu.matmul %14, %138, %cst_93 {dimension_numbers = #tpu.dot_dimension_numbers<[1], [0], [0], [1], [0, 0, 1, 1], [], []>} : vector<128x128xbf16>, vector<128x128xbf16>, vector<128x128xf32> -> vector<128x128xf32>
    %140 = arith.addf %137, %139 : vector<128x128xf32>
    %141 = vector.extract_strided_slice %127 {offsets = [128, 256], sizes = [128, 128], strides = [1, 1]} : vector<256x384xbf16> to vector<128x128xbf16>
    %cst_94 = arith.constant dense<0.000000e+00> : vector<128x128xf32>
    %142 = tpu.matmul %16, %141, %cst_94 {dimension_numbers = #tpu.dot_dimension_numbers<[1], [0], [0], [1], [0, 0, 1, 1], [], []>} : vector<128x128xbf16>, vector<128x128xbf16>, vector<128x128xf32> -> vector<128x128xf32>
    %143 = arith.addf %140, %142 : vector<128x128xf32>
    %144 = tpu.concatenate %135, %143 in 0 : vector<128x128xf32>, vector<128x128xf32> -> vector<256x128xf32>
    %145 = vector.shape_cast %144 : vector<256x128xf32> to vector<32x8x128xf32>
    %c0_95 = arith.constant 0 : index
    %c0_96 = arith.constant 0 : index
    %146 = vector.load %arg12[%c0_95, %c0_96] : memref<8x128xf32, #tpu.memory_space<vmem>>, vector<8x128xf32>
    %147 = vector.shape_cast %146 : vector<8x128xf32> to vector<1x8x128xf32>
    %148 = vector.broadcast %147 : vector<1x8x128xf32> to vector<32x8x128xf32>
    %149 = arith.addf %145, %148 : vector<32x8x128xf32>
    %cst_97 = arith.constant 0.000000e+00 : f32
    %150 = vector.broadcast %cst_97 : f32 to vector<32x8x128xf32>
    %151 = arith.maximumf %149, %150 : vector<32x8x128xf32>
    %152 = vector.shape_cast %151 : vector<32x8x128xf32> to vector<2x128x128xf32>
    %cst_98 = arith.constant 0.000000e+00 : f32
    %153 = vector.broadcast %cst_98 : f32 to vector<2x32x128xf32>
    %c0_99 = arith.constant 0 : index
    %c0_100 = arith.constant 0 : index
    %c0_101 = arith.constant 0 : index
    %154 = vector.load %arg23[%c0_99, %c0_100, %c0_101] : memref<2x192x128xf32, #tpu.memory_space<vmem>>, vector<2x32x128xf32>
    tpu.vector_store %arg23[%c0_99, %c0_100, %c0_101], %153 {strides = array<i32>} : memref<2x192x128xf32, #tpu.memory_space<vmem>>, vector<2x32x128xf32>,
    %c0_102 = arith.constant 0 : index
    %c160_103 = arith.constant 160 : index
    %c0_104 = arith.constant 0 : index
    %155 = vector.load %arg23[%c0_102, %c160_103, %c0_104] : memref<2x192x128xf32, #tpu.memory_space<vmem>>, vector<2x32x128xf32>
    tpu.vector_store %arg23[%c0_102, %c160_103, %c0_104], %153 {strides = array<i32>} : memref<2x192x128xf32, #tpu.memory_space<vmem>>, vector<2x32x128xf32>,
    %c0_105 = arith.constant 0 : index
    %c32_106 = arith.constant 32 : index
    %c0_107 = arith.constant 0 : index
    %156 = vector.load %arg23[%c0_105, %c32_106, %c0_107] : memref<2x192x128xf32, #tpu.memory_space<vmem>>, vector<2x128x128xf32>
    tpu.vector_store %arg23[%c0_105, %c32_106, %c0_107], %152 {strides = array<i32>} : memref<2x192x128xf32, #tpu.memory_space<vmem>>, vector<2x128x128xf32>,
    %cst_108 = arith.constant 0.000000e+00 : f32
    %157 = vector.broadcast %cst_108 : f32 to vector<256x128xf32>
    %c0_109 = arith.constant 0 : index
    %c0_110 = arith.constant 0 : index
    %c0_111 = arith.constant 0 : index
    %158 = vector.load %arg23[%c0_109, %c0_110, %c0_111] : memref<2x192x128xf32, #tpu.memory_space<vmem>>, vector<2x128x128xf32>
    %159 = vector.shape_cast %158 : vector<2x128x128xf32> to vector<256x128xf32>
    %160 = arith.truncf %159 : vector<256x128xf32> to vector<256x128xbf16>
    %c0_112 = arith.constant 0 : index
    %c0_113 = arith.constant 0 : index
    %161 = vector.load %arg13[%c0_112, %c0_113] : memref<1152x128xbf16, #tpu.memory_space<vmem>>, vector<128x128xbf16>
    %cst_114 = arith.constant dense<0.000000e+00> : vector<256x128xf32>
    %162 = tpu.matmul %160, %161, %cst_114 {dimension_numbers = #tpu.dot_dimension_numbers<[1], [0], [0], [1], [0, 0, 1, 1], [], []>} : vector<256x128xbf16>, vector<128x128xbf16>, vector<256x128xf32> -> vector<256x128xf32>
    %163 = arith.addf %157, %162 : vector<256x128xf32>
    %c0_115 = arith.constant 0 : index
    %c8_116 = arith.constant 8 : index
    %c0_117 = arith.constant 0 : index
    %164 = vector.load %arg23[%c0_115, %c8_116, %c0_117] : memref<2x192x128xf32, #tpu.memory_space<vmem>>, vector<2x128x128xf32>
    %165 = vector.shape_cast %164 : vector<2x128x128xf32> to vector<256x128xf32>
    %166 = arith.truncf %165 : vector<256x128xf32> to vector<256x128xbf16>
    %c128_118 = arith.constant 128 : index
    %c0_119 = arith.constant 0 : index
    %167 = vector.load %arg13[%c128_118, %c0_119] : memref<1152x128xbf16, #tpu.memory_space<vmem>>, vector<128x128xbf16>
    %cst_120 = arith.constant dense<0.000000e+00> : vector<256x128xf32>
    %168 = tpu.matmul %166, %167, %cst_120 {dimension_numbers = #tpu.dot_dimension_numbers<[1], [0], [0], [1], [0, 0, 1, 1], [], []>} : vector<256x128xbf16>, vector<128x128xbf16>, vector<256x128xf32> -> vector<256x128xf32>
    %169 = arith.addf %163, %168 : vector<256x128xf32>
    %c0_121 = arith.constant 0 : index
    %c16_122 = arith.constant 16 : index
    %c0_123 = arith.constant 0 : index
    %170 = vector.load %arg23[%c0_121, %c16_122, %c0_123] : memref<2x192x128xf32, #tpu.memory_space<vmem>>, vector<2x128x128xf32>
    %171 = vector.shape_cast %170 : vector<2x128x128xf32> to vector<256x128xf32>
    %172 = arith.truncf %171 : vector<256x128xf32> to vector<256x128xbf16>
    %c256_124 = arith.constant 256 : index
    %c0_125 = arith.constant 0 : index
    %173 = vector.load %arg13[%c256_124, %c0_125] : memref<1152x128xbf16, #tpu.memory_space<vmem>>, vector<128x128xbf16>
    %cst_126 = arith.constant dense<0.000000e+00> : vector<256x128xf32>
    %174 = tpu.matmul %172, %173, %cst_126 {dimension_numbers = #tpu.dot_dimension_numbers<[1], [0], [0], [1], [0, 0, 1, 1], [], []>} : vector<256x128xbf16>, vector<128x128xbf16>, vector<256x128xf32> -> vector<256x128xf32>
    %175 = arith.addf %169, %174 : vector<256x128xf32>
    %c0_127 = arith.constant 0 : index
    %c24_128 = arith.constant 24 : index
    %c0_129 = arith.constant 0 : index
    %176 = vector.load %arg23[%c0_127, %c24_128, %c0_129] : memref<2x192x128xf32, #tpu.memory_space<vmem>>, vector<2x128x128xf32>
    %177 = vector.shape_cast %176 : vector<2x128x128xf32> to vector<256x128xf32>
    %178 = arith.truncf %177 : vector<256x128xf32> to vector<256x128xbf16>
    %c384_130 = arith.constant 384 : index
    %c0_131 = arith.constant 0 : index
    %179 = vector.load %arg13[%c384_130, %c0_131] : memref<1152x128xbf16, #tpu.memory_space<vmem>>, vector<128x128xbf16>
    %cst_132 = arith.constant dense<0.000000e+00> : vector<256x128xf32>
    %180 = tpu.matmul %178, %179, %cst_132 {dimension_numbers = #tpu.dot_dimension_numbers<[1], [0], [0], [1], [0, 0, 1, 1], [], []>} : vector<256x128xbf16>, vector<128x128xbf16>, vector<256x128xf32> -> vector<256x128xf32>
    %181 = arith.addf %175, %180 : vector<256x128xf32>
    %c0_133 = arith.constant 0 : index
    %c32_134 = arith.constant 32 : index
    %c0_135 = arith.constant 0 : index
    %182 = vector.load %arg23[%c0_133, %c32_134, %c0_135] : memref<2x192x128xf32, #tpu.memory_space<vmem>>, vector<2x128x128xf32>
    %183 = vector.shape_cast %182 : vector<2x128x128xf32> to vector<256x128xf32>
    %184 = arith.truncf %183 : vector<256x128xf32> to vector<256x128xbf16>
    %c512_136 = arith.constant 512 : index
    %c0_137 = arith.constant 0 : index
    %185 = vector.load %arg13[%c512_136, %c0_137] : memref<1152x128xbf16, #tpu.memory_space<vmem>>, vector<128x128xbf16>
    %cst_138 = arith.constant dense<0.000000e+00> : vector<256x128xf32>
    %186 = tpu.matmul %184, %185, %cst_138 {dimension_numbers = #tpu.dot_dimension_numbers<[1], [0], [0], [1], [0, 0, 1, 1], [], []>} : vector<256x128xbf16>, vector<128x128xbf16>, vector<256x128xf32> -> vector<256x128xf32>
    %187 = arith.addf %181, %186 : vector<256x128xf32>
    %c0_139 = arith.constant 0 : index
    %c40_140 = arith.constant 40 : index
    %c0_141 = arith.constant 0 : index
    %188 = vector.load %arg23[%c0_139, %c40_140, %c0_141] : memref<2x192x128xf32, #tpu.memory_space<vmem>>, vector<2x128x128xf32>
    %189 = vector.shape_cast %188 : vector<2x128x128xf32> to vector<256x128xf32>
    %190 = arith.truncf %189 : vector<256x128xf32> to vector<256x128xbf16>
    %c640 = arith.constant 640 : index
    %c0_142 = arith.constant 0 : index
    %191 = vector.load %arg13[%c640, %c0_142] : memref<1152x128xbf16, #tpu.memory_space<vmem>>, vector<128x128xbf16>
    %cst_143 = arith.constant dense<0.000000e+00> : vector<256x128xf32>
    %192 = tpu.matmul %190, %191, %cst_143 {dimension_numbers = #tpu.dot_dimension_numbers<[1], [0], [0], [1], [0, 0, 1, 1], [], []>} : vector<256x128xbf16>, vector<128x128xbf16>, vector<256x128xf32> -> vector<256x128xf32>
    %193 = arith.addf %187, %192 : vector<256x128xf32>
    %c0_144 = arith.constant 0 : index
    %c48_145 = arith.constant 48 : index
    %c0_146 = arith.constant 0 : index
    %194 = vector.load %arg23[%c0_144, %c48_145, %c0_146] : memref<2x192x128xf32, #tpu.memory_space<vmem>>, vector<2x128x128xf32>
    %195 = vector.shape_cast %194 : vector<2x128x128xf32> to vector<256x128xf32>
    %196 = arith.truncf %195 : vector<256x128xf32> to vector<256x128xbf16>
    %c768 = arith.constant 768 : index
    %c0_147 = arith.constant 0 : index
    %197 = vector.load %arg13[%c768, %c0_147] : memref<1152x128xbf16, #tpu.memory_space<vmem>>, vector<128x128xbf16>
    %cst_148 = arith.constant dense<0.000000e+00> : vector<256x128xf32>
    %198 = tpu.matmul %196, %197, %cst_148 {dimension_numbers = #tpu.dot_dimension_numbers<[1], [0], [0], [1], [0, 0, 1, 1], [], []>} : vector<256x128xbf16>, vector<128x128xbf16>, vector<256x128xf32> -> vector<256x128xf32>
    %199 = arith.addf %193, %198 : vector<256x128xf32>
    %c0_149 = arith.constant 0 : index
    %c56_150 = arith.constant 56 : index
    %c0_151 = arith.constant 0 : index
    %200 = vector.load %arg23[%c0_149, %c56_150, %c0_151] : memref<2x192x128xf32, #tpu.memory_space<vmem>>, vector<2x128x128xf32>
    %201 = vector.shape_cast %200 : vector<2x128x128xf32> to vector<256x128xf32>
    %202 = arith.truncf %201 : vector<256x128xf32> to vector<256x128xbf16>
    %c896 = arith.constant 896 : index
    %c0_152 = arith.constant 0 : index
    %203 = vector.load %arg13[%c896, %c0_152] : memref<1152x128xbf16, #tpu.memory_space<vmem>>, vector<128x128xbf16>
    %cst_153 = arith.constant dense<0.000000e+00> : vector<256x128xf32>
    %204 = tpu.matmul %202, %203, %cst_153 {dimension_numbers = #tpu.dot_dimension_numbers<[1], [0], [0], [1], [0, 0, 1, 1], [], []>} : vector<256x128xbf16>, vector<128x128xbf16>, vector<256x128xf32> -> vector<256x128xf32>
    %205 = arith.addf %199, %204 : vector<256x128xf32>
    %c0_154 = arith.constant 0 : index
    %c64_155 = arith.constant 64 : index
    %c0_156 = arith.constant 0 : index
    %206 = vector.load %arg23[%c0_154, %c64_155, %c0_156] : memref<2x192x128xf32, #tpu.memory_space<vmem>>, vector<2x128x128xf32>
    %207 = vector.shape_cast %206 : vector<2x128x128xf32> to vector<256x128xf32>
    %208 = arith.truncf %207 : vector<256x128xf32> to vector<256x128xbf16>
    %c1024 = arith.constant 1024 : index
    %c0_157 = arith.constant 0 : index
    %209 = vector.load %arg13[%c1024, %c0_157] : memref<1152x128xbf16, #tpu.memory_space<vmem>>, vector<128x128xbf16>
    %cst_158 = arith.constant dense<0.000000e+00> : vector<256x128xf32>
    %210 = tpu.matmul %208, %209, %cst_158 {dimension_numbers = #tpu.dot_dimension_numbers<[1], [0], [0], [1], [0, 0, 1, 1], [], []>} : vector<256x128xbf16>, vector<128x128xbf16>, vector<256x128xf32> -> vector<256x128xf32>
    %211 = arith.addf %205, %210 : vector<256x128xf32>
    %c0_159 = arith.constant 0 : index
    %c0_160 = arith.constant 0 : index
    %212 = vector.load %arg14[%c0_159, %c0_160] : memref<1x128xf32, #tpu.memory_space<vmem>>, vector<1x128xf32>
    %213 = vector.broadcast %212 : vector<1x128xf32> to vector<256x128xf32>
    %214 = arith.addf %211, %213 : vector<256x128xf32>
    %215 = arith.addf %214, %124 : vector<256x128xf32>
    %cst_161 = arith.constant 0.000000e+00 : f32
    %216 = vector.broadcast %cst_161 : f32 to vector<256x128xf32>
    %217 = arith.maximumf %215, %216 : vector<256x128xf32>
    %218 = vector.shape_cast %217 : vector<256x128xf32> to vector<2x128x128xf32>
    %219 = vector.shape_cast %218 : vector<2x128x128xf32> to vector<256x128xf32>
    %220 = arith.truncf %219 : vector<256x128xf32> to vector<256x128xbf16>
    %221 = vector.shape_cast %218 : vector<2x128x128xf32> to vector<256x128xf32>
    %c0_162 = arith.constant 0 : index
    %c0_163 = arith.constant 0 : index
    %222 = vector.load %arg17[%c0_162, %c0_163] : memref<128x384xbf16, #tpu.memory_space<vmem>>, vector<128x384xbf16>
    %cst_164 = arith.constant dense<0.000000e+00> : vector<256x384xf32>
    %223 = tpu.matmul %220, %222, %cst_164 {dimension_numbers = #tpu.dot_dimension_numbers<[1], [0], [0], [1], [0, 0, 1, 1], [], []>} : vector<256x128xbf16>, vector<128x384xbf16>, vector<256x384xf32> -> vector<256x384xf32>
    %224 = arith.truncf %223 : vector<256x384xf32> to vector<256x384xbf16>
    %225 = vector.extract_strided_slice %224 {offsets = [0, 0], sizes = [128, 128], strides = [1, 1]} : vector<256x384xbf16> to vector<128x128xbf16>
    %cst_165 = arith.constant dense<0.000000e+00> : vector<128x128xf32>
    %226 = tpu.matmul %12, %225, %cst_165 {dimension_numbers = #tpu.dot_dimension_numbers<[1], [0], [0], [1], [0, 0, 1, 1], [], []>} : vector<128x128xbf16>, vector<128x128xbf16>, vector<128x128xf32> -> vector<128x128xf32>
    %227 = vector.extract_strided_slice %224 {offsets = [0, 128], sizes = [128, 128], strides = [1, 1]} : vector<256x384xbf16> to vector<128x128xbf16>
    %cst_166 = arith.constant dense<0.000000e+00> : vector<128x128xf32>
    %228 = tpu.matmul %14, %227, %cst_166 {dimension_numbers = #tpu.dot_dimension_numbers<[1], [0], [0], [1], [0, 0, 1, 1], [], []>} : vector<128x128xbf16>, vector<128x128xbf16>, vector<128x128xf32> -> vector<128x128xf32>
    %229 = arith.addf %226, %228 : vector<128x128xf32>
    %230 = vector.extract_strided_slice %224 {offsets = [0, 256], sizes = [128, 128], strides = [1, 1]} : vector<256x384xbf16> to vector<128x128xbf16>
    %cst_167 = arith.constant dense<0.000000e+00> : vector<128x128xf32>
    %231 = tpu.matmul %16, %230, %cst_167 {dimension_numbers = #tpu.dot_dimension_numbers<[1], [0], [0], [1], [0, 0, 1, 1], [], []>} : vector<128x128xbf16>, vector<128x128xbf16>, vector<128x128xf32> -> vector<128x128xf32>
    %232 = arith.addf %229, %231 : vector<128x128xf32>
    %233 = vector.extract_strided_slice %224 {offsets = [128, 0], sizes = [128, 128], strides = [1, 1]} : vector<256x384xbf16> to vector<128x128xbf16>
    %cst_168 = arith.constant dense<0.000000e+00> : vector<128x128xf32>
    %234 = tpu.matmul %12, %233, %cst_168 {dimension_numbers = #tpu.dot_dimension_numbers<[1], [0], [0], [1], [0, 0, 1, 1], [], []>} : vector<128x128xbf16>, vector<128x128xbf16>, vector<128x128xf32> -> vector<128x128xf32>
    %235 = vector.extract_strided_slice %224 {offsets = [128, 128], sizes = [128, 128], strides = [1, 1]} : vector<256x384xbf16> to vector<128x128xbf16>
    %cst_169 = arith.constant dense<0.000000e+00> : vector<128x128xf32>
    %236 = tpu.matmul %14, %235, %cst_169 {dimension_numbers = #tpu.dot_dimension_numbers<[1], [0], [0], [1], [0, 0, 1, 1], [], []>} : vector<128x128xbf16>, vector<128x128xbf16>, vector<128x128xf32> -> vector<128x128xf32>
    %237 = arith.addf %234, %236 : vector<128x128xf32>
    %238 = vector.extract_strided_slice %224 {offsets = [128, 256], sizes = [128, 128], strides = [1, 1]} : vector<256x384xbf16> to vector<128x128xbf16>
    %cst_170 = arith.constant dense<0.000000e+00> : vector<128x128xf32>
    %239 = tpu.matmul %16, %238, %cst_170 {dimension_numbers = #tpu.dot_dimension_numbers<[1], [0], [0], [1], [0, 0, 1, 1], [], []>} : vector<128x128xbf16>, vector<128x128xbf16>, vector<128x128xf32> -> vector<128x128xf32>
    %240 = arith.addf %237, %239 : vector<128x128xf32>
    %241 = tpu.concatenate %232, %240 in 0 : vector<128x128xf32>, vector<128x128xf32> -> vector<256x128xf32>
    %242 = vector.shape_cast %241 : vector<256x128xf32> to vector<32x8x128xf32>
    %c0_171 = arith.constant 0 : index
    %c0_172 = arith.constant 0 : index
    %243 = vector.load %arg18[%c0_171, %c0_172] : memref<8x128xf32, #tpu.memory_space<vmem>>, vector<8x128xf32>
    %244 = vector.shape_cast %243 : vector<8x128xf32> to vector<1x8x128xf32>
    %245 = vector.broadcast %244 : vector<1x8x128xf32> to vector<32x8x128xf32>
    %246 = arith.addf %242, %245 : vector<32x8x128xf32>
    %cst_173 = arith.constant 0.000000e+00 : f32
    %247 = vector.broadcast %cst_173 : f32 to vector<32x8x128xf32>
    %248 = arith.maximumf %246, %247 : vector<32x8x128xf32>
    %249 = vector.shape_cast %248 : vector<32x8x128xf32> to vector<2x128x128xf32>
    %c0_174 = arith.constant 0 : index
    %c32_175 = arith.constant 32 : index
    %c0_176 = arith.constant 0 : index
    %250 = vector.load %arg23[%c0_174, %c32_175, %c0_176] : memref<2x192x128xf32, #tpu.memory_space<vmem>>, vector<2x128x128xf32>
    tpu.vector_store %arg23[%c0_174, %c32_175, %c0_176], %249 {strides = array<i32>} : memref<2x192x128xf32, #tpu.memory_space<vmem>>, vector<2x128x128xf32>,
    %cst_177 = arith.constant 0.000000e+00 : f32
    %251 = vector.broadcast %cst_177 : f32 to vector<256x128xf32>
    %c0_178 = arith.constant 0 : index
    %c0_179 = arith.constant 0 : index
    %c0_180 = arith.constant 0 : index
    %252 = vector.load %arg23[%c0_178, %c0_179, %c0_180] : memref<2x192x128xf32, #tpu.memory_space<vmem>>, vector<2x128x128xf32>
    %253 = vector.shape_cast %252 : vector<2x128x128xf32> to vector<256x128xf32>
    %254 = arith.truncf %253 : vector<256x128xf32> to vector<256x128xbf16>
    %c0_181 = arith.constant 0 : index
    %c0_182 = arith.constant 0 : index
    %255 = vector.load %arg19[%c0_181, %c0_182] : memref<1152x128xbf16, #tpu.memory_space<vmem>>, vector<128x128xbf16>
    %cst_183 = arith.constant dense<0.000000e+00> : vector<256x128xf32>
    %256 = tpu.matmul %254, %255, %cst_183 {dimension_numbers = #tpu.dot_dimension_numbers<[1], [0], [0], [1], [0, 0, 1, 1], [], []>} : vector<256x128xbf16>, vector<128x128xbf16>, vector<256x128xf32> -> vector<256x128xf32>
    %257 = arith.addf %251, %256 : vector<256x128xf32>
    %c0_184 = arith.constant 0 : index
    %c8_185 = arith.constant 8 : index
    %c0_186 = arith.constant 0 : index
    %258 = vector.load %arg23[%c0_184, %c8_185, %c0_186] : memref<2x192x128xf32, #tpu.memory_space<vmem>>, vector<2x128x128xf32>
    %259 = vector.shape_cast %258 : vector<2x128x128xf32> to vector<256x128xf32>
    %260 = arith.truncf %259 : vector<256x128xf32> to vector<256x128xbf16>
    %c128_187 = arith.constant 128 : index
    %c0_188 = arith.constant 0 : index
    %261 = vector.load %arg19[%c128_187, %c0_188] : memref<1152x128xbf16, #tpu.memory_space<vmem>>, vector<128x128xbf16>
    %cst_189 = arith.constant dense<0.000000e+00> : vector<256x128xf32>
    %262 = tpu.matmul %260, %261, %cst_189 {dimension_numbers = #tpu.dot_dimension_numbers<[1], [0], [0], [1], [0, 0, 1, 1], [], []>} : vector<256x128xbf16>, vector<128x128xbf16>, vector<256x128xf32> -> vector<256x128xf32>
    %263 = arith.addf %257, %262 : vector<256x128xf32>
    %c0_190 = arith.constant 0 : index
    %c16_191 = arith.constant 16 : index
    %c0_192 = arith.constant 0 : index
    %264 = vector.load %arg23[%c0_190, %c16_191, %c0_192] : memref<2x192x128xf32, #tpu.memory_space<vmem>>, vector<2x128x128xf32>
    %265 = vector.shape_cast %264 : vector<2x128x128xf32> to vector<256x128xf32>
    %266 = arith.truncf %265 : vector<256x128xf32> to vector<256x128xbf16>
    %c256_193 = arith.constant 256 : index
    %c0_194 = arith.constant 0 : index
    %267 = vector.load %arg19[%c256_193, %c0_194] : memref<1152x128xbf16, #tpu.memory_space<vmem>>, vector<128x128xbf16>
    %cst_195 = arith.constant dense<0.000000e+00> : vector<256x128xf32>
    %268 = tpu.matmul %266, %267, %cst_195 {dimension_numbers = #tpu.dot_dimension_numbers<[1], [0], [0], [1], [0, 0, 1, 1], [], []>} : vector<256x128xbf16>, vector<128x128xbf16>, vector<256x128xf32> -> vector<256x128xf32>
    %269 = arith.addf %263, %268 : vector<256x128xf32>
    %c0_196 = arith.constant 0 : index
    %c24_197 = arith.constant 24 : index
    %c0_198 = arith.constant 0 : index
    %270 = vector.load %arg23[%c0_196, %c24_197, %c0_198] : memref<2x192x128xf32, #tpu.memory_space<vmem>>, vector<2x128x128xf32>
    %271 = vector.shape_cast %270 : vector<2x128x128xf32> to vector<256x128xf32>
    %272 = arith.truncf %271 : vector<256x128xf32> to vector<256x128xbf16>
    %c384_199 = arith.constant 384 : index
    %c0_200 = arith.constant 0 : index
    %273 = vector.load %arg19[%c384_199, %c0_200] : memref<1152x128xbf16, #tpu.memory_space<vmem>>, vector<128x128xbf16>
    %cst_201 = arith.constant dense<0.000000e+00> : vector<256x128xf32>
    %274 = tpu.matmul %272, %273, %cst_201 {dimension_numbers = #tpu.dot_dimension_numbers<[1], [0], [0], [1], [0, 0, 1, 1], [], []>} : vector<256x128xbf16>, vector<128x128xbf16>, vector<256x128xf32> -> vector<256x128xf32>
    %275 = arith.addf %269, %274 : vector<256x128xf32>
    %c0_202 = arith.constant 0 : index
    %c32_203 = arith.constant 32 : index
    %c0_204 = arith.constant 0 : index
    %276 = vector.load %arg23[%c0_202, %c32_203, %c0_204] : memref<2x192x128xf32, #tpu.memory_space<vmem>>, vector<2x128x128xf32>
    %277 = vector.shape_cast %276 : vector<2x128x128xf32> to vector<256x128xf32>
    %278 = arith.truncf %277 : vector<256x128xf32> to vector<256x128xbf16>
    %c512_205 = arith.constant 512 : index
    %c0_206 = arith.constant 0 : index
    %279 = vector.load %arg19[%c512_205, %c0_206] : memref<1152x128xbf16, #tpu.memory_space<vmem>>, vector<128x128xbf16>
    %cst_207 = arith.constant dense<0.000000e+00> : vector<256x128xf32>
    %280 = tpu.matmul %278, %279, %cst_207 {dimension_numbers = #tpu.dot_dimension_numbers<[1], [0], [0], [1], [0, 0, 1, 1], [], []>} : vector<256x128xbf16>, vector<128x128xbf16>, vector<256x128xf32> -> vector<256x128xf32>
    %281 = arith.addf %275, %280 : vector<256x128xf32>
    %c0_208 = arith.constant 0 : index
    %c40_209 = arith.constant 40 : index
    %c0_210 = arith.constant 0 : index
    %282 = vector.load %arg23[%c0_208, %c40_209, %c0_210] : memref<2x192x128xf32, #tpu.memory_space<vmem>>, vector<2x128x128xf32>
    %283 = vector.shape_cast %282 : vector<2x128x128xf32> to vector<256x128xf32>
    %284 = arith.truncf %283 : vector<256x128xf32> to vector<256x128xbf16>
    %c640_211 = arith.constant 640 : index
    %c0_212 = arith.constant 0 : index
    %285 = vector.load %arg19[%c640_211, %c0_212] : memref<1152x128xbf16, #tpu.memory_space<vmem>>, vector<128x128xbf16>
    %cst_213 = arith.constant dense<0.000000e+00> : vector<256x128xf32>
    %286 = tpu.matmul %284, %285, %cst_213 {dimension_numbers = #tpu.dot_dimension_numbers<[1], [0], [0], [1], [0, 0, 1, 1], [], []>} : vector<256x128xbf16>, vector<128x128xbf16>, vector<256x128xf32> -> vector<256x128xf32>
    %287 = arith.addf %281, %286 : vector<256x128xf32>
    %c0_214 = arith.constant 0 : index
    %c48_215 = arith.constant 48 : index
    %c0_216 = arith.constant 0 : index
    %288 = vector.load %arg23[%c0_214, %c48_215, %c0_216] : memref<2x192x128xf32, #tpu.memory_space<vmem>>, vector<2x128x128xf32>
    %289 = vector.shape_cast %288 : vector<2x128x128xf32> to vector<256x128xf32>
    %290 = arith.truncf %289 : vector<256x128xf32> to vector<256x128xbf16>
    %c768_217 = arith.constant 768 : index
    %c0_218 = arith.constant 0 : index
    %291 = vector.load %arg19[%c768_217, %c0_218] : memref<1152x128xbf16, #tpu.memory_space<vmem>>, vector<128x128xbf16>
    %cst_219 = arith.constant dense<0.000000e+00> : vector<256x128xf32>
    %292 = tpu.matmul %290, %291, %cst_219 {dimension_numbers = #tpu.dot_dimension_numbers<[1], [0], [0], [1], [0, 0, 1, 1], [], []>} : vector<256x128xbf16>, vector<128x128xbf16>, vector<256x128xf32> -> vector<256x128xf32>
    %293 = arith.addf %287, %292 : vector<256x128xf32>
    %c0_220 = arith.constant 0 : index
    %c56_221 = arith.constant 56 : index
    %c0_222 = arith.constant 0 : index
    %294 = vector.load %arg23[%c0_220, %c56_221, %c0_222] : memref<2x192x128xf32, #tpu.memory_space<vmem>>, vector<2x128x128xf32>
    %295 = vector.shape_cast %294 : vector<2x128x128xf32> to vector<256x128xf32>
    %296 = arith.truncf %295 : vector<256x128xf32> to vector<256x128xbf16>
    %c896_223 = arith.constant 896 : index
    %c0_224 = arith.constant 0 : index
    %297 = vector.load %arg19[%c896_223, %c0_224] : memref<1152x128xbf16, #tpu.memory_space<vmem>>, vector<128x128xbf16>
    %cst_225 = arith.constant dense<0.000000e+00> : vector<256x128xf32>
    %298 = tpu.matmul %296, %297, %cst_225 {dimension_numbers = #tpu.dot_dimension_numbers<[1], [0], [0], [1], [0, 0, 1, 1], [], []>} : vector<256x128xbf16>, vector<128x128xbf16>, vector<256x128xf32> -> vector<256x128xf32>
    %299 = arith.addf %293, %298 : vector<256x128xf32>
    %c0_226 = arith.constant 0 : index
    %c64_227 = arith.constant 64 : index
    %c0_228 = arith.constant 0 : index
    %300 = vector.load %arg23[%c0_226, %c64_227, %c0_228] : memref<2x192x128xf32, #tpu.memory_space<vmem>>, vector<2x128x128xf32>
    %301 = vector.shape_cast %300 : vector<2x128x128xf32> to vector<256x128xf32>
    %302 = arith.truncf %301 : vector<256x128xf32> to vector<256x128xbf16>
    %c1024_229 = arith.constant 1024 : index
    %c0_230 = arith.constant 0 : index
    %303 = vector.load %arg19[%c1024_229, %c0_230] : memref<1152x128xbf16, #tpu.memory_space<vmem>>, vector<128x128xbf16>
    %cst_231 = arith.constant dense<0.000000e+00> : vector<256x128xf32>
    %304 = tpu.matmul %302, %303, %cst_231 {dimension_numbers = #tpu.dot_dimension_numbers<[1], [0], [0], [1], [0, 0, 1, 1], [], []>} : vector<256x128xbf16>, vector<128x128xbf16>, vector<256x128xf32> -> vector<256x128xf32>
    %305 = arith.addf %299, %304 : vector<256x128xf32>
    %c0_232 = arith.constant 0 : index
    %c0_233 = arith.constant 0 : index
    %306 = vector.load %arg20[%c0_232, %c0_233] : memref<1x128xf32, #tpu.memory_space<vmem>>, vector<1x128xf32>
    %307 = vector.broadcast %306 : vector<1x128xf32> to vector<256x128xf32>
    %308 = arith.addf %305, %307 : vector<256x128xf32>
    %309 = arith.addf %308, %221 : vector<256x128xf32>
    %cst_234 = arith.constant 0.000000e+00 : f32
    %310 = vector.broadcast %cst_234 : f32 to vector<256x128xf32>
    %311 = arith.maximumf %309, %310 : vector<256x128xf32>
    %312 = vector.shape_cast %311 : vector<256x128xf32> to vector<2x128x128xf32>
    %cst_235 = arith.constant dense<0.000000e+00> : vector<2x128xf32>
    %313 = vector.multi_reduction <add>, %312, %cst_235 [1] : vector<2x128x128xf32> to vector<2x128xf32>
    %cst_236 = arith.constant 1.280000e+02 : f32
    %314 = vector.broadcast %cst_236 : f32 to vector<2x128xf32>
    %315 = arith.divf %313, %314 : vector<2x128xf32>
    %c0_237 = arith.constant 0 : index
    %c0_238 = arith.constant 0 : index
    %c0_239 = arith.constant 0 : index
    %316 = vector.load %arg21[%c0_237, %c0_238, %c0_239] : memref<1x2x128xf32, #tpu.memory_space<vmem>>, vector<1x2x128xf32>
    %317 = vector.shape_cast %316 : vector<1x2x128xf32> to vector<2x128xf32>
    %318 = vector.shape_cast %315 : vector<2x128xf32> to vector<1x2x128xf32>
    tpu.vector_store %arg21[%c0_237, %c0_238, %c0_239], %318 {strides = array<i32>} : memref<1x2x128xf32, #tpu.memory_space<vmem>>, vector<1x2x128xf32>,
    return
  }
  func.func @transform_0(%arg0: i32) -> (i32, i32, i32) {
    %c0_i32 = arith.constant 0 : i32
    %c0_i32_0 = arith.constant 0 : i32
    %c0_i32_1 = arith.constant 0 : i32
    return %arg0, %c0_i32, %c0_i32_0 : i32, i32, i32
  }
  func.func @transform_1(%arg0: i32) -> (i32, i32, i32) {
    %c0_i32 = arith.constant 0 : i32
    %c0_i32_0 = arith.constant 0 : i32
    %c0_i32_1 = arith.constant 0 : i32
    %c0_i32_2 = arith.constant 0 : i32
    return %c0_i32, %c0_i32_0, %c0_i32_1 : i32, i32, i32
  }
  func.func @transform_2(%arg0: i32) -> (i32, i32) {
    %c0_i32 = arith.constant 0 : i32
    %c0_i32_0 = arith.constant 0 : i32
    %c0_i32_1 = arith.constant 0 : i32
    return %c0_i32, %c0_i32_0 : i32, i32
  }
  func.func @transform_3(%arg0: i32) -> (i32, i32) {
    %c0_i32 = arith.constant 0 : i32
    %c0_i32_0 = arith.constant 0 : i32
    %c0_i32_1 = arith.constant 0 : i32
    return %c0_i32, %c0_i32_0 : i32, i32
  }
  func.func @transform_4(%arg0: i32) -> (i32, i32) {
    %c0_i32 = arith.constant 0 : i32
    %c0_i32_0 = arith.constant 0 : i32
    %c0_i32_1 = arith.constant 0 : i32
    return %c0_i32, %c0_i32_0 : i32, i32
  }
  func.func @transform_5(%arg0: i32) -> (i32, i32) {
    %c0_i32 = arith.constant 0 : i32
    %c0_i32_0 = arith.constant 0 : i32
    %c0_i32_1 = arith.constant 0 : i32
    return %c0_i32, %c0_i32_0 : i32, i32
  }
  func.func @transform_6(%arg0: i32) -> (i32, i32) {
    %c0_i32 = arith.constant 0 : i32
    %c0_i32_0 = arith.constant 0 : i32
    %c0_i32_1 = arith.constant 0 : i32
    return %c0_i32, %c0_i32_0 : i32, i32
  }
  func.func @transform_7(%arg0: i32) -> (i32, i32) {
    %c0_i32 = arith.constant 0 : i32
    %c0_i32_0 = arith.constant 0 : i32
    %c0_i32_1 = arith.constant 0 : i32
    return %c0_i32, %c0_i32_0 : i32, i32
  }
  func.func @transform_8(%arg0: i32) -> (i32, i32) {
    %c0_i32 = arith.constant 0 : i32
    %c0_i32_0 = arith.constant 0 : i32
    %c0_i32_1 = arith.constant 0 : i32
    return %c0_i32, %c0_i32_0 : i32, i32
  }
  func.func @transform_9(%arg0: i32) -> (i32, i32) {
    %c0_i32 = arith.constant 0 : i32
    %c0_i32_0 = arith.constant 0 : i32
    %c0_i32_1 = arith.constant 0 : i32
    return %c0_i32, %c0_i32_0 : i32, i32
  }
  func.func @transform_10(%arg0: i32) -> (i32, i32) {
    %c0_i32 = arith.constant 0 : i32
    %c0_i32_0 = arith.constant 0 : i32
    %c0_i32_1 = arith.constant 0 : i32
    return %c0_i32, %c0_i32_0 : i32, i32
  }
  func.func @transform_11(%arg0: i32) -> (i32, i32) {
    %c0_i32 = arith.constant 0 : i32
    %c0_i32_0 = arith.constant 0 : i32
    %c0_i32_1 = arith.constant 0 : i32
    return %c0_i32, %c0_i32_0 : i32, i32
  }
  func.func @transform_12(%arg0: i32) -> (i32, i32) {
    %c0_i32 = arith.constant 0 : i32
    %c0_i32_0 = arith.constant 0 : i32
    %c0_i32_1 = arith.constant 0 : i32
    return %c0_i32, %c0_i32_0 : i32, i32
  }
  func.func @transform_13(%arg0: i32) -> (i32, i32) {
    %c0_i32 = arith.constant 0 : i32
    %c0_i32_0 = arith.constant 0 : i32
    %c0_i32_1 = arith.constant 0 : i32
    return %c0_i32, %c0_i32_0 : i32, i32
  }
  func.func @transform_14(%arg0: i32) -> (i32, i32) {
    %c0_i32 = arith.constant 0 : i32
    %c0_i32_0 = arith.constant 0 : i32
    %c0_i32_1 = arith.constant 0 : i32
    return %c0_i32, %c0_i32_0 : i32, i32
  }
  func.func @transform_15(%arg0: i32) -> (i32, i32) {
    %c0_i32 = arith.constant 0 : i32
    %c0_i32_0 = arith.constant 0 : i32
    %c0_i32_1 = arith.constant 0 : i32
    return %c0_i32, %c0_i32_0 : i32, i32
  }
  func.func @transform_16(%arg0: i32) -> (i32, i32) {
    %c0_i32 = arith.constant 0 : i32
    %c0_i32_0 = arith.constant 0 : i32
    %c0_i32_1 = arith.constant 0 : i32
    return %c0_i32, %c0_i32_0 : i32, i32
  }
  func.func @transform_17(%arg0: i32) -> (i32, i32) {
    %c0_i32 = arith.constant 0 : i32
    %c0_i32_0 = arith.constant 0 : i32
    %c0_i32_1 = arith.constant 0 : i32
    return %c0_i32, %c0_i32_0 : i32, i32
  }
  func.func @transform_18(%arg0: i32) -> (i32, i32) {
    %c0_i32 = arith.constant 0 : i32
    %c0_i32_0 = arith.constant 0 : i32
    %c0_i32_1 = arith.constant 0 : i32
    return %c0_i32, %c0_i32_0 : i32, i32
  }
  func.func @transform_19(%arg0: i32) -> (i32, i32) {
    %c0_i32 = arith.constant 0 : i32
    %c0_i32_0 = arith.constant 0 : i32
    %c0_i32_1 = arith.constant 0 : i32
    return %c0_i32, %c0_i32_0 : i32, i32
  }
  func.func @transform_20(%arg0: i32) -> (i32, i32, i32) {
    %c0_i32 = arith.constant 0 : i32
    %c0_i32_0 = arith.constant 0 : i32
    %c0_i32_1 = arith.constant 0 : i32
    return %arg0, %c0_i32, %c0_i32_0 : i32, i32, i32
  }
}

</mosaic_0001>

<llo_original>
// kernel: tile.18
$region0: #{tile.18}
  #allocation0 [shape = 's32[1]{0}', space=sflag, size = 0x4, scoped, tag = 'scoped memory for tile.18']
  %s0 = inlined_call_operand.vmem [shape: f32[64], index: 0, kind: input, shape index: {}]
  %s1 = inlined_call_operand.vmem [shape: f32[3,64], index: 1, kind: output, shape index: {}]
  // Predicated region
  $region2: #{tile.18} parent=0 // pred_check
    _
  $region3: #{tile.18} parent=0 // pred_check_branch
    %3 = sbr.rel (0) target = $region5
  $region4: #{tile.18} parent=0 // pred_region
    _
  $region5: #{tile.18} parent=0 // pred_fallthru
    _
  %v4 = vld [vmem:[%s0] ss:$0 sm:$0xff]
  %5 = vst [vmem:[%s1] sm:$0xf] %v4

// kernel: mul.75
$region0: #{mul.75}
  %s0 = inlined_call_operand.vmem [shape: f32[3,64], index: 0, kind: input, shape index: {}]
  %s1 = inlined_call_operand.vmem [shape: f32[192], index: 1, kind: output, shape index: {}]
  $region1: #{mul.75} parent=0
    #allocation0 [shape = 'u8[4096]{0}', space=vmem, size = 0x1000, scoped, tag = 'scoped mem for output reshape']
    #allocation1 [shape = 'u8[4096]{0}', space=vmem, size = 0x1000, scoped, tag = 'scoped mem for input reshape']
    %s3 = ssub.s32 16, 1
    %v4 = vld [vmem:[%s0] sm:%s3]
    %5 = vst [vmem:[#allocation1] sm:%s3] %v4
    %s6 = smov 3
    %v7 = vld [vmem:[#allocation1] ss:$2 sm:%s6]
    %vm8 = vcmask 523264
    %9 = vst.msk [vmem:[#allocation0] sm:$0x3] %vm8, %v7
    %s10 = scalar_lea.vmem [#allocation1], 1
    %v11 = vld [vmem:[%s10] sm:$0x1]
    %12 = vrot.lane.b32.xlu0 %v11, 64
    %v13 = vpop.permute.xlu0 %12
    %vm14 = vcmask 1048064
    %15 = vst.msk [vmem:[#allocation0] sm:$0x1] %vm14, %v13
    %s17 = ssub.s32 4, 1
    %v18 = vld [vmem:[#allocation0] sm:%s17]
    %s20 = ssub.s32 4, 1
    %21 = vst [vmem:[%s1] sm:%s20] %v18

// kernel: encoder_forward_pallas.1
$region0: #{encoder_forward_pallas.1}
  #allocation0 [shape = 'u32[]', space=smem, size = 0x4, offset = 0x4, fixed_abs, tag = 'smem constant byte address 0x4 - core index']
  #allocation1 [shape = 'u32[72,128]{1,0:T(1,128)}', space=vmem, size = 0x9000, scoped, tag = 'internal scratch']
  #allocation2 [shape = 'f32[2,192,64]{2,1,0:T(8,128)}', space=vmem, size = 0x30000, scoped, tag = 'scratch operand']
  #allocation3 [shape = 'f32[2,192,128]{2,1,0:T(8,128)}', space=vmem, size = 0x30000, scoped, tag = 'scratch operand']
  %s0 = inlined_call_operand.vmem [shape: f32[4,128,4], index: 0, kind: input, shape index: {}]
  %s1 = inlined_call_operand.vmem [shape: bf16[3,128,128], index: 1, kind: input, shape index: {}]
  %s2 = inlined_call_operand.vmem [shape: f32[8,4], index: 2, kind: input, shape index: {}]
  %s3 = inlined_call_operand.vmem [shape: f32[8,4], index: 3, kind: input, shape index: {}]
  %s4 = inlined_call_operand.vmem [shape: bf16[4,192], index: 4, kind: input, shape index: {}]
  %s5 = inlined_call_operand.vmem [shape: f32[8,64], index: 5, kind: input, shape index: {}]
  %s6 = inlined_call_operand.vmem [shape: bf16[576,64], index: 6, kind: input, shape index: {}]
  %s7 = inlined_call_operand.vmem [shape: f32[1,64], index: 7, kind: input, shape index: {}]
  %s8 = inlined_call_operand.vmem [shape: bf16[4,64], index: 8, kind: input, shape index: {}]
  %s9 = inlined_call_operand.vmem [shape: f32[1,64], index: 9, kind: input, shape index: {}]
  %s10 = inlined_call_operand.vmem [shape: bf16[64,384], index: 10, kind: input, shape index: {}]
  %s11 = inlined_call_operand.vmem [shape: f32[8,128], index: 11, kind: input, shape index: {}]
  %s12 = inlined_call_operand.vmem [shape: bf16[1152,128], index: 12, kind: input, shape index: {}]
  %s13 = inlined_call_operand.vmem [shape: f32[1,128], index: 13, kind: input, shape index: {}]
  %s14 = inlined_call_operand.vmem [shape: bf16[64,128], index: 14, kind: input, shape index: {}]
  %s15 = inlined_call_operand.vmem [shape: f32[1,128], index: 15, kind: input, shape index: {}]
  %s16 = inlined_call_operand.vmem [shape: bf16[128,384], index: 16, kind: input, shape index: {}]
  %s17 = inlined_call_operand.vmem [shape: f32[8,128], index: 17, kind: input, shape index: {}]
  %s18 = inlined_call_operand.vmem [shape: bf16[1152,128], index: 18, kind: input, shape index: {}]
  %s19 = inlined_call_operand.vmem [shape: f32[1,128], index: 19, kind: input, shape index: {}]
  %s20 = inlined_call_operand.vmem [shape: f32[2,2,128], index: 20, kind: output, shape index: {}]
  %s21 = sld [smem:[#allocation0]]
  $region113: #{encoder_forward_pallas.1} parent=0
    _
  %s23 = ssub.s32 1, %s21
  %s24 = scalar_select 0, %s23, %s21
  loop: start=0, step=1, limit=4
  $region2: #{encoder_forward_pallas.1} parent=0 // loop_pre_header
    _
  $region3: #{encoder_forward_pallas.1} parent=0 // loop_header
    %s26 = sphi 0, %s30
    %p27 = scmp.ge.s32.totalorder %s26, 4
    %s36 = sphi 0, %s38
    %s39 = sphi 0, %s36
    %s40 = sphi 0, %s39
    %s56 = sphi 0, %s40
    %s60 = sphi 0, %s60
    %s62 = sphi 0, %s60
    %s63 = sphi 0, %s62
    %s77 = sphi 0, %s63
    %s81 = sphi 0, %s81
    %s83 = sphi 0, %s81
    %s84 = sphi 0, %s83
    %s98 = sphi 0, %s84
    %s102 = sphi 0, %s102
    %s104 = sphi 0, %s102
    %s105 = sphi 0, %s104
    %s119 = sphi 0, %s105
    %s123 = sphi 0, %s123
    %s125 = sphi 0, %s123
    %s126 = sphi 0, %s125
    %s140 = sphi 0, %s126
    %s144 = sphi 0, %s144
    %s146 = sphi 0, %s144
    %s147 = sphi 0, %s146
    %s161 = sphi 0, %s147
    %s165 = sphi 0, %s165
    %s167 = sphi 0, %s165
    %s168 = sphi 0, %s167
    %s182 = sphi 0, %s168
    %s186 = sphi 0, %s186
    %s188 = sphi 0, %s186
    %s189 = sphi 0, %s188
    %s203 = sphi 0, %s189
    %s207 = sphi 0, %s207
    %s209 = sphi 0, %s207
    %s210 = sphi 0, %s209
    %s224 = sphi 0, %s210
    %s228 = sphi 0, %s228
    %s230 = sphi 0, %s228
    %s231 = sphi 0, %s230
    %s245 = sphi 0, %s231
    %s249 = sphi 0, %s249
    %s251 = sphi 0, %s249
    %s252 = sphi 0, %s251
    %s266 = sphi 0, %s252
    %s270 = sphi 0, %s270
    %s272 = sphi 0, %s270
    %s273 = sphi 0, %s272
    %s287 = sphi 0, %s273
    %s291 = sphi 0, %s291
    %s293 = sphi 0, %s291
    %s294 = sphi 0, %s293
    %s308 = sphi 0, %s294
    %s312 = sphi 0, %s312
    %s314 = sphi 0, %s312
    %s315 = sphi 0, %s314
    %s329 = sphi 0, %s315
    %s333 = sphi 0, %s333
    %s335 = sphi 0, %s333
    %s336 = sphi 0, %s335
    %s350 = sphi 0, %s336
    %s354 = sphi 0, %s354
    %s356 = sphi 0, %s354
    %s357 = sphi 0, %s356
    %s371 = sphi 0, %s357
    %s375 = sphi 0, %s375
    %s377 = sphi 0, %s375
    %s378 = sphi 0, %s377
    %s392 = sphi 0, %s378
    %s396 = sphi 0, %s396
    %s398 = sphi 0, %s396
    %s399 = sphi 0, %s398
    %s413 = sphi 0, %s399
    %s417 = sphi 0, %s417
    %s419 = sphi 0, %s417
    %s420 = sphi 0, %s419
    %s434 = sphi 0, %s420
    %s438 = sphi 0, %s438
    %s440 = sphi 0, %s438
    %s441 = sphi 0, %s440
    %s455 = sphi 0, %s441
    %s461 = sphi 0, %s463
    %s464 = sphi 0, %s461
    %s465 = sphi 0, %s464
    %s481 = sphi 0, %s465
  $region4: #{encoder_forward_pallas.1} parent=0 // loop_header_branch
    %29 = sbr.rel (%p27) target = $region8
  $region5: #{encoder_forward_pallas.1} parent=0 // loop_body
    %s31 = ssub.s32 %s26, 1
    %s32 = ssub.s32 %s26, 2
    %s33 = sadd.s32 %s26, 1
    %s34 = ssub.s32 %s26, %s33
    %p35 = scmp.eq.s32.totalorder %s34, 0
    %s37 = sadd.s32 %s36, 1
    %s38 = scalar_select %p35, %s36, %s37
    %p41 = pneg %p35
    %p42 = scmp.eq.s32.totalorder %s26, 1
    %p43 = por %p41, %p42
    %p44 = scmp.ne.s32.totalorder %s36, %s39
    %p45 = scmp.eq.s32.totalorder %s26, 0
    %p46 = por %p44, %p45
    %p47 = scmp.ne.s32.totalorder %s36, %s39
    %p48 = scmp.eq.s32.totalorder %s31, 1
    %p49 = por %p47, %p48
    %p50 = scmp.ne.s32.totalorder %s39, %s40
    %p51 = scmp.eq.s32.totalorder %s31, 0
    %p52 = por %p50, %p51
    %p53 = scmp.ne.s32.totalorder %s39, %s40
    %p54 = scmp.eq.s32.totalorder %s32, 1
    %p55 = por %p53, %p54
    %p57 = scmp.ne.s32.totalorder %s40, %s56
    %p58 = scmp.eq.s32.totalorder %s32, 0
    %p59 = por %p57, %p58
    %s61 = sadd.s32 %s60, 1
    %p64 = scmp.eq.s32.totalorder %s26, 1
    %p65 = scmp.ne.s32.totalorder %s60, %s62
    %p66 = scmp.eq.s32.totalorder %s26, 0
    %p67 = por %p65, %p66
    %p68 = scmp.ne.s32.totalorder %s60, %s62
    %p69 = scmp.eq.s32.totalorder %s31, 1
    %p70 = por %p68, %p69
    %p71 = scmp.ne.s32.totalorder %s62, %s63
    %p72 = scmp.eq.s32.totalorder %s31, 0
    %p73 = por %p71, %p72
    %p74 = scmp.ne.s32.totalorder %s62, %s63
    %p75 = scmp.eq.s32.totalorder %s32, 1
    %p76 = por %p74, %p75
    %p78 = scmp.ne.s32.totalorder %s63, %s77
    %p79 = scmp.eq.s32.totalorder %s32, 0
    %p80 = por %p78, %p79
    %s82 = sadd.s32 %s81, 1
    %p85 = scmp.eq.s32.totalorder %s26, 1
    %p86 = scmp.ne.s32.totalorder %s81, %s83
    %p87 = scmp.eq.s32.totalorder %s26, 0
    %p88 = por %p86, %p87
    %p89 = scmp.ne.s32.totalorder %s81, %s83
    %p90 = scmp.eq.s32.totalorder %s31, 1
    %p91 = por %p89, %p90
    %p92 = scmp.ne.s32.totalorder %s83, %s84
    %p93 = scmp.eq.s32.totalorder %s31, 0
    %p94 = por %p92, %p93
    %p95 = scmp.ne.s32.totalorder %s83, %s84
    %p96 = scmp.eq.s32.totalorder %s32, 1
    %p97 = por %p95, %p96
    %p99 = scmp.ne.s32.totalorder %s84, %s98
    %p100 = scmp.eq.s32.totalorder %s32, 0
    %p101 = por %p99, %p100
    %s103 = sadd.s32 %s102, 1
    %p106 = scmp.eq.s32.totalorder %s26, 1
    %p107 = scmp.ne.s32.totalorder %s102, %s104
    %p108 = scmp.eq.s32.totalorder %s26, 0
    %p109 = por %p107, %p108
    %p110 = scmp.ne.s32.totalorder %s102, %s104
    %p111 = scmp.eq.s32.totalorder %s31, 1
    %p112 = por %p110, %p111
    %p113 = scmp.ne.s32.totalorder %s104, %s105
    %p114 = scmp.eq.s32.totalorder %s31, 0
    %p115 = por %p113, %p114
    %p116 = scmp.ne.s32.totalorder %s104, %s105
    %p117 = scmp.eq.s32.totalorder %s32, 1
    %p118 = por %p116, %p117
    %p120 = scmp.ne.s32.totalorder %s105, %s119
    %p121 = scmp.eq.s32.totalorder %s32, 0
    %p122 = por %p120, %p121
    %s124 = sadd.s32 %s123, 1
    %p127 = scmp.eq.s32.totalorder %s26, 1
    %p128 = scmp.ne.s32.totalorder %s123, %s125
    %p129 = scmp.eq.s32.totalorder %s26, 0
    %p130 = por %p128, %p129
    %p131 = scmp.ne.s32.totalorder %s123, %s125
    %p132 = scmp.eq.s32.totalorder %s31, 1
    %p133 = por %p131, %p132
    %p134 = scmp.ne.s32.totalorder %s125, %s126
    %p135 = scmp.eq.s32.totalorder %s31, 0
    %p136 = por %p134, %p135
    %p137 = scmp.ne.s32.totalorder %s125, %s126
    %p138 = scmp.eq.s32.totalorder %s32, 1
    %p139 = por %p137, %p138
    %p141 = scmp.ne.s32.totalorder %s126, %s140
    %p142 = scmp.eq.s32.totalorder %s32, 0
    %p143 = por %p141, %p142
    %s145 = sadd.s32 %s144, 1
    %p148 = scmp.eq.s32.totalorder %s26, 1
    %p149 = scmp.ne.s32.totalorder %s144, %s146
    %p150 = scmp.eq.s32.totalorder %s26, 0
    %p151 = por %p149, %p150
    %p152 = scmp.ne.s32.totalorder %s144, %s146
    %p153 = scmp.eq.s32.totalorder %s31, 1
    %p154 = por %p152, %p153
    %p155 = scmp.ne.s32.totalorder %s146, %s147
    %p156 = scmp.eq.s32.totalorder %s31, 0
    %p157 = por %p155, %p156
    %p158 = scmp.ne.s32.totalorder %s146, %s147
    %p159 = scmp.eq.s32.totalorder %s32, 1
    %p160 = por %p158, %p159
    %p162 = scmp.ne.s32.totalorder %s147, %s161
    %p163 = scmp.eq.s32.totalorder %s32, 0
    %p164 = por %p162, %p163
    %s166 = sadd.s32 %s165, 1
    %p169 = scmp.eq.s32.totalorder %s26, 1
    %p170 = scmp.ne.s32.totalorder %s165, %s167
    %p171 = scmp.eq.s32.totalorder %s26, 0
    %p172 = por %p170, %p171
    %p173 = scmp.ne.s32.totalorder %s165, %s167
    %p174 = scmp.eq.s32.totalorder %s31, 1
    %p175 = por %p173, %p174
    %p176 = scmp.ne.s32.totalorder %s167, %s168
    %p177 = scmp.eq.s32.totalorder %s31, 0
    %p178 = por %p176, %p177
    %p179 = scmp.ne.s32.totalorder %s167, %s168
    %p180 = scmp.eq.s32.totalorder %s32, 1
    %p181 = por %p179, %p180
    %p183 = scmp.ne.s32.totalorder %s168, %s182
    %p184 = scmp.eq.s32.totalorder %s32, 0
    %p185 = por %p183, %p184
    %s187 = sadd.s32 %s186, 1
    %p190 = scmp.eq.s32.totalorder %s26, 1
    %p191 = scmp.ne.s32.totalorder %s186, %s188
    %p192 = scmp.eq.s32.totalorder %s26, 0
    %p193 = por %p191, %p192
    %p194 = scmp.ne.s32.totalorder %s186, %s188
    %p195 = scmp.eq.s32.totalorder %s31, 1
    %p196 = por %p194, %p195
    %p197 = scmp.ne.s32.totalorder %s188, %s189
    %p198 = scmp.eq.s32.totalorder %s31, 0
    %p199 = por %p197, %p198
    %p200 = scmp.ne.s32.totalorder %s188, %s189
    %p201 = scmp.eq.s32.totalorder %s32, 1
    %p202 = por %p200, %p201
    %p204 = scmp.ne.s32.totalorder %s189, %s203
    %p205 = scmp.eq.s32.totalorder %s32, 0
    %p206 = por %p204, %p205
    %s208 = sadd.s32 %s207, 1
    %p211 = scmp.eq.s32.totalorder %s26, 1
    %p212 = scmp.ne.s32.totalorder %s207, %s209
    %p213 = scmp.eq.s32.totalorder %s26, 0
    %p214 = por %p212, %p213
    %p215 = scmp.ne.s32.totalorder %s207, %s209
    %p216 = scmp.eq.s32.totalorder %s31, 1
    %p217 = por %p215, %p216
    %p218 = scmp.ne.s32.totalorder %s209, %s210
    %p219 = scmp.eq.s32.totalorder %s31, 0
    %p220 = por %p218, %p219
    %p221 = scmp.ne.s32.totalorder %s209, %s210
    %p222 = scmp.eq.s32.totalorder %s32, 1
    %p223 = por %p221, %p222
    %p225 = scmp.ne.s32.totalorder %s210, %s224
    %p226 = scmp.eq.s32.totalorder %s32, 0
    %p227 = por %p225, %p226
    %s229 = sadd.s32 %s228, 1
    %p232 = scmp.eq.s32.totalorder %s26, 1
    %p233 = scmp.ne.s32.totalorder %s228, %s230
    %p234 = scmp.eq.s32.totalorder %s26, 0
    %p235 = por %p233, %p234
    %p236 = scmp.ne.s32.totalorder %s228, %s230
    %p237 = scmp.eq.s32.totalorder %s31, 1
    %p238 = por %p236, %p237
    %p239 = scmp.ne.s32.totalorder %s230, %s231
    %p240 = scmp.eq.s32.totalorder %s31, 0
    %p241 = por %p239, %p240
    %p242 = scmp.ne.s32.totalorder %s230, %s231
    %p243 = scmp.eq.s32.totalorder %s32, 1
    %p244 = por %p242, %p243
    %p246 = scmp.ne.s32.totalorder %s231, %s245
    %p247 = scmp.eq.s32.totalorder %s32, 0
    %p248 = por %p246, %p247
    %s250 = sadd.s32 %s249, 1
    %p253 = scmp.eq.s32.totalorder %s26, 1
    %p254 = scmp.ne.s32.totalorder %s249, %s251
    %p255 = scmp.eq.s32.totalorder %s26, 0
    %p256 = por %p254, %p255
    %p257 = scmp.ne.s32.totalorder %s249, %s251
    %p258 = scmp.eq.s32.totalorder %s31, 1
    %p259 = por %p257, %p258
    %p260 = scmp.ne.s32.totalorder %s251, %s252
    %p261 = scmp.eq.s32.totalorder %s31, 0
    %p262 = por %p260, %p261
    %p263 = scmp.ne.s32.totalorder %s251, %s252
    %p264 = scmp.eq.s32.totalorder %s32, 1
    %p265 = por %p263, %p264
    %p267 = scmp.ne.s32.totalorder %s252, %s266
    %p268 = scmp.eq.s32.totalorder %s32, 0
    %p269 = por %p267, %p268
    %s271 = sadd.s32 %s270, 1
    %p274 = scmp.eq.s32.totalorder %s26, 1
    %p275 = scmp.ne.s32.totalorder %s270, %s272
    %p276 = scmp.eq.s32.totalorder %s26, 0
    %p277 = por %p275, %p276
    %p278 = scmp.ne.s32.totalorder %s270, %s272
    %p279 = scmp.eq.s32.totalorder %s31, 1
    %p280 = por %p278, %p279
    %p281 = scmp.ne.s32.totalorder %s272, %s273
    %p282 = scmp.eq.s32.totalorder %s31, 0
    %p283 = por %p281, %p282
    %p284 = scmp.ne.s32.totalorder %s272, %s273
    %p285 = scmp.eq.s32.totalorder %s32, 1
    %p286 = por %p284, %p285
    %p288 = scmp.ne.s32.totalorder %s273, %s287
    %p289 = scmp.eq.s32.totalorder %s32, 0
    %p290 = por %p288, %p289
    %s292 = sadd.s32 %s291, 1
    %p295 = scmp.eq.s32.totalorder %s26, 1
    %p296 = scmp.ne.s32.totalorder %s291, %s293
    %p297 = scmp.eq.s32.totalorder %s26, 0
    %p298 = por %p296, %p297
    %p299 = scmp.ne.s32.totalorder %s291, %s293
    %p300 = scmp.eq.s32.totalorder %s31, 1
    %p301 = por %p299, %p300
    %p302 = scmp.ne.s32.totalorder %s293, %s294
    %p303 = scmp.eq.s32.totalorder %s31, 0
    %p304 = por %p302, %p303
    %p305 = scmp.ne.s32.totalorder %s293, %s294
    %p306 = scmp.eq.s32.totalorder %s32, 1
    %p307 = por %p305, %p306
    %p309 = scmp.ne.s32.totalorder %s294, %s308
    %p310 = scmp.eq.s32.totalorder %s32, 0
    %p311 = por %p309, %p310
    %s313 = sadd.s32 %s312, 1
    %p316 = scmp.eq.s32.totalorder %s26, 1
    %p317 = scmp.ne.s32.totalorder %s312, %s314
    %p318 = scmp.eq.s32.totalorder %s26, 0
    %p319 = por %p317, %p318
    %p320 = scmp.ne.s32.totalorder %s312, %s314
    %p321 = scmp.eq.s32.totalorder %s31, 1
    %p322 = por %p320, %p321
    %p323 = scmp.ne.s32.totalorder %s314, %s315
    %p324 = scmp.eq.s32.totalorder %s31, 0
    %p325 = por %p323, %p324
    %p326 = scmp.ne.s32.totalorder %s314, %s315
    %p327 = scmp.eq.s32.totalorder %s32, 1
    %p328 = por %p326, %p327
    %p330 = scmp.ne.s32.totalorder %s315, %s329
    %p331 = scmp.eq.s32.totalorder %s32, 0
    %p332 = por %p330, %p331
    %s334 = sadd.s32 %s333, 1
    %p337 = scmp.eq.s32.totalorder %s26, 1
    %p338 = scmp.ne.s32.totalorder %s333, %s335
    %p339 = scmp.eq.s32.totalorder %s26, 0
    %p340 = por %p338, %p339
    %p341 = scmp.ne.s32.totalorder %s333, %s335
    %p342 = scmp.eq.s32.totalorder %s31, 1
    %p343 = por %p341, %p342
    %p344 = scmp.ne.s32.totalorder %s335, %s336
    %p345 = scmp.eq.s32.totalorder %s31, 0
    %p346 = por %p344, %p345
    %p347 = scmp.ne.s32.totalorder %s335, %s336
    %p348 = scmp.eq.s32.totalorder %s32, 1
    %p349 = por %p347, %p348
    %p351 = scmp.ne.s32.totalorder %s336, %s350
    %p352 = scmp.eq.s32.totalorder %s32, 0
    %p353 = por %p351, %p352
    %s355 = sadd.s32 %s354, 1
    %p358 = scmp.eq.s32.totalorder %s26, 1
    %p359 = scmp.ne.s32.totalorder %s354, %s356
    %p360 = scmp.eq.s32.totalorder %s26, 0
    %p361 = por %p359, %p360
    %p362 = scmp.ne.s32.totalorder %s354, %s356
    %p363 = scmp.eq.s32.totalorder %s31, 1
    %p364 = por %p362, %p363
    %p365 = scmp.ne.s32.totalorder %s356, %s357
    %p366 = scmp.eq.s32.totalorder %s31, 0
    %p367 = por %p365, %p366
    %p368 = scmp.ne.s32.totalorder %s356, %s357
    %p369 = scmp.eq.s32.totalorder %s32, 1
    %p370 = por %p368, %p369
    %p372 = scmp.ne.s32.totalorder %s357, %s371
    %p373 = scmp.eq.s32.totalorder %s32, 0
    %p374 = por %p372, %p373
    %s376 = sadd.s32 %s375, 1
    %p379 = scmp.eq.s32.totalorder %s26, 1
    %p380 = scmp.ne.s32.totalorder %s375, %s377
    %p381 = scmp.eq.s32.totalorder %s26, 0
    %p382 = por %p380, %p381
    %p383 = scmp.ne.s32.totalorder %s375, %s377
    %p384 = scmp.eq.s32.totalorder %s31, 1
    %p385 = por %p383, %p384
    %p386 = scmp.ne.s32.totalorder %s377, %s378
    %p387 = scmp.eq.s32.totalorder %s31, 0
    %p388 = por %p386, %p387
    %p389 = scmp.ne.s32.totalorder %s377, %s378
    %p390 = scmp.eq.s32.totalorder %s32, 1
    %p391 = por %p389, %p390
    %p393 = scmp.ne.s32.totalorder %s378, %s392
    %p394 = scmp.eq.s32.totalorder %s32, 0
    %p395 = por %p393, %p394
    %s397 = sadd.s32 %s396, 1
    %p400 = scmp.eq.s32.totalorder %s26, 1
    %p401 = scmp.ne.s32.totalorder %s396, %s398
    %p402 = scmp.eq.s32.totalorder %s26, 0
    %p403 = por %p401, %p402
    %p404 = scmp.ne.s32.totalorder %s396, %s398
    %p405 = scmp.eq.s32.totalorder %s31, 1
    %p406 = por %p404, %p405
    %p407 = scmp.ne.s32.totalorder %s398, %s399
    %p408 = scmp.eq.s32.totalorder %s31, 0
    %p409 = por %p407, %p408
    %p410 = scmp.ne.s32.totalorder %s398, %s399
    %p411 = scmp.eq.s32.totalorder %s32, 1
    %p412 = por %p410, %p411
    %p414 = scmp.ne.s32.totalorder %s399, %s413
    %p415 = scmp.eq.s32.totalorder %s32, 0
    %p416 = por %p414, %p415
    %s418 = sadd.s32 %s417, 1
    %p421 = scmp.eq.s32.totalorder %s26, 1
    %p422 = scmp.ne.s32.totalorder %s417, %s419
    %p423 = scmp.eq.s32.totalorder %s26, 0
    %p424 = por %p422, %p423
    %p425 = scmp.ne.s32.totalorder %s417, %s419
    %p426 = scmp.eq.s32.totalorder %s31, 1
    %p427 = por %p425, %p426
    %p428 = scmp.ne.s32.totalorder %s419, %s420
    %p429 = scmp.eq.s32.totalorder %s31, 0
    %p430 = por %p428, %p429
    %p431 = scmp.ne.s32.totalorder %s419, %s420
    %p432 = scmp.eq.s32.totalorder %s32, 1
    %p433 = por %p431, %p432
    %p435 = scmp.ne.s32.totalorder %s420, %s434
    %p436 = scmp.eq.s32.totalorder %s32, 0
    %p437 = por %p435, %p436
    %s439 = sadd.s32 %s438, 1
    %p442 = scmp.eq.s32.totalorder %s26, 1
    %p443 = scmp.ne.s32.totalorder %s438, %s440
    %p444 = scmp.eq.s32.totalorder %s26, 0
    %p445 = por %p443, %p444
    %p446 = scmp.ne.s32.totalorder %s438, %s440
    %p447 = scmp.eq.s32.totalorder %s31, 1
    %p448 = por %p446, %p447
    %p449 = scmp.ne.s32.totalorder %s440, %s441
    %p450 = scmp.eq.s32.totalorder %s31, 0
    %p451 = por %p449, %p450
    %p452 = scmp.ne.s32.totalorder %s440, %s441
    %p453 = scmp.eq.s32.totalorder %s32, 1
    %p454 = por %p452, %p453
    %p456 = scmp.ne.s32.totalorder %s441, %s455
    %p457 = scmp.eq.s32.totalorder %s32, 0
    %p458 = por %p456, %p457
    %s459 = ssub.s32 %s26, %s33
    %p460 = scmp.eq.s32.totalorder %s459, 0
    %s462 = sadd.s32 %s461, 1
    %s463 = scalar_select %p460, %s461, %s462
    %p466 = pneg %p460
    %p467 = scmp.eq.s32.totalorder %s26, 1
    %p468 = por %p466, %p467
    %p469 = scmp.ne.s32.totalorder %s461, %s464
    %p470 = scmp.eq.s32.totalorder %s26, 0
    %p471 = por %p469, %p470
    %p472 = scmp.ne.s32.totalorder %s461, %s464
    %p473 = scmp.eq.s32.totalorder %s31, 1
    %p474 = por %p472, %p473
    %p475 = scmp.ne.s32.totalorder %s464, %s465
    %p476 = scmp.eq.s32.totalorder %s31, 0
    %p477 = por %p475, %p476
    %p478 = scmp.ne.s32.totalorder %s464, %s465
    %p479 = scmp.eq.s32.totalorder %s32, 1
    %p480 = por %p478, %p479
    %p482 = scmp.ne.s32.totalorder %s465, %s481
    %p483 = scmp.eq.s32.totalorder %s32, 0
    %p484 = por %p482, %p483
    %p485 = scmp.le.s32.totalorder 1, %s26
    %p486 = scmp.lt.s32.totalorder %s26, 3
    %p487 = pnand %p485, %p486
    %p488 = pneg %p487
    // Predicated region
    $region9: #{encoder_forward_pallas.1} parent=5 // pred_check
      _
    $region10: #{encoder_forward_pallas.1} parent=5 // pred_check_branch
      %490 = sbr.rel (%p487) target = $region12
    $region11: #{encoder_forward_pallas.1} parent=5 // pred_region
      %s491 = ssub.s32 %s26, 1
      // Predicated region
      $region13: #{encoder_forward_pallas.1} parent=11 // pred_check
        %p492 = pneg %p73
      $region14: #{encoder_forward_pallas.1} parent=11 // pred_check_branch
        %494 = sbr.rel (%p492) target = $region16
      $region15: #{encoder_forward_pallas.1} parent=11 // pred_region
        _
      $region16: #{encoder_forward_pallas.1} parent=11 // pred_fallthru
        _
      // Predicated region
      $region17: #{encoder_forward_pallas.1} parent=11 // pred_check
        %p495 = pneg %p94
      $region18: #{encoder_forward_pallas.1} parent=11 // pred_check_branch
        %497 = sbr.rel (%p495) target = $region20
      $region19: #{encoder_forward_pallas.1} parent=11 // pred_region
        _
      $region20: #{encoder_forward_pallas.1} parent=11 // pred_fallthru
        _
      // Predicated region
      $region21: #{encoder_forward_pallas.1} parent=11 // pred_check
        %p498 = pneg %p115
      $region22: #{encoder_forward_pallas.1} parent=11 // pred_check_branch
        %500 = sbr.rel (%p498) target = $region24
      $region23: #{encoder_forward_pallas.1} parent=11 // pred_region
        _
      $region24: #{encoder_forward_pallas.1} parent=11 // pred_fallthru
        _
      // Predicated region
      $region25: #{encoder_forward_pallas.1} parent=11 // pred_check
        %p501 = pneg %p136
      $region26: #{encoder_forward_pallas.1} parent=11 // pred_check_branch
        %503 = sbr.rel (%p501) target = $region28
      $region27: #{encoder_forward_pallas.1} parent=11 // pred_region
        _
      $region28: #{encoder_forward_pallas.1} parent=11 // pred_fallthru
        _
      // Predicated region
      $region29: #{encoder_forward_pallas.1} parent=11 // pred_check
        %p504 = pneg %p157
      $region30: #{encoder_forward_pallas.1} parent=11 // pred_check_branch
        %506 = sbr.rel (%p504) target = $region32
      $region31: #{encoder_forward_pallas.1} parent=11 // pred_region
        _
      $region32: #{encoder_forward_pallas.1} parent=11 // pred_fallthru
        _
      // Predicated region
      $region33: #{encoder_forward_pallas.1} parent=11 // pred_check
        %p507 = pneg %p178
      $region34: #{encoder_forward_pallas.1} parent=11 // pred_check_branch
        %509 = sbr.rel (%p507) target = $region36
      $region35: #{encoder_forward_pallas.1} parent=11 // pred_region
        _
      $region36: #{encoder_forward_pallas.1} parent=11 // pred_fallthru
        _
      // Predicated region
      $region37: #{encoder_forward_pallas.1} parent=11 // pred_check
        %p510 = pneg %p199
      $region38: #{encoder_forward_pallas.1} parent=11 // pred_check_branch
        %512 = sbr.rel (%p510) target = $region40
      $region39: #{encoder_forward_pallas.1} parent=11 // pred_region
        _
      $region40: #{encoder_forward_pallas.1} parent=11 // pred_fallthru
        _
      // Predicated region
      $region41: #{encoder_forward_pallas.1} parent=11 // pred_check
        %p513 = pneg %p220
      $region42: #{encoder_forward_pallas.1} parent=11 // pred_check_branch
        %515 = sbr.rel (%p513) target = $region44
      $region43: #{encoder_forward_pallas.1} parent=11 // pred_region
        _
      $region44: #{encoder_forward_pallas.1} parent=11 // pred_fallthru
        _
      // Predicated region
      $region45: #{encoder_forward_pallas.1} parent=11 // pred_check
        %p516 = pneg %p241
      $region46: #{encoder_forward_pallas.1} parent=11 // pred_check_branch
        %518 = sbr.rel (%p516) target = $region48
      $region47: #{encoder_forward_pallas.1} parent=11 // pred_region
        _
      $region48: #{encoder_forward_pallas.1} parent=11 // pred_fallthru
        _
      // Predicated region
      $region49: #{encoder_forward_pallas.1} parent=11 // pred_check
        %p519 = pneg %p262
      $region50: #{encoder_forward_pallas.1} parent=11 // pred_check_branch
        %521 = sbr.rel (%p519) target = $region52
      $region51: #{encoder_forward_pallas.1} parent=11 // pred_region
        _
      $region52: #{encoder_forward_pallas.1} parent=11 // pred_fallthru
        _
      // Predicated region
      $region53: #{encoder_forward_pallas.1} parent=11 // pred_check
        %p522 = pneg %p283
      $region54: #{encoder_forward_pallas.1} parent=11 // pred_check_branch
        %524 = sbr.rel (%p522) target = $region56
      $region55: #{encoder_forward_pallas.1} parent=11 // pred_region
        _
      $region56: #{encoder_forward_pallas.1} parent=11 // pred_fallthru
        _
      // Predicated region
      $region57: #{encoder_forward_pallas.1} parent=11 // pred_check
        %p525 = pneg %p304
      $region58: #{encoder_forward_pallas.1} parent=11 // pred_check_branch
        %527 = sbr.rel (%p525) target = $region60
      $region59: #{encoder_forward_pallas.1} parent=11 // pred_region
        _
      $region60: #{encoder_forward_pallas.1} parent=11 // pred_fallthru
        _
      // Predicated region
      $region61: #{encoder_forward_pallas.1} parent=11 // pred_check
        %p528 = pneg %p325
      $region62: #{encoder_forward_pallas.1} parent=11 // pred_check_branch
        %530 = sbr.rel (%p528) target = $region64
      $region63: #{encoder_forward_pallas.1} parent=11 // pred_region
        _
      $region64: #{encoder_forward_pallas.1} parent=11 // pred_fallthru
        _
      // Predicated region
      $region65: #{encoder_forward_pallas.1} parent=11 // pred_check
        %p531 = pneg %p346
      $region66: #{encoder_forward_pallas.1} parent=11 // pred_check_branch
        %533 = sbr.rel (%p531) target = $region68
      $region67: #{encoder_forward_pallas.1} parent=11 // pred_region
        _
      $region68: #{encoder_forward_pallas.1} parent=11 // pred_fallthru
        _
      // Predicated region
      $region69: #{encoder_forward_pallas.1} parent=11 // pred_check
        %p534 = pneg %p367
      $region70: #{encoder_forward_pallas.1} parent=11 // pred_check_branch
        %536 = sbr.rel (%p534) target = $region72
      $region71: #{encoder_forward_pallas.1} parent=11 // pred_region
        _
      $region72: #{encoder_forward_pallas.1} parent=11 // pred_fallthru
        _
      // Predicated region
      $region73: #{encoder_forward_pallas.1} parent=11 // pred_check
        %p537 = pneg %p388
      $region74: #{encoder_forward_pallas.1} parent=11 // pred_check_branch
        %539 = sbr.rel (%p537) target = $region76
      $region75: #{encoder_forward_pallas.1} parent=11 // pred_region
        _
      $region76: #{encoder_forward_pallas.1} parent=11 // pred_fallthru
        _
      // Predicated region
      $region77: #{encoder_forward_pallas.1} parent=11 // pred_check
        %p540 = pneg %p409
      $region78: #{encoder_forward_pallas.1} parent=11 // pred_check_branch
        %542 = sbr.rel (%p540) target = $region80
      $region79: #{encoder_forward_pallas.1} parent=11 // pred_region
        _
      $region80: #{encoder_forward_pallas.1} parent=11 // pred_fallthru
        _
      // Predicated region
      $region81: #{encoder_forward_pallas.1} parent=11 // pred_check
        %p543 = pneg %p430
      $region82: #{encoder_forward_pallas.1} parent=11 // pred_check_branch
        %545 = sbr.rel (%p543) target = $region84
      $region83: #{encoder_forward_pallas.1} parent=11 // pred_region
        _
      $region84: #{encoder_forward_pallas.1} parent=11 // pred_fallthru
        _
      // Predicated region
      $region85: #{encoder_forward_pallas.1} parent=11 // pred_check
        %p546 = pneg %p451
      $region86: #{encoder_forward_pallas.1} parent=11 // pred_check_branch
        %548 = sbr.rel (%p546) target = $region88
      $region87: #{encoder_forward_pallas.1} parent=11 // pred_region
        _
      $region88: #{encoder_forward_pallas.1} parent=11 // pred_fallthru
        _
    $region12: #{encoder_forward_pallas.1} parent=5 // pred_fallthru
      _
    %p549 = scmp.lt.s32.totalorder %s26, 2
    // Predicated region
    $region89: #{encoder_forward_pallas.1} parent=5 // pred_check
      %p550 = pneg %p549
    $region90: #{encoder_forward_pallas.1} parent=5 // pred_check_branch
      %552 = sbr.rel (%p550) target = $region92
    $region91: #{encoder_forward_pallas.1} parent=5 // pred_region
      // Predicated region
      $region93: #{encoder_forward_pallas.1} parent=91 // pred_check
        %p553 = pneg %p46
      $region94: #{encoder_forward_pallas.1} parent=91 // pred_check_branch
        %555 = sbr.rel (%p553) target = $region96
      $region95: #{encoder_forward_pallas.1} parent=91 // pred_region
        %s556 = smul.u32 2, %s26
        %p557 = scmp.lt.s32.totalorder %s556, 3
        %s558 = scalar_select %p557, %s556, 3
        %s559 = smul.addr %s558, 16
        %s560 = smul.addr %s559, 8
        %s561 = scalar_lea.vmem %s0, %s560
        %s562 = smul.u32 2, %s26
      $region96: #{encoder_forward_pallas.1} parent=91 // pred_fallthru
        _
    $region92: #{encoder_forward_pallas.1} parent=5 // pred_fallthru
      _
    %p563 = scmp.le.s32.totalorder 1, %s26
    %p564 = scmp.lt.s32.totalorder %s26, 3
    %p565 = pnand %p563, %p564
    %p566 = pneg %p565
    // Predicated region
    $region97: #{encoder_forward_pallas.1} parent=5 // pred_check
      _
    $region98: #{encoder_forward_pallas.1} parent=5 // pred_check_branch
      %568 = sbr.rel (%p565) target = $region100
    $region99: #{encoder_forward_pallas.1} parent=5 // pred_region
      %s569 = ssub.s32 %s26, 1
      %s570 = smul.u32 2, %s31
      %p571 = scmp.lt.s32.totalorder %s570, 3
      %s572 = scalar_select %p571, %s570, 3
      %s573 = smul.addr %s572, 16
      %s574 = smul.addr %s573, 8
      %s575 = scalar_lea.vmem %s0, %s574
      %p576 = pneg %p52
      %p577 = pneg %p49
      %p578 = pneg %p73
      %p579 = pneg %p70
      %p580 = pneg %p94
      %p581 = pneg %p91
      %p582 = pneg %p115
      %p583 = pneg %p112
      %p584 = pneg %p136
      %p585 = pneg %p133
      %p586 = pneg %p157
      %p587 = pneg %p154
      %p588 = pneg %p178
      %p589 = pneg %p175
      %p590 = pneg %p199
      %p591 = pneg %p196
      %p592 = pneg %p220
      %p593 = pneg %p217
      %p594 = pneg %p241
      %p595 = pneg %p238
      %p596 = pneg %p262
      %p597 = pneg %p259
      %p598 = pneg %p283
      %p599 = pneg %p280
      %p600 = pneg %p304
      %p601 = pneg %p301
      %p602 = pneg %p325
      %p603 = pneg %p322
      %p604 = pneg %p346
      %p605 = pneg %p343
      %p606 = pneg %p367
      %p607 = pneg %p364
      %p608 = pneg %p388
      %p609 = pneg %p385
      %p610 = pneg %p409
      %p611 = pneg %p406
      %p612 = pneg %p430
      %p613 = pneg %p427
      %p614 = pneg %p451
      %p615 = pneg %p448
      %p616 = pneg %p477
      %p617 = pneg %p474
      %p618 = scmp.lt.s32.totalorder %s31, 1
      %s619 = scalar_select %p618, %s31, 1
      %s620 = smul.addr %s619, 2
      %s621 = scalar_lea.vmem %s20, %s620
      %s622 = smul.u32 2, %s31
      %p623 = scmp.lt.s32.totalorder %s622, 3
      %s624 = scalar_select %p623, %s622, 3
      %s625 = smul.addr %s624, 16
      %s626 = smul.addr %s625, 8
      %s627 = scalar_lea.vmem %s0, %s626
      %s628 = smul.u32 2, %s31
      %p629 = scmp.lt.s32.totalorder %s31, 1
      %s630 = scalar_select %p629, %s31, 1
      %s631 = smul.addr %s630, 2
      %s632 = scalar_lea.vmem %s20, %s631
      %v634 = vld [vmem:[%s627] sm:$0xff]
      %v635 = vld [vmem:[%s627 + $0x8] sm:$0xff]
      %v636 = vld [vmem:[%s627 + $0x10] sm:$0xff]
      %v637 = vld [vmem:[%s627 + $0x18] sm:$0xff]
      %v638 = vld [vmem:[%s627 + $0x20] sm:$0xff]
      %v639 = vld [vmem:[%s627 + $0x28] sm:$0xff]
      %v640 = vld [vmem:[%s627 + $0x30] sm:$0xff]
      %v641 = vld [vmem:[%s627 + $0x38] sm:$0xff]
      %v642 = vld [vmem:[%s627 + $0x40] sm:$0xff]
      %v643 = vld [vmem:[%s627 + $0x48] sm:$0xff]
      %v644 = vld [vmem:[%s627 + $0x50] sm:$0xff]
      %v645 = vld [vmem:[%s627 + $0x58] sm:$0xff]
      %v646 = vld [vmem:[%s627 + $0x60] sm:$0xff]
      %v647 = vld [vmem:[%s627 + $0x68] sm:$0xff]
      %v648 = vld [vmem:[%s627 + $0x70] sm:$0xff]
      %v649 = vld [vmem:[%s627 + $0x78] sm:$0xff]
      %v650 = vld [vmem:[%s627 + $0x80] sm:$0xff]
      %v651 = vld [vmem:[%s627 + $0x88] sm:$0xff]
      %v652 = vld [vmem:[%s627 + $0x90] sm:$0xff]
      %v653 = vld [vmem:[%s627 + $0x98] sm:$0xff]
      %v654 = vld [vmem:[%s627 + $0xa0] sm:$0xff]
      %v655 = vld [vmem:[%s627 + $0xa8] sm:$0xff]
      %v656 = vld [vmem:[%s627 + $0xb0] sm:$0xff]
      %v657 = vld [vmem:[%s627 + $0xb8] sm:$0xff]
      %v658 = vld [vmem:[%s627 + $0xc0] sm:$0xff]
      %v659 = vld [vmem:[%s627 + $0xc8] sm:$0xff]
      %v660 = vld [vmem:[%s627 + $0xd0] sm:$0xff]
      %v661 = vld [vmem:[%s627 + $0xd8] sm:$0xff]
      %v662 = vld [vmem:[%s627 + $0xe0] sm:$0xff]
      %v663 = vld [vmem:[%s627 + $0xe8] sm:$0xff]
      %v664 = vld [vmem:[%s627 + $0xf0] sm:$0xff]
      %v665 = vld [vmem:[%s627 + $0xf8] sm:$0xff]
      %v666 = vld [vmem:[%s2] sm:$0xff]
      %v667 = vmul.f32 %v634, %v666
      %v668 = vmul.f32 %v635, %v666
      %v669 = vmul.f32 %v636, %v666
      %v670 = vmul.f32 %v637, %v666
      %v671 = vmul.f32 %v638, %v666
      %v672 = vmul.f32 %v639, %v666
      %v673 = vmul.f32 %v640, %v666
      %v674 = vmul.f32 %v641, %v666
      %v675 = vmul.f32 %v642, %v666
      %v676 = vmul.f32 %v643, %v666
      %v677 = vmul.f32 %v644, %v666
      %v678 = vmul.f32 %v645, %v666
      %v679 = vmul.f32 %v646, %v666
      %v680 = vmul.f32 %v647, %v666
      %v681 = vmul.f32 %v648, %v666
      %v682 = vmul.f32 %v649, %v666
      %v683 = vmul.f32 %v650, %v666
      %v684 = vmul.f32 %v651, %v666
      %v685 = vmul.f32 %v652, %v666
      %v686 = vmul.f32 %v653, %v666
      %v687 = vmul.f32 %v654, %v666
      %v688 = vmul.f32 %v655, %v666
      %v689 = vmul.f32 %v656, %v666
      %v690 = vmul.f32 %v657, %v666
      %v691 = vmul.f32 %v658, %v666
      %v692 = vmul.f32 %v659, %v666
      %v693 = vmul.f32 %v660, %v666
      %v694 = vmul.f32 %v661, %v666
      %v695 = vmul.f32 %v662, %v666
      %v696 = vmul.f32 %v663, %v666
      %v697 = vmul.f32 %v664, %v666
      %v698 = vmul.f32 %v665, %v666
      %v699 = vld [vmem:[%s3] sm:$0xff]
      %v700 = vadd.f32 %v667, %v699
      %v701 = vadd.f32 %v668, %v699
      %v702 = vadd.f32 %v669, %v699
      %v703 = vadd.f32 %v670, %v699
      %v704 = vadd.f32 %v671, %v699
      %v705 = vadd.f32 %v672, %v699
      %v706 = vadd.f32 %v673, %v699
      %v707 = vadd.f32 %v674, %v699
      %v708 = vadd.f32 %v675, %v699
      %v709 = vadd.f32 %v676, %v699
      %v710 = vadd.f32 %v677, %v699
      %v711 = vadd.f32 %v678, %v699
      %v712 = vadd.f32 %v679, %v699
      %v713 = vadd.f32 %v680, %v699
      %v714 = vadd.f32 %v681, %v699
      %v715 = vadd.f32 %v682, %v699
      %v716 = vadd.f32 %v683, %v699
      %v717 = vadd.f32 %v684, %v699
      %v718 = vadd.f32 %v685, %v699
      %v719 = vadd.f32 %v686, %v699
      %v720 = vadd.f32 %v687, %v699
      %v721 = vadd.f32 %v688, %v699
      %v722 = vadd.f32 %v689, %v699
      %v723 = vadd.f32 %v690, %v699
      %v724 = vadd.f32 %v691, %v699
      %v725 = vadd.f32 %v692, %v699
      %v726 = vadd.f32 %v693, %v699
      %v727 = vadd.f32 %v694, %v699
      %v728 = vadd.f32 %v695, %v699
      %v729 = vadd.f32 %v696, %v699
      %v730 = vadd.f32 %v697, %v699
      %v731 = vadd.f32 %v698, %v699
      %v732 = vld [vmem:[%s1] sm:$0xf]
      %v733 = vld [vmem:[%s1 + $0x4] sm:$0xf]
      %v734 = vld [vmem:[%s1 + $0x8] sm:$0xf]
      %v735 = vld [vmem:[%s1 + $0xc] sm:$0xf]
      %v736 = vld [vmem:[%s1 + $0x10] sm:$0xf]
      %v737 = vld [vmem:[%s1 + $0x14] sm:$0xf]
      %v738 = vld [vmem:[%s1 + $0x18] sm:$0xf]
      %v739 = vld [vmem:[%s1 + $0x1c] sm:$0xf]
      %v740 = vld [vmem:[%s1 + $0x20] sm:$0xf]
      %v741 = vld [vmem:[%s1 + $0x24] sm:$0xf]
      %v742 = vld [vmem:[%s1 + $0x28] sm:$0xf]
      %v743 = vld [vmem:[%s1 + $0x2c] sm:$0xf]
      %v744 = vld [vmem:[%s1 + $0x30] sm:$0xf]
      %v745 = vld [vmem:[%s1 + $0x34] sm:$0xf]
      %v746 = vld [vmem:[%s1 + $0x38] sm:$0xf]
      %v747 = vld [vmem:[%s1 + $0x3c] sm:$0xf]
      %s748 = scalar_lea.vmem %s1, 64
      %v749 = vld [vmem:[%s748] sm:$0xf]
      %v750 = vld [vmem:[%s748 + $0x4] sm:$0xf]
      %v751 = vld [vmem:[%s748 + $0x8] sm:$0xf]
      %v752 = vld [vmem:[%s748 + $0xc] sm:$0xf]
      %v753 = vld [vmem:[%s748 + $0x10] sm:$0xf]
      %v754 = vld [vmem:[%s748 + $0x14] sm:$0xf]
      %v755 = vld [vmem:[%s748 + $0x18] sm:$0xf]
      %v756 = vld [vmem:[%s748 + $0x1c] sm:$0xf]
      %v757 = vld [vmem:[%s748 + $0x20] sm:$0xf]
      %v758 = vld [vmem:[%s748 + $0x24] sm:$0xf]
      %v759 = vld [vmem:[%s748 + $0x28] sm:$0xf]
      %v760 = vld [vmem:[%s748 + $0x2c] sm:$0xf]
      %v761 = vld [vmem:[%s748 + $0x30] sm:$0xf]
      %v762 = vld [vmem:[%s748 + $0x34] sm:$0xf]
      %v763 = vld [vmem:[%s748 + $0x38] sm:$0xf]
      %v764 = vld [vmem:[%s748 + $0x3c] sm:$0xf]
      %s765 = scalar_lea.vmem %s1, 128
      %v766 = vld [vmem:[%s765] sm:$0xf]
      %v767 = vld [vmem:[%s765 + $0x4] sm:$0xf]
      %v768 = vld [vmem:[%s765 + $0x8] sm:$0xf]
      %v769 = vld [vmem:[%s765 + $0xc] sm:$0xf]
      %v770 = vld [vmem:[%s765 + $0x10] sm:$0xf]
      %v771 = vld [vmem:[%s765 + $0x14] sm:$0xf]
      %v772 = vld [vmem:[%s765 + $0x18] sm:$0xf]
      %v773 = vld [vmem:[%s765 + $0x1c] sm:$0xf]
      %v774 = vld [vmem:[%s765 + $0x20] sm:$0xf]
      %v775 = vld [vmem:[%s765 + $0x24] sm:$0xf]
      %v776 = vld [vmem:[%s765 + $0x28] sm:$0xf]
      %v777 = vld [vmem:[%s765 + $0x2c] sm:$0xf]
      %v778 = vld [vmem:[%s765 + $0x30] sm:$0xf]
      %v779 = vld [vmem:[%s765 + $0x34] sm:$0xf]
      %v780 = vld [vmem:[%s765 + $0x38] sm:$0xf]
      %v781 = vld [vmem:[%s765 + $0x3c] sm:$0xf]
      %v782 = vpack.c.bf16 %v701, %v700
      %v783 = vpack.c.bf16 %v703, %v702
      %v784 = vpack.c.bf16 %v705, %v704
      %v785 = vpack.c.bf16 %v707, %v706
      %v786 = vpack.c.bf16 %v709, %v708
      %v787 = vpack.c.bf16 %v711, %v710
      %v788 = vpack.c.bf16 %v713, %v712
      %v789 = vpack.c.bf16 %v715, %v714
      %v790 = vpack.c.bf16 %v717, %v716
      %v791 = vpack.c.bf16 %v719, %v718
      %v792 = vpack.c.bf16 %v721, %v720
      %v793 = vpack.c.bf16 %v723, %v722
      %v794 = vpack.c.bf16 %v725, %v724
      %v795 = vpack.c.bf16 %v727, %v726
      %v796 = vpack.c.bf16 %v729, %v728
      %v797 = vpack.c.bf16 %v731, %v730
      %v798 = vld [vmem:[%s8] sm:$0x3]
      %v799 = vld [vmem:[%s9] sm:$0x1]
      %v801 = vperm.slane %v799, 0
      %vm803 = vcmask 31744
      %v805 = vsel %vm803, %v782, 0
      %v808 = vsel %vm803, %v783, 0
      %v811 = vsel %vm803, %v784, 0
      %v814 = vsel %vm803, %v785, 0
      %v817 = vsel %vm803, %v786, 0
      %v820 = vsel %vm803, %v787, 0
      %v823 = vsel %vm803, %v788, 0
      %v826 = vsel %vm803, %v789, 0
      %v829 = vsel %vm803, %v790, 0
      %v832 = vsel %vm803, %v791, 0
      %v835 = vsel %vm803, %v792, 0
      %v838 = vsel %vm803, %v793, 0
      %v841 = vsel %vm803, %v794, 0
      %v844 = vsel %vm803, %v795, 0
      %v847 = vsel %vm803, %v796, 0
      %v850 = vsel %vm803, %v797, 0
      %vm852 = vcmask 1041408
      %v854 = vsel %vm852, %v798, 0
      %856 = vmatpush.bf16.msra.mxu0 0
      %857 = vmatpush.bf16.msra.mxu0 0
      %858 = vmatpush.bf16.msra.mxu0 0
      %859 = vmatpush.bf16.msra.mxu0 0
      %860 = vmatpush.bf16.msra.mxu0 0
      %861 = vmatpush.bf16.msra.mxu0 0
      %862 = vmatpush.bf16.msra.mxu0 0
      %863 = vmatpush.bf16.msra.mxu0 %v854
      %864 = vmatmul.bf16.gmra.mxu0 %v805
      %v865 = vpop.f32.mrf.mxu0
      %v866 = vadd.f32 %v801, %v865
      %v867 = vpop.f32.mrf.mxu0
      %v868 = vadd.f32 %v801, %v867
      %869 = vmatmul.bf16.gmra.mxu0 %v808
      %v870 = vpop.f32.mrf.mxu0
      %v871 = vadd.f32 %v801, %v870
      %v872 = vpop.f32.mrf.mxu0
      %v873 = vadd.f32 %v801, %v872
      %874 = vmatmul.bf16.gmra.mxu0 %v811
      %v875 = vpop.f32.mrf.mxu0
      %v876 = vadd.f32 %v801, %v875
      %v877 = vpop.f32.mrf.mxu0
      %v878 = vadd.f32 %v801, %v877
      %879 = vmatmul.bf16.gmra.mxu0 %v814
      %v880 = vpop.f32.mrf.mxu0
      %v881 = vadd.f32 %v801, %v880
      %v882 = vpop.f32.mrf.mxu0
      %v883 = vadd.f32 %v801, %v882
      %884 = vmatmul.bf16.gmra.mxu0 %v817
      %v885 = vpop.f32.mrf.mxu0
      %v886 = vadd.f32 %v801, %v885
      %v887 = vpop.f32.mrf.mxu0
      %v888 = vadd.f32 %v801, %v887
      %889 = vmatmul.bf16.gmra.mxu0 %v820
      %v890 = vpop.f32.mrf.mxu0
      %v891 = vadd.f32 %v801, %v890
      %v892 = vpop.f32.mrf.mxu0
      %v893 = vadd.f32 %v801, %v892
      %894 = vmatmul.bf16.gmra.mxu0 %v823
      %v895 = vpop.f32.mrf.mxu0
      %v896 = vadd.f32 %v801, %v895
      %v897 = vpop.f32.mrf.mxu0
      %v898 = vadd.f32 %v801, %v897
      %899 = vmatmul.bf16.gmra.mxu0 %v826
      %v900 = vpop.f32.mrf.mxu0
      %v901 = vadd.f32 %v801, %v900
      %v902 = vpop.f32.mrf.mxu0
      %v903 = vadd.f32 %v801, %v902
      %904 = vmatmul.bf16.gmra.mxu0 %v829
      %v905 = vpop.f32.mrf.mxu0
      %v906 = vadd.f32 %v801, %v905
      %v907 = vpop.f32.mrf.mxu0
      %v908 = vadd.f32 %v801, %v907
      %909 = vmatmul.bf16.gmra.mxu0 %v832
      %v910 = vpop.f32.mrf.mxu0
      %v911 = vadd.f32 %v801, %v910
      %v912 = vpop.f32.mrf.mxu0
      %v913 = vadd.f32 %v801, %v912
      %914 = vmatmul.bf16.gmra.mxu0 %v835
      %v915 = vpop.f32.mrf.mxu0
      %v916 = vadd.f32 %v801, %v915
      %v917 = vpop.f32.mrf.mxu0
      %v918 = vadd.f32 %v801, %v917
      %919 = vmatmul.bf16.gmra.mxu0 %v838
      %v920 = vpop.f32.mrf.mxu0
      %v921 = vadd.f32 %v801, %v920
      %v922 = vpop.f32.mrf.mxu0
      %v923 = vadd.f32 %v801, %v922
      %924 = vmatmul.bf16.gmra.mxu0 %v841
      %v925 = vpop.f32.mrf.mxu0
      %v926 = vadd.f32 %v801, %v925
      %v927 = vpop.f32.mrf.mxu0
      %v928 = vadd.f32 %v801, %v927
      %929 = vmatmul.bf16.gmra.mxu0 %v844
      %v930 = vpop.f32.mrf.mxu0
      %v931 = vadd.f32 %v801, %v930
      %v932 = vpop.f32.mrf.mxu0
      %v933 = vadd.f32 %v801, %v932
      %934 = vmatmul.bf16.gmra.mxu0 %v847
      %v935 = vpop.f32.mrf.mxu0
      %v936 = vadd.f32 %v801, %v935
      %v937 = vpop.f32.mrf.mxu0
      %v938 = vadd.f32 %v801, %v937
      %939 = vmatmul.bf16.gmra.mxu0 %v850
      %v940 = vpop.f32.mrf.mxu0
      %v941 = vadd.f32 %v801, %v940
      %v942 = vpop.f32.mrf.mxu0
      %v943 = vadd.f32 %v801, %v942
      %944 = vdwg.mxu0
      %v945 = vld [vmem:[%s4] sm:$0xf]
      %947 = vst [vmem:[#allocation1] ss:$4 sm:$0xff] %v945
      %v948 = vld.sshfl [vmem:[#allocation1] sm:$0xff pattern:$0x73625140]
      %v949 = vld.sshfl [vmem:[#allocation1 + $0x8] sm:$0xff pattern:$0x73625140]
      %v950 = vsel %vm852, %v948, 0
      %v952 = vsel %vm852, %v949, 0
      %954 = vmatpush.bf16.msra.mxu0 0
      %955 = vmatpush.bf16.msra.mxu0 0
      %956 = vmatpush.bf16.msra.mxu0 0
      %957 = vmatpush.bf16.msra.mxu0 0
      %958 = vmatpush.bf16.msra.mxu0 0
      %959 = vmatpush.bf16.msra.mxu0 0
      %960 = vmatpush.bf16.msra.mxu0 0
      %961 = vmatpush.bf16.msra.mxu0 %v950
      %962 = vmatmul.bf16.gmra.mxu0 %v805
      %v963 = vpop.f32.mrf.mxu0
      %v964 = vadd.f32 0.0, %v963
      %v965 = vpop.f32.mrf.mxu0
      %v966 = vadd.f32 0.0, %v965
      %967 = vmatmul.bf16.gmra.mxu0 %v808
      %v968 = vpop.f32.mrf.mxu0
      %v969 = vadd.f32 0.0, %v968
      %v970 = vpop.f32.mrf.mxu0
      %v971 = vadd.f32 0.0, %v970
      %972 = vmatmul.bf16.gmra.mxu0 %v811
      %v973 = vpop.f32.mrf.mxu0
      %v974 = vadd.f32 0.0, %v973
      %v975 = vpop.f32.mrf.mxu0
      %v976 = vadd.f32 0.0, %v975
      %977 = vmatmul.bf16.gmra.mxu0 %v814
      %v978 = vpop.f32.mrf.mxu0
      %v979 = vadd.f32 0.0, %v978
      %v980 = vpop.f32.mrf.mxu0
      %v981 = vadd.f32 0.0, %v980
      %982 = vmatmul.bf16.gmra.mxu0 %v817
      %v983 = vpop.f32.mrf.mxu0
      %v984 = vadd.f32 0.0, %v983
      %v985 = vpop.f32.mrf.mxu0
      %v986 = vadd.f32 0.0, %v985
      %987 = vmatmul.bf16.gmra.mxu0 %v820
      %v988 = vpop.f32.mrf.mxu0
      %v989 = vadd.f32 0.0, %v988
      %v990 = vpop.f32.mrf.mxu0
      %v991 = vadd.f32 0.0, %v990
      %992 = vmatmul.bf16.gmra.mxu0 %v823
      %v993 = vpop.f32.mrf.mxu0
      %v994 = vadd.f32 0.0, %v993
      %v995 = vpop.f32.mrf.mxu0
      %v996 = vadd.f32 0.0, %v995
      %997 = vmatmul.bf16.gmra.mxu0 %v826
      %v998 = vpop.f32.mrf.mxu0
      %v999 = vadd.f32 0.0, %v998
      %v1000 = vpop.f32.mrf.mxu0
      %v1001 = vadd.f32 0.0, %v1000
      %1002 = vmatmul.bf16.gmra.mxu0 %v829
      %v1003 = vpop.f32.mrf.mxu0
      %v1004 = vadd.f32 0.0, %v1003
      %v1005 = vpop.f32.mrf.mxu0
      %v1006 = vadd.f32 0.0, %v1005
      %1007 = vmatmul.bf16.gmra.mxu0 %v832
      %v1008 = vpop.f32.mrf.mxu0
      %v1009 = vadd.f32 0.0, %v1008
      %v1010 = vpop.f32.mrf.mxu0
      %v1011 = vadd.f32 0.0, %v1010
      %1012 = vmatmul.bf16.gmra.mxu0 %v835
      %v1013 = vpop.f32.mrf.mxu0
      %v1014 = vadd.f32 0.0, %v1013
      %v1015 = vpop.f32.mrf.mxu0
      %v1016 = vadd.f32 0.0, %v1015
      %1017 = vmatmul.bf16.gmra.mxu0 %v838
      %v1018 = vpop.f32.mrf.mxu0
      %v1019 = vadd.f32 0.0, %v1018
      %v1020 = vpop.f32.mrf.mxu0
      %v1021 = vadd.f32 0.0, %v1020
      %1022 = vmatmul.bf16.gmra.mxu0 %v841
      %v1023 = vpop.f32.mrf.mxu0
      %v1024 = vadd.f32 0.0, %v1023
      %v1025 = vpop.f32.mrf.mxu0
      %v1026 = vadd.f32 0.0, %v1025
      %1027 = vmatmul.bf16.gmra.mxu0 %v844
      %v1028 = vpop.f32.mrf.mxu0
      %v1029 = vadd.f32 0.0, %v1028
      %v1030 = vpop.f32.mrf.mxu0
      %v1031 = vadd.f32 0.0, %v1030
      %1032 = vmatmul.bf16.gmra.mxu0 %v847
      %v1033 = vpop.f32.mrf.mxu0
      %v1034 = vadd.f32 0.0, %v1033
      %v1035 = vpop.f32.mrf.mxu0
      %v1036 = vadd.f32 0.0, %v1035
      %1037 = vmatmul.bf16.gmra.mxu0 %v850
      %v1038 = vpop.f32.mrf.mxu0
      %v1039 = vadd.f32 0.0, %v1038
      %v1040 = vpop.f32.mrf.mxu0
      %v1041 = vadd.f32 0.0, %v1040
      %1042 = vdwg.mxu0
      %1043 = vmatpush.bf16.msra.mxu0 0
      %1044 = vmatpush.bf16.msra.mxu0 0
      %1045 = vmatpush.bf16.msra.mxu0 0
      %1046 = vmatpush.bf16.msra.mxu0 0
      %1047 = vmatpush.bf16.msra.mxu0 0
      %1048 = vmatpush.bf16.msra.mxu0 0
      %1049 = vmatpush.bf16.msra.mxu0 0
      %1050 = vmatpush.bf16.msra.mxu0 %v952
      %1051 = vmatmul.bf16.gmra.mxu0 %v805
      %v1052 = vpop.f32.mrf.mxu0
      %v1053 = vadd.f32 0.0, %v1052
      %v1054 = vpop.f32.mrf.mxu0
      %v1055 = vadd.f32 0.0, %v1054
      %1056 = vmatmul.bf16.gmra.mxu0 %v808
      %v1057 = vpop.f32.mrf.mxu0
      %v1058 = vadd.f32 0.0, %v1057
      %v1059 = vpop.f32.mrf.mxu0
      %v1060 = vadd.f32 0.0, %v1059
      %1061 = vmatmul.bf16.gmra.mxu0 %v811
      %v1062 = vpop.f32.mrf.mxu0
      %v1063 = vadd.f32 0.0, %v1062
      %v1064 = vpop.f32.mrf.mxu0
      %v1065 = vadd.f32 0.0, %v1064
      %1066 = vmatmul.bf16.gmra.mxu0 %v814
      %v1067 = vpop.f32.mrf.mxu0
      %v1068 = vadd.f32 0.0, %v1067
      %v1069 = vpop.f32.mrf.mxu0
      %v1070 = vadd.f32 0.0, %v1069
      %1071 = vmatmul.bf16.gmra.mxu0 %v817
      %v1072 = vpop.f32.mrf.mxu0
      %v1073 = vadd.f32 0.0, %v1072
      %v1074 = vpop.f32.mrf.mxu0
      %v1075 = vadd.f32 0.0, %v1074
      %1076 = vmatmul.bf16.gmra.mxu0 %v820
      %v1077 = vpop.f32.mrf.mxu0
      %v1078 = vadd.f32 0.0, %v1077
      %v1079 = vpop.f32.mrf.mxu0
      %v1080 = vadd.f32 0.0, %v1079
      %1081 = vmatmul.bf16.gmra.mxu0 %v823
      %v1082 = vpop.f32.mrf.mxu0
      %v1083 = vadd.f32 0.0, %v1082
      %v1084 = vpop.f32.mrf.mxu0
      %v1085 = vadd.f32 0.0, %v1084
      %1086 = vmatmul.bf16.gmra.mxu0 %v826
      %v1087 = vpop.f32.mrf.mxu0
      %v1088 = vadd.f32 0.0, %v1087
      %v1089 = vpop.f32.mrf.mxu0
      %v1090 = vadd.f32 0.0, %v1089
      %1091 = vmatmul.bf16.gmra.mxu0 %v829
      %v1092 = vpop.f32.mrf.mxu0
      %v1093 = vadd.f32 0.0, %v1092
      %v1094 = vpop.f32.mrf.mxu0
      %v1095 = vadd.f32 0.0, %v1094
      %1096 = vmatmul.bf16.gmra.mxu0 %v832
      %v1097 = vpop.f32.mrf.mxu0
      %v1098 = vadd.f32 0.0, %v1097
      %v1099 = vpop.f32.mrf.mxu0
      %v1100 = vadd.f32 0.0, %v1099
      %1101 = vmatmul.bf16.gmra.mxu0 %v835
      %v1102 = vpop.f32.mrf.mxu0
      %v1103 = vadd.f32 0.0, %v1102
      %v1104 = vpop.f32.mrf.mxu0
      %v1105 = vadd.f32 0.0, %v1104
      %1106 = vmatmul.bf16.gmra.mxu0 %v838
      %v1107 = vpop.f32.mrf.mxu0
      %v1108 = vadd.f32 0.0, %v1107
      %v1109 = vpop.f32.mrf.mxu0
      %v1110 = vadd.f32 0.0, %v1109
      %1111 = vmatmul.bf16.gmra.mxu0 %v841
      %v1112 = vpop.f32.mrf.mxu0
      %v1113 = vadd.f32 0.0, %v1112
      %v1114 = vpop.f32.mrf.mxu0
      %v1115 = vadd.f32 0.0, %v1114
      %1116 = vmatmul.bf16.gmra.mxu0 %v844
      %v1117 = vpop.f32.mrf.mxu0
      %v1118 = vadd.f32 0.0, %v1117
      %v1119 = vpop.f32.mrf.mxu0
      %v1120 = vadd.f32 0.0, %v1119
      %1121 = vmatmul.bf16.gmra.mxu0 %v847
      %v1122 = vpop.f32.mrf.mxu0
      %v1123 = vadd.f32 0.0, %v1122
      %v1124 = vpop.f32.mrf.mxu0
      %v1125 = vadd.f32 0.0, %v1124
      %1126 = vmatmul.bf16.gmra.mxu0 %v850
      %v1127 = vpop.f32.mrf.mxu0
      %v1128 = vadd.f32 0.0, %v1127
      %v1129 = vpop.f32.mrf.mxu0
      %v1130 = vadd.f32 0.0, %v1129
      %1131 = vdwg.mxu0
      %v1132 = vpack.c.bf16 %v1053, %v964
      %v1133 = vpack.c.bf16 %v1055, %v966
      %v1134 = vpack.c.bf16 %v1058, %v969
      %v1135 = vpack.c.bf16 %v1060, %v971
      %v1136 = vpack.c.bf16 %v1063, %v974
      %v1137 = vpack.c.bf16 %v1065, %v976
      %v1138 = vpack.c.bf16 %v1068, %v979
      %v1139 = vpack.c.bf16 %v1070, %v981
      %v1140 = vpack.c.bf16 %v1073, %v984
      %v1141 = vpack.c.bf16 %v1075, %v986
      %v1142 = vpack.c.bf16 %v1078, %v989
      %v1143 = vpack.c.bf16 %v1080, %v991
      %v1144 = vpack.c.bf16 %v1083, %v994
      %v1145 = vpack.c.bf16 %v1085, %v996
      %v1146 = vpack.c.bf16 %v1088, %v999
      %v1147 = vpack.c.bf16 %v1090, %v1001
      %v1148 = vpack.c.bf16 %v1093, %v1004
      %v1149 = vpack.c.bf16 %v1095, %v1006
      %v1150 = vpack.c.bf16 %v1098, %v1009
      %v1151 = vpack.c.bf16 %v1100, %v1011
      %v1152 = vpack.c.bf16 %v1103, %v1014
      %v1153 = vpack.c.bf16 %v1105, %v1016
      %v1154 = vpack.c.bf16 %v1108, %v1019
      %v1155 = vpack.c.bf16 %v1110, %v1021
      %v1156 = vpack.c.bf16 %v1113, %v1024
      %v1157 = vpack.c.bf16 %v1115, %v1026
      %v1158 = vpack.c.bf16 %v1118, %v1029
      %v1159 = vpack.c.bf16 %v1120, %v1031
      %v1160 = vpack.c.bf16 %v1123, %v1034
      %v1161 = vpack.c.bf16 %v1125, %v1036
      %v1162 = vpack.c.bf16 %v1128, %v1039
      %v1163 = vpack.c.bf16 %v1130, %v1041
      %v1180 = vunpack.c.l.b16 %v749
      %v1181 = vunpack.c.l.b16 %v750
      %v1182 = vunpack.c.l.b16 %v751
      %v1183 = vunpack.c.l.b16 %v752
      %v1184 = vunpack.c.l.b16 %v753
      %v1185 = vunpack.c.l.b16 %v754
      %v1186 = vunpack.c.l.b16 %v755
      %v1187 = vunpack.c.l.b16 %v756
      %v1188 = vunpack.c.l.b16 %v757
      %v1189 = vunpack.c.l.b16 %v758
      %v1190 = vunpack.c.l.b16 %v759
      %v1191 = vunpack.c.l.b16 %v760
      %v1192 = vunpack.c.l.b16 %v761
      %v1193 = vunpack.c.l.b16 %v762
      %v1194 = vunpack.c.l.b16 %v763
      %v1195 = vunpack.c.l.b16 %v764
      %v1196 = vpack.c.b16 %v1181, %v1180
      %v1197 = vpack.c.b16 %v1183, %v1182
      %v1198 = vpack.c.b16 %v1185, %v1184
      %v1199 = vpack.c.b16 %v1187, %v1186
      %v1200 = vpack.c.b16 %v1189, %v1188
      %v1201 = vpack.c.b16 %v1191, %v1190
      %v1202 = vpack.c.b16 %v1193, %v1192
      %v1203 = vpack.c.b16 %v1195, %v1194
      %v1228 = vunpack.c.l.b16 %v1132
      %v1229 = vunpack.c.l.b16 %v1133
      %v1230 = vunpack.c.l.b16 %v1134
      %v1231 = vunpack.c.l.b16 %v1135
      %v1232 = vunpack.c.l.b16 %v1136
      %v1233 = vunpack.c.l.b16 %v1137
      %v1234 = vunpack.c.l.b16 %v1138
      %v1235 = vunpack.c.l.b16 %v1139
      %v1236 = vunpack.c.l.b16 %v1140
      %v1237 = vunpack.c.l.b16 %v1141
      %v1238 = vunpack.c.l.b16 %v1142
      %v1239 = vunpack.c.l.b16 %v1143
      %v1240 = vunpack.c.l.b16 %v1144
      %v1241 = vunpack.c.l.b16 %v1145
      %v1242 = vunpack.c.l.b16 %v1146
      %v1243 = vunpack.c.l.b16 %v1147
      %v1244 = vpack.c.b16 %v1229, %v1228
      %v1245 = vpack.c.b16 %v1231, %v1230
      %v1246 = vpack.c.b16 %v1233, %v1232
      %v1247 = vpack.c.b16 %v1235, %v1234
      %v1248 = vpack.c.b16 %v1237, %v1236
      %v1249 = vpack.c.b16 %v1239, %v1238
      %v1250 = vpack.c.b16 %v1241, %v1240
      %v1251 = vpack.c.b16 %v1243, %v1242
      %1252 = vrot.lane.b32.xlu0 %v1244, 64
      %v1253 = vpop.permute.xlu0 %1252
      %1254 = vrot.lane.b32.xlu0 %v1245, 64
      %v1255 = vpop.permute.xlu0 %1254
      %1256 = vrot.lane.b32.xlu0 %v1246, 64
      %v1257 = vpop.permute.xlu0 %1256
      %1258 = vrot.lane.b32.xlu0 %v1247, 64
      %v1259 = vpop.permute.xlu0 %1258
      %1260 = vrot.lane.b32.xlu0 %v1248, 64
      %v1261 = vpop.permute.xlu0 %1260
      %1262 = vrot.lane.b32.xlu0 %v1249, 64
      %v1263 = vpop.permute.xlu0 %1262
      %1264 = vrot.lane.b32.xlu0 %v1250, 64
      %v1265 = vpop.permute.xlu0 %1264
      %1266 = vrot.lane.b32.xlu0 %v1251, 64
      %v1267 = vpop.permute.xlu0 %1266
      %1276 = vmatpush.bf16.msra.mxu0 %v1267
      %1277 = vmatpush.bf16.msra.mxu0 %v1265
      %1278 = vmatpush.bf16.msra.mxu0 %v1263
      %1279 = vmatpush.bf16.msra.mxu0 %v1261
      %1280 = vmatpush.bf16.msra.mxu0 %v1259
      %1281 = vmatpush.bf16.msra.mxu0 %v1257
      %1282 = vmatpush.bf16.msra.mxu0 %v1255
      %1283 = vmatpush.bf16.msra.mxu0 %v1253
      %1284 = vmatmul.bf16.gmra.mxu0 %v1196
      %v1285 = vpop.f32.mrf.mxu0
      %v1286 = vadd.f32 0.0, %v1285
      %v1287 = vpop.f32.mrf.mxu0
      %v1288 = vadd.f32 0.0, %v1287
      %1289 = vmatmul.bf16.gmra.mxu0 %v1197
      %v1290 = vpop.f32.mrf.mxu0
      %v1291 = vadd.f32 0.0, %v1290
      %v1292 = vpop.f32.mrf.mxu0
      %v1293 = vadd.f32 0.0, %v1292
      %1294 = vmatmul.bf16.gmra.mxu0 %v1198
      %v1295 = vpop.f32.mrf.mxu0
      %v1296 = vadd.f32 0.0, %v1295
      %v1297 = vpop.f32.mrf.mxu0
      %v1298 = vadd.f32 0.0, %v1297
      %1299 = vmatmul.bf16.gmra.mxu0 %v1199
      %v1300 = vpop.f32.mrf.mxu0
      %v1301 = vadd.f32 0.0, %v1300
      %v1302 = vpop.f32.mrf.mxu0
      %v1303 = vadd.f32 0.0, %v1302
      %1304 = vmatmul.bf16.gmra.mxu0 %v1200
      %v1305 = vpop.f32.mrf.mxu0
      %v1306 = vadd.f32 0.0, %v1305
      %v1307 = vpop.f32.mrf.mxu0
      %v1308 = vadd.f32 0.0, %v1307
      %1309 = vmatmul.bf16.gmra.mxu0 %v1201
      %v1310 = vpop.f32.mrf.mxu0
      %v1311 = vadd.f32 0.0, %v1310
      %v1312 = vpop.f32.mrf.mxu0
      %v1313 = vadd.f32 0.0, %v1312
      %1314 = vmatmul.bf16.gmra.mxu0 %v1202
      %v1315 = vpop.f32.mrf.mxu0
      %v1316 = vadd.f32 0.0, %v1315
      %v1317 = vpop.f32.mrf.mxu0
      %v1318 = vadd.f32 0.0, %v1317
      %1319 = vmatmul.bf16.gmra.mxu0 %v1203
      %v1320 = vpop.f32.mrf.mxu0
      %v1321 = vadd.f32 0.0, %v1320
      %v1322 = vpop.f32.mrf.mxu0
      %v1323 = vadd.f32 0.0, %v1322
      %1324 = vdwg.mxu0
      %v1341 = vunpack.c.l.b16 %v732
      %v1342 = vunpack.c.l.b16 %v733
      %v1343 = vunpack.c.l.b16 %v734
      %v1344 = vunpack.c.l.b16 %v735
      %v1345 = vunpack.c.l.b16 %v736
      %v1346 = vunpack.c.l.b16 %v737
      %v1347 = vunpack.c.l.b16 %v738
      %v1348 = vunpack.c.l.b16 %v739
      %v1349 = vunpack.c.l.b16 %v740
      %v1350 = vunpack.c.l.b16 %v741
      %v1351 = vunpack.c.l.b16 %v742
      %v1352 = vunpack.c.l.b16 %v743
      %v1353 = vunpack.c.l.b16 %v744
      %v1354 = vunpack.c.l.b16 %v745
      %v1355 = vunpack.c.l.b16 %v746
      %v1356 = vunpack.c.l.b16 %v747
      %v1357 = vpack.c.b16 %v1342, %v1341
      %v1358 = vpack.c.b16 %v1344, %v1343
      %v1359 = vpack.c.b16 %v1346, %v1345
      %v1360 = vpack.c.b16 %v1348, %v1347
      %v1361 = vpack.c.b16 %v1350, %v1349
      %v1362 = vpack.c.b16 %v1352, %v1351
      %v1363 = vpack.c.b16 %v1354, %v1353
      %v1364 = vpack.c.b16 %v1356, %v1355
      %1381 = vmatpush.bf16.msra.mxu0 %v1251
      %1382 = vmatpush.bf16.msra.mxu0 %v1250
      %1383 = vmatpush.bf16.msra.mxu0 %v1249
      %1384 = vmatpush.bf16.msra.mxu0 %v1248
      %1385 = vmatpush.bf16.msra.mxu0 %v1247
      %1386 = vmatpush.bf16.msra.mxu0 %v1246
      %1387 = vmatpush.bf16.msra.mxu0 %v1245
      %1388 = vmatpush.bf16.msra.mxu0 %v1244
      %1389 = vmatmul.bf16.gmra.mxu0 %v1357
      %v1390 = vpop.f32.mrf.mxu0
      %v1391 = vadd.f32 %v1286, %v1390
      %v1392 = vpop.f32.mrf.mxu0
      %v1393 = vadd.f32 %v1288, %v1392
      %1394 = vmatmul.bf16.gmra.mxu0 %v1358
      %v1395 = vpop.f32.mrf.mxu0
      %v1396 = vadd.f32 %v1291, %v1395
      %v1397 = vpop.f32.mrf.mxu0
      %v1398 = vadd.f32 %v1293, %v1397
      %1399 = vmatmul.bf16.gmra.mxu0 %v1359
      %v1400 = vpop.f32.mrf.mxu0
      %v1401 = vadd.f32 %v1296, %v1400
      %v1402 = vpop.f32.mrf.mxu0
      %v1403 = vadd.f32 %v1298, %v1402
      %1404 = vmatmul.bf16.gmra.mxu0 %v1360
      %v1405 = vpop.f32.mrf.mxu0
      %v1406 = vadd.f32 %v1301, %v1405
      %v1407 = vpop.f32.mrf.mxu0
      %v1408 = vadd.f32 %v1303, %v1407
      %1409 = vmatmul.bf16.gmra.mxu0 %v1361
      %v1410 = vpop.f32.mrf.mxu0
      %v1411 = vadd.f32 %v1306, %v1410
      %v1412 = vpop.f32.mrf.mxu0
      %v1413 = vadd.f32 %v1308, %v1412
      %1414 = vmatmul.bf16.gmra.mxu0 %v1362
      %v1415 = vpop.f32.mrf.mxu0
      %v1416 = vadd.f32 %v1311, %v1415
      %v1417 = vpop.f32.mrf.mxu0
      %v1418 = vadd.f32 %v1313, %v1417
      %1419 = vmatmul.bf16.gmra.mxu0 %v1363
      %v1420 = vpop.f32.mrf.mxu0
      %v1421 = vadd.f32 %v1316, %v1420
      %v1422 = vpop.f32.mrf.mxu0
      %v1423 = vadd.f32 %v1318, %v1422
      %1424 = vmatmul.bf16.gmra.mxu0 %v1364
      %v1425 = vpop.f32.mrf.mxu0
      %v1426 = vadd.f32 %v1321, %v1425
      %v1427 = vpop.f32.mrf.mxu0
      %v1428 = vadd.f32 %v1323, %v1427
      %1429 = vdwg.mxu0
      %v1446 = vunpack.c.l.b16 %v766
      %v1447 = vunpack.c.l.b16 %v767
      %v1448 = vunpack.c.l.b16 %v768
      %v1449 = vunpack.c.l.b16 %v769
      %v1450 = vunpack.c.l.b16 %v770
      %v1451 = vunpack.c.l.b16 %v771
      %v1452 = vunpack.c.l.b16 %v772
      %v1453 = vunpack.c.l.b16 %v773
      %v1454 = vunpack.c.l.b16 %v774
      %v1455 = vunpack.c.l.b16 %v775
      %v1456 = vunpack.c.l.b16 %v776
      %v1457 = vunpack.c.l.b16 %v777
      %v1458 = vunpack.c.l.b16 %v778
      %v1459 = vunpack.c.l.b16 %v779
      %v1460 = vunpack.c.l.b16 %v780
      %v1461 = vunpack.c.l.b16 %v781
      %v1462 = vpack.c.b16 %v1447, %v1446
      %v1463 = vpack.c.b16 %v1449, %v1448
      %v1464 = vpack.c.b16 %v1451, %v1450
      %v1465 = vpack.c.b16 %v1453, %v1452
      %v1466 = vpack.c.b16 %v1455, %v1454
      %v1467 = vpack.c.b16 %v1457, %v1456
      %v1468 = vpack.c.b16 %v1459, %v1458
      %v1469 = vpack.c.b16 %v1461, %v1460
      %v1478 = vunpack.c.h.b16 %v1132
      %v1479 = vunpack.c.h.b16 %v1133
      %v1480 = vunpack.c.h.b16 %v1134
      %v1481 = vunpack.c.h.b16 %v1135
      %v1482 = vunpack.c.h.b16 %v1136
      %v1483 = vunpack.c.h.b16 %v1137
      %v1484 = vunpack.c.h.b16 %v1138
      %v1485 = vunpack.c.h.b16 %v1139
      %v1486 = vunpack.c.h.b16 %v1140
      %v1487 = vunpack.c.h.b16 %v1141
      %v1488 = vunpack.c.h.b16 %v1142
      %v1489 = vunpack.c.h.b16 %v1143
      %v1490 = vunpack.c.h.b16 %v1144
      %v1491 = vunpack.c.h.b16 %v1145
      %v1492 = vunpack.c.h.b16 %v1146
      %v1493 = vunpack.c.h.b16 %v1147
      %v1494 = vpack.c.b16 %v1479, %v1478
      %v1495 = vpack.c.b16 %v1481, %v1480
      %v1496 = vpack.c.b16 %v1483, %v1482
      %v1497 = vpack.c.b16 %v1485, %v1484
      %v1498 = vpack.c.b16 %v1487, %v1486
      %v1499 = vpack.c.b16 %v1489, %v1488
      %v1500 = vpack.c.b16 %v1491, %v1490
      %v1501 = vpack.c.b16 %v1493, %v1492
      %1510 = vmatpush.bf16.msra.mxu0 %v1501
      %1511 = vmatpush.bf16.msra.mxu0 %v1500
      %1512 = vmatpush.bf16.msra.mxu0 %v1499
      %1513 = vmatpush.bf16.msra.mxu0 %v1498
      %1514 = vmatpush.bf16.msra.mxu0 %v1497
      %1515 = vmatpush.bf16.msra.mxu0 %v1496
      %1516 = vmatpush.bf16.msra.mxu0 %v1495
      %1517 = vmatpush.bf16.msra.mxu0 %v1494
      %1518 = vmatmul.bf16.gmra.mxu0 %v1462
      %v1519 = vpop.f32.mrf.mxu0
      %v1520 = vadd.f32 0.0, %v1519
      %v1521 = vpop.f32.mrf.mxu0
      %v1522 = vadd.f32 0.0, %v1521
      %1523 = vmatmul.bf16.gmra.mxu0 %v1463
      %v1524 = vpop.f32.mrf.mxu0
      %v1525 = vadd.f32 0.0, %v1524
      %v1526 = vpop.f32.mrf.mxu0
      %v1527 = vadd.f32 0.0, %v1526
      %1528 = vmatmul.bf16.gmra.mxu0 %v1464
      %v1529 = vpop.f32.mrf.mxu0
      %v1530 = vadd.f32 0.0, %v1529
      %v1531 = vpop.f32.mrf.mxu0
      %v1532 = vadd.f32 0.0, %v1531
      %1533 = vmatmul.bf16.gmra.mxu0 %v1465
      %v1534 = vpop.f32.mrf.mxu0
      %v1535 = vadd.f32 0.0, %v1534
      %v1536 = vpop.f32.mrf.mxu0
      %v1537 = vadd.f32 0.0, %v1536
      %1538 = vmatmul.bf16.gmra.mxu0 %v1466
      %v1539 = vpop.f32.mrf.mxu0
      %v1540 = vadd.f32 0.0, %v1539
      %v1541 = vpop.f32.mrf.mxu0
      %v1542 = vadd.f32 0.0, %v1541
      %1543 = vmatmul.bf16.gmra.mxu0 %v1467
      %v1544 = vpop.f32.mrf.mxu0
      %v1545 = vadd.f32 0.0, %v1544
      %v1546 = vpop.f32.mrf.mxu0
      %v1547 = vadd.f32 0.0, %v1546
      %1548 = vmatmul.bf16.gmra.mxu0 %v1468
      %v1549 = vpop.f32.mrf.mxu0
      %v1550 = vadd.f32 0.0, %v1549
      %v1551 = vpop.f32.mrf.mxu0
      %v1552 = vadd.f32 0.0, %v1551
      %1553 = vmatmul.bf16.gmra.mxu0 %v1469
      %v1554 = vpop.f32.mrf.mxu0
      %v1555 = vadd.f32 0.0, %v1554
      %v1556 = vpop.f32.mrf.mxu0
      %v1557 = vadd.f32 0.0, %v1556
      %1558 = vdwg.mxu0
      %v1559 = vadd.f32 %v1391, %v1520
      %v1560 = vadd.f32 %v1393, %v1522
      %v1561 = vadd.f32 %v1396, %v1525
      %v1562 = vadd.f32 %v1398, %v1527
      %v1563 = vadd.f32 %v1401, %v1530
      %v1564 = vadd.f32 %v1403, %v1532
      %v1565 = vadd.f32 %v1406, %v1535
      %v1566 = vadd.f32 %v1408, %v1537
      %v1567 = vadd.f32 %v1411, %v1540
      %v1568 = vadd.f32 %v1413, %v1542
      %v1569 = vadd.f32 %v1416, %v1545
      %v1570 = vadd.f32 %v1418, %v1547
      %v1571 = vadd.f32 %v1421, %v1550
      %v1572 = vadd.f32 %v1423, %v1552
      %v1573 = vadd.f32 %v1426, %v1555
      %v1574 = vadd.f32 %v1428, %v1557
      %v1591 = vunpack.c.l.b16 %v1148
      %v1592 = vunpack.c.l.b16 %v1149
      %v1593 = vunpack.c.l.b16 %v1150
      %v1594 = vunpack.c.l.b16 %v1151
      %v1595 = vunpack.c.l.b16 %v1152
      %v1596 = vunpack.c.l.b16 %v1153
      %v1597 = vunpack.c.l.b16 %v1154
      %v1598 = vunpack.c.l.b16 %v1155
      %v1599 = vunpack.c.l.b16 %v1156
      %v1600 = vunpack.c.l.b16 %v1157
      %v1601 = vunpack.c.l.b16 %v1158
      %v1602 = vunpack.c.l.b16 %v1159
      %v1603 = vunpack.c.l.b16 %v1160
      %v1604 = vunpack.c.l.b16 %v1161
      %v1605 = vunpack.c.l.b16 %v1162
      %v1606 = vunpack.c.l.b16 %v1163
      %v1607 = vpack.c.b16 %v1592, %v1591
      %v1608 = vpack.c.b16 %v1594, %v1593
      %v1609 = vpack.c.b16 %v1596, %v1595
      %v1610 = vpack.c.b16 %v1598, %v1597
      %v1611 = vpack.c.b16 %v1600, %v1599
      %v1612 = vpack.c.b16 %v1602, %v1601
      %v1613 = vpack.c.b16 %v1604, %v1603
      %v1614 = vpack.c.b16 %v1606, %v1605
      %1615 = vrot.lane.b32.xlu0 %v1607, 64
      %v1616 = vpop.permute.xlu0 %1615
      %1617 = vrot.lane.b32.xlu0 %v1608, 64
      %v1618 = vpop.permute.xlu0 %1617
      %1619 = vrot.lane.b32.xlu0 %v1609, 64
      %v1620 = vpop.permute.xlu0 %1619
      %1621 = vrot.lane.b32.xlu0 %v1610, 64
      %v1622 = vpop.permute.xlu0 %1621
      %1623 = vrot.lane.b32.xlu0 %v1611, 64
      %v1624 = vpop.permute.xlu0 %1623
      %1625 = vrot.lane.b32.xlu0 %v1612, 64
      %v1626 = vpop.permute.xlu0 %1625
      %1627 = vrot.lane.b32.xlu0 %v1613, 64
      %v1628 = vpop.permute.xlu0 %1627
      %1629 = vrot.lane.b32.xlu0 %v1614, 64
      %v1630 = vpop.permute.xlu0 %1629
      %1639 = vmatpush.bf16.msra.mxu0 %v1630
      %1640 = vmatpush.bf16.msra.mxu0 %v1628
      %1641 = vmatpush.bf16.msra.mxu0 %v1626
      %1642 = vmatpush.bf16.msra.mxu0 %v1624
      %1643 = vmatpush.bf16.msra.mxu0 %v1622
      %1644 = vmatpush.bf16.msra.mxu0 %v1620
      %1645 = vmatpush.bf16.msra.mxu0 %v1618
      %1646 = vmatpush.bf16.msra.mxu0 %v1616
      %1647 = vmatmul.bf16.gmra.mxu0 %v1196
      %v1648 = vpop.f32.mrf.mxu0
      %v1649 = vadd.f32 0.0, %v1648
      %v1650 = vpop.f32.mrf.mxu0
      %v1651 = vadd.f32 0.0, %v1650
      %1652 = vmatmul.bf16.gmra.mxu0 %v1197
      %v1653 = vpop.f32.mrf.mxu0
      %v1654 = vadd.f32 0.0, %v1653
      %v1655 = vpop.f32.mrf.mxu0
      %v1656 = vadd.f32 0.0, %v1655
      %1657 = vmatmul.bf16.gmra.mxu0 %v1198
      %v1658 = vpop.f32.mrf.mxu0
      %v1659 = vadd.f32 0.0, %v1658
      %v1660 = vpop.f32.mrf.mxu0
      %v1661 = vadd.f32 0.0, %v1660
      %1662 = vmatmul.bf16.gmra.mxu0 %v1199
      %v1663 = vpop.f32.mrf.mxu0
      %v1664 = vadd.f32 0.0, %v1663
      %v1665 = vpop.f32.mrf.mxu0
      %v1666 = vadd.f32 0.0, %v1665
      %1667 = vmatmul.bf16.gmra.mxu0 %v1200
      %v1668 = vpop.f32.mrf.mxu0
      %v1669 = vadd.f32 0.0, %v1668
      %v1670 = vpop.f32.mrf.mxu0
      %v1671 = vadd.f32 0.0, %v1670
      %1672 = vmatmul.bf16.gmra.mxu0 %v1201
      %v1673 = vpop.f32.mrf.mxu0
      %v1674 = vadd.f32 0.0, %v1673
      %v1675 = vpop.f32.mrf.mxu0
      %v1676 = vadd.f32 0.0, %v1675
      %1677 = vmatmul.bf16.gmra.mxu0 %v1202
      %v1678 = vpop.f32.mrf.mxu0
      %v1679 = vadd.f32 0.0, %v1678
      %v1680 = vpop.f32.mrf.mxu0
      %v1681 = vadd.f32 0.0, %v1680
      %1682 = vmatmul.bf16.gmra.mxu0 %v1203
      %v1683 = vpop.f32.mrf.mxu0
      %v1684 = vadd.f32 0.0, %v1683
      %v1685 = vpop.f32.mrf.mxu0
      %v1686 = vadd.f32 0.0, %v1685
      %1687 = vdwg.mxu0
      %1696 = vmatpush.bf16.msra.mxu0 %v1614
      %1697 = vmatpush.bf16.msra.mxu0 %v1613
      %1698 = vmatpush.bf16.msra.mxu0 %v1612
      %1699 = vmatpush.bf16.msra.mxu0 %v1611
      %1700 = vmatpush.bf16.msra.mxu0 %v1610
      %1701 = vmatpush.bf16.msra.mxu0 %v1609
      %1702 = vmatpush.bf16.msra.mxu0 %v1608
      %1703 = vmatpush.bf16.msra.mxu0 %v1607
      %1704 = vmatmul.bf16.gmra.mxu0 %v1357
      %v1705 = vpop.f32.mrf.mxu0
      %v1706 = vadd.f32 %v1649, %v1705
      %v1707 = vpop.f32.mrf.mxu0
      %v1708 = vadd.f32 %v1651, %v1707
      %1709 = vmatmul.bf16.gmra.mxu0 %v1358
      %v1710 = vpop.f32.mrf.mxu0
      %v1711 = vadd.f32 %v1654, %v1710
      %v1712 = vpop.f32.mrf.mxu0
      %v1713 = vadd.f32 %v1656, %v1712
      %1714 = vmatmul.bf16.gmra.mxu0 %v1359
      %v1715 = vpop.f32.mrf.mxu0
      %v1716 = vadd.f32 %v1659, %v1715
      %v1717 = vpop.f32.mrf.mxu0
      %v1718 = vadd.f32 %v1661, %v1717
      %1719 = vmatmul.bf16.gmra.mxu0 %v1360
      %v1720 = vpop.f32.mrf.mxu0
      %v1721 = vadd.f32 %v1664, %v1720
      %v1722 = vpop.f32.mrf.mxu0
      %v1723 = vadd.f32 %v1666, %v1722
      %1724 = vmatmul.bf16.gmra.mxu0 %v1361
      %v1725 = vpop.f32.mrf.mxu0
      %v1726 = vadd.f32 %v1669, %v1725
      %v1727 = vpop.f32.mrf.mxu0
      %v1728 = vadd.f32 %v1671, %v1727
      %1729 = vmatmul.bf16.gmra.mxu0 %v1362
      %v1730 = vpop.f32.mrf.mxu0
      %v1731 = vadd.f32 %v1674, %v1730
      %v1732 = vpop.f32.mrf.mxu0
      %v1733 = vadd.f32 %v1676, %v1732
      %1734 = vmatmul.bf16.gmra.mxu0 %v1363
      %v1735 = vpop.f32.mrf.mxu0
      %v1736 = vadd.f32 %v1679, %v1735
      %v1737 = vpop.f32.mrf.mxu0
      %v1738 = vadd.f32 %v1681, %v1737
      %1739 = vmatmul.bf16.gmra.mxu0 %v1364
      %v1740 = vpop.f32.mrf.mxu0
      %v1741 = vadd.f32 %v1684, %v1740
      %v1742 = vpop.f32.mrf.mxu0
      %v1743 = vadd.f32 %v1686, %v1742
      %1744 = vdwg.mxu0
      %v1745 = vunpack.c.h.b16 %v1148
      %v1746 = vunpack.c.h.b16 %v1149
      %v1747 = vunpack.c.h.b16 %v1150
      %v1748 = vunpack.c.h.b16 %v1151
      %v1749 = vunpack.c.h.b16 %v1152
      %v1750 = vunpack.c.h.b16 %v1153
      %v1751 = vunpack.c.h.b16 %v1154
      %v1752 = vunpack.c.h.b16 %v1155
      %v1753 = vunpack.c.h.b16 %v1156
      %v1754 = vunpack.c.h.b16 %v1157
      %v1755 = vunpack.c.h.b16 %v1158
      %v1756 = vunpack.c.h.b16 %v1159
      %v1757 = vunpack.c.h.b16 %v1160
      %v1758 = vunpack.c.h.b16 %v1161
      %v1759 = vunpack.c.h.b16 %v1162
      %v1760 = vunpack.c.h.b16 %v1163
      %v1761 = vpack.c.b16 %v1746, %v1745
      %v1762 = vpack.c.b16 %v1748, %v1747
      %v1763 = vpack.c.b16 %v1750, %v1749
      %v1764 = vpack.c.b16 %v1752, %v1751
      %v1765 = vpack.c.b16 %v1754, %v1753
      %v1766 = vpack.c.b16 %v1756, %v1755
      %v1767 = vpack.c.b16 %v1758, %v1757
      %v1768 = vpack.c.b16 %v1760, %v1759
      %1777 = vmatpush.bf16.msra.mxu0 %v1768
      %1778 = vmatpush.bf16.msra.mxu0 %v1767
      %1779 = vmatpush.bf16.msra.mxu0 %v1766
      %1780 = vmatpush.bf16.msra.mxu0 %v1765
      %1781 = vmatpush.bf16.msra.mxu0 %v1764
      %1782 = vmatpush.bf16.msra.mxu0 %v1763
      %1783 = vmatpush.bf16.msra.mxu0 %v1762
      %1784 = vmatpush.bf16.msra.mxu0 %v1761
      %1785 = vmatmul.bf16.gmra.mxu0 %v1462
      %v1786 = vpop.f32.mrf.mxu0
      %v1787 = vadd.f32 0.0, %v1786
      %v1788 = vpop.f32.mrf.mxu0
      %v1789 = vadd.f32 0.0, %v1788
      %1790 = vmatmul.bf16.gmra.mxu0 %v1463
      %v1791 = vpop.f32.mrf.mxu0
      %v1792 = vadd.f32 0.0, %v1791
      %v1793 = vpop.f32.mrf.mxu0
      %v1794 = vadd.f32 0.0, %v1793
      %1795 = vmatmul.bf16.gmra.mxu0 %v1464
      %v1796 = vpop.f32.mrf.mxu0
      %v1797 = vadd.f32 0.0, %v1796
      %v1798 = vpop.f32.mrf.mxu0
      %v1799 = vadd.f32 0.0, %v1798
      %1800 = vmatmul.bf16.gmra.mxu0 %v1465
      %v1801 = vpop.f32.mrf.mxu0
      %v1802 = vadd.f32 0.0, %v1801
      %v1803 = vpop.f32.mrf.mxu0
      %v1804 = vadd.f32 0.0, %v1803
      %1805 = vmatmul.bf16.gmra.mxu0 %v1466
      %v1806 = vpop.f32.mrf.mxu0
      %v1807 = vadd.f32 0.0, %v1806
      %v1808 = vpop.f32.mrf.mxu0
      %v1809 = vadd.f32 0.0, %v1808
      %1810 = vmatmul.bf16.gmra.mxu0 %v1467
      %v1811 = vpop.f32.mrf.mxu0
      %v1812 = vadd.f32 0.0, %v1811
      %v1813 = vpop.f32.mrf.mxu0
      %v1814 = vadd.f32 0.0, %v1813
      %1815 = vmatmul.bf16.gmra.mxu0 %v1468
      %v1816 = vpop.f32.mrf.mxu0
      %v1817 = vadd.f32 0.0, %v1816
      %v1818 = vpop.f32.mrf.mxu0
      %v1819 = vadd.f32 0.0, %v1818
      %1820 = vmatmul.bf16.gmra.mxu0 %v1469
      %v1821 = vpop.f32.mrf.mxu0
      %v1822 = vadd.f32 0.0, %v1821
      %v1823 = vpop.f32.mrf.mxu0
      %v1824 = vadd.f32 0.0, %v1823
      %1825 = vdwg.mxu0
      %v1826 = vadd.f32 %v1706, %v1787
      %v1827 = vadd.f32 %v1708, %v1789
      %v1828 = vadd.f32 %v1711, %v1792
      %v1829 = vadd.f32 %v1713, %v1794
      %v1830 = vadd.f32 %v1716, %v1797
      %v1831 = vadd.f32 %v1718, %v1799
      %v1832 = vadd.f32 %v1721, %v1802
      %v1833 = vadd.f32 %v1723, %v1804
      %v1834 = vadd.f32 %v1726, %v1807
      %v1835 = vadd.f32 %v1728, %v1809
      %v1836 = vadd.f32 %v1731, %v1812
      %v1837 = vadd.f32 %v1733, %v1814
      %v1838 = vadd.f32 %v1736, %v1817
      %v1839 = vadd.f32 %v1738, %v1819
      %v1840 = vadd.f32 %v1741, %v1822
      %v1841 = vadd.f32 %v1743, %v1824
      %v1842 = vld [vmem:[%s5] sm:$0xff]
      %v1843 = vadd.f32 %v1559, %v1842
      %v1844 = vadd.f32 %v1560, %v1842
      %v1845 = vadd.f32 %v1561, %v1842
      %v1846 = vadd.f32 %v1562, %v1842
      %v1847 = vadd.f32 %v1563, %v1842
      %v1848 = vadd.f32 %v1564, %v1842
      %v1849 = vadd.f32 %v1565, %v1842
      %v1850 = vadd.f32 %v1566, %v1842
      %v1851 = vadd.f32 %v1567, %v1842
      %v1852 = vadd.f32 %v1568, %v1842
      %v1853 = vadd.f32 %v1569, %v1842
      %v1854 = vadd.f32 %v1570, %v1842
      %v1855 = vadd.f32 %v1571, %v1842
      %v1856 = vadd.f32 %v1572, %v1842
      %v1857 = vadd.f32 %v1573, %v1842
      %v1858 = vadd.f32 %v1574, %v1842
      %v1859 = vadd.f32 %v1826, %v1842
      %v1860 = vadd.f32 %v1827, %v1842
      %v1861 = vadd.f32 %v1828, %v1842
      %v1862 = vadd.f32 %v1829, %v1842
      %v1863 = vadd.f32 %v1830, %v1842
      %v1864 = vadd.f32 %v1831, %v1842
      %v1865 = vadd.f32 %v1832, %v1842
      %v1866 = vadd.f32 %v1833, %v1842
      %v1867 = vadd.f32 %v1834, %v1842
      %v1868 = vadd.f32 %v1835, %v1842
      %v1869 = vadd.f32 %v1836, %v1842
      %v1870 = vadd.f32 %v1837, %v1842
      %v1871 = vadd.f32 %v1838, %v1842
      %v1872 = vadd.f32 %v1839, %v1842
      %v1873 = vadd.f32 %v1840, %v1842
      %v1874 = vadd.f32 %v1841, %v1842
      %v1875 = vmax.f32 %v1843, 0.0
      %v1876 = vmax.f32 %v1844, 0.0
      %v1877 = vmax.f32 %v1845, 0.0
      %v1878 = vmax.f32 %v1846, 0.0
      %v1879 = vmax.f32 %v1847, 0.0
      %v1880 = vmax.f32 %v1848, 0.0
      %v1881 = vmax.f32 %v1849, 0.0
      %v1882 = vmax.f32 %v1850, 0.0
      %v1883 = vmax.f32 %v1851, 0.0
      %v1884 = vmax.f32 %v1852, 0.0
      %v1885 = vmax.f32 %v1853, 0.0
      %v1886 = vmax.f32 %v1854, 0.0
      %v1887 = vmax.f32 %v1855, 0.0
      %v1888 = vmax.f32 %v1856, 0.0
      %v1889 = vmax.f32 %v1857, 0.0
      %v1890 = vmax.f32 %v1858, 0.0
      %v1891 = vmax.f32 %v1859, 0.0
      %v1892 = vmax.f32 %v1860, 0.0
      %v1893 = vmax.f32 %v1861, 0.0
      %v1894 = vmax.f32 %v1862, 0.0
      %v1895 = vmax.f32 %v1863, 0.0
      %v1896 = vmax.f32 %v1864, 0.0
      %v1897 = vmax.f32 %v1865, 0.0
      %v1898 = vmax.f32 %v1866, 0.0
      %v1899 = vmax.f32 %v1867, 0.0
      %v1900 = vmax.f32 %v1868, 0.0
      %v1901 = vmax.f32 %v1869, 0.0
      %v1902 = vmax.f32 %v1870, 0.0
      %v1903 = vmax.f32 %v1871, 0.0
      %v1904 = vmax.f32 %v1872, 0.0
      %v1905 = vmax.f32 %v1873, 0.0
      %v1906 = vmax.f32 %v1874, 0.0
      %vm1907 = vcmask 523264
      %1908 = vst.msk [vmem:[#allocation2] sm:$0xff] %vm1907, 0.0
      %1909 = vst.msk [vmem:[#allocation2 + $0x8] sm:$0xff] %vm1907, 0.0
      %1910 = vst.msk [vmem:[#allocation2 + $0x10] sm:$0xff] %vm1907, 0.0
      %1911 = vst.msk [vmem:[#allocation2 + $0x18] sm:$0xff] %vm1907, 0.0
      %1912 = vst.msk [vmem:[#allocation2 + $0xc0] sm:$0xff] %vm1907, 0.0
      %1913 = vst.msk [vmem:[#allocation2 + $0xc8] sm:$0xff] %vm1907, 0.0
      %1914 = vst.msk [vmem:[#allocation2 + $0xd0] sm:$0xff] %vm1907, 0.0
      %1915 = vst.msk [vmem:[#allocation2 + $0xd8] sm:$0xff] %vm1907, 0.0
      %1916 = vst.msk [vmem:[#allocation2 + $0xa0] sm:$0xff] %vm1907, 0.0
      %1917 = vst.msk [vmem:[#allocation2 + $0xa8] sm:$0xff] %vm1907, 0.0
      %1918 = vst.msk [vmem:[#allocation2 + $0xb0] sm:$0xff] %vm1907, 0.0
      %1919 = vst.msk [vmem:[#allocation2 + $0xb8] sm:$0xff] %vm1907, 0.0
      %1920 = vst.msk [vmem:[#allocation2 + $0x160] sm:$0xff] %vm1907, 0.0
      %1921 = vst.msk [vmem:[#allocation2 + $0x168] sm:$0xff] %vm1907, 0.0
      %1922 = vst.msk [vmem:[#allocation2 + $0x170] sm:$0xff] %vm1907, 0.0
      %1923 = vst.msk [vmem:[#allocation2 + $0x178] sm:$0xff] %vm1907, 0.0
      %1924 = vst.msk [vmem:[#allocation2 + $0x20] sm:$0xff] %vm1907, %v1875
      %1925 = vst.msk [vmem:[#allocation2 + $0x28] sm:$0xff] %vm1907, %v1876
      %1926 = vst.msk [vmem:[#allocation2 + $0x30] sm:$0xff] %vm1907, %v1877
      %1927 = vst.msk [vmem:[#allocation2 + $0x38] sm:$0xff] %vm1907, %v1878
      %1928 = vst.msk [vmem:[#allocation2 + $0x40] sm:$0xff] %vm1907, %v1879
      %1929 = vst.msk [vmem:[#allocation2 + $0x48] sm:$0xff] %vm1907, %v1880
      %1930 = vst.msk [vmem:[#allocation2 + $0x50] sm:$0xff] %vm1907, %v1881
      %1931 = vst.msk [vmem:[#allocation2 + $0x58] sm:$0xff] %vm1907, %v1882
      %1932 = vst.msk [vmem:[#allocation2 + $0x60] sm:$0xff] %vm1907, %v1883
      %1933 = vst.msk [vmem:[#allocation2 + $0x68] sm:$0xff] %vm1907, %v1884
      %1934 = vst.msk [vmem:[#allocation2 + $0x70] sm:$0xff] %vm1907, %v1885
      %1935 = vst.msk [vmem:[#allocation2 + $0x78] sm:$0xff] %vm1907, %v1886
      %1936 = vst.msk [vmem:[#allocation2 + $0x80] sm:$0xff] %vm1907, %v1887
      %1937 = vst.msk [vmem:[#allocation2 + $0x88] sm:$0xff] %vm1907, %v1888
      %1938 = vst.msk [vmem:[#allocation2 + $0x90] sm:$0xff] %vm1907, %v1889
      %1939 = vst.msk [vmem:[#allocation2 + $0x98] sm:$0xff] %vm1907, %v1890
      %1940 = vst.msk [vmem:[#allocation2 + $0xe0] sm:$0xff] %vm1907, %v1891
      %1941 = vst.msk [vmem:[#allocation2 + $0xe8] sm:$0xff] %vm1907, %v1892
      %1942 = vst.msk [vmem:[#allocation2 + $0xf0] sm:$0xff] %vm1907, %v1893
      %1943 = vst.msk [vmem:[#allocation2 + $0xf8] sm:$0xff] %vm1907, %v1894
      %1944 = vst.msk [vmem:[#allocation2 + $0x100] sm:$0xff] %vm1907, %v1895
      %1945 = vst.msk [vmem:[#allocation2 + $0x108] sm:$0xff] %vm1907, %v1896
      %1946 = vst.msk [vmem:[#allocation2 + $0x110] sm:$0xff] %vm1907, %v1897
      %1947 = vst.msk [vmem:[#allocation2 + $0x118] sm:$0xff] %vm1907, %v1898
      %1948 = vst.msk [vmem:[#allocation2 + $0x120] sm:$0xff] %vm1907, %v1899
      %1949 = vst.msk [vmem:[#allocation2 + $0x128] sm:$0xff] %vm1907, %v1900
      %1950 = vst.msk [vmem:[#allocation2 + $0x130] sm:$0xff] %vm1907, %v1901
      %1951 = vst.msk [vmem:[#allocation2 + $0x138] sm:$0xff] %vm1907, %v1902
      %1952 = vst.msk [vmem:[#allocation2 + $0x140] sm:$0xff] %vm1907, %v1903
      %1953 = vst.msk [vmem:[#allocation2 + $0x148] sm:$0xff] %vm1907, %v1904
      %1954 = vst.msk [vmem:[#allocation2 + $0x150] sm:$0xff] %vm1907, %v1905
      %1955 = vst.msk [vmem:[#allocation2 + $0x158] sm:$0xff] %vm1907, %v1906
      %v1956 = vld [vmem:[#allocation2] sm:$0xff]
      %v1957 = vld [vmem:[#allocation2 + $0x8] sm:$0xff]
      %v1958 = vld [vmem:[#allocation2 + $0x10] sm:$0xff]
      %v1959 = vld [vmem:[#allocation2 + $0x18] sm:$0xff]
      %v1960 = vld [vmem:[#allocation2 + $0x20] sm:$0xff]
      %v1961 = vld [vmem:[#allocation2 + $0x28] sm:$0xff]
      %v1962 = vld [vmem:[#allocation2 + $0x30] sm:$0xff]
      %v1963 = vld [vmem:[#allocation2 + $0x38] sm:$0xff]
      %v1964 = vld [vmem:[#allocation2 + $0x40] sm:$0xff]
      %v1965 = vld [vmem:[#allocation2 + $0x48] sm:$0xff]
      %v1966 = vld [vmem:[#allocation2 + $0x50] sm:$0xff]
      %v1967 = vld [vmem:[#allocation2 + $0x58] sm:$0xff]
      %v1968 = vld [vmem:[#allocation2 + $0x60] sm:$0xff]
      %v1969 = vld [vmem:[#allocation2 + $0x68] sm:$0xff]
      %v1970 = vld [vmem:[#allocation2 + $0x70] sm:$0xff]
      %v1971 = vld [vmem:[#allocation2 + $0x78] sm:$0xff]
      %v1972 = vld [vmem:[#allocation2 + $0xc0] sm:$0xff]
      %v1973 = vld [vmem:[#allocation2 + $0xc8] sm:$0xff]
      %v1974 = vld [vmem:[#allocation2 + $0xd0] sm:$0xff]
      %v1975 = vld [vmem:[#allocation2 + $0xd8] sm:$0xff]
      %v1976 = vld [vmem:[#allocation2 + $0xe0] sm:$0xff]
      %v1977 = vld [vmem:[#allocation2 + $0xe8] sm:$0xff]
      %v1978 = vld [vmem:[#allocation2 + $0xf0] sm:$0xff]
      %v1979 = vld [vmem:[#allocation2 + $0xf8] sm:$0xff]
      %v1980 = vld [vmem:[#allocation2 + $0x100] sm:$0xff]
      %v1981 = vld [vmem:[#allocation2 + $0x108] sm:$0xff]
      %v1982 = vld [vmem:[#allocation2 + $0x110] sm:$0xff]
      %v1983 = vld [vmem:[#allocation2 + $0x118] sm:$0xff]
      %v1984 = vld [vmem:[#allocation2 + $0x120] sm:$0xff]
      %v1985 = vld [vmem:[#allocation2 + $0x128] sm:$0xff]
      %v1986 = vld [vmem:[#allocation2 + $0x130] sm:$0xff]
      %v1987 = vld [vmem:[#allocation2 + $0x138] sm:$0xff]
      %v1988 = vpack.c.bf16 %v1957, %v1956
      %v1989 = vpack.c.bf16 %v1959, %v1958
      %v1990 = vpack.c.bf16 %v1961, %v1960
      %v1991 = vpack.c.bf16 %v1963, %v1962
      %v1992 = vpack.c.bf16 %v1965, %v1964
      %v1993 = vpack.c.bf16 %v1967, %v1966
      %v1994 = vpack.c.bf16 %v1969, %v1968
      %v1995 = vpack.c.bf16 %v1971, %v1970
      %v1996 = vpack.c.bf16 %v1973, %v1972
      %v1997 = vpack.c.bf16 %v1975, %v1974
      %v1998 = vpack.c.bf16 %v1977, %v1976
      %v1999 = vpack.c.bf16 %v1979, %v1978
      %v2000 = vpack.c.bf16 %v1981, %v1980
      %v2001 = vpack.c.bf16 %v1983, %v1982
      %v2002 = vpack.c.bf16 %v1985, %v1984
      %v2003 = vpack.c.bf16 %v1987, %v1986
      %v2004 = vld [vmem:[%s6] sm:$0xf]
      %v2005 = vld [vmem:[%s6 + $0x4] sm:$0xf]
      %v2006 = vld [vmem:[%s6 + $0x8] sm:$0xf]
      %v2007 = vld [vmem:[%s6 + $0xc] sm:$0xf]
      %v2008 = vld [vmem:[%s6 + $0x10] sm:$0xf]
      %v2009 = vld [vmem:[%s6 + $0x14] sm:$0xf]
      %v2010 = vld [vmem:[%s6 + $0x18] sm:$0xf]
      %v2011 = vld [vmem:[%s6 + $0x1c] sm:$0xf]
      %v2012 = vld [vmem:[#allocation2 + $0x80] sm:$0xff]
      %v2013 = vld [vmem:[#allocation2 + $0x140] sm:$0xff]
      %v2014 = vpack.c.bf16 %v1958, %v1957
      %v2015 = vpack.c.bf16 %v1960, %v1959
      %v2016 = vpack.c.bf16 %v1962, %v1961
      %v2017 = vpack.c.bf16 %v1964, %v1963
      %v2018 = vpack.c.bf16 %v1966, %v1965
      %v2019 = vpack.c.bf16 %v1968, %v1967
      %v2020 = vpack.c.bf16 %v1970, %v1969
      %v2021 = vpack.c.bf16 %v2012, %v1971
      %v2022 = vpack.c.bf16 %v1974, %v1973
      %v2023 = vpack.c.bf16 %v1976, %v1975
      %v2024 = vpack.c.bf16 %v1978, %v1977
      %v2025 = vpack.c.bf16 %v1980, %v1979
      %v2026 = vpack.c.bf16 %v1982, %v1981
      %v2027 = vpack.c.bf16 %v1984, %v1983
      %v2028 = vpack.c.bf16 %v1986, %v1985
      %v2029 = vpack.c.bf16 %v2013, %v1987
      %v2030 = vld [vmem:[%s6 + $0x20] sm:$0xf]
      %v2031 = vld [vmem:[%s6 + $0x24] sm:$0xf]
      %v2032 = vld [vmem:[%s6 + $0x28] sm:$0xf]
      %v2033 = vld [vmem:[%s6 + $0x2c] sm:$0xf]
      %v2034 = vld [vmem:[%s6 + $0x30] sm:$0xf]
      %v2035 = vld [vmem:[%s6 + $0x34] sm:$0xf]
      %v2036 = vld [vmem:[%s6 + $0x38] sm:$0xf]
      %v2037 = vld [vmem:[%s6 + $0x3c] sm:$0xf]
      %v2046 = vunpack.c.l.b16 %v2030
      %v2047 = vunpack.c.l.b16 %v2031
      %v2048 = vunpack.c.l.b16 %v2032
      %v2049 = vunpack.c.l.b16 %v2033
      %v2050 = vunpack.c.l.b16 %v2034
      %v2051 = vunpack.c.l.b16 %v2035
      %v2052 = vunpack.c.l.b16 %v2036
      %v2053 = vunpack.c.l.b16 %v2037
      %v2054 = vpack.c.b16 %v2047, %v2046
      %v2055 = vpack.c.b16 %v2049, %v2048
      %v2056 = vpack.c.b16 %v2051, %v2050
      %v2057 = vpack.c.b16 %v2053, %v2052
      %v2063 = vsel %vm1907, %v2014, 0
      %v2066 = vsel %vm1907, %v2015, 0
      %v2069 = vsel %vm1907, %v2016, 0
      %v2072 = vsel %vm1907, %v2017, 0
      %v2075 = vsel %vm1907, %v2018, 0
      %v2078 = vsel %vm1907, %v2019, 0
      %v2081 = vsel %vm1907, %v2020, 0
      %v2084 = vsel %vm1907, %v2021, 0
      %v2087 = vsel %vm1907, %v2022, 0
      %v2090 = vsel %vm1907, %v2023, 0
      %v2093 = vsel %vm1907, %v2024, 0
      %v2096 = vsel %vm1907, %v2025, 0
      %v2099 = vsel %vm1907, %v2026, 0
      %v2102 = vsel %vm1907, %v2027, 0
      %v2105 = vsel %vm1907, %v2028, 0
      %v2108 = vsel %vm1907, %v2029, 0
      %2110 = vmatpush.bf16.msra.mxu0 0
      %2111 = vmatpush.bf16.msra.mxu0 0
      %2112 = vmatpush.bf16.msra.mxu0 0
      %2113 = vmatpush.bf16.msra.mxu0 0
      %2114 = vmatpush.bf16.msra.mxu0 %v2057
      %2115 = vmatpush.bf16.msra.mxu0 %v2056
      %2116 = vmatpush.bf16.msra.mxu0 %v2055
      %2117 = vmatpush.bf16.msra.mxu0 %v2054
      %2118 = vmatmul.bf16.gmra.mxu0 %v2063
      %v2119 = vpop.f32.mrf.mxu0
      %v2120 = vadd.f32 0.0, %v2119
      %v2121 = vpop.f32.mrf.mxu0
      %v2122 = vadd.f32 0.0, %v2121
      %2123 = vmatmul.bf16.gmra.mxu0 %v2066
      %v2124 = vpop.f32.mrf.mxu0
      %v2125 = vadd.f32 0.0, %v2124
      %v2126 = vpop.f32.mrf.mxu0
      %v2127 = vadd.f32 0.0, %v2126
      %2128 = vmatmul.bf16.gmra.mxu0 %v2069
      %v2129 = vpop.f32.mrf.mxu0
      %v2130 = vadd.f32 0.0, %v2129
      %v2131 = vpop.f32.mrf.mxu0
      %v2132 = vadd.f32 0.0, %v2131
      %2133 = vmatmul.bf16.gmra.mxu0 %v2072
      %v2134 = vpop.f32.mrf.mxu0
      %v2135 = vadd.f32 0.0, %v2134
      %v2136 = vpop.f32.mrf.mxu0
      %v2137 = vadd.f32 0.0, %v2136
      %2138 = vmatmul.bf16.gmra.mxu0 %v2075
      %v2139 = vpop.f32.mrf.mxu0
      %v2140 = vadd.f32 0.0, %v2139
      %v2141 = vpop.f32.mrf.mxu0
      %v2142 = vadd.f32 0.0, %v2141
      %2143 = vmatmul.bf16.gmra.mxu0 %v2078
      %v2144 = vpop.f32.mrf.mxu0
      %v2145 = vadd.f32 0.0, %v2144
      %v2146 = vpop.f32.mrf.mxu0
      %v2147 = vadd.f32 0.0, %v2146
      %2148 = vmatmul.bf16.gmra.mxu0 %v2081
      %v2149 = vpop.f32.mrf.mxu0
      %v2150 = vadd.f32 0.0, %v2149
      %v2151 = vpop.f32.mrf.mxu0
      %v2152 = vadd.f32 0.0, %v2151
      %2153 = vmatmul.bf16.gmra.mxu0 %v2084
      %v2154 = vpop.f32.mrf.mxu0
      %v2155 = vadd.f32 0.0, %v2154
      %v2156 = vpop.f32.mrf.mxu0
      %v2157 = vadd.f32 0.0, %v2156
      %2158 = vmatmul.bf16.gmra.mxu0 %v2087
      %v2159 = vpop.f32.mrf.mxu0
      %v2160 = vadd.f32 0.0, %v2159
      %v2161 = vpop.f32.mrf.mxu0
      %v2162 = vadd.f32 0.0, %v2161
      %2163 = vmatmul.bf16.gmra.mxu0 %v2090
      %v2164 = vpop.f32.mrf.mxu0
      %v2165 = vadd.f32 0.0, %v2164
      %v2166 = vpop.f32.mrf.mxu0
      %v2167 = vadd.f32 0.0, %v2166
      %2168 = vmatmul.bf16.gmra.mxu0 %v2093
      %v2169 = vpop.f32.mrf.mxu0
      %v2170 = vadd.f32 0.0, %v2169
      %v2171 = vpop.f32.mrf.mxu0
      %v2172 = vadd.f32 0.0, %v2171
      %2173 = vmatmul.bf16.gmra.mxu0 %v2096
      %v2174 = vpop.f32.mrf.mxu0
      %v2175 = vadd.f32 0.0, %v2174
      %v2176 = vpop.f32.mrf.mxu0
      %v2177 = vadd.f32 0.0, %v2176
      %2178 = vmatmul.bf16.gmra.mxu0 %v2099
      %v2179 = vpop.f32.mrf.mxu0
      %v2180 = vadd.f32 0.0, %v2179
      %v2181 = vpop.f32.mrf.mxu0
      %v2182 = vadd.f32 0.0, %v2181
      %2183 = vmatmul.bf16.gmra.mxu0 %v2102
      %v2184 = vpop.f32.mrf.mxu0
      %v2185 = vadd.f32 0.0, %v2184
      %v2186 = vpop.f32.mrf.mxu0
      %v2187 = vadd.f32 0.0, %v2186
      %2188 = vmatmul.bf16.gmra.mxu0 %v2105
      %v2189 = vpop.f32.mrf.mxu0
      %v2190 = vadd.f32 0.0, %v2189
      %v2191 = vpop.f32.mrf.mxu0
      %v2192 = vadd.f32 0.0, %v2191
      %2193 = vmatmul.bf16.gmra.mxu0 %v2108
      %v2194 = vpop.f32.mrf.mxu0
      %v2195 = vadd.f32 0.0, %v2194
      %v2196 = vpop.f32.mrf.mxu0
      %v2197 = vadd.f32 0.0, %v2196
      %2198 = vdwg.mxu0
      %v2207 = vunpack.c.l.b16 %v2004
      %v2208 = vunpack.c.l.b16 %v2005
      %v2209 = vunpack.c.l.b16 %v2006
      %v2210 = vunpack.c.l.b16 %v2007
      %v2211 = vunpack.c.l.b16 %v2008
      %v2212 = vunpack.c.l.b16 %v2009
      %v2213 = vunpack.c.l.b16 %v2010
      %v2214 = vunpack.c.l.b16 %v2011
      %v2215 = vpack.c.b16 %v2208, %v2207
      %v2216 = vpack.c.b16 %v2210, %v2209
      %v2217 = vpack.c.b16 %v2212, %v2211
      %v2218 = vpack.c.b16 %v2214, %v2213
      %v2224 = vsel %vm1907, %v1988, 0
      %v2227 = vsel %vm1907, %v1989, 0
      %v2230 = vsel %vm1907, %v1990, 0
      %v2233 = vsel %vm1907, %v1991, 0
      %v2236 = vsel %vm1907, %v1992, 0
      %v2239 = vsel %vm1907, %v1993, 0
      %v2242 = vsel %vm1907, %v1994, 0
      %v2245 = vsel %vm1907, %v1995, 0
      %v2248 = vsel %vm1907, %v1996, 0
      %v2251 = vsel %vm1907, %v1997, 0
      %v2254 = vsel %vm1907, %v1998, 0
      %v2257 = vsel %vm1907, %v1999, 0
      %v2260 = vsel %vm1907, %v2000, 0
      %v2263 = vsel %vm1907, %v2001, 0
      %v2266 = vsel %vm1907, %v2002, 0
      %v2269 = vsel %vm1907, %v2003, 0
      %2271 = vmatpush.bf16.msra.mxu0 0
      %2272 = vmatpush.bf16.msra.mxu0 0
      %2273 = vmatpush.bf16.msra.mxu0 0
      %2274 = vmatpush.bf16.msra.mxu0 0
      %2275 = vmatpush.bf16.msra.mxu0 %v2218
      %2276 = vmatpush.bf16.msra.mxu0 %v2217
      %2277 = vmatpush.bf16.msra.mxu0 %v2216
      %2278 = vmatpush.bf16.msra.mxu0 %v2215
      %2279 = vmatmul.bf16.gmra.mxu0 %v2224
      %v2280 = vpop.f32.mrf.mxu0
      %v2281 = vadd.f32 %v2120, %v2280
      %v2282 = vpop.f32.mrf.mxu0
      %v2283 = vadd.f32 %v2122, %v2282
      %2284 = vmatmul.bf16.gmra.mxu0 %v2227
      %v2285 = vpop.f32.mrf.mxu0
      %v2286 = vadd.f32 %v2125, %v2285
      %v2287 = vpop.f32.mrf.mxu0
      %v2288 = vadd.f32 %v2127, %v2287
      %2289 = vmatmul.bf16.gmra.mxu0 %v2230
      %v2290 = vpop.f32.mrf.mxu0
      %v2291 = vadd.f32 %v2130, %v2290
      %v2292 = vpop.f32.mrf.mxu0
      %v2293 = vadd.f32 %v2132, %v2292
      %2294 = vmatmul.bf16.gmra.mxu0 %v2233
      %v2295 = vpop.f32.mrf.mxu0
      %v2296 = vadd.f32 %v2135, %v2295
      %v2297 = vpop.f32.mrf.mxu0
      %v2298 = vadd.f32 %v2137, %v2297
      %2299 = vmatmul.bf16.gmra.mxu0 %v2236
      %v2300 = vpop.f32.mrf.mxu0
      %v2301 = vadd.f32 %v2140, %v2300
      %v2302 = vpop.f32.mrf.mxu0
      %v2303 = vadd.f32 %v2142, %v2302
      %2304 = vmatmul.bf16.gmra.mxu0 %v2239
      %v2305 = vpop.f32.mrf.mxu0
      %v2306 = vadd.f32 %v2145, %v2305
      %v2307 = vpop.f32.mrf.mxu0
      %v2308 = vadd.f32 %v2147, %v2307
      %2309 = vmatmul.bf16.gmra.mxu0 %v2242
      %v2310 = vpop.f32.mrf.mxu0
      %v2311 = vadd.f32 %v2150, %v2310
      %v2312 = vpop.f32.mrf.mxu0
      %v2313 = vadd.f32 %v2152, %v2312
      %2314 = vmatmul.bf16.gmra.mxu0 %v2245
      %v2315 = vpop.f32.mrf.mxu0
      %v2316 = vadd.f32 %v2155, %v2315
      %v2317 = vpop.f32.mrf.mxu0
      %v2318 = vadd.f32 %v2157, %v2317
      %2319 = vmatmul.bf16.gmra.mxu0 %v2248
      %v2320 = vpop.f32.mrf.mxu0
      %v2321 = vadd.f32 %v2160, %v2320
      %v2322 = vpop.f32.mrf.mxu0
      %v2323 = vadd.f32 %v2162, %v2322
      %2324 = vmatmul.bf16.gmra.mxu0 %v2251
      %v2325 = vpop.f32.mrf.mxu0
      %v2326 = vadd.f32 %v2165, %v2325
      %v2327 = vpop.f32.mrf.mxu0
      %v2328 = vadd.f32 %v2167, %v2327
      %2329 = vmatmul.bf16.gmra.mxu0 %v2254
      %v2330 = vpop.f32.mrf.mxu0
      %v2331 = vadd.f32 %v2170, %v2330
      %v2332 = vpop.f32.mrf.mxu0
      %v2333 = vadd.f32 %v2172, %v2332
      %2334 = vmatmul.bf16.gmra.mxu0 %v2257
      %v2335 = vpop.f32.mrf.mxu0
      %v2336 = vadd.f32 %v2175, %v2335
      %v2337 = vpop.f32.mrf.mxu0
      %v2338 = vadd.f32 %v2177, %v2337
      %2339 = vmatmul.bf16.gmra.mxu0 %v2260
      %v2340 = vpop.f32.mrf.mxu0
      %v2341 = vadd.f32 %v2180, %v2340
      %v2342 = vpop.f32.mrf.mxu0
      %v2343 = vadd.f32 %v2182, %v2342
      %2344 = vmatmul.bf16.gmra.mxu0 %v2263
      %v2345 = vpop.f32.mrf.mxu0
      %v2346 = vadd.f32 %v2185, %v2345
      %v2347 = vpop.f32.mrf.mxu0
      %v2348 = vadd.f32 %v2187, %v2347
      %2349 = vmatmul.bf16.gmra.mxu0 %v2266
      %v2350 = vpop.f32.mrf.mxu0
      %v2351 = vadd.f32 %v2190, %v2350
      %v2352 = vpop.f32.mrf.mxu0
      %v2353 = vadd.f32 %v2192, %v2352
      %2354 = vmatmul.bf16.gmra.mxu0 %v2269
      %v2355 = vpop.f32.mrf.mxu0
      %v2356 = vadd.f32 %v2195, %v2355
      %v2357 = vpop.f32.mrf.mxu0
      %v2358 = vadd.f32 %v2197, %v2357
      %2359 = vdwg.mxu0
      %v2360 = vld [vmem:[#allocation2 + $0x10] sm:$0xff]
      %v2361 = vld [vmem:[#allocation2 + $0x18] sm:$0xff]
      %v2362 = vld [vmem:[#allocation2 + $0x20] sm:$0xff]
      %v2363 = vld [vmem:[#allocation2 + $0x28] sm:$0xff]
      %v2364 = vld [vmem:[#allocation2 + $0x30] sm:$0xff]
      %v2365 = vld [vmem:[#allocation2 + $0x38] sm:$0xff]
      %v2366 = vld [vmem:[#allocation2 + $0x40] sm:$0xff]
      %v2367 = vld [vmem:[#allocation2 + $0x48] sm:$0xff]
      %v2368 = vld [vmem:[#allocation2 + $0x50] sm:$0xff]
      %v2369 = vld [vmem:[#allocation2 + $0x58] sm:$0xff]
      %v2370 = vld [vmem:[#allocation2 + $0x60] sm:$0xff]
      %v2371 = vld [vmem:[#allocation2 + $0x68] sm:$0xff]
      %v2372 = vld [vmem:[#allocation2 + $0x70] sm:$0xff]
      %v2373 = vld [vmem:[#allocation2 + $0x78] sm:$0xff]
      %v2374 = vld [vmem:[#allocation2 + $0x80] sm:$0xff]
      %v2375 = vld [vmem:[#allocation2 + $0x88] sm:$0xff]
      %v2376 = vld [vmem:[#allocation2 + $0xd0] sm:$0xff]
      %v2377 = vld [vmem:[#allocation2 + $0xd8] sm:$0xff]
      %v2378 = vld [vmem:[#allocation2 + $0xe0] sm:$0xff]
      %v2379 = vld [vmem:[#allocation2 + $0xe8] sm:$0xff]
      %v2380 = vld [vmem:[#allocation2 + $0xf0] sm:$0xff]
      %v2381 = vld [vmem:[#allocation2 + $0xf8] sm:$0xff]
      %v2382 = vld [vmem:[#allocation2 + $0x100] sm:$0xff]
      %v2383 = vld [vmem:[#allocation2 + $0x108] sm:$0xff]
      %v2384 = vld [vmem:[#allocation2 + $0x110] sm:$0xff]
      %v2385 = vld [vmem:[#allocation2 + $0x118] sm:$0xff]
      %v2386 = vld [vmem:[#allocation2 + $0x120] sm:$0xff]
      %v2387 = vld [vmem:[#allocation2 + $0x128] sm:$0xff]
      %v2388 = vld [vmem:[#allocation2 + $0x130] sm:$0xff]
      %v2389 = vld [vmem:[#allocation2 + $0x138] sm:$0xff]
      %v2390 = vld [vmem:[#allocation2 + $0x140] sm:$0xff]
      %v2391 = vld [vmem:[#allocation2 + $0x148] sm:$0xff]
      %v2392 = vpack.c.bf16 %v2361, %v2360
      %v2393 = vpack.c.bf16 %v2363, %v2362
      %v2394 = vpack.c.bf16 %v2365, %v2364
      %v2395 = vpack.c.bf16 %v2367, %v2366
      %v2396 = vpack.c.bf16 %v2369, %v2368
      %v2397 = vpack.c.bf16 %v2371, %v2370
      %v2398 = vpack.c.bf16 %v2373, %v2372
      %v2399 = vpack.c.bf16 %v2375, %v2374
      %v2400 = vpack.c.bf16 %v2377, %v2376
      %v2401 = vpack.c.bf16 %v2379, %v2378
      %v2402 = vpack.c.bf16 %v2381, %v2380
      %v2403 = vpack.c.bf16 %v2383, %v2382
      %v2404 = vpack.c.bf16 %v2385, %v2384
      %v2405 = vpack.c.bf16 %v2387, %v2386
      %v2406 = vpack.c.bf16 %v2389, %v2388
      %v2407 = vpack.c.bf16 %v2391, %v2390
      %v2408 = vld [vmem:[%s6 + $0x40] sm:$0xf]
      %v2409 = vld [vmem:[%s6 + $0x44] sm:$0xf]
      %v2410 = vld [vmem:[%s6 + $0x48] sm:$0xf]
      %v2411 = vld [vmem:[%s6 + $0x4c] sm:$0xf]
      %v2412 = vld [vmem:[%s6 + $0x50] sm:$0xf]
      %v2413 = vld [vmem:[%s6 + $0x54] sm:$0xf]
      %v2414 = vld [vmem:[%s6 + $0x58] sm:$0xf]
      %v2415 = vld [vmem:[%s6 + $0x5c] sm:$0xf]
      %v2424 = vunpack.c.l.b16 %v2408
      %v2425 = vunpack.c.l.b16 %v2409
      %v2426 = vunpack.c.l.b16 %v2410
      %v2427 = vunpack.c.l.b16 %v2411
      %v2428 = vunpack.c.l.b16 %v2412
      %v2429 = vunpack.c.l.b16 %v2413
      %v2430 = vunpack.c.l.b16 %v2414
      %v2431 = vunpack.c.l.b16 %v2415
      %v2432 = vpack.c.b16 %v2425, %v2424
      %v2433 = vpack.c.b16 %v2427, %v2426
      %v2434 = vpack.c.b16 %v2429, %v2428
      %v2435 = vpack.c.b16 %v2431, %v2430
      %v2441 = vsel %vm1907, %v2392, 0
      %v2444 = vsel %vm1907, %v2393, 0
      %v2447 = vsel %vm1907, %v2394, 0
      %v2450 = vsel %vm1907, %v2395, 0
      %v2453 = vsel %vm1907, %v2396, 0
      %v2456 = vsel %vm1907, %v2397, 0
      %v2459 = vsel %vm1907, %v2398, 0
      %v2462 = vsel %vm1907, %v2399, 0
      %v2465 = vsel %vm1907, %v2400, 0
      %v2468 = vsel %vm1907, %v2401, 0
      %v2471 = vsel %vm1907, %v2402, 0
      %v2474 = vsel %vm1907, %v2403, 0
      %v2477 = vsel %vm1907, %v2404, 0
      %v2480 = vsel %vm1907, %v2405, 0
      %v2483 = vsel %vm1907, %v2406, 0
      %v2486 = vsel %vm1907, %v2407, 0
      %2488 = vmatpush.bf16.msra.mxu0 0
      %2489 = vmatpush.bf16.msra.mxu0 0
      %2490 = vmatpush.bf16.msra.mxu0 0
      %2491 = vmatpush.bf16.msra.mxu0 0
      %2492 = vmatpush.bf16.msra.mxu0 %v2435
      %2493 = vmatpush.bf16.msra.mxu0 %v2434
      %2494 = vmatpush.bf16.msra.mxu0 %v2433
      %2495 = vmatpush.bf16.msra.mxu0 %v2432
      %2496 = vmatmul.bf16.gmra.mxu0 %v2441
      %v2497 = vpop.f32.mrf.mxu0
      %v2498 = vadd.f32 0.0, %v2497
      %v2499 = vpop.f32.mrf.mxu0
      %v2500 = vadd.f32 0.0, %v2499
      %2501 = vmatmul.bf16.gmra.mxu0 %v2444
      %v2502 = vpop.f32.mrf.mxu0
      %v2503 = vadd.f32 0.0, %v2502
      %v2504 = vpop.f32.mrf.mxu0
      %v2505 = vadd.f32 0.0, %v2504
      %2506 = vmatmul.bf16.gmra.mxu0 %v2447
      %v2507 = vpop.f32.mrf.mxu0
      %v2508 = vadd.f32 0.0, %v2507
      %v2509 = vpop.f32.mrf.mxu0
      %v2510 = vadd.f32 0.0, %v2509
      %2511 = vmatmul.bf16.gmra.mxu0 %v2450
      %v2512 = vpop.f32.mrf.mxu0
      %v2513 = vadd.f32 0.0, %v2512
      %v2514 = vpop.f32.mrf.mxu0
      %v2515 = vadd.f32 0.0, %v2514
      %2516 = vmatmul.bf16.gmra.mxu0 %v2453
      %v2517 = vpop.f32.mrf.mxu0
      %v2518 = vadd.f32 0.0, %v2517
      %v2519 = vpop.f32.mrf.mxu0
      %v2520 = vadd.f32 0.0, %v2519
      %2521 = vmatmul.bf16.gmra.mxu0 %v2456
      %v2522 = vpop.f32.mrf.mxu0
      %v2523 = vadd.f32 0.0, %v2522
      %v2524 = vpop.f32.mrf.mxu0
      %v2525 = vadd.f32 0.0, %v2524
      %2526 = vmatmul.bf16.gmra.mxu0 %v2459
      %v2527 = vpop.f32.mrf.mxu0
      %v2528 = vadd.f32 0.0, %v2527
      %v2529 = vpop.f32.mrf.mxu0
      %v2530 = vadd.f32 0.0, %v2529
      %2531 = vmatmul.bf16.gmra.mxu0 %v2462
      %v2532 = vpop.f32.mrf.mxu0
      %v2533 = vadd.f32 0.0, %v2532
      %v2534 = vpop.f32.mrf.mxu0
      %v2535 = vadd.f32 0.0, %v2534
      %2536 = vmatmul.bf16.gmra.mxu0 %v2465
      %v2537 = vpop.f32.mrf.mxu0
      %v2538 = vadd.f32 0.0, %v2537
      %v2539 = vpop.f32.mrf.mxu0
      %v2540 = vadd.f32 0.0, %v2539
      %2541 = vmatmul.bf16.gmra.mxu0 %v2468
      %v2542 = vpop.f32.mrf.mxu0
      %v2543 = vadd.f32 0.0, %v2542
      %v2544 = vpop.f32.mrf.mxu0
      %v2545 = vadd.f32 0.0, %v2544
      %2546 = vmatmul.bf16.gmra.mxu0 %v2471
      %v2547 = vpop.f32.mrf.mxu0
      %v2548 = vadd.f32 0.0, %v2547
      %v2549 = vpop.f32.mrf.mxu0
      %v2550 = vadd.f32 0.0, %v2549
      %2551 = vmatmul.bf16.gmra.mxu0 %v2474
      %v2552 = vpop.f32.mrf.mxu0
      %v2553 = vadd.f32 0.0, %v2552
      %v2554 = vpop.f32.mrf.mxu0
      %v2555 = vadd.f32 0.0, %v2554
      %2556 = vmatmul.bf16.gmra.mxu0 %v2477
      %v2557 = vpop.f32.mrf.mxu0
      %v2558 = vadd.f32 0.0, %v2557
      %v2559 = vpop.f32.mrf.mxu0
      %v2560 = vadd.f32 0.0, %v2559
      %2561 = vmatmul.bf16.gmra.mxu0 %v2480
      %v2562 = vpop.f32.mrf.mxu0
      %v2563 = vadd.f32 0.0, %v2562
      %v2564 = vpop.f32.mrf.mxu0
      %v2565 = vadd.f32 0.0, %v2564
      %2566 = vmatmul.bf16.gmra.mxu0 %v2483
      %v2567 = vpop.f32.mrf.mxu0
      %v2568 = vadd.f32 0.0, %v2567
      %v2569 = vpop.f32.mrf.mxu0
      %v2570 = vadd.f32 0.0, %v2569
      %2571 = vmatmul.bf16.gmra.mxu0 %v2486
      %v2572 = vpop.f32.mrf.mxu0
      %v2573 = vadd.f32 0.0, %v2572
      %v2574 = vpop.f32.mrf.mxu0
      %v2575 = vadd.f32 0.0, %v2574
      %2576 = vdwg.mxu0
      %v2577 = vadd.f32 %v2281, %v2498
      %v2578 = vadd.f32 %v2283, %v2500
      %v2579 = vadd.f32 %v2286, %v2503
      %v2580 = vadd.f32 %v2288, %v2505
      %v2581 = vadd.f32 %v2291, %v2508
      %v2582 = vadd.f32 %v2293, %v2510
      %v2583 = vadd.f32 %v2296, %v2513
      %v2584 = vadd.f32 %v2298, %v2515
      %v2585 = vadd.f32 %v2301, %v2518
      %v2586 = vadd.f32 %v2303, %v2520
      %v2587 = vadd.f32 %v2306, %v2523
      %v2588 = vadd.f32 %v2308, %v2525
      %v2589 = vadd.f32 %v2311, %v2528
      %v2590 = vadd.f32 %v2313, %v2530
      %v2591 = vadd.f32 %v2316, %v2533
      %v2592 = vadd.f32 %v2318, %v2535
      %v2593 = vadd.f32 %v2321, %v2538
      %v2594 = vadd.f32 %v2323, %v2540
      %v2595 = vadd.f32 %v2326, %v2543
      %v2596 = vadd.f32 %v2328, %v2545
      %v2597 = vadd.f32 %v2331, %v2548
      %v2598 = vadd.f32 %v2333, %v2550
      %v2599 = vadd.f32 %v2336, %v2553
      %v2600 = vadd.f32 %v2338, %v2555
      %v2601 = vadd.f32 %v2341, %v2558
      %v2602 = vadd.f32 %v2343, %v2560
      %v2603 = vadd.f32 %v2346, %v2563
      %v2604 = vadd.f32 %v2348, %v2565
      %v2605 = vadd.f32 %v2351, %v2568
      %v2606 = vadd.f32 %v2353, %v2570
      %v2607 = vadd.f32 %v2356, %v2573
      %v2608 = vadd.f32 %v2358, %v2575
      %v2609 = vld [vmem:[#allocation2 + $0x18] sm:$0xff]
      %v2610 = vld [vmem:[#allocation2 + $0x20] sm:$0xff]
      %v2611 = vld [vmem:[#allocation2 + $0x28] sm:$0xff]
      %v2612 = vld [vmem:[#allocation2 + $0x30] sm:$0xff]
      %v2613 = vld [vmem:[#allocation2 + $0x38] sm:$0xff]
      %v2614 = vld [vmem:[#allocation2 + $0x40] sm:$0xff]
      %v2615 = vld [vmem:[#allocation2 + $0x48] sm:$0xff]
      %v2616 = vld [vmem:[#allocation2 + $0x50] sm:$0xff]
      %v2617 = vld [vmem:[#allocation2 + $0x58] sm:$0xff]
      %v2618 = vld [vmem:[#allocation2 + $0x60] sm:$0xff]
      %v2619 = vld [vmem:[#allocation2 + $0x68] sm:$0xff]
      %v2620 = vld [vmem:[#allocation2 + $0x70] sm:$0xff]
      %v2621 = vld [vmem:[#allocation2 + $0x78] sm:$0xff]
      %v2622 = vld [vmem:[#allocation2 + $0x80] sm:$0xff]
      %v2623 = vld [vmem:[#allocation2 + $0x88] sm:$0xff]
      %v2624 = vld [vmem:[#allocation2 + $0x90] sm:$0xff]
      %v2625 = vld [vmem:[#allocation2 + $0xd8] sm:$0xff]
      %v2626 = vld [vmem:[#allocation2 + $0xe0] sm:$0xff]
      %v2627 = vld [vmem:[#allocation2 + $0xe8] sm:$0xff]
      %v2628 = vld [vmem:[#allocation2 + $0xf0] sm:$0xff]
      %v2629 = vld [vmem:[#allocation2 + $0xf8] sm:$0xff]
      %v2630 = vld [vmem:[#allocation2 + $0x100] sm:$0xff]
      %v2631 = vld [vmem:[#allocation2 + $0x108] sm:$0xff]
      %v2632 = vld [vmem:[#allocation2 + $0x110] sm:$0xff]
      %v2633 = vld [vmem:[#allocation2 + $0x118] sm:$0xff]
      %v2634 = vld [vmem:[#allocation2 + $0x120] sm:$0xff]
      %v2635 = vld [vmem:[#allocation2 + $0x128] sm:$0xff]
      %v2636 = vld [vmem:[#allocation2 + $0x130] sm:$0xff]
      %v2637 = vld [vmem:[#allocation2 + $0x138] sm:$0xff]
      %v2638 = vld [vmem:[#allocation2 + $0x140] sm:$0xff]
      %v2639 = vld [vmem:[#allocation2 + $0x148] sm:$0xff]
      %v2640 = vld [vmem:[#allocation2 + $0x150] sm:$0xff]
      %v2641 = vpack.c.bf16 %v2610, %v2609
      %v2642 = vpack.c.bf16 %v2612, %v2611
      %v2643 = vpack.c.bf16 %v2614, %v2613
      %v2644 = vpack.c.bf16 %v2616, %v2615
      %v2645 = vpack.c.bf16 %v2618, %v2617
      %v2646 = vpack.c.bf16 %v2620, %v2619
      %v2647 = vpack.c.bf16 %v2622, %v2621
      %v2648 = vpack.c.bf16 %v2624, %v2623
      %v2649 = vpack.c.bf16 %v2626, %v2625
      %v2650 = vpack.c.bf16 %v2628, %v2627
      %v2651 = vpack.c.bf16 %v2630, %v2629
      %v2652 = vpack.c.bf16 %v2632, %v2631
      %v2653 = vpack.c.bf16 %v2634, %v2633
      %v2654 = vpack.c.bf16 %v2636, %v2635
      %v2655 = vpack.c.bf16 %v2638, %v2637
      %v2656 = vpack.c.bf16 %v2640, %v2639
      %v2657 = vld [vmem:[%s6 + $0x60] sm:$0xf]
      %v2658 = vld [vmem:[%s6 + $0x64] sm:$0xf]
      %v2659 = vld [vmem:[%s6 + $0x68] sm:$0xf]
      %v2660 = vld [vmem:[%s6 + $0x6c] sm:$0xf]
      %v2661 = vld [vmem:[%s6 + $0x70] sm:$0xf]
      %v2662 = vld [vmem:[%s6 + $0x74] sm:$0xf]
      %v2663 = vld [vmem:[%s6 + $0x78] sm:$0xf]
      %v2664 = vld [vmem:[%s6 + $0x7c] sm:$0xf]
      %v2673 = vunpack.c.l.b16 %v2657
      %v2674 = vunpack.c.l.b16 %v2658
      %v2675 = vunpack.c.l.b16 %v2659
      %v2676 = vunpack.c.l.b16 %v2660
      %v2677 = vunpack.c.l.b16 %v2661
      %v2678 = vunpack.c.l.b16 %v2662
      %v2679 = vunpack.c.l.b16 %v2663
      %v2680 = vunpack.c.l.b16 %v2664
      %v2681 = vpack.c.b16 %v2674, %v2673
      %v2682 = vpack.c.b16 %v2676, %v2675
      %v2683 = vpack.c.b16 %v2678, %v2677
      %v2684 = vpack.c.b16 %v2680, %v2679
      %v2690 = vsel %vm1907, %v2641, 0
      %v2693 = vsel %vm1907, %v2642, 0
      %v2696 = vsel %vm1907, %v2643, 0
      %v2699 = vsel %vm1907, %v2644, 0
      %v2702 = vsel %vm1907, %v2645, 0
      %v2705 = vsel %vm1907, %v2646, 0
      %v2708 = vsel %vm1907, %v2647, 0
      %v2711 = vsel %vm1907, %v2648, 0
      %v2714 = vsel %vm1907, %v2649, 0
      %v2717 = vsel %vm1907, %v2650, 0
      %v2720 = vsel %vm1907, %v2651, 0
      %v2723 = vsel %vm1907, %v2652, 0
      %v2726 = vsel %vm1907, %v2653, 0
      %v2729 = vsel %vm1907, %v2654, 0
      %v2732 = vsel %vm1907, %v2655, 0
      %v2735 = vsel %vm1907, %v2656, 0
      %2737 = vmatpush.bf16.msra.mxu0 0
      %2738 = vmatpush.bf16.msra.mxu0 0
      %2739 = vmatpush.bf16.msra.mxu0 0
      %2740 = vmatpush.bf16.msra.mxu0 0
      %2741 = vmatpush.bf16.msra.mxu0 %v2684
      %2742 = vmatpush.bf16.msra.mxu0 %v2683
      %2743 = vmatpush.bf16.msra.mxu0 %v2682
      %2744 = vmatpush.bf16.msra.mxu0 %v2681
      %2745 = vmatmul.bf16.gmra.mxu0 %v2690
      %v2746 = vpop.f32.mrf.mxu0
      %v2747 = vadd.f32 0.0, %v2746
      %v2748 = vpop.f32.mrf.mxu0
      %v2749 = vadd.f32 0.0, %v2748
      %2750 = vmatmul.bf16.gmra.mxu0 %v2693
      %v2751 = vpop.f32.mrf.mxu0
      %v2752 = vadd.f32 0.0, %v2751
      %v2753 = vpop.f32.mrf.mxu0
      %v2754 = vadd.f32 0.0, %v2753
      %2755 = vmatmul.bf16.gmra.mxu0 %v2696
      %v2756 = vpop.f32.mrf.mxu0
      %v2757 = vadd.f32 0.0, %v2756
      %v2758 = vpop.f32.mrf.mxu0
      %v2759 = vadd.f32 0.0, %v2758
      %2760 = vmatmul.bf16.gmra.mxu0 %v2699
      %v2761 = vpop.f32.mrf.mxu0
      %v2762 = vadd.f32 0.0, %v2761
      %v2763 = vpop.f32.mrf.mxu0
      %v2764 = vadd.f32 0.0, %v2763
      %2765 = vmatmul.bf16.gmra.mxu0 %v2702
      %v2766 = vpop.f32.mrf.mxu0
      %v2767 = vadd.f32 0.0, %v2766
      %v2768 = vpop.f32.mrf.mxu0
      %v2769 = vadd.f32 0.0, %v2768
      %2770 = vmatmul.bf16.gmra.mxu0 %v2705
      %v2771 = vpop.f32.mrf.mxu0
      %v2772 = vadd.f32 0.0, %v2771
      %v2773 = vpop.f32.mrf.mxu0
      %v2774 = vadd.f32 0.0, %v2773
      %2775 = vmatmul.bf16.gmra.mxu0 %v2708
      %v2776 = vpop.f32.mrf.mxu0
      %v2777 = vadd.f32 0.0, %v2776
      %v2778 = vpop.f32.mrf.mxu0
      %v2779 = vadd.f32 0.0, %v2778
      %2780 = vmatmul.bf16.gmra.mxu0 %v2711
      %v2781 = vpop.f32.mrf.mxu0
      %v2782 = vadd.f32 0.0, %v2781
      %v2783 = vpop.f32.mrf.mxu0
      %v2784 = vadd.f32 0.0, %v2783
      %2785 = vmatmul.bf16.gmra.mxu0 %v2714
      %v2786 = vpop.f32.mrf.mxu0
      %v2787 = vadd.f32 0.0, %v2786
      %v2788 = vpop.f32.mrf.mxu0
      %v2789 = vadd.f32 0.0, %v2788
      %2790 = vmatmul.bf16.gmra.mxu0 %v2717
      %v2791 = vpop.f32.mrf.mxu0
      %v2792 = vadd.f32 0.0, %v2791
      %v2793 = vpop.f32.mrf.mxu0
      %v2794 = vadd.f32 0.0, %v2793
      %2795 = vmatmul.bf16.gmra.mxu0 %v2720
      %v2796 = vpop.f32.mrf.mxu0
      %v2797 = vadd.f32 0.0, %v2796
      %v2798 = vpop.f32.mrf.mxu0
      %v2799 = vadd.f32 0.0, %v2798
      %2800 = vmatmul.bf16.gmra.mxu0 %v2723
      %v2801 = vpop.f32.mrf.mxu0
      %v2802 = vadd.f32 0.0, %v2801
      %v2803 = vpop.f32.mrf.mxu0
      %v2804 = vadd.f32 0.0, %v2803
      %2805 = vmatmul.bf16.gmra.mxu0 %v2726
      %v2806 = vpop.f32.mrf.mxu0
      %v2807 = vadd.f32 0.0, %v2806
      %v2808 = vpop.f32.mrf.mxu0
      %v2809 = vadd.f32 0.0, %v2808
      %2810 = vmatmul.bf16.gmra.mxu0 %v2729
      %v2811 = vpop.f32.mrf.mxu0
      %v2812 = vadd.f32 0.0, %v2811
      %v2813 = vpop.f32.mrf.mxu0
      %v2814 = vadd.f32 0.0, %v2813
      %2815 = vmatmul.bf16.gmra.mxu0 %v2732
      %v2816 = vpop.f32.mrf.mxu0
      %v2817 = vadd.f32 0.0, %v2816
      %v2818 = vpop.f32.mrf.mxu0
      %v2819 = vadd.f32 0.0, %v2818
      %2820 = vmatmul.bf16.gmra.mxu0 %v2735
      %v2821 = vpop.f32.mrf.mxu0
      %v2822 = vadd.f32 0.0, %v2821
      %v2823 = vpop.f32.mrf.mxu0
      %v2824 = vadd.f32 0.0, %v2823
      %2825 = vdwg.mxu0
      %v2826 = vadd.f32 %v2577, %v2747
      %v2827 = vadd.f32 %v2578, %v2749
      %v2828 = vadd.f32 %v2579, %v2752
      %v2829 = vadd.f32 %v2580, %v2754
      %v2830 = vadd.f32 %v2581, %v2757
      %v2831 = vadd.f32 %v2582, %v2759
      %v2832 = vadd.f32 %v2583, %v2762
      %v2833 = vadd.f32 %v2584, %v2764
      %v2834 = vadd.f32 %v2585, %v2767
      %v2835 = vadd.f32 %v2586, %v2769
      %v2836 = vadd.f32 %v2587, %v2772
      %v2837 = vadd.f32 %v2588, %v2774
      %v2838 = vadd.f32 %v2589, %v2777
      %v2839 = vadd.f32 %v2590, %v2779
      %v2840 = vadd.f32 %v2591, %v2782
      %v2841 = vadd.f32 %v2592, %v2784
      %v2842 = vadd.f32 %v2593, %v2787
      %v2843 = vadd.f32 %v2594, %v2789
      %v2844 = vadd.f32 %v2595, %v2792
      %v2845 = vadd.f32 %v2596, %v2794
      %v2846 = vadd.f32 %v2597, %v2797
      %v2847 = vadd.f32 %v2598, %v2799
      %v2848 = vadd.f32 %v2599, %v2802
      %v2849 = vadd.f32 %v2600, %v2804
      %v2850 = vadd.f32 %v2601, %v2807
      %v2851 = vadd.f32 %v2602, %v2809
      %v2852 = vadd.f32 %v2603, %v2812
      %v2853 = vadd.f32 %v2604, %v2814
      %v2854 = vadd.f32 %v2605, %v2817
      %v2855 = vadd.f32 %v2606, %v2819
      %v2856 = vadd.f32 %v2607, %v2822
      %v2857 = vadd.f32 %v2608, %v2824
      %v2858 = vld [vmem:[#allocation2 + $0x20] sm:$0xff]
      %v2859 = vld [vmem:[#allocation2 + $0x28] sm:$0xff]
      %v2860 = vld [vmem:[#allocation2 + $0x30] sm:$0xff]
      %v2861 = vld [vmem:[#allocation2 + $0x38] sm:$0xff]
      %v2862 = vld [vmem:[#allocation2 + $0x40] sm:$0xff]
      %v2863 = vld [vmem:[#allocation2 + $0x48] sm:$0xff]
      %v2864 = vld [vmem:[#allocation2 + $0x50] sm:$0xff]
      %v2865 = vld [vmem:[#allocation2 + $0x58] sm:$0xff]
      %v2866 = vld [vmem:[#allocation2 + $0x60] sm:$0xff]
      %v2867 = vld [vmem:[#allocation2 + $0x68] sm:$0xff]
      %v2868 = vld [vmem:[#allocation2 + $0x70] sm:$0xff]
      %v2869 = vld [vmem:[#allocation2 + $0x78] sm:$0xff]
      %v2870 = vld [vmem:[#allocation2 + $0x80] sm:$0xff]
      %v2871 = vld [vmem:[#allocation2 + $0x88] sm:$0xff]
      %v2872 = vld [vmem:[#allocation2 + $0x90] sm:$0xff]
      %v2873 = vld [vmem:[#allocation2 + $0x98] sm:$0xff]
      %v2874 = vld [vmem:[#allocation2 + $0xe0] sm:$0xff]
      %v2875 = vld [vmem:[#allocation2 + $0xe8] sm:$0xff]
      %v2876 = vld [vmem:[#allocation2 + $0xf0] sm:$0xff]
      %v2877 = vld [vmem:[#allocation2 + $0xf8] sm:$0xff]
      %v2878 = vld [vmem:[#allocation2 + $0x100] sm:$0xff]
      %v2879 = vld [vmem:[#allocation2 + $0x108] sm:$0xff]
      %v2880 = vld [vmem:[#allocation2 + $0x110] sm:$0xff]
      %v2881 = vld [vmem:[#allocation2 + $0x118] sm:$0xff]
      %v2882 = vld [vmem:[#allocation2 + $0x120] sm:$0xff]
      %v2883 = vld [vmem:[#allocation2 + $0x128] sm:$0xff]
      %v2884 = vld [vmem:[#allocation2 + $0x130] sm:$0xff]
      %v2885 = vld [vmem:[#allocation2 + $0x138] sm:$0xff]
      %v2886 = vld [vmem:[#allocation2 + $0x140] sm:$0xff]
      %v2887 = vld [vmem:[#allocation2 + $0x148] sm:$0xff]
      %v2888 = vld [vmem:[#allocation2 + $0x150] sm:$0xff]
      %v2889 = vld [vmem:[#allocation2 + $0x158] sm:$0xff]
      %v2890 = vpack.c.bf16 %v2859, %v2858
      %v2891 = vpack.c.bf16 %v2861, %v2860
      %v2892 = vpack.c.bf16 %v2863, %v2862
      %v2893 = vpack.c.bf16 %v2865, %v2864
      %v2894 = vpack.c.bf16 %v2867, %v2866
      %v2895 = vpack.c.bf16 %v2869, %v2868
      %v2896 = vpack.c.bf16 %v2871, %v2870
      %v2897 = vpack.c.bf16 %v2873, %v2872
      %v2898 = vpack.c.bf16 %v2875, %v2874
      %v2899 = vpack.c.bf16 %v2877, %v2876
      %v2900 = vpack.c.bf16 %v2879, %v2878
      %v2901 = vpack.c.bf16 %v2881, %v2880
      %v2902 = vpack.c.bf16 %v2883, %v2882
      %v2903 = vpack.c.bf16 %v2885, %v2884
      %v2904 = vpack.c.bf16 %v2887, %v2886
      %v2905 = vpack.c.bf16 %v2889, %v2888
      %v2906 = vld [vmem:[%s6 + $0x80] sm:$0xf]
      %v2907 = vld [vmem:[%s6 + $0x84] sm:$0xf]
      %v2908 = vld [vmem:[%s6 + $0x88] sm:$0xf]
      %v2909 = vld [vmem:[%s6 + $0x8c] sm:$0xf]
      %v2910 = vld [vmem:[%s6 + $0x90] sm:$0xf]
      %v2911 = vld [vmem:[%s6 + $0x94] sm:$0xf]
      %v2912 = vld [vmem:[%s6 + $0x98] sm:$0xf]
      %v2913 = vld [vmem:[%s6 + $0x9c] sm:$0xf]
      %v2922 = vunpack.c.l.b16 %v2906
      %v2923 = vunpack.c.l.b16 %v2907
      %v2924 = vunpack.c.l.b16 %v2908
      %v2925 = vunpack.c.l.b16 %v2909
      %v2926 = vunpack.c.l.b16 %v2910
      %v2927 = vunpack.c.l.b16 %v2911
      %v2928 = vunpack.c.l.b16 %v2912
      %v2929 = vunpack.c.l.b16 %v2913
      %v2930 = vpack.c.b16 %v2923, %v2922
      %v2931 = vpack.c.b16 %v2925, %v2924
      %v2932 = vpack.c.b16 %v2927, %v2926
      %v2933 = vpack.c.b16 %v2929, %v2928
      %v2939 = vsel %vm1907, %v2890, 0
      %v2942 = vsel %vm1907, %v2891, 0
      %v2945 = vsel %vm1907, %v2892, 0
      %v2948 = vsel %vm1907, %v2893, 0
      %v2951 = vsel %vm1907, %v2894, 0
      %v2954 = vsel %vm1907, %v2895, 0
      %v2957 = vsel %vm1907, %v2896, 0
      %v2960 = vsel %vm1907, %v2897, 0
      %v2963 = vsel %vm1907, %v2898, 0
      %v2966 = vsel %vm1907, %v2899, 0
      %v2969 = vsel %vm1907, %v2900, 0
      %v2972 = vsel %vm1907, %v2901, 0
      %v2975 = vsel %vm1907, %v2902, 0
      %v2978 = vsel %vm1907, %v2903, 0
      %v2981 = vsel %vm1907, %v2904, 0
      %v2984 = vsel %vm1907, %v2905, 0
      %2986 = vmatpush.bf16.msra.mxu0 0
      %2987 = vmatpush.bf16.msra.mxu0 0
      %2988 = vmatpush.bf16.msra.mxu0 0
      %2989 = vmatpush.bf16.msra.mxu0 0
      %2990 = vmatpush.bf16.msra.mxu0 %v2933
      %2991 = vmatpush.bf16.msra.mxu0 %v2932
      %2992 = vmatpush.bf16.msra.mxu0 %v2931
      %2993 = vmatpush.bf16.msra.mxu0 %v2930
      %2994 = vmatmul.bf16.gmra.mxu0 %v2939
      %v2995 = vpop.f32.mrf.mxu0
      %v2996 = vadd.f32 0.0, %v2995
      %v2997 = vpop.f32.mrf.mxu0
      %v2998 = vadd.f32 0.0, %v2997
      %2999 = vmatmul.bf16.gmra.mxu0 %v2942
      %v3000 = vpop.f32.mrf.mxu0
      %v3001 = vadd.f32 0.0, %v3000
      %v3002 = vpop.f32.mrf.mxu0
      %v3003 = vadd.f32 0.0, %v3002
      %3004 = vmatmul.bf16.gmra.mxu0 %v2945
      %v3005 = vpop.f32.mrf.mxu0
      %v3006 = vadd.f32 0.0, %v3005
      %v3007 = vpop.f32.mrf.mxu0
      %v3008 = vadd.f32 0.0, %v3007
      %3009 = vmatmul.bf16.gmra.mxu0 %v2948
      %v3010 = vpop.f32.mrf.mxu0
      %v3011 = vadd.f32 0.0, %v3010
      %v3012 = vpop.f32.mrf.mxu0
      %v3013 = vadd.f32 0.0, %v3012
      %3014 = vmatmul.bf16.gmra.mxu0 %v2951
      %v3015 = vpop.f32.mrf.mxu0
      %v3016 = vadd.f32 0.0, %v3015
      %v3017 = vpop.f32.mrf.mxu0
      %v3018 = vadd.f32 0.0, %v3017
      %3019 = vmatmul.bf16.gmra.mxu0 %v2954
      %v3020 = vpop.f32.mrf.mxu0
      %v3021 = vadd.f32 0.0, %v3020
      %v3022 = vpop.f32.mrf.mxu0
      %v3023 = vadd.f32 0.0, %v3022
      %3024 = vmatmul.bf16.gmra.mxu0 %v2957
      %v3025 = vpop.f32.mrf.mxu0
      %v3026 = vadd.f32 0.0, %v3025
      %v3027 = vpop.f32.mrf.mxu0
      %v3028 = vadd.f32 0.0, %v3027
      %3029 = vmatmul.bf16.gmra.mxu0 %v2960
      %v3030 = vpop.f32.mrf.mxu0
      %v3031 = vadd.f32 0.0, %v3030
      %v3032 = vpop.f32.mrf.mxu0
      %v3033 = vadd.f32 0.0, %v3032
      %3034 = vmatmul.bf16.gmra.mxu0 %v2963
      %v3035 = vpop.f32.mrf.mxu0
      %v3036 = vadd.f32 0.0, %v3035
      %v3037 = vpop.f32.mrf.mxu0
      %v3038 = vadd.f32 0.0, %v3037
      %3039 = vmatmul.bf16.gmra.mxu0 %v2966
      %v3040 = vpop.f32.mrf.mxu0
      %v3041 = vadd.f32 0.0, %v3040
      %v3042 = vpop.f32.mrf.mxu0
      %v3043 = vadd.f32 0.0, %v3042
      %3044 = vmatmul.bf16.gmra.mxu0 %v2969
      %v3045 = vpop.f32.mrf.mxu0
      %v3046 = vadd.f32 0.0, %v3045
      %v3047 = vpop.f32.mrf.mxu0
      %v3048 = vadd.f32 0.0, %v3047
      %3049 = vmatmul.bf16.gmra.mxu0 %v2972
      %v3050 = vpop.f32.mrf.mxu0
      %v3051 = vadd.f32 0.0, %v3050
      %v3052 = vpop.f32.mrf.mxu0
      %v3053 = vadd.f32 0.0, %v3052
      %3054 = vmatmul.bf16.gmra.mxu0 %v2975
      %v3055 = vpop.f32.mrf.mxu0
      %v3056 = vadd.f32 0.0, %v3055
      %v3057 = vpop.f32.mrf.mxu0
      %v3058 = vadd.f32 0.0, %v3057
      %3059 = vmatmul.bf16.gmra.mxu0 %v2978
      %v3060 = vpop.f32.mrf.mxu0
      %v3061 = vadd.f32 0.0, %v3060
      %v3062 = vpop.f32.mrf.mxu0
      %v3063 = vadd.f32 0.0, %v3062
      %3064 = vmatmul.bf16.gmra.mxu0 %v2981
      %v3065 = vpop.f32.mrf.mxu0
      %v3066 = vadd.f32 0.0, %v3065
      %v3067 = vpop.f32.mrf.mxu0
      %v3068 = vadd.f32 0.0, %v3067
      %3069 = vmatmul.bf16.gmra.mxu0 %v2984
      %v3070 = vpop.f32.mrf.mxu0
      %v3071 = vadd.f32 0.0, %v3070
      %v3072 = vpop.f32.mrf.mxu0
      %v3073 = vadd.f32 0.0, %v3072
      %3074 = vdwg.mxu0
      %v3075 = vadd.f32 %v2826, %v2996
      %v3076 = vadd.f32 %v2827, %v2998
      %v3077 = vadd.f32 %v2828, %v3001
      %v3078 = vadd.f32 %v2829, %v3003
      %v3079 = vadd.f32 %v2830, %v3006
      %v3080 = vadd.f32 %v2831, %v3008
      %v3081 = vadd.f32 %v2832, %v3011
      %v3082 = vadd.f32 %v2833, %v3013
      %v3083 = vadd.f32 %v2834, %v3016
      %v3084 = vadd.f32 %v2835, %v3018
      %v3085 = vadd.f32 %v2836, %v3021
      %v3086 = vadd.f32 %v2837, %v3023
      %v3087 = vadd.f32 %v2838, %v3026
      %v3088 = vadd.f32 %v2839, %v3028
      %v3089 = vadd.f32 %v2840, %v3031
      %v3090 = vadd.f32 %v2841, %v3033
      %v3091 = vadd.f32 %v2842, %v3036
      %v3092 = vadd.f32 %v2843, %v3038
      %v3093 = vadd.f32 %v2844, %v3041
      %v3094 = vadd.f32 %v2845, %v3043
      %v3095 = vadd.f32 %v2846, %v3046
      %v3096 = vadd.f32 %v2847, %v3048
      %v3097 = vadd.f32 %v2848, %v3051
      %v3098 = vadd.f32 %v2849, %v3053
      %v3099 = vadd.f32 %v2850, %v3056
      %v3100 = vadd.f32 %v2851, %v3058
      %v3101 = vadd.f32 %v2852, %v3061
      %v3102 = vadd.f32 %v2853, %v3063
      %v3103 = vadd.f32 %v2854, %v3066
      %v3104 = vadd.f32 %v2855, %v3068
      %v3105 = vadd.f32 %v2856, %v3071
      %v3106 = vadd.f32 %v2857, %v3073
      %v3107 = vld [vmem:[#allocation2 + $0x28] sm:$0xff]
      %v3108 = vld [vmem:[#allocation2 + $0x30] sm:$0xff]
      %v3109 = vld [vmem:[#allocation2 + $0x38] sm:$0xff]
      %v3110 = vld [vmem:[#allocation2 + $0x40] sm:$0xff]
      %v3111 = vld [vmem:[#allocation2 + $0x48] sm:$0xff]
      %v3112 = vld [vmem:[#allocation2 + $0x50] sm:$0xff]
      %v3113 = vld [vmem:[#allocation2 + $0x58] sm:$0xff]
      %v3114 = vld [vmem:[#allocation2 + $0x60] sm:$0xff]
      %v3115 = vld [vmem:[#allocation2 + $0x68] sm:$0xff]
      %v3116 = vld [vmem:[#allocation2 + $0x70] sm:$0xff]
      %v3117 = vld [vmem:[#allocation2 + $0x78] sm:$0xff]
      %v3118 = vld [vmem:[#allocation2 + $0x80] sm:$0xff]
      %v3119 = vld [vmem:[#allocation2 + $0x88] sm:$0xff]
      %v3120 = vld [vmem:[#allocation2 + $0x90] sm:$0xff]
      %v3121 = vld [vmem:[#allocation2 + $0x98] sm:$0xff]
      %v3122 = vld [vmem:[#allocation2 + $0xa0] sm:$0xff]
      %v3123 = vld [vmem:[#allocation2 + $0xe8] sm:$0xff]
      %v3124 = vld [vmem:[#allocation2 + $0xf0] sm:$0xff]
      %v3125 = vld [vmem:[#allocation2 + $0xf8] sm:$0xff]
      %v3126 = vld [vmem:[#allocation2 + $0x100] sm:$0xff]
      %v3127 = vld [vmem:[#allocation2 + $0x108] sm:$0xff]
      %v3128 = vld [vmem:[#allocation2 + $0x110] sm:$0xff]
      %v3129 = vld [vmem:[#allocation2 + $0x118] sm:$0xff]
      %v3130 = vld [vmem:[#allocation2 + $0x120] sm:$0xff]
      %v3131 = vld [vmem:[#allocation2 + $0x128] sm:$0xff]
      %v3132 = vld [vmem:[#allocation2 + $0x130] sm:$0xff]
      %v3133 = vld [vmem:[#allocation2 + $0x138] sm:$0xff]
      %v3134 = vld [vmem:[#allocation2 + $0x140] sm:$0xff]
      %v3135 = vld [vmem:[#allocation2 + $0x148] sm:$0xff]
      %v3136 = vld [vmem:[#allocation2 + $0x150] sm:$0xff]
      %v3137 = vld [vmem:[#allocation2 + $0x158] sm:$0xff]
      %v3138 = vld [vmem:[#allocation2 + $0x160] sm:$0xff]
      %v3139 = vpack.c.bf16 %v3108, %v3107
      %v3140 = vpack.c.bf16 %v3110, %v3109
      %v3141 = vpack.c.bf16 %v3112, %v3111
      %v3142 = vpack.c.bf16 %v3114, %v3113
      %v3143 = vpack.c.bf16 %v3116, %v3115
      %v3144 = vpack.c.bf16 %v3118, %v3117
      %v3145 = vpack.c.bf16 %v3120, %v3119
      %v3146 = vpack.c.bf16 %v3122, %v3121
      %v3147 = vpack.c.bf16 %v3124, %v3123
      %v3148 = vpack.c.bf16 %v3126, %v3125
      %v3149 = vpack.c.bf16 %v3128, %v3127
      %v3150 = vpack.c.bf16 %v3130, %v3129
      %v3151 = vpack.c.bf16 %v3132, %v3131
      %v3152 = vpack.c.bf16 %v3134, %v3133
      %v3153 = vpack.c.bf16 %v3136, %v3135
      %v3154 = vpack.c.bf16 %v3138, %v3137
      %v3155 = vld [vmem:[%s6 + $0xa0] sm:$0xf]
      %v3156 = vld [vmem:[%s6 + $0xa4] sm:$0xf]
      %v3157 = vld [vmem:[%s6 + $0xa8] sm:$0xf]
      %v3158 = vld [vmem:[%s6 + $0xac] sm:$0xf]
      %v3159 = vld [vmem:[%s6 + $0xb0] sm:$0xf]
      %v3160 = vld [vmem:[%s6 + $0xb4] sm:$0xf]
      %v3161 = vld [vmem:[%s6 + $0xb8] sm:$0xf]
      %v3162 = vld [vmem:[%s6 + $0xbc] sm:$0xf]
      %v3171 = vunpack.c.l.b16 %v3155
      %v3172 = vunpack.c.l.b16 %v3156
      %v3173 = vunpack.c.l.b16 %v3157
      %v3174 = vunpack.c.l.b16 %v3158
      %v3175 = vunpack.c.l.b16 %v3159
      %v3176 = vunpack.c.l.b16 %v3160
      %v3177 = vunpack.c.l.b16 %v3161
      %v3178 = vunpack.c.l.b16 %v3162
      %v3179 = vpack.c.b16 %v3172, %v3171
      %v3180 = vpack.c.b16 %v3174, %v3173
      %v3181 = vpack.c.b16 %v3176, %v3175
      %v3182 = vpack.c.b16 %v3178, %v3177
      %v3188 = vsel %vm1907, %v3139, 0
      %v3191 = vsel %vm1907, %v3140, 0
      %v3194 = vsel %vm1907, %v3141, 0
      %v3197 = vsel %vm1907, %v3142, 0
      %v3200 = vsel %vm1907, %v3143, 0
      %v3203 = vsel %vm1907, %v3144, 0
      %v3206 = vsel %vm1907, %v3145, 0
      %v3209 = vsel %vm1907, %v3146, 0
      %v3212 = vsel %vm1907, %v3147, 0
      %v3215 = vsel %vm1907, %v3148, 0
      %v3218 = vsel %vm1907, %v3149, 0
      %v3221 = vsel %vm1907, %v3150, 0
      %v3224 = vsel %vm1907, %v3151, 0
      %v3227 = vsel %vm1907, %v3152, 0
      %v3230 = vsel %vm1907, %v3153, 0
      %v3233 = vsel %vm1907, %v3154, 0
      %3235 = vmatpush.bf16.msra.mxu0 0
      %3236 = vmatpush.bf16.msra.mxu0 0
      %3237 = vmatpush.bf16.msra.mxu0 0
      %3238 = vmatpush.bf16.msra.mxu0 0
      %3239 = vmatpush.bf16.msra.mxu0 %v3182
      %3240 = vmatpush.bf16.msra.mxu0 %v3181
      %3241 = vmatpush.bf16.msra.mxu0 %v3180
      %3242 = vmatpush.bf16.msra.mxu0 %v3179
      %3243 = vmatmul.bf16.gmra.mxu0 %v3188
      %v3244 = vpop.f32.mrf.mxu0
      %v3245 = vadd.f32 0.0, %v3244
      %v3246 = vpop.f32.mrf.mxu0
      %v3247 = vadd.f32 0.0, %v3246
      %3248 = vmatmul.bf16.gmra.mxu0 %v3191
      %v3249 = vpop.f32.mrf.mxu0
      %v3250 = vadd.f32 0.0, %v3249
      %v3251 = vpop.f32.mrf.mxu0
      %v3252 = vadd.f32 0.0, %v3251
      %3253 = vmatmul.bf16.gmra.mxu0 %v3194
      %v3254 = vpop.f32.mrf.mxu0
      %v3255 = vadd.f32 0.0, %v3254
      %v3256 = vpop.f32.mrf.mxu0
      %v3257 = vadd.f32 0.0, %v3256
      %3258 = vmatmul.bf16.gmra.mxu0 %v3197
      %v3259 = vpop.f32.mrf.mxu0
      %v3260 = vadd.f32 0.0, %v3259
      %v3261 = vpop.f32.mrf.mxu0
      %v3262 = vadd.f32 0.0, %v3261
      %3263 = vmatmul.bf16.gmra.mxu0 %v3200
      %v3264 = vpop.f32.mrf.mxu0
      %v3265 = vadd.f32 0.0, %v3264
      %v3266 = vpop.f32.mrf.mxu0
      %v3267 = vadd.f32 0.0, %v3266
      %3268 = vmatmul.bf16.gmra.mxu0 %v3203
      %v3269 = vpop.f32.mrf.mxu0
      %v3270 = vadd.f32 0.0, %v3269
      %v3271 = vpop.f32.mrf.mxu0
      %v3272 = vadd.f32 0.0, %v3271
      %3273 = vmatmul.bf16.gmra.mxu0 %v3206
      %v3274 = vpop.f32.mrf.mxu0
      %v3275 = vadd.f32 0.0, %v3274
      %v3276 = vpop.f32.mrf.mxu0
      %v3277 = vadd.f32 0.0, %v3276
      %3278 = vmatmul.bf16.gmra.mxu0 %v3209
      %v3279 = vpop.f32.mrf.mxu0
      %v3280 = vadd.f32 0.0, %v3279
      %v3281 = vpop.f32.mrf.mxu0
      %v3282 = vadd.f32 0.0, %v3281
      %3283 = vmatmul.bf16.gmra.mxu0 %v3212
      %v3284 = vpop.f32.mrf.mxu0
      %v3285 = vadd.f32 0.0, %v3284
      %v3286 = vpop.f32.mrf.mxu0
      %v3287 = vadd.f32 0.0, %v3286
      %3288 = vmatmul.bf16.gmra.mxu0 %v3215
      %v3289 = vpop.f32.mrf.mxu0
      %v3290 = vadd.f32 0.0, %v3289
      %v3291 = vpop.f32.mrf.mxu0
      %v3292 = vadd.f32 0.0, %v3291
      %3293 = vmatmul.bf16.gmra.mxu0 %v3218
      %v3294 = vpop.f32.mrf.mxu0
      %v3295 = vadd.f32 0.0, %v3294
      %v3296 = vpop.f32.mrf.mxu0
      %v3297 = vadd.f32 0.0, %v3296
      %3298 = vmatmul.bf16.gmra.mxu0 %v3221
      %v3299 = vpop.f32.mrf.mxu0
      %v3300 = vadd.f32 0.0, %v3299
      %v3301 = vpop.f32.mrf.mxu0
      %v3302 = vadd.f32 0.0, %v3301
      %3303 = vmatmul.bf16.gmra.mxu0 %v3224
      %v3304 = vpop.f32.mrf.mxu0
      %v3305 = vadd.f32 0.0, %v3304
      %v3306 = vpop.f32.mrf.mxu0
      %v3307 = vadd.f32 0.0, %v3306
      %3308 = vmatmul.bf16.gmra.mxu0 %v3227
      %v3309 = vpop.f32.mrf.mxu0
      %v3310 = vadd.f32 0.0, %v3309
      %v3311 = vpop.f32.mrf.mxu0
      %v3312 = vadd.f32 0.0, %v3311
      %3313 = vmatmul.bf16.gmra.mxu0 %v3230
      %v3314 = vpop.f32.mrf.mxu0
      %v3315 = vadd.f32 0.0, %v3314
      %v3316 = vpop.f32.mrf.mxu0
      %v3317 = vadd.f32 0.0, %v3316
      %3318 = vmatmul.bf16.gmra.mxu0 %v3233
      %v3319 = vpop.f32.mrf.mxu0
      %v3320 = vadd.f32 0.0, %v3319
      %v3321 = vpop.f32.mrf.mxu0
      %v3322 = vadd.f32 0.0, %v3321
      %3323 = vdwg.mxu0
      %v3324 = vadd.f32 %v3075, %v3245
      %v3325 = vadd.f32 %v3076, %v3247
      %v3326 = vadd.f32 %v3077, %v3250
      %v3327 = vadd.f32 %v3078, %v3252
      %v3328 = vadd.f32 %v3079, %v3255
      %v3329 = vadd.f32 %v3080, %v3257
      %v3330 = vadd.f32 %v3081, %v3260
      %v3331 = vadd.f32 %v3082, %v3262
      %v3332 = vadd.f32 %v3083, %v3265
      %v3333 = vadd.f32 %v3084, %v3267
      %v3334 = vadd.f32 %v3085, %v3270
      %v3335 = vadd.f32 %v3086, %v3272
      %v3336 = vadd.f32 %v3087, %v3275
      %v3337 = vadd.f32 %v3088, %v3277
      %v3338 = vadd.f32 %v3089, %v3280
      %v3339 = vadd.f32 %v3090, %v3282
      %v3340 = vadd.f32 %v3091, %v3285
      %v3341 = vadd.f32 %v3092, %v3287
      %v3342 = vadd.f32 %v3093, %v3290
      %v3343 = vadd.f32 %v3094, %v3292
      %v3344 = vadd.f32 %v3095, %v3295
      %v3345 = vadd.f32 %v3096, %v3297
      %v3346 = vadd.f32 %v3097, %v3300
      %v3347 = vadd.f32 %v3098, %v3302
      %v3348 = vadd.f32 %v3099, %v3305
      %v3349 = vadd.f32 %v3100, %v3307
      %v3350 = vadd.f32 %v3101, %v3310
      %v3351 = vadd.f32 %v3102, %v3312
      %v3352 = vadd.f32 %v3103, %v3315
      %v3353 = vadd.f32 %v3104, %v3317
      %v3354 = vadd.f32 %v3105, %v3320
      %v3355 = vadd.f32 %v3106, %v3322
      %v3356 = vld [vmem:[#allocation2 + $0x30] sm:$0xff]
      %v3357 = vld [vmem:[#allocation2 + $0x38] sm:$0xff]
      %v3358 = vld [vmem:[#allocation2 + $0x40] sm:$0xff]
      %v3359 = vld [vmem:[#allocation2 + $0x48] sm:$0xff]
      %v3360 = vld [vmem:[#allocation2 + $0x50] sm:$0xff]
      %v3361 = vld [vmem:[#allocation2 + $0x58] sm:$0xff]
      %v3362 = vld [vmem:[#allocation2 + $0x60] sm:$0xff]
      %v3363 = vld [vmem:[#allocation2 + $0x68] sm:$0xff]
      %v3364 = vld [vmem:[#allocation2 + $0x70] sm:$0xff]
      %v3365 = vld [vmem:[#allocation2 + $0x78] sm:$0xff]
      %v3366 = vld [vmem:[#allocation2 + $0x80] sm:$0xff]
      %v3367 = vld [vmem:[#allocation2 + $0x88] sm:$0xff]
      %v3368 = vld [vmem:[#allocation2 + $0x90] sm:$0xff]
      %v3369 = vld [vmem:[#allocation2 + $0x98] sm:$0xff]
      %v3370 = vld [vmem:[#allocation2 + $0xa0] sm:$0xff]
      %v3371 = vld [vmem:[#allocation2 + $0xa8] sm:$0xff]
      %v3372 = vld [vmem:[#allocation2 + $0xf0] sm:$0xff]
      %v3373 = vld [vmem:[#allocation2 + $0xf8] sm:$0xff]
      %v3374 = vld [vmem:[#allocation2 + $0x100] sm:$0xff]
      %v3375 = vld [vmem:[#allocation2 + $0x108] sm:$0xff]
      %v3376 = vld [vmem:[#allocation2 + $0x110] sm:$0xff]
      %v3377 = vld [vmem:[#allocation2 + $0x118] sm:$0xff]
      %v3378 = vld [vmem:[#allocation2 + $0x120] sm:$0xff]
      %v3379 = vld [vmem:[#allocation2 + $0x128] sm:$0xff]
      %v3380 = vld [vmem:[#allocation2 + $0x130] sm:$0xff]
      %v3381 = vld [vmem:[#allocation2 + $0x138] sm:$0xff]
      %v3382 = vld [vmem:[#allocation2 + $0x140] sm:$0xff]
      %v3383 = vld [vmem:[#allocation2 + $0x148] sm:$0xff]
      %v3384 = vld [vmem:[#allocation2 + $0x150] sm:$0xff]
      %v3385 = vld [vmem:[#allocation2 + $0x158] sm:$0xff]
      %v3386 = vld [vmem:[#allocation2 + $0x160] sm:$0xff]
      %v3387 = vld [vmem:[#allocation2 + $0x168] sm:$0xff]
      %v3388 = vpack.c.bf16 %v3357, %v3356
      %v3389 = vpack.c.bf16 %v3359, %v3358
      %v3390 = vpack.c.bf16 %v3361, %v3360
      %v3391 = vpack.c.bf16 %v3363, %v3362
      %v3392 = vpack.c.bf16 %v3365, %v3364
      %v3393 = vpack.c.bf16 %v3367, %v3366
      %v3394 = vpack.c.bf16 %v3369, %v3368
      %v3395 = vpack.c.bf16 %v3371, %v3370
      %v3396 = vpack.c.bf16 %v3373, %v3372
      %v3397 = vpack.c.bf16 %v3375, %v3374
      %v3398 = vpack.c.bf16 %v3377, %v3376
      %v3399 = vpack.c.bf16 %v3379, %v3378
      %v3400 = vpack.c.bf16 %v3381, %v3380
      %v3401 = vpack.c.bf16 %v3383, %v3382
      %v3402 = vpack.c.bf16 %v3385, %v3384
      %v3403 = vpack.c.bf16 %v3387, %v3386
      %v3404 = vld [vmem:[%s6 + $0xc0] sm:$0xf]
      %v3405 = vld [vmem:[%s6 + $0xc4] sm:$0xf]
      %v3406 = vld [vmem:[%s6 + $0xc8] sm:$0xf]
      %v3407 = vld [vmem:[%s6 + $0xcc] sm:$0xf]
      %v3408 = vld [vmem:[%s6 + $0xd0] sm:$0xf]
      %v3409 = vld [vmem:[%s6 + $0xd4] sm:$0xf]
      %v3410 = vld [vmem:[%s6 + $0xd8] sm:$0xf]
      %v3411 = vld [vmem:[%s6 + $0xdc] sm:$0xf]
      %v3420 = vunpack.c.l.b16 %v3404
      %v3421 = vunpack.c.l.b16 %v3405
      %v3422 = vunpack.c.l.b16 %v3406
      %v3423 = vunpack.c.l.b16 %v3407
      %v3424 = vunpack.c.l.b16 %v3408
      %v3425 = vunpack.c.l.b16 %v3409
      %v3426 = vunpack.c.l.b16 %v3410
      %v3427 = vunpack.c.l.b16 %v3411
      %v3428 = vpack.c.b16 %v3421, %v3420
      %v3429 = vpack.c.b16 %v3423, %v3422
      %v3430 = vpack.c.b16 %v3425, %v3424
      %v3431 = vpack.c.b16 %v3427, %v3426
      %v3437 = vsel %vm1907, %v3388, 0
      %v3440 = vsel %vm1907, %v3389, 0
      %v3443 = vsel %vm1907, %v3390, 0
      %v3446 = vsel %vm1907, %v3391, 0
      %v3449 = vsel %vm1907, %v3392, 0
      %v3452 = vsel %vm1907, %v3393, 0
      %v3455 = vsel %vm1907, %v3394, 0
      %v3458 = vsel %vm1907, %v3395, 0
      %v3461 = vsel %vm1907, %v3396, 0
      %v3464 = vsel %vm1907, %v3397, 0
      %v3467 = vsel %vm1907, %v3398, 0
      %v3470 = vsel %vm1907, %v3399, 0
      %v3473 = vsel %vm1907, %v3400, 0
      %v3476 = vsel %vm1907, %v3401, 0
      %v3479 = vsel %vm1907, %v3402, 0
      %v3482 = vsel %vm1907, %v3403, 0
      %3484 = vmatpush.bf16.msra.mxu0 0
      %3485 = vmatpush.bf16.msra.mxu0 0
      %3486 = vmatpush.bf16.msra.mxu0 0
      %3487 = vmatpush.bf16.msra.mxu0 0
      %3488 = vmatpush.bf16.msra.mxu0 %v3431
      %3489 = vmatpush.bf16.msra.mxu0 %v3430
      %3490 = vmatpush.bf16.msra.mxu0 %v3429
      %3491 = vmatpush.bf16.msra.mxu0 %v3428
      %3492 = vmatmul.bf16.gmra.mxu0 %v3437
      %v3493 = vpop.f32.mrf.mxu0
      %v3494 = vadd.f32 0.0, %v3493
      %v3495 = vpop.f32.mrf.mxu0
      %v3496 = vadd.f32 0.0, %v3495
      %3497 = vmatmul.bf16.gmra.mxu0 %v3440
      %v3498 = vpop.f32.mrf.mxu0
      %v3499 = vadd.f32 0.0, %v3498
      %v3500 = vpop.f32.mrf.mxu0
      %v3501 = vadd.f32 0.0, %v3500
      %3502 = vmatmul.bf16.gmra.mxu0 %v3443
      %v3503 = vpop.f32.mrf.mxu0
      %v3504 = vadd.f32 0.0, %v3503
      %v3505 = vpop.f32.mrf.mxu0
      %v3506 = vadd.f32 0.0, %v3505
      %3507 = vmatmul.bf16.gmra.mxu0 %v3446
      %v3508 = vpop.f32.mrf.mxu0
      %v3509 = vadd.f32 0.0, %v3508
      %v3510 = vpop.f32.mrf.mxu0
      %v3511 = vadd.f32 0.0, %v3510
      %3512 = vmatmul.bf16.gmra.mxu0 %v3449
      %v3513 = vpop.f32.mrf.mxu0
      %v3514 = vadd.f32 0.0, %v3513
      %v3515 = vpop.f32.mrf.mxu0
      %v3516 = vadd.f32 0.0, %v3515
      %3517 = vmatmul.bf16.gmra.mxu0 %v3452
      %v3518 = vpop.f32.mrf.mxu0
      %v3519 = vadd.f32 0.0, %v3518
      %v3520 = vpop.f32.mrf.mxu0
      %v3521 = vadd.f32 0.0, %v3520
      %3522 = vmatmul.bf16.gmra.mxu0 %v3455
      %v3523 = vpop.f32.mrf.mxu0
      %v3524 = vadd.f32 0.0, %v3523
      %v3525 = vpop.f32.mrf.mxu0
      %v3526 = vadd.f32 0.0, %v3525
      %3527 = vmatmul.bf16.gmra.mxu0 %v3458
      %v3528 = vpop.f32.mrf.mxu0
      %v3529 = vadd.f32 0.0, %v3528
      %v3530 = vpop.f32.mrf.mxu0
      %v3531 = vadd.f32 0.0, %v3530
      %3532 = vmatmul.bf16.gmra.mxu0 %v3461
      %v3533 = vpop.f32.mrf.mxu0
      %v3534 = vadd.f32 0.0, %v3533
      %v3535 = vpop.f32.mrf.mxu0
      %v3536 = vadd.f32 0.0, %v3535
      %3537 = vmatmul.bf16.gmra.mxu0 %v3464
      %v3538 = vpop.f32.mrf.mxu0
      %v3539 = vadd.f32 0.0, %v3538
      %v3540 = vpop.f32.mrf.mxu0
      %v3541 = vadd.f32 0.0, %v3540
      %3542 = vmatmul.bf16.gmra.mxu0 %v3467
      %v3543 = vpop.f32.mrf.mxu0
      %v3544 = vadd.f32 0.0, %v3543
      %v3545 = vpop.f32.mrf.mxu0
      %v3546 = vadd.f32 0.0, %v3545
      %3547 = vmatmul.bf16.gmra.mxu0 %v3470
      %v3548 = vpop.f32.mrf.mxu0
      %v3549 = vadd.f32 0.0, %v3548
      %v3550 = vpop.f32.mrf.mxu0
      %v3551 = vadd.f32 0.0, %v3550
      %3552 = vmatmul.bf16.gmra.mxu0 %v3473
      %v3553 = vpop.f32.mrf.mxu0
      %v3554 = vadd.f32 0.0, %v3553
      %v3555 = vpop.f32.mrf.mxu0
      %v3556 = vadd.f32 0.0, %v3555
      %3557 = vmatmul.bf16.gmra.mxu0 %v3476
      %v3558 = vpop.f32.mrf.mxu0
      %v3559 = vadd.f32 0.0, %v3558
      %v3560 = vpop.f32.mrf.mxu0
      %v3561 = vadd.f32 0.0, %v3560
      %3562 = vmatmul.bf16.gmra.mxu0 %v3479
      %v3563 = vpop.f32.mrf.mxu0
      %v3564 = vadd.f32 0.0, %v3563
      %v3565 = vpop.f32.mrf.mxu0
      %v3566 = vadd.f32 0.0, %v3565
      %3567 = vmatmul.bf16.gmra.mxu0 %v3482
      %v3568 = vpop.f32.mrf.mxu0
      %v3569 = vadd.f32 0.0, %v3568
      %v3570 = vpop.f32.mrf.mxu0
      %v3571 = vadd.f32 0.0, %v3570
      %3572 = vdwg.mxu0
      %v3573 = vadd.f32 %v3324, %v3494
      %v3574 = vadd.f32 %v3325, %v3496
      %v3575 = vadd.f32 %v3326, %v3499
      %v3576 = vadd.f32 %v3327, %v3501
      %v3577 = vadd.f32 %v3328, %v3504
      %v3578 = vadd.f32 %v3329, %v3506
      %v3579 = vadd.f32 %v3330, %v3509
      %v3580 = vadd.f32 %v3331, %v3511
      %v3581 = vadd.f32 %v3332, %v3514
      %v3582 = vadd.f32 %v3333, %v3516
      %v3583 = vadd.f32 %v3334, %v3519
      %v3584 = vadd.f32 %v3335, %v3521
      %v3585 = vadd.f32 %v3336, %v3524
      %v3586 = vadd.f32 %v3337, %v3526
      %v3587 = vadd.f32 %v3338, %v3529
      %v3588 = vadd.f32 %v3339, %v3531
      %v3589 = vadd.f32 %v3340, %v3534
      %v3590 = vadd.f32 %v3341, %v3536
      %v3591 = vadd.f32 %v3342, %v3539
      %v3592 = vadd.f32 %v3343, %v3541
      %v3593 = vadd.f32 %v3344, %v3544
      %v3594 = vadd.f32 %v3345, %v3546
      %v3595 = vadd.f32 %v3346, %v3549
      %v3596 = vadd.f32 %v3347, %v3551
      %v3597 = vadd.f32 %v3348, %v3554
      %v3598 = vadd.f32 %v3349, %v3556
      %v3599 = vadd.f32 %v3350, %v3559
      %v3600 = vadd.f32 %v3351, %v3561
      %v3601 = vadd.f32 %v3352, %v3564
      %v3602 = vadd.f32 %v3353, %v3566
      %v3603 = vadd.f32 %v3354, %v3569
      %v3604 = vadd.f32 %v3355, %v3571
      %v3605 = vld [vmem:[#allocation2 + $0x38] sm:$0xff]
      %v3606 = vld [vmem:[#allocation2 + $0x40] sm:$0xff]
      %v3607 = vld [vmem:[#allocation2 + $0x48] sm:$0xff]
      %v3608 = vld [vmem:[#allocation2 + $0x50] sm:$0xff]
      %v3609 = vld [vmem:[#allocation2 + $0x58] sm:$0xff]
      %v3610 = vld [vmem:[#allocation2 + $0x60] sm:$0xff]
      %v3611 = vld [vmem:[#allocation2 + $0x68] sm:$0xff]
      %v3612 = vld [vmem:[#allocation2 + $0x70] sm:$0xff]
      %v3613 = vld [vmem:[#allocation2 + $0x78] sm:$0xff]
      %v3614 = vld [vmem:[#allocation2 + $0x80] sm:$0xff]
      %v3615 = vld [vmem:[#allocation2 + $0x88] sm:$0xff]
      %v3616 = vld [vmem:[#allocation2 + $0x90] sm:$0xff]
      %v3617 = vld [vmem:[#allocation2 + $0x98] sm:$0xff]
      %v3618 = vld [vmem:[#allocation2 + $0xa0] sm:$0xff]
      %v3619 = vld [vmem:[#allocation2 + $0xa8] sm:$0xff]
      %v3620 = vld [vmem:[#allocation2 + $0xb0] sm:$0xff]
      %v3621 = vld [vmem:[#allocation2 + $0xf8] sm:$0xff]
      %v3622 = vld [vmem:[#allocation2 + $0x100] sm:$0xff]
      %v3623 = vld [vmem:[#allocation2 + $0x108] sm:$0xff]
      %v3624 = vld [vmem:[#allocation2 + $0x110] sm:$0xff]
      %v3625 = vld [vmem:[#allocation2 + $0x118] sm:$0xff]
      %v3626 = vld [vmem:[#allocation2 + $0x120] sm:$0xff]
      %v3627 = vld [vmem:[#allocation2 + $0x128] sm:$0xff]
      %v3628 = vld [vmem:[#allocation2 + $0x130] sm:$0xff]
      %v3629 = vld [vmem:[#allocation2 + $0x138] sm:$0xff]
      %v3630 = vld [vmem:[#allocation2 + $0x140] sm:$0xff]
      %v3631 = vld [vmem:[#allocation2 + $0x148] sm:$0xff]
      %v3632 = vld [vmem:[#allocation2 + $0x150] sm:$0xff]
      %v3633 = vld [vmem:[#allocation2 + $0x158] sm:$0xff]
      %v3634 = vld [vmem:[#allocation2 + $0x160] sm:$0xff]
      %v3635 = vld [vmem:[#allocation2 + $0x168] sm:$0xff]
      %v3636 = vld [vmem:[#allocation2 + $0x170] sm:$0xff]
      %v3637 = vpack.c.bf16 %v3606, %v3605
      %v3638 = vpack.c.bf16 %v3608, %v3607
      %v3639 = vpack.c.bf16 %v3610, %v3609
      %v3640 = vpack.c.bf16 %v3612, %v3611
      %v3641 = vpack.c.bf16 %v3614, %v3613
      %v3642 = vpack.c.bf16 %v3616, %v3615
      %v3643 = vpack.c.bf16 %v3618, %v3617
      %v3644 = vpack.c.bf16 %v3620, %v3619
      %v3645 = vpack.c.bf16 %v3622, %v3621
      %v3646 = vpack.c.bf16 %v3624, %v3623
      %v3647 = vpack.c.bf16 %v3626, %v3625
      %v3648 = vpack.c.bf16 %v3628, %v3627
      %v3649 = vpack.c.bf16 %v3630, %v3629
      %v3650 = vpack.c.bf16 %v3632, %v3631
      %v3651 = vpack.c.bf16 %v3634, %v3633
      %v3652 = vpack.c.bf16 %v3636, %v3635
      %v3653 = vld [vmem:[%s6 + $0xe0] sm:$0xf]
      %v3654 = vld [vmem:[%s6 + $0xe4] sm:$0xf]
      %v3655 = vld [vmem:[%s6 + $0xe8] sm:$0xf]
      %v3656 = vld [vmem:[%s6 + $0xec] sm:$0xf]
      %v3657 = vld [vmem:[%s6 + $0xf0] sm:$0xf]
      %v3658 = vld [vmem:[%s6 + $0xf4] sm:$0xf]
      %v3659 = vld [vmem:[%s6 + $0xf8] sm:$0xf]
      %v3660 = vld [vmem:[%s6 + $0xfc] sm:$0xf]
      %v3669 = vunpack.c.l.b16 %v3653
      %v3670 = vunpack.c.l.b16 %v3654
      %v3671 = vunpack.c.l.b16 %v3655
      %v3672 = vunpack.c.l.b16 %v3656
      %v3673 = vunpack.c.l.b16 %v3657
      %v3674 = vunpack.c.l.b16 %v3658
      %v3675 = vunpack.c.l.b16 %v3659
      %v3676 = vunpack.c.l.b16 %v3660
      %v3677 = vpack.c.b16 %v3670, %v3669
      %v3678 = vpack.c.b16 %v3672, %v3671
      %v3679 = vpack.c.b16 %v3674, %v3673
      %v3680 = vpack.c.b16 %v3676, %v3675
      %v3686 = vsel %vm1907, %v3637, 0
      %v3689 = vsel %vm1907, %v3638, 0
      %v3692 = vsel %vm1907, %v3639, 0
      %v3695 = vsel %vm1907, %v3640, 0
      %v3698 = vsel %vm1907, %v3641, 0
      %v3701 = vsel %vm1907, %v3642, 0
      %v3704 = vsel %vm1907, %v3643, 0
      %v3707 = vsel %vm1907, %v3644, 0
      %v3710 = vsel %vm1907, %v3645, 0
      %v3713 = vsel %vm1907, %v3646, 0
      %v3716 = vsel %vm1907, %v3647, 0
      %v3719 = vsel %vm1907, %v3648, 0
      %v3722 = vsel %vm1907, %v3649, 0
      %v3725 = vsel %vm1907, %v3650, 0
      %v3728 = vsel %vm1907, %v3651, 0
      %v3731 = vsel %vm1907, %v3652, 0
      %3733 = vmatpush.bf16.msra.mxu0 0
      %3734 = vmatpush.bf16.msra.mxu0 0
      %3735 = vmatpush.bf16.msra.mxu0 0
      %3736 = vmatpush.bf16.msra.mxu0 0
      %3737 = vmatpush.bf16.msra.mxu0 %v3680
      %3738 = vmatpush.bf16.msra.mxu0 %v3679
      %3739 = vmatpush.bf16.msra.mxu0 %v3678
      %3740 = vmatpush.bf16.msra.mxu0 %v3677
      %3741 = vmatmul.bf16.gmra.mxu0 %v3686
      %v3742 = vpop.f32.mrf.mxu0
      %v3743 = vadd.f32 0.0, %v3742
      %v3744 = vpop.f32.mrf.mxu0
      %v3745 = vadd.f32 0.0, %v3744
      %3746 = vmatmul.bf16.gmra.mxu0 %v3689
      %v3747 = vpop.f32.mrf.mxu0
      %v3748 = vadd.f32 0.0, %v3747
      %v3749 = vpop.f32.mrf.mxu0
      %v3750 = vadd.f32 0.0, %v3749
      %3751 = vmatmul.bf16.gmra.mxu0 %v3692
      %v3752 = vpop.f32.mrf.mxu0
      %v3753 = vadd.f32 0.0, %v3752
      %v3754 = vpop.f32.mrf.mxu0
      %v3755 = vadd.f32 0.0, %v3754
      %3756 = vmatmul.bf16.gmra.mxu0 %v3695
      %v3757 = vpop.f32.mrf.mxu0
      %v3758 = vadd.f32 0.0, %v3757
      %v3759 = vpop.f32.mrf.mxu0
      %v3760 = vadd.f32 0.0, %v3759
      %3761 = vmatmul.bf16.gmra.mxu0 %v3698
      %v3762 = vpop.f32.mrf.mxu0
      %v3763 = vadd.f32 0.0, %v3762
      %v3764 = vpop.f32.mrf.mxu0
      %v3765 = vadd.f32 0.0, %v3764
      %3766 = vmatmul.bf16.gmra.mxu0 %v3701
      %v3767 = vpop.f32.mrf.mxu0
      %v3768 = vadd.f32 0.0, %v3767
      %v3769 = vpop.f32.mrf.mxu0
      %v3770 = vadd.f32 0.0, %v3769
      %3771 = vmatmul.bf16.gmra.mxu0 %v3704
      %v3772 = vpop.f32.mrf.mxu0
      %v3773 = vadd.f32 0.0, %v3772
      %v3774 = vpop.f32.mrf.mxu0
      %v3775 = vadd.f32 0.0, %v3774
      %3776 = vmatmul.bf16.gmra.mxu0 %v3707
      %v3777 = vpop.f32.mrf.mxu0
      %v3778 = vadd.f32 0.0, %v3777
      %v3779 = vpop.f32.mrf.mxu0
      %v3780 = vadd.f32 0.0, %v3779
      %3781 = vmatmul.bf16.gmra.mxu0 %v3710
      %v3782 = vpop.f32.mrf.mxu0
      %v3783 = vadd.f32 0.0, %v3782
      %v3784 = vpop.f32.mrf.mxu0
      %v3785 = vadd.f32 0.0, %v3784
      %3786 = vmatmul.bf16.gmra.mxu0 %v3713
      %v3787 = vpop.f32.mrf.mxu0
      %v3788 = vadd.f32 0.0, %v3787
      %v3789 = vpop.f32.mrf.mxu0
      %v3790 = vadd.f32 0.0, %v3789
      %3791 = vmatmul.bf16.gmra.mxu0 %v3716
      %v3792 = vpop.f32.mrf.mxu0
      %v3793 = vadd.f32 0.0, %v3792
      %v3794 = vpop.f32.mrf.mxu0
      %v3795 = vadd.f32 0.0, %v3794
      %3796 = vmatmul.bf16.gmra.mxu0 %v3719
      %v3797 = vpop.f32.mrf.mxu0
      %v3798 = vadd.f32 0.0, %v3797
      %v3799 = vpop.f32.mrf.mxu0
      %v3800 = vadd.f32 0.0, %v3799
      %3801 = vmatmul.bf16.gmra.mxu0 %v3722
      %v3802 = vpop.f32.mrf.mxu0
      %v3803 = vadd.f32 0.0, %v3802
      %v3804 = vpop.f32.mrf.mxu0
      %v3805 = vadd.f32 0.0, %v3804
      %3806 = vmatmul.bf16.gmra.mxu0 %v3725
      %v3807 = vpop.f32.mrf.mxu0
      %v3808 = vadd.f32 0.0, %v3807
      %v3809 = vpop.f32.mrf.mxu0
      %v3810 = vadd.f32 0.0, %v3809
      %3811 = vmatmul.bf16.gmra.mxu0 %v3728
      %v3812 = vpop.f32.mrf.mxu0
      %v3813 = vadd.f32 0.0, %v3812
      %v3814 = vpop.f32.mrf.mxu0
      %v3815 = vadd.f32 0.0, %v3814
      %3816 = vmatmul.bf16.gmra.mxu0 %v3731
      %v3817 = vpop.f32.mrf.mxu0
      %v3818 = vadd.f32 0.0, %v3817
      %v3819 = vpop.f32.mrf.mxu0
      %v3820 = vadd.f32 0.0, %v3819
      %3821 = vdwg.mxu0
      %v3822 = vadd.f32 %v3573, %v3743
      %v3823 = vadd.f32 %v3574, %v3745
      %v3824 = vadd.f32 %v3575, %v3748
      %v3825 = vadd.f32 %v3576, %v3750
      %v3826 = vadd.f32 %v3577, %v3753
      %v3827 = vadd.f32 %v3578, %v3755
      %v3828 = vadd.f32 %v3579, %v3758
      %v3829 = vadd.f32 %v3580, %v3760
      %v3830 = vadd.f32 %v3581, %v3763
      %v3831 = vadd.f32 %v3582, %v3765
      %v3832 = vadd.f32 %v3583, %v3768
      %v3833 = vadd.f32 %v3584, %v3770
      %v3834 = vadd.f32 %v3585, %v3773
      %v3835 = vadd.f32 %v3586, %v3775
      %v3836 = vadd.f32 %v3587, %v3778
      %v3837 = vadd.f32 %v3588, %v3780
      %v3838 = vadd.f32 %v3589, %v3783
      %v3839 = vadd.f32 %v3590, %v3785
      %v3840 = vadd.f32 %v3591, %v3788
      %v3841 = vadd.f32 %v3592, %v3790
      %v3842 = vadd.f32 %v3593, %v3793
      %v3843 = vadd.f32 %v3594, %v3795
      %v3844 = vadd.f32 %v3595, %v3798
      %v3845 = vadd.f32 %v3596, %v3800
      %v3846 = vadd.f32 %v3597, %v3803
      %v3847 = vadd.f32 %v3598, %v3805
      %v3848 = vadd.f32 %v3599, %v3808
      %v3849 = vadd.f32 %v3600, %v3810
      %v3850 = vadd.f32 %v3601, %v3813
      %v3851 = vadd.f32 %v3602, %v3815
      %v3852 = vadd.f32 %v3603, %v3818
      %v3853 = vadd.f32 %v3604, %v3820
      %v3854 = vld [vmem:[#allocation2 + $0x40] sm:$0xff]
      %v3855 = vld [vmem:[#allocation2 + $0x48] sm:$0xff]
      %v3856 = vld [vmem:[#allocation2 + $0x50] sm:$0xff]
      %v3857 = vld [vmem:[#allocation2 + $0x58] sm:$0xff]
      %v3858 = vld [vmem:[#allocation2 + $0x60] sm:$0xff]
      %v3859 = vld [vmem:[#allocation2 + $0x68] sm:$0xff]
      %v3860 = vld [vmem:[#allocation2 + $0x70] sm:$0xff]
      %v3861 = vld [vmem:[#allocation2 + $0x78] sm:$0xff]
      %v3862 = vld [vmem:[#allocation2 + $0x80] sm:$0xff]
      %v3863 = vld [vmem:[#allocation2 + $0x88] sm:$0xff]
      %v3864 = vld [vmem:[#allocation2 + $0x90] sm:$0xff]
      %v3865 = vld [vmem:[#allocation2 + $0x98] sm:$0xff]
      %v3866 = vld [vmem:[#allocation2 + $0xa0] sm:$0xff]
      %v3867 = vld [vmem:[#allocation2 + $0xa8] sm:$0xff]
      %v3868 = vld [vmem:[#allocation2 + $0xb0] sm:$0xff]
      %v3869 = vld [vmem:[#allocation2 + $0xb8] sm:$0xff]
      %v3870 = vld [vmem:[#allocation2 + $0x100] sm:$0xff]
      %v3871 = vld [vmem:[#allocation2 + $0x108] sm:$0xff]
      %v3872 = vld [vmem:[#allocation2 + $0x110] sm:$0xff]
      %v3873 = vld [vmem:[#allocation2 + $0x118] sm:$0xff]
      %v3874 = vld [vmem:[#allocation2 + $0x120] sm:$0xff]
      %v3875 = vld [vmem:[#allocation2 + $0x128] sm:$0xff]
      %v3876 = vld [vmem:[#allocation2 + $0x130] sm:$0xff]
      %v3877 = vld [vmem:[#allocation2 + $0x138] sm:$0xff]
      %v3878 = vld [vmem:[#allocation2 + $0x140] sm:$0xff]
      %v3879 = vld [vmem:[#allocation2 + $0x148] sm:$0xff]
      %v3880 = vld [vmem:[#allocation2 + $0x150] sm:$0xff]
      %v3881 = vld [vmem:[#allocation2 + $0x158] sm:$0xff]
      %v3882 = vld [vmem:[#allocation2 + $0x160] sm:$0xff]
      %v3883 = vld [vmem:[#allocation2 + $0x168] sm:$0xff]
      %v3884 = vld [vmem:[#allocation2 + $0x170] sm:$0xff]
      %v3885 = vld [vmem:[#allocation2 + $0x178] sm:$0xff]
      %v3886 = vpack.c.bf16 %v3855, %v3854
      %v3887 = vpack.c.bf16 %v3857, %v3856
      %v3888 = vpack.c.bf16 %v3859, %v3858
      %v3889 = vpack.c.bf16 %v3861, %v3860
      %v3890 = vpack.c.bf16 %v3863, %v3862
      %v3891 = vpack.c.bf16 %v3865, %v3864
      %v3892 = vpack.c.bf16 %v3867, %v3866
      %v3893 = vpack.c.bf16 %v3869, %v3868
      %v3894 = vpack.c.bf16 %v3871, %v3870
      %v3895 = vpack.c.bf16 %v3873, %v3872
      %v3896 = vpack.c.bf16 %v3875, %v3874
      %v3897 = vpack.c.bf16 %v3877, %v3876
      %v3898 = vpack.c.bf16 %v3879, %v3878
      %v3899 = vpack.c.bf16 %v3881, %v3880
      %v3900 = vpack.c.bf16 %v3883, %v3882
      %v3901 = vpack.c.bf16 %v3885, %v3884
      %v3902 = vld [vmem:[%s6 + $0x100] sm:$0xf]
      %v3903 = vld [vmem:[%s6 + $0x104] sm:$0xf]
      %v3904 = vld [vmem:[%s6 + $0x108] sm:$0xf]
      %v3905 = vld [vmem:[%s6 + $0x10c] sm:$0xf]
      %v3906 = vld [vmem:[%s6 + $0x110] sm:$0xf]
      %v3907 = vld [vmem:[%s6 + $0x114] sm:$0xf]
      %v3908 = vld [vmem:[%s6 + $0x118] sm:$0xf]
      %v3909 = vld [vmem:[%s6 + $0x11c] sm:$0xf]
      %v3918 = vunpack.c.l.b16 %v3902
      %v3919 = vunpack.c.l.b16 %v3903
      %v3920 = vunpack.c.l.b16 %v3904
      %v3921 = vunpack.c.l.b16 %v3905
      %v3922 = vunpack.c.l.b16 %v3906
      %v3923 = vunpack.c.l.b16 %v3907
      %v3924 = vunpack.c.l.b16 %v3908
      %v3925 = vunpack.c.l.b16 %v3909
      %v3926 = vpack.c.b16 %v3919, %v3918
      %v3927 = vpack.c.b16 %v3921, %v3920
      %v3928 = vpack.c.b16 %v3923, %v3922
      %v3929 = vpack.c.b16 %v3925, %v3924
      %v3935 = vsel %vm1907, %v3886, 0
      %v3938 = vsel %vm1907, %v3887, 0
      %v3941 = vsel %vm1907, %v3888, 0
      %v3944 = vsel %vm1907, %v3889, 0
      %v3947 = vsel %vm1907, %v3890, 0
      %v3950 = vsel %vm1907, %v3891, 0
      %v3953 = vsel %vm1907, %v3892, 0
      %v3956 = vsel %vm1907, %v3893, 0
      %v3959 = vsel %vm1907, %v3894, 0
      %v3962 = vsel %vm1907, %v3895, 0
      %v3965 = vsel %vm1907, %v3896, 0
      %v3968 = vsel %vm1907, %v3897, 0
      %v3971 = vsel %vm1907, %v3898, 0
      %v3974 = vsel %vm1907, %v3899, 0
      %v3977 = vsel %vm1907, %v3900, 0
      %v3980 = vsel %vm1907, %v3901, 0
      %3982 = vmatpush.bf16.msra.mxu0 0
      %3983 = vmatpush.bf16.msra.mxu0 0
      %3984 = vmatpush.bf16.msra.mxu0 0
      %3985 = vmatpush.bf16.msra.mxu0 0
      %3986 = vmatpush.bf16.msra.mxu0 %v3929
      %3987 = vmatpush.bf16.msra.mxu0 %v3928
      %3988 = vmatpush.bf16.msra.mxu0 %v3927
      %3989 = vmatpush.bf16.msra.mxu0 %v3926
      %3990 = vmatmul.bf16.gmra.mxu0 %v3935
      %v3991 = vpop.f32.mrf.mxu0
      %v3992 = vadd.f32 0.0, %v3991
      %v3993 = vpop.f32.mrf.mxu0
      %v3994 = vadd.f32 0.0, %v3993
      %3995 = vmatmul.bf16.gmra.mxu0 %v3938
      %v3996 = vpop.f32.mrf.mxu0
      %v3997 = vadd.f32 0.0, %v3996
      %v3998 = vpop.f32.mrf.mxu0
      %v3999 = vadd.f32 0.0, %v3998
      %4000 = vmatmul.bf16.gmra.mxu0 %v3941
      %v4001 = vpop.f32.mrf.mxu0
      %v4002 = vadd.f32 0.0, %v4001
      %v4003 = vpop.f32.mrf.mxu0
      %v4004 = vadd.f32 0.0, %v4003
      %4005 = vmatmul.bf16.gmra.mxu0 %v3944
      %v4006 = vpop.f32.mrf.mxu0
      %v4007 = vadd.f32 0.0, %v4006
      %v4008 = vpop.f32.mrf.mxu0
      %v4009 = vadd.f32 0.0, %v4008
      %4010 = vmatmul.bf16.gmra.mxu0 %v3947
      %v4011 = vpop.f32.mrf.mxu0
      %v4012 = vadd.f32 0.0, %v4011
      %v4013 = vpop.f32.mrf.mxu0
      %v4014 = vadd.f32 0.0, %v4013
      %4015 = vmatmul.bf16.gmra.mxu0 %v3950
      %v4016 = vpop.f32.mrf.mxu0
      %v4017 = vadd.f32 0.0, %v4016
      %v4018 = vpop.f32.mrf.mxu0
      %v4019 = vadd.f32 0.0, %v4018
      %4020 = vmatmul.bf16.gmra.mxu0 %v3953
      %v4021 = vpop.f32.mrf.mxu0
      %v4022 = vadd.f32 0.0, %v4021
      %v4023 = vpop.f32.mrf.mxu0
      %v4024 = vadd.f32 0.0, %v4023
      %4025 = vmatmul.bf16.gmra.mxu0 %v3956
      %v4026 = vpop.f32.mrf.mxu0
      %v4027 = vadd.f32 0.0, %v4026
      %v4028 = vpop.f32.mrf.mxu0
      %v4029 = vadd.f32 0.0, %v4028
      %4030 = vmatmul.bf16.gmra.mxu0 %v3959
      %v4031 = vpop.f32.mrf.mxu0
      %v4032 = vadd.f32 0.0, %v4031
      %v4033 = vpop.f32.mrf.mxu0
      %v4034 = vadd.f32 0.0, %v4033
      %4035 = vmatmul.bf16.gmra.mxu0 %v3962
      %v4036 = vpop.f32.mrf.mxu0
      %v4037 = vadd.f32 0.0, %v4036
      %v4038 = vpop.f32.mrf.mxu0
      %v4039 = vadd.f32 0.0, %v4038
      %4040 = vmatmul.bf16.gmra.mxu0 %v3965
      %v4041 = vpop.f32.mrf.mxu0
      %v4042 = vadd.f32 0.0, %v4041
      %v4043 = vpop.f32.mrf.mxu0
      %v4044 = vadd.f32 0.0, %v4043
      %4045 = vmatmul.bf16.gmra.mxu0 %v3968
      %v4046 = vpop.f32.mrf.mxu0
      %v4047 = vadd.f32 0.0, %v4046
      %v4048 = vpop.f32.mrf.mxu0
      %v4049 = vadd.f32 0.0, %v4048
      %4050 = vmatmul.bf16.gmra.mxu0 %v3971
      %v4051 = vpop.f32.mrf.mxu0
      %v4052 = vadd.f32 0.0, %v4051
      %v4053 = vpop.f32.mrf.mxu0
      %v4054 = vadd.f32 0.0, %v4053
      %4055 = vmatmul.bf16.gmra.mxu0 %v3974
      %v4056 = vpop.f32.mrf.mxu0
      %v4057 = vadd.f32 0.0, %v4056
      %v4058 = vpop.f32.mrf.mxu0
      %v4059 = vadd.f32 0.0, %v4058
      %4060 = vmatmul.bf16.gmra.mxu0 %v3977
      %v4061 = vpop.f32.mrf.mxu0
      %v4062 = vadd.f32 0.0, %v4061
      %v4063 = vpop.f32.mrf.mxu0
      %v4064 = vadd.f32 0.0, %v4063
      %4065 = vmatmul.bf16.gmra.mxu0 %v3980
      %v4066 = vpop.f32.mrf.mxu0
      %v4067 = vadd.f32 0.0, %v4066
      %v4068 = vpop.f32.mrf.mxu0
      %v4069 = vadd.f32 0.0, %v4068
      %4070 = vdwg.mxu0
      %v4071 = vadd.f32 %v3822, %v3992
      %v4072 = vadd.f32 %v3823, %v3994
      %v4073 = vadd.f32 %v3824, %v3997
      %v4074 = vadd.f32 %v3825, %v3999
      %v4075 = vadd.f32 %v3826, %v4002
      %v4076 = vadd.f32 %v3827, %v4004
      %v4077 = vadd.f32 %v3828, %v4007
      %v4078 = vadd.f32 %v3829, %v4009
      %v4079 = vadd.f32 %v3830, %v4012
      %v4080 = vadd.f32 %v3831, %v4014
      %v4081 = vadd.f32 %v3832, %v4017
      %v4082 = vadd.f32 %v3833, %v4019
      %v4083 = vadd.f32 %v3834, %v4022
      %v4084 = vadd.f32 %v3835, %v4024
      %v4085 = vadd.f32 %v3836, %v4027
      %v4086 = vadd.f32 %v3837, %v4029
      %v4087 = vadd.f32 %v3838, %v4032
      %v4088 = vadd.f32 %v3839, %v4034
      %v4089 = vadd.f32 %v3840, %v4037
      %v4090 = vadd.f32 %v3841, %v4039
      %v4091 = vadd.f32 %v3842, %v4042
      %v4092 = vadd.f32 %v3843, %v4044
      %v4093 = vadd.f32 %v3844, %v4047
      %v4094 = vadd.f32 %v3845, %v4049
      %v4095 = vadd.f32 %v3846, %v4052
      %v4096 = vadd.f32 %v3847, %v4054
      %v4097 = vadd.f32 %v3848, %v4057
      %v4098 = vadd.f32 %v3849, %v4059
      %v4099 = vadd.f32 %v3850, %v4062
      %v4100 = vadd.f32 %v3851, %v4064
      %v4101 = vadd.f32 %v3852, %v4067
      %v4102 = vadd.f32 %v3853, %v4069
      %v4103 = vld [vmem:[%s7] sm:$0x1]
      %v4105 = vperm.slane %v4103, 0
      %v4107 = vadd.f32 %v4071, %v4105
      %v4108 = vadd.f32 %v4072, %v4105
      %v4109 = vadd.f32 %v4073, %v4105
      %v4110 = vadd.f32 %v4074, %v4105
      %v4111 = vadd.f32 %v4075, %v4105
      %v4112 = vadd.f32 %v4076, %v4105
      %v4113 = vadd.f32 %v4077, %v4105
      %v4114 = vadd.f32 %v4078, %v4105
      %v4115 = vadd.f32 %v4079, %v4105
      %v4116 = vadd.f32 %v4080, %v4105
      %v4117 = vadd.f32 %v4081, %v4105
      %v4118 = vadd.f32 %v4082, %v4105
      %v4119 = vadd.f32 %v4083, %v4105
      %v4120 = vadd.f32 %v4084, %v4105
      %v4121 = vadd.f32 %v4085, %v4105
      %v4122 = vadd.f32 %v4086, %v4105
      %v4123 = vadd.f32 %v4087, %v4105
      %v4124 = vadd.f32 %v4088, %v4105
      %v4125 = vadd.f32 %v4089, %v4105
      %v4126 = vadd.f32 %v4090, %v4105
      %v4127 = vadd.f32 %v4091, %v4105
      %v4128 = vadd.f32 %v4092, %v4105
      %v4129 = vadd.f32 %v4093, %v4105
      %v4130 = vadd.f32 %v4094, %v4105
      %v4131 = vadd.f32 %v4095, %v4105
      %v4132 = vadd.f32 %v4096, %v4105
      %v4133 = vadd.f32 %v4097, %v4105
      %v4134 = vadd.f32 %v4098, %v4105
      %v4135 = vadd.f32 %v4099, %v4105
      %v4136 = vadd.f32 %v4100, %v4105
      %v4137 = vadd.f32 %v4101, %v4105
      %v4138 = vadd.f32 %v4102, %v4105
      %v4139 = vadd.f32 %v4107, %v866
      %v4140 = vadd.f32 %v4108, %v868
      %v4141 = vadd.f32 %v4109, %v871
      %v4142 = vadd.f32 %v4110, %v873
      %v4143 = vadd.f32 %v4111, %v876
      %v4144 = vadd.f32 %v4112, %v878
      %v4145 = vadd.f32 %v4113, %v881
      %v4146 = vadd.f32 %v4114, %v883
      %v4147 = vadd.f32 %v4115, %v886
      %v4148 = vadd.f32 %v4116, %v888
      %v4149 = vadd.f32 %v4117, %v891
      %v4150 = vadd.f32 %v4118, %v893
      %v4151 = vadd.f32 %v4119, %v896
      %v4152 = vadd.f32 %v4120, %v898
      %v4153 = vadd.f32 %v4121, %v901
      %v4154 = vadd.f32 %v4122, %v903
      %v4155 = vadd.f32 %v4123, %v906
      %v4156 = vadd.f32 %v4124, %v908
      %v4157 = vadd.f32 %v4125, %v911
      %v4158 = vadd.f32 %v4126, %v913
      %v4159 = vadd.f32 %v4127, %v916
      %v4160 = vadd.f32 %v4128, %v918
      %v4161 = vadd.f32 %v4129, %v921
      %v4162 = vadd.f32 %v4130, %v923
      %v4163 = vadd.f32 %v4131, %v926
      %v4164 = vadd.f32 %v4132, %v928
      %v4165 = vadd.f32 %v4133, %v931
      %v4166 = vadd.f32 %v4134, %v933
      %v4167 = vadd.f32 %v4135, %v936
      %v4168 = vadd.f32 %v4136, %v938
      %v4169 = vadd.f32 %v4137, %v941
      %v4170 = vadd.f32 %v4138, %v943
      %v4171 = vmax.f32 %v4139, 0.0
      %v4172 = vmax.f32 %v4140, 0.0
      %v4173 = vmax.f32 %v4141, 0.0
      %v4174 = vmax.f32 %v4142, 0.0
      %v4175 = vmax.f32 %v4143, 0.0
      %v4176 = vmax.f32 %v4144, 0.0
      %v4177 = vmax.f32 %v4145, 0.0
      %v4178 = vmax.f32 %v4146, 0.0
      %v4179 = vmax.f32 %v4147, 0.0
      %v4180 = vmax.f32 %v4148, 0.0
      %v4181 = vmax.f32 %v4149, 0.0
      %v4182 = vmax.f32 %v4150, 0.0
      %v4183 = vmax.f32 %v4151, 0.0
      %v4184 = vmax.f32 %v4152, 0.0
      %v4185 = vmax.f32 %v4153, 0.0
      %v4186 = vmax.f32 %v4154, 0.0
      %v4187 = vmax.f32 %v4155, 0.0
      %v4188 = vmax.f32 %v4156, 0.0
      %v4189 = vmax.f32 %v4157, 0.0
      %v4190 = vmax.f32 %v4158, 0.0
      %v4191 = vmax.f32 %v4159, 0.0
      %v4192 = vmax.f32 %v4160, 0.0
      %v4193 = vmax.f32 %v4161, 0.0
      %v4194 = vmax.f32 %v4162, 0.0
      %v4195 = vmax.f32 %v4163, 0.0
      %v4196 = vmax.f32 %v4164, 0.0
      %v4197 = vmax.f32 %v4165, 0.0
      %v4198 = vmax.f32 %v4166, 0.0
      %v4199 = vmax.f32 %v4167, 0.0
      %v4200 = vmax.f32 %v4168, 0.0
      %v4201 = vmax.f32 %v4169, 0.0
      %v4202 = vmax.f32 %v4170, 0.0
      %v4203 = vpack.c.bf16 %v4172, %v4171
      %v4204 = vpack.c.bf16 %v4174, %v4173
      %v4205 = vpack.c.bf16 %v4176, %v4175
      %v4206 = vpack.c.bf16 %v4178, %v4177
      %v4207 = vpack.c.bf16 %v4180, %v4179
      %v4208 = vpack.c.bf16 %v4182, %v4181
      %v4209 = vpack.c.bf16 %v4184, %v4183
      %v4210 = vpack.c.bf16 %v4186, %v4185
      %v4211 = vpack.c.bf16 %v4188, %v4187
      %v4212 = vpack.c.bf16 %v4190, %v4189
      %v4213 = vpack.c.bf16 %v4192, %v4191
      %v4214 = vpack.c.bf16 %v4194, %v4193
      %v4215 = vpack.c.bf16 %v4196, %v4195
      %v4216 = vpack.c.bf16 %v4198, %v4197
      %v4217 = vpack.c.bf16 %v4200, %v4199
      %v4218 = vpack.c.bf16 %v4202, %v4201
      %v4219 = vld [vmem:[%s14] sm:$0xf]
      %v4220 = vld [vmem:[%s14 + $0x4] sm:$0xf]
      %v4221 = vld [vmem:[%s14 + $0x8] sm:$0xf]
      %v4222 = vld [vmem:[%s14 + $0xc] sm:$0xf]
      %v4223 = vld [vmem:[%s14 + $0x10] sm:$0xf]
      %v4224 = vld [vmem:[%s14 + $0x14] sm:$0xf]
      %v4225 = vld [vmem:[%s14 + $0x18] sm:$0xf]
      %v4226 = vld [vmem:[%s14 + $0x1c] sm:$0xf]
      %v4227 = vld [vmem:[%s15] sm:$0x1]
      %v4229 = vperm.slane %v4227, 0
      %v4239 = vunpack.c.l.b16 %v4219
      %v4240 = vunpack.c.l.b16 %v4220
      %v4241 = vunpack.c.l.b16 %v4221
      %v4242 = vunpack.c.l.b16 %v4222
      %v4243 = vunpack.c.l.b16 %v4223
      %v4244 = vunpack.c.l.b16 %v4224
      %v4245 = vunpack.c.l.b16 %v4225
      %v4246 = vunpack.c.l.b16 %v4226
      %v4247 = vpack.c.b16 %v4240, %v4239
      %v4248 = vpack.c.b16 %v4242, %v4241
      %v4249 = vpack.c.b16 %v4244, %v4243
      %v4250 = vpack.c.b16 %v4246, %v4245
      %v4256 = vsel %vm1907, %v4203, 0
      %v4259 = vsel %vm1907, %v4204, 0
      %v4262 = vsel %vm1907, %v4205, 0
      %v4265 = vsel %vm1907, %v4206, 0
      %v4268 = vsel %vm1907, %v4207, 0
      %v4271 = vsel %vm1907, %v4208, 0
      %v4274 = vsel %vm1907, %v4209, 0
      %v4277 = vsel %vm1907, %v4210, 0
      %v4280 = vsel %vm1907, %v4211, 0
      %v4283 = vsel %vm1907, %v4212, 0
      %v4286 = vsel %vm1907, %v4213, 0
      %v4289 = vsel %vm1907, %v4214, 0
      %v4292 = vsel %vm1907, %v4215, 0
      %v4295 = vsel %vm1907, %v4216, 0
      %v4298 = vsel %vm1907, %v4217, 0
      %v4301 = vsel %vm1907, %v4218, 0
      %4303 = vmatpush.bf16.msra.mxu0 0
      %4304 = vmatpush.bf16.msra.mxu0 0
      %4305 = vmatpush.bf16.msra.mxu0 0
      %4306 = vmatpush.bf16.msra.mxu0 0
      %4307 = vmatpush.bf16.msra.mxu0 %v4250
      %4308 = vmatpush.bf16.msra.mxu0 %v4249
      %4309 = vmatpush.bf16.msra.mxu0 %v4248
      %4310 = vmatpush.bf16.msra.mxu0 %v4247
      %4311 = vmatmul.bf16.gmra.mxu0 %v4256
      %v4312 = vpop.f32.mrf.mxu0
      %v4313 = vadd.f32 %v4229, %v4312
      %v4314 = vpop.f32.mrf.mxu0
      %v4315 = vadd.f32 %v4229, %v4314
      %4316 = vmatmul.bf16.gmra.mxu0 %v4259
      %v4317 = vpop.f32.mrf.mxu0
      %v4318 = vadd.f32 %v4229, %v4317
      %v4319 = vpop.f32.mrf.mxu0
      %v4320 = vadd.f32 %v4229, %v4319
      %4321 = vmatmul.bf16.gmra.mxu0 %v4262
      %v4322 = vpop.f32.mrf.mxu0
      %v4323 = vadd.f32 %v4229, %v4322
      %v4324 = vpop.f32.mrf.mxu0
      %v4325 = vadd.f32 %v4229, %v4324
      %4326 = vmatmul.bf16.gmra.mxu0 %v4265
      %v4327 = vpop.f32.mrf.mxu0
      %v4328 = vadd.f32 %v4229, %v4327
      %v4329 = vpop.f32.mrf.mxu0
      %v4330 = vadd.f32 %v4229, %v4329
      %4331 = vmatmul.bf16.gmra.mxu0 %v4268
      %v4332 = vpop.f32.mrf.mxu0
      %v4333 = vadd.f32 %v4229, %v4332
      %v4334 = vpop.f32.mrf.mxu0
      %v4335 = vadd.f32 %v4229, %v4334
      %4336 = vmatmul.bf16.gmra.mxu0 %v4271
      %v4337 = vpop.f32.mrf.mxu0
      %v4338 = vadd.f32 %v4229, %v4337
      %v4339 = vpop.f32.mrf.mxu0
      %v4340 = vadd.f32 %v4229, %v4339
      %4341 = vmatmul.bf16.gmra.mxu0 %v4274
      %v4342 = vpop.f32.mrf.mxu0
      %v4343 = vadd.f32 %v4229, %v4342
      %v4344 = vpop.f32.mrf.mxu0
      %v4345 = vadd.f32 %v4229, %v4344
      %4346 = vmatmul.bf16.gmra.mxu0 %v4277
      %v4347 = vpop.f32.mrf.mxu0
      %v4348 = vadd.f32 %v4229, %v4347
      %v4349 = vpop.f32.mrf.mxu0
      %v4350 = vadd.f32 %v4229, %v4349
      %4351 = vmatmul.bf16.gmra.mxu0 %v4280
      %v4352 = vpop.f32.mrf.mxu0
      %v4353 = vadd.f32 %v4229, %v4352
      %v4354 = vpop.f32.mrf.mxu0
      %v4355 = vadd.f32 %v4229, %v4354
      %4356 = vmatmul.bf16.gmra.mxu0 %v4283
      %v4357 = vpop.f32.mrf.mxu0
      %v4358 = vadd.f32 %v4229, %v4357
      %v4359 = vpop.f32.mrf.mxu0
      %v4360 = vadd.f32 %v4229, %v4359
      %4361 = vmatmul.bf16.gmra.mxu0 %v4286
      %v4362 = vpop.f32.mrf.mxu0
      %v4363 = vadd.f32 %v4229, %v4362
      %v4364 = vpop.f32.mrf.mxu0
      %v4365 = vadd.f32 %v4229, %v4364
      %4366 = vmatmul.bf16.gmra.mxu0 %v4289
      %v4367 = vpop.f32.mrf.mxu0
      %v4368 = vadd.f32 %v4229, %v4367
      %v4369 = vpop.f32.mrf.mxu0
      %v4370 = vadd.f32 %v4229, %v4369
      %4371 = vmatmul.bf16.gmra.mxu0 %v4292
      %v4372 = vpop.f32.mrf.mxu0
      %v4373 = vadd.f32 %v4229, %v4372
      %v4374 = vpop.f32.mrf.mxu0
      %v4375 = vadd.f32 %v4229, %v4374
      %4376 = vmatmul.bf16.gmra.mxu0 %v4295
      %v4377 = vpop.f32.mrf.mxu0
      %v4378 = vadd.f32 %v4229, %v4377
      %v4379 = vpop.f32.mrf.mxu0
      %v4380 = vadd.f32 %v4229, %v4379
      %4381 = vmatmul.bf16.gmra.mxu0 %v4298
      %v4382 = vpop.f32.mrf.mxu0
      %v4383 = vadd.f32 %v4229, %v4382
      %v4384 = vpop.f32.mrf.mxu0
      %v4385 = vadd.f32 %v4229, %v4384
      %4386 = vmatmul.bf16.gmra.mxu0 %v4301
      %v4387 = vpop.f32.mrf.mxu0
      %v4388 = vadd.f32 %v4229, %v4387
      %v4389 = vpop.f32.mrf.mxu0
      %v4390 = vadd.f32 %v4229, %v4389
      %4391 = vdwg.mxu0
      %v4392 = vld [vmem:[%s10] sm:$0xff]
      %v4393 = vld [vmem:[%s10 + $0x8] sm:$0xf]
      %v4394 = vld [vmem:[%s10 + $0xc] sm:$0xff]
      %v4395 = vld [vmem:[%s10 + $0x14] sm:$0xf]
      %v4396 = vld [vmem:[%s10 + $0x18] sm:$0xff]
      %v4397 = vld [vmem:[%s10 + $0x20] sm:$0xf]
      %v4398 = vld [vmem:[%s10 + $0x24] sm:$0xff]
      %v4399 = vld [vmem:[%s10 + $0x2c] sm:$0xf]
      %v4400 = vld [vmem:[%s10 + $0x30] sm:$0xff]
      %v4401 = vld [vmem:[%s10 + $0x38] sm:$0xf]
      %v4402 = vld [vmem:[%s10 + $0x3c] sm:$0xff]
      %v4403 = vld [vmem:[%s10 + $0x44] sm:$0xf]
      %v4404 = vld [vmem:[%s10 + $0x48] sm:$0xff]
      %v4405 = vld [vmem:[%s10 + $0x50] sm:$0xf]
      %v4406 = vld [vmem:[%s10 + $0x54] sm:$0xff]
      %v4407 = vld [vmem:[%s10 + $0x5c] sm:$0xf]
      %v4424 = vunpack.c.l.b16 %v4392
      %v4425 = vunpack.c.h.b16 %v4392
      %v4426 = vunpack.c.l.b16 %v4393
      %v4427 = vunpack.c.l.b16 %v4394
      %v4428 = vunpack.c.h.b16 %v4394
      %v4429 = vunpack.c.l.b16 %v4395
      %v4430 = vunpack.c.l.b16 %v4396
      %v4431 = vunpack.c.h.b16 %v4396
      %v4432 = vunpack.c.l.b16 %v4397
      %v4433 = vunpack.c.l.b16 %v4398
      %v4434 = vunpack.c.h.b16 %v4398
      %v4435 = vunpack.c.l.b16 %v4399
      %v4436 = vunpack.c.l.b16 %v4400
      %v4437 = vunpack.c.h.b16 %v4400
      %v4438 = vunpack.c.l.b16 %v4401
      %v4439 = vunpack.c.l.b16 %v4402
      %v4440 = vunpack.c.h.b16 %v4402
      %v4441 = vunpack.c.l.b16 %v4403
      %v4442 = vunpack.c.l.b16 %v4404
      %v4443 = vunpack.c.h.b16 %v4404
      %v4444 = vunpack.c.l.b16 %v4405
      %v4445 = vunpack.c.l.b16 %v4406
      %v4446 = vunpack.c.h.b16 %v4406
      %v4447 = vunpack.c.l.b16 %v4407
      %v4448 = vpack.c.b16 %v4427, %v4424
      %v4449 = vpack.c.b16 %v4428, %v4425
      %v4450 = vpack.c.b16 %v4429, %v4426
      %v4451 = vpack.c.b16 %v4433, %v4430
      %v4452 = vpack.c.b16 %v4434, %v4431
      %v4453 = vpack.c.b16 %v4435, %v4432
      %v4454 = vpack.c.b16 %v4439, %v4436
      %v4455 = vpack.c.b16 %v4440, %v4437
      %v4456 = vpack.c.b16 %v4441, %v4438
      %v4457 = vpack.c.b16 %v4445, %v4442
      %v4458 = vpack.c.b16 %v4446, %v4443
      %v4459 = vpack.c.b16 %v4447, %v4444
      %4472 = vmatpush.bf16.msra.mxu0 0
      %4473 = vmatpush.bf16.msra.mxu0 0
      %4474 = vmatpush.bf16.msra.mxu0 0
      %4475 = vmatpush.bf16.msra.mxu0 0
      %4476 = vmatpush.bf16.msra.mxu0 %v4457
      %4477 = vmatpush.bf16.msra.mxu0 %v4454
      %4478 = vmatpush.bf16.msra.mxu0 %v4451
      %4479 = vmatpush.bf16.msra.mxu0 %v4448
      %4480 = vmatmul.bf16.gmra.mxu0 %v4256
      %v4481 = vpop.f32.mrf.mxu0
      %v4482 = vadd.f32 0.0, %v4481
      %v4483 = vpop.f32.mrf.mxu0
      %v4484 = vadd.f32 0.0, %v4483
      %4485 = vmatmul.bf16.gmra.mxu0 %v4259
      %v4486 = vpop.f32.mrf.mxu0
      %v4487 = vadd.f32 0.0, %v4486
      %v4488 = vpop.f32.mrf.mxu0
      %v4489 = vadd.f32 0.0, %v4488
      %4490 = vmatmul.bf16.gmra.mxu0 %v4262
      %v4491 = vpop.f32.mrf.mxu0
      %v4492 = vadd.f32 0.0, %v4491
      %v4493 = vpop.f32.mrf.mxu0
      %v4494 = vadd.f32 0.0, %v4493
      %4495 = vmatmul.bf16.gmra.mxu0 %v4265
      %v4496 = vpop.f32.mrf.mxu0
      %v4497 = vadd.f32 0.0, %v4496
      %v4498 = vpop.f32.mrf.mxu0
      %v4499 = vadd.f32 0.0, %v4498
      %4500 = vmatmul.bf16.gmra.mxu0 %v4268
      %v4501 = vpop.f32.mrf.mxu0
      %v4502 = vadd.f32 0.0, %v4501
      %v4503 = vpop.f32.mrf.mxu0
      %v4504 = vadd.f32 0.0, %v4503
      %4505 = vmatmul.bf16.gmra.mxu0 %v4271
      %v4506 = vpop.f32.mrf.mxu0
      %v4507 = vadd.f32 0.0, %v4506
      %v4508 = vpop.f32.mrf.mxu0
      %v4509 = vadd.f32 0.0, %v4508
      %4510 = vmatmul.bf16.gmra.mxu0 %v4274
      %v4511 = vpop.f32.mrf.mxu0
      %v4512 = vadd.f32 0.0, %v4511
      %v4513 = vpop.f32.mrf.mxu0
      %v4514 = vadd.f32 0.0, %v4513
      %4515 = vmatmul.bf16.gmra.mxu0 %v4277
      %v4516 = vpop.f32.mrf.mxu0
      %v4517 = vadd.f32 0.0, %v4516
      %v4518 = vpop.f32.mrf.mxu0
      %v4519 = vadd.f32 0.0, %v4518
      %4520 = vmatmul.bf16.gmra.mxu0 %v4280
      %v4521 = vpop.f32.mrf.mxu0
      %v4522 = vadd.f32 0.0, %v4521
      %v4523 = vpop.f32.mrf.mxu0
      %v4524 = vadd.f32 0.0, %v4523
      %4525 = vmatmul.bf16.gmra.mxu0 %v4283
      %v4526 = vpop.f32.mrf.mxu0
      %v4527 = vadd.f32 0.0, %v4526
      %v4528 = vpop.f32.mrf.mxu0
      %v4529 = vadd.f32 0.0, %v4528
      %4530 = vmatmul.bf16.gmra.mxu0 %v4286
      %v4531 = vpop.f32.mrf.mxu0
      %v4532 = vadd.f32 0.0, %v4531
      %v4533 = vpop.f32.mrf.mxu0
      %v4534 = vadd.f32 0.0, %v4533
      %4535 = vmatmul.bf16.gmra.mxu0 %v4289
      %v4536 = vpop.f32.mrf.mxu0
      %v4537 = vadd.f32 0.0, %v4536
      %v4538 = vpop.f32.mrf.mxu0
      %v4539 = vadd.f32 0.0, %v4538
      %4540 = vmatmul.bf16.gmra.mxu0 %v4292
      %v4541 = vpop.f32.mrf.mxu0
      %v4542 = vadd.f32 0.0, %v4541
      %v4543 = vpop.f32.mrf.mxu0
      %v4544 = vadd.f32 0.0, %v4543
      %4545 = vmatmul.bf16.gmra.mxu0 %v4295
      %v4546 = vpop.f32.mrf.mxu0
      %v4547 = vadd.f32 0.0, %v4546
      %v4548 = vpop.f32.mrf.mxu0
      %v4549 = vadd.f32 0.0, %v4548
      %4550 = vmatmul.bf16.gmra.mxu0 %v4298
      %v4551 = vpop.f32.mrf.mxu0
      %v4552 = vadd.f32 0.0, %v4551
      %v4553 = vpop.f32.mrf.mxu0
      %v4554 = vadd.f32 0.0, %v4553
      %4555 = vmatmul.bf16.gmra.mxu0 %v4301
      %v4556 = vpop.f32.mrf.mxu0
      %v4557 = vadd.f32 0.0, %v4556
      %v4558 = vpop.f32.mrf.mxu0
      %v4559 = vadd.f32 0.0, %v4558
      %4560 = vdwg.mxu0
      %4561 = vmatpush.bf16.msra.mxu0 0
      %4562 = vmatpush.bf16.msra.mxu0 0
      %4563 = vmatpush.bf16.msra.mxu0 0
      %4564 = vmatpush.bf16.msra.mxu0 0
      %4565 = vmatpush.bf16.msra.mxu0 %v4458
      %4566 = vmatpush.bf16.msra.mxu0 %v4455
      %4567 = vmatpush.bf16.msra.mxu0 %v4452
      %4568 = vmatpush.bf16.msra.mxu0 %v4449
      %4569 = vmatmul.bf16.gmra.mxu0 %v4256
      %v4570 = vpop.f32.mrf.mxu0
      %v4571 = vadd.f32 0.0, %v4570
      %v4572 = vpop.f32.mrf.mxu0
      %v4573 = vadd.f32 0.0, %v4572
      %4574 = vmatmul.bf16.gmra.mxu0 %v4259
      %v4575 = vpop.f32.mrf.mxu0
      %v4576 = vadd.f32 0.0, %v4575
      %v4577 = vpop.f32.mrf.mxu0
      %v4578 = vadd.f32 0.0, %v4577
      %4579 = vmatmul.bf16.gmra.mxu0 %v4262
      %v4580 = vpop.f32.mrf.mxu0
      %v4581 = vadd.f32 0.0, %v4580
      %v4582 = vpop.f32.mrf.mxu0
      %v4583 = vadd.f32 0.0, %v4582
      %4584 = vmatmul.bf16.gmra.mxu0 %v4265
      %v4585 = vpop.f32.mrf.mxu0
      %v4586 = vadd.f32 0.0, %v4585
      %v4587 = vpop.f32.mrf.mxu0
      %v4588 = vadd.f32 0.0, %v4587
      %4589 = vmatmul.bf16.gmra.mxu0 %v4268
      %v4590 = vpop.f32.mrf.mxu0
      %v4591 = vadd.f32 0.0, %v4590
      %v4592 = vpop.f32.mrf.mxu0
      %v4593 = vadd.f32 0.0, %v4592
      %4594 = vmatmul.bf16.gmra.mxu0 %v4271
      %v4595 = vpop.f32.mrf.mxu0
      %v4596 = vadd.f32 0.0, %v4595
      %v4597 = vpop.f32.mrf.mxu0
      %v4598 = vadd.f32 0.0, %v4597
      %4599 = vmatmul.bf16.gmra.mxu0 %v4274
      %v4600 = vpop.f32.mrf.mxu0
      %v4601 = vadd.f32 0.0, %v4600
      %v4602 = vpop.f32.mrf.mxu0
      %v4603 = vadd.f32 0.0, %v4602
      %4604 = vmatmul.bf16.gmra.mxu0 %v4277
      %v4605 = vpop.f32.mrf.mxu0
      %v4606 = vadd.f32 0.0, %v4605
      %v4607 = vpop.f32.mrf.mxu0
      %v4608 = vadd.f32 0.0, %v4607
      %4609 = vmatmul.bf16.gmra.mxu0 %v4280
      %v4610 = vpop.f32.mrf.mxu0
      %v4611 = vadd.f32 0.0, %v4610
      %v4612 = vpop.f32.mrf.mxu0
      %v4613 = vadd.f32 0.0, %v4612
      %4614 = vmatmul.bf16.gmra.mxu0 %v4283
      %v4615 = vpop.f32.mrf.mxu0
      %v4616 = vadd.f32 0.0, %v4615
      %v4617 = vpop.f32.mrf.mxu0
      %v4618 = vadd.f32 0.0, %v4617
      %4619 = vmatmul.bf16.gmra.mxu0 %v4286
      %v4620 = vpop.f32.mrf.mxu0
      %v4621 = vadd.f32 0.0, %v4620
      %v4622 = vpop.f32.mrf.mxu0
      %v4623 = vadd.f32 0.0, %v4622
      %4624 = vmatmul.bf16.gmra.mxu0 %v4289
      %v4625 = vpop.f32.mrf.mxu0
      %v4626 = vadd.f32 0.0, %v4625
      %v4627 = vpop.f32.mrf.mxu0
      %v4628 = vadd.f32 0.0, %v4627
      %4629 = vmatmul.bf16.gmra.mxu0 %v4292
      %v4630 = vpop.f32.mrf.mxu0
      %v4631 = vadd.f32 0.0, %v4630
      %v4632 = vpop.f32.mrf.mxu0
      %v4633 = vadd.f32 0.0, %v4632
      %4634 = vmatmul.bf16.gmra.mxu0 %v4295
      %v4635 = vpop.f32.mrf.mxu0
      %v4636 = vadd.f32 0.0, %v4635
      %v4637 = vpop.f32.mrf.mxu0
      %v4638 = vadd.f32 0.0, %v4637
      %4639 = vmatmul.bf16.gmra.mxu0 %v4298
      %v4640 = vpop.f32.mrf.mxu0
      %v4641 = vadd.f32 0.0, %v4640
      %v4642 = vpop.f32.mrf.mxu0
      %v4643 = vadd.f32 0.0, %v4642
      %4644 = vmatmul.bf16.gmra.mxu0 %v4301
      %v4645 = vpop.f32.mrf.mxu0
      %v4646 = vadd.f32 0.0, %v4645
      %v4647 = vpop.f32.mrf.mxu0
      %v4648 = vadd.f32 0.0, %v4647
      %4649 = vdwg.mxu0
      %4650 = vmatpush.bf16.msra.mxu0 0
      %4651 = vmatpush.bf16.msra.mxu0 0
      %4652 = vmatpush.bf16.msra.mxu0 0
      %4653 = vmatpush.bf16.msra.mxu0 0
      %4654 = vmatpush.bf16.msra.mxu0 %v4459
      %4655 = vmatpush.bf16.msra.mxu0 %v4456
      %4656 = vmatpush.bf16.msra.mxu0 %v4453
      %4657 = vmatpush.bf16.msra.mxu0 %v4450
      %4658 = vmatmul.bf16.gmra.mxu0 %v4256
      %v4659 = vpop.f32.mrf.mxu0
      %v4660 = vadd.f32 0.0, %v4659
      %v4661 = vpop.f32.mrf.mxu0
      %v4662 = vadd.f32 0.0, %v4661
      %4663 = vmatmul.bf16.gmra.mxu0 %v4259
      %v4664 = vpop.f32.mrf.mxu0
      %v4665 = vadd.f32 0.0, %v4664
      %v4666 = vpop.f32.mrf.mxu0
      %v4667 = vadd.f32 0.0, %v4666
      %4668 = vmatmul.bf16.gmra.mxu0 %v4262
      %v4669 = vpop.f32.mrf.mxu0
      %v4670 = vadd.f32 0.0, %v4669
      %v4671 = vpop.f32.mrf.mxu0
      %v4672 = vadd.f32 0.0, %v4671
      %4673 = vmatmul.bf16.gmra.mxu0 %v4265
      %v4674 = vpop.f32.mrf.mxu0
      %v4675 = vadd.f32 0.0, %v4674
      %v4676 = vpop.f32.mrf.mxu0
      %v4677 = vadd.f32 0.0, %v4676
      %4678 = vmatmul.bf16.gmra.mxu0 %v4268
      %v4679 = vpop.f32.mrf.mxu0
      %v4680 = vadd.f32 0.0, %v4679
      %v4681 = vpop.f32.mrf.mxu0
      %v4682 = vadd.f32 0.0, %v4681
      %4683 = vmatmul.bf16.gmra.mxu0 %v4271
      %v4684 = vpop.f32.mrf.mxu0
      %v4685 = vadd.f32 0.0, %v4684
      %v4686 = vpop.f32.mrf.mxu0
      %v4687 = vadd.f32 0.0, %v4686
      %4688 = vmatmul.bf16.gmra.mxu0 %v4274
      %v4689 = vpop.f32.mrf.mxu0
      %v4690 = vadd.f32 0.0, %v4689
      %v4691 = vpop.f32.mrf.mxu0
      %v4692 = vadd.f32 0.0, %v4691
      %4693 = vmatmul.bf16.gmra.mxu0 %v4277
      %v4694 = vpop.f32.mrf.mxu0
      %v4695 = vadd.f32 0.0, %v4694
      %v4696 = vpop.f32.mrf.mxu0
      %v4697 = vadd.f32 0.0, %v4696
      %4698 = vmatmul.bf16.gmra.mxu0 %v4280
      %v4699 = vpop.f32.mrf.mxu0
      %v4700 = vadd.f32 0.0, %v4699
      %v4701 = vpop.f32.mrf.mxu0
      %v4702 = vadd.f32 0.0, %v4701
      %4703 = vmatmul.bf16.gmra.mxu0 %v4283
      %v4704 = vpop.f32.mrf.mxu0
      %v4705 = vadd.f32 0.0, %v4704
      %v4706 = vpop.f32.mrf.mxu0
      %v4707 = vadd.f32 0.0, %v4706
      %4708 = vmatmul.bf16.gmra.mxu0 %v4286
      %v4709 = vpop.f32.mrf.mxu0
      %v4710 = vadd.f32 0.0, %v4709
      %v4711 = vpop.f32.mrf.mxu0
      %v4712 = vadd.f32 0.0, %v4711
      %4713 = vmatmul.bf16.gmra.mxu0 %v4289
      %v4714 = vpop.f32.mrf.mxu0
      %v4715 = vadd.f32 0.0, %v4714
      %v4716 = vpop.f32.mrf.mxu0
      %v4717 = vadd.f32 0.0, %v4716
      %4718 = vmatmul.bf16.gmra.mxu0 %v4292
      %v4719 = vpop.f32.mrf.mxu0
      %v4720 = vadd.f32 0.0, %v4719
      %v4721 = vpop.f32.mrf.mxu0
      %v4722 = vadd.f32 0.0, %v4721
      %4723 = vmatmul.bf16.gmra.mxu0 %v4295
      %v4724 = vpop.f32.mrf.mxu0
      %v4725 = vadd.f32 0.0, %v4724
      %v4726 = vpop.f32.mrf.mxu0
      %v4727 = vadd.f32 0.0, %v4726
      %4728 = vmatmul.bf16.gmra.mxu0 %v4298
      %v4729 = vpop.f32.mrf.mxu0
      %v4730 = vadd.f32 0.0, %v4729
      %v4731 = vpop.f32.mrf.mxu0
      %v4732 = vadd.f32 0.0, %v4731
      %4733 = vmatmul.bf16.gmra.mxu0 %v4301
      %v4734 = vpop.f32.mrf.mxu0
      %v4735 = vadd.f32 0.0, %v4734
      %v4736 = vpop.f32.mrf.mxu0
      %v4737 = vadd.f32 0.0, %v4736
      %4738 = vdwg.mxu0
      %v4739 = vpack.c.bf16 %v4571, %v4482
      %v4740 = vpack.c.bf16 %v4660, %v4660
      %v4741 = vpack.c.bf16 %v4573, %v4484
      %v4742 = vpack.c.bf16 %v4662, %v4662
      %v4743 = vpack.c.bf16 %v4576, %v4487
      %v4744 = vpack.c.bf16 %v4665, %v4665
      %v4745 = vpack.c.bf16 %v4578, %v4489
      %v4746 = vpack.c.bf16 %v4667, %v4667
      %v4747 = vpack.c.bf16 %v4581, %v4492
      %v4748 = vpack.c.bf16 %v4670, %v4670
      %v4749 = vpack.c.bf16 %v4583, %v4494
      %v4750 = vpack.c.bf16 %v4672, %v4672
      %v4751 = vpack.c.bf16 %v4586, %v4497
      %v4752 = vpack.c.bf16 %v4675, %v4675
      %v4753 = vpack.c.bf16 %v4588, %v4499
      %v4754 = vpack.c.bf16 %v4677, %v4677
      %v4755 = vpack.c.bf16 %v4591, %v4502
      %v4756 = vpack.c.bf16 %v4680, %v4680
      %v4757 = vpack.c.bf16 %v4593, %v4504
      %v4758 = vpack.c.bf16 %v4682, %v4682
      %v4759 = vpack.c.bf16 %v4596, %v4507
      %v4760 = vpack.c.bf16 %v4685, %v4685
      %v4761 = vpack.c.bf16 %v4598, %v4509
      %v4762 = vpack.c.bf16 %v4687, %v4687
      %v4763 = vpack.c.bf16 %v4601, %v4512
      %v4764 = vpack.c.bf16 %v4690, %v4690
      %v4765 = vpack.c.bf16 %v4603, %v4514
      %v4766 = vpack.c.bf16 %v4692, %v4692
      %v4767 = vpack.c.bf16 %v4606, %v4517
      %v4768 = vpack.c.bf16 %v4695, %v4695
      %v4769 = vpack.c.bf16 %v4608, %v4519
      %v4770 = vpack.c.bf16 %v4697, %v4697
      %v4771 = vpack.c.bf16 %v4611, %v4522
      %v4772 = vpack.c.bf16 %v4700, %v4700
      %v4773 = vpack.c.bf16 %v4613, %v4524
      %v4774 = vpack.c.bf16 %v4702, %v4702
      %v4775 = vpack.c.bf16 %v4616, %v4527
      %v4776 = vpack.c.bf16 %v4705, %v4705
      %v4777 = vpack.c.bf16 %v4618, %v4529
      %v4778 = vpack.c.bf16 %v4707, %v4707
      %v4779 = vpack.c.bf16 %v4621, %v4532
      %v4780 = vpack.c.bf16 %v4710, %v4710
      %v4781 = vpack.c.bf16 %v4623, %v4534
      %v4782 = vpack.c.bf16 %v4712, %v4712
      %v4783 = vpack.c.bf16 %v4626, %v4537
      %v4784 = vpack.c.bf16 %v4715, %v4715
      %v4785 = vpack.c.bf16 %v4628, %v4539
      %v4786 = vpack.c.bf16 %v4717, %v4717
      %v4787 = vpack.c.bf16 %v4631, %v4542
      %v4788 = vpack.c.bf16 %v4720, %v4720
      %v4789 = vpack.c.bf16 %v4633, %v4544
      %v4790 = vpack.c.bf16 %v4722, %v4722
      %v4791 = vpack.c.bf16 %v4636, %v4547
      %v4792 = vpack.c.bf16 %v4725, %v4725
      %v4793 = vpack.c.bf16 %v4638, %v4549
      %v4794 = vpack.c.bf16 %v4727, %v4727
      %v4795 = vpack.c.bf16 %v4641, %v4552
      %v4796 = vpack.c.bf16 %v4730, %v4730
      %v4797 = vpack.c.bf16 %v4643, %v4554
      %v4798 = vpack.c.bf16 %v4732, %v4732
      %v4799 = vpack.c.bf16 %v4646, %v4557
      %v4800 = vpack.c.bf16 %v4735, %v4735
      %v4801 = vpack.c.bf16 %v4648, %v4559
      %v4802 = vpack.c.bf16 %v4737, %v4737
      %v4819 = vunpack.c.h.b16 %v4739
      %v4820 = vunpack.c.h.b16 %v4741
      %v4821 = vunpack.c.h.b16 %v4743
      %v4822 = vunpack.c.h.b16 %v4745
      %v4823 = vunpack.c.h.b16 %v4747
      %v4824 = vunpack.c.h.b16 %v4749
      %v4825 = vunpack.c.h.b16 %v4751
      %v4826 = vunpack.c.h.b16 %v4753
      %v4827 = vunpack.c.h.b16 %v4755
      %v4828 = vunpack.c.h.b16 %v4757
      %v4829 = vunpack.c.h.b16 %v4759
      %v4830 = vunpack.c.h.b16 %v4761
      %v4831 = vunpack.c.h.b16 %v4763
      %v4832 = vunpack.c.h.b16 %v4765
      %v4833 = vunpack.c.h.b16 %v4767
      %v4834 = vunpack.c.h.b16 %v4769
      %v4835 = vpack.c.b16 %v4820, %v4819
      %v4836 = vpack.c.b16 %v4822, %v4821
      %v4837 = vpack.c.b16 %v4824, %v4823
      %v4838 = vpack.c.b16 %v4826, %v4825
      %v4839 = vpack.c.b16 %v4828, %v4827
      %v4840 = vpack.c.b16 %v4830, %v4829
      %v4841 = vpack.c.b16 %v4832, %v4831
      %v4842 = vpack.c.b16 %v4834, %v4833
      %4851 = vmatpush.bf16.msra.mxu0 %v4842
      %4852 = vmatpush.bf16.msra.mxu0 %v4841
      %4853 = vmatpush.bf16.msra.mxu0 %v4840
      %4854 = vmatpush.bf16.msra.mxu0 %v4839
      %4855 = vmatpush.bf16.msra.mxu0 %v4838
      %4856 = vmatpush.bf16.msra.mxu0 %v4837
      %4857 = vmatpush.bf16.msra.mxu0 %v4836
      %4858 = vmatpush.bf16.msra.mxu0 %v4835
      %4859 = vmatmul.bf16.gmra.mxu0 %v1196
      %v4860 = vpop.f32.mrf.mxu0
      %v4861 = vadd.f32 0.0, %v4860
      %v4862 = vpop.f32.mrf.mxu0
      %v4863 = vadd.f32 0.0, %v4862
      %4864 = vmatmul.bf16.gmra.mxu0 %v1197
      %v4865 = vpop.f32.mrf.mxu0
      %v4866 = vadd.f32 0.0, %v4865
      %v4867 = vpop.f32.mrf.mxu0
      %v4868 = vadd.f32 0.0, %v4867
      %4869 = vmatmul.bf16.gmra.mxu0 %v1198
      %v4870 = vpop.f32.mrf.mxu0
      %v4871 = vadd.f32 0.0, %v4870
      %v4872 = vpop.f32.mrf.mxu0
      %v4873 = vadd.f32 0.0, %v4872
      %4874 = vmatmul.bf16.gmra.mxu0 %v1199
      %v4875 = vpop.f32.mrf.mxu0
      %v4876 = vadd.f32 0.0, %v4875
      %v4877 = vpop.f32.mrf.mxu0
      %v4878 = vadd.f32 0.0, %v4877
      %4879 = vmatmul.bf16.gmra.mxu0 %v1200
      %v4880 = vpop.f32.mrf.mxu0
      %v4881 = vadd.f32 0.0, %v4880
      %v4882 = vpop.f32.mrf.mxu0
      %v4883 = vadd.f32 0.0, %v4882
      %4884 = vmatmul.bf16.gmra.mxu0 %v1201
      %v4885 = vpop.f32.mrf.mxu0
      %v4886 = vadd.f32 0.0, %v4885
      %v4887 = vpop.f32.mrf.mxu0
      %v4888 = vadd.f32 0.0, %v4887
      %4889 = vmatmul.bf16.gmra.mxu0 %v1202
      %v4890 = vpop.f32.mrf.mxu0
      %v4891 = vadd.f32 0.0, %v4890
      %v4892 = vpop.f32.mrf.mxu0
      %v4893 = vadd.f32 0.0, %v4892
      %4894 = vmatmul.bf16.gmra.mxu0 %v1203
      %v4895 = vpop.f32.mrf.mxu0
      %v4896 = vadd.f32 0.0, %v4895
      %v4897 = vpop.f32.mrf.mxu0
      %v4898 = vadd.f32 0.0, %v4897
      %4899 = vdwg.mxu0
      %v4900 = vunpack.c.l.b16 %v4739
      %v4901 = vunpack.c.l.b16 %v4741
      %v4902 = vunpack.c.l.b16 %v4743
      %v4903 = vunpack.c.l.b16 %v4745
      %v4904 = vunpack.c.l.b16 %v4747
      %v4905 = vunpack.c.l.b16 %v4749
      %v4906 = vunpack.c.l.b16 %v4751
      %v4907 = vunpack.c.l.b16 %v4753
      %v4908 = vunpack.c.l.b16 %v4755
      %v4909 = vunpack.c.l.b16 %v4757
      %v4910 = vunpack.c.l.b16 %v4759
      %v4911 = vunpack.c.l.b16 %v4761
      %v4912 = vunpack.c.l.b16 %v4763
      %v4913 = vunpack.c.l.b16 %v4765
      %v4914 = vunpack.c.l.b16 %v4767
      %v4915 = vunpack.c.l.b16 %v4769
      %v4916 = vpack.c.b16 %v4901, %v4900
      %v4917 = vpack.c.b16 %v4903, %v4902
      %v4918 = vpack.c.b16 %v4905, %v4904
      %v4919 = vpack.c.b16 %v4907, %v4906
      %v4920 = vpack.c.b16 %v4909, %v4908
      %v4921 = vpack.c.b16 %v4911, %v4910
      %v4922 = vpack.c.b16 %v4913, %v4912
      %v4923 = vpack.c.b16 %v4915, %v4914
      %4932 = vmatpush.bf16.msra.mxu0 %v4923
      %4933 = vmatpush.bf16.msra.mxu0 %v4922
      %4934 = vmatpush.bf16.msra.mxu0 %v4921
      %4935 = vmatpush.bf16.msra.mxu0 %v4920
      %4936 = vmatpush.bf16.msra.mxu0 %v4919
      %4937 = vmatpush.bf16.msra.mxu0 %v4918
      %4938 = vmatpush.bf16.msra.mxu0 %v4917
      %4939 = vmatpush.bf16.msra.mxu0 %v4916
      %4940 = vmatmul.bf16.gmra.mxu0 %v1357
      %v4941 = vpop.f32.mrf.mxu0
      %v4942 = vadd.f32 %v4861, %v4941
      %v4943 = vpop.f32.mrf.mxu0
      %v4944 = vadd.f32 %v4863, %v4943
      %4945 = vmatmul.bf16.gmra.mxu0 %v1358
      %v4946 = vpop.f32.mrf.mxu0
      %v4947 = vadd.f32 %v4866, %v4946
      %v4948 = vpop.f32.mrf.mxu0
      %v4949 = vadd.f32 %v4868, %v4948
      %4950 = vmatmul.bf16.gmra.mxu0 %v1359
      %v4951 = vpop.f32.mrf.mxu0
      %v4952 = vadd.f32 %v4871, %v4951
      %v4953 = vpop.f32.mrf.mxu0
      %v4954 = vadd.f32 %v4873, %v4953
      %4955 = vmatmul.bf16.gmra.mxu0 %v1360
      %v4956 = vpop.f32.mrf.mxu0
      %v4957 = vadd.f32 %v4876, %v4956
      %v4958 = vpop.f32.mrf.mxu0
      %v4959 = vadd.f32 %v4878, %v4958
      %4960 = vmatmul.bf16.gmra.mxu0 %v1361
      %v4961 = vpop.f32.mrf.mxu0
      %v4962 = vadd.f32 %v4881, %v4961
      %v4963 = vpop.f32.mrf.mxu0
      %v4964 = vadd.f32 %v4883, %v4963
      %4965 = vmatmul.bf16.gmra.mxu0 %v1362
      %v4966 = vpop.f32.mrf.mxu0
      %v4967 = vadd.f32 %v4886, %v4966
      %v4968 = vpop.f32.mrf.mxu0
      %v4969 = vadd.f32 %v4888, %v4968
      %4970 = vmatmul.bf16.gmra.mxu0 %v1363
      %v4971 = vpop.f32.mrf.mxu0
      %v4972 = vadd.f32 %v4891, %v4971
      %v4973 = vpop.f32.mrf.mxu0
      %v4974 = vadd.f32 %v4893, %v4973
      %4975 = vmatmul.bf16.gmra.mxu0 %v1364
      %v4976 = vpop.f32.mrf.mxu0
      %v4977 = vadd.f32 %v4896, %v4976
      %v4978 = vpop.f32.mrf.mxu0
      %v4979 = vadd.f32 %v4898, %v4978
      %4980 = vdwg.mxu0
      %v4997 = vunpack.c.l.b16 %v4740
      %v4998 = vunpack.c.l.b16 %v4742
      %v4999 = vunpack.c.l.b16 %v4744
      %v5000 = vunpack.c.l.b16 %v4746
      %v5001 = vunpack.c.l.b16 %v4748
      %v5002 = vunpack.c.l.b16 %v4750
      %v5003 = vunpack.c.l.b16 %v4752
      %v5004 = vunpack.c.l.b16 %v4754
      %v5005 = vunpack.c.l.b16 %v4756
      %v5006 = vunpack.c.l.b16 %v4758
      %v5007 = vunpack.c.l.b16 %v4760
      %v5008 = vunpack.c.l.b16 %v4762
      %v5009 = vunpack.c.l.b16 %v4764
      %v5010 = vunpack.c.l.b16 %v4766
      %v5011 = vunpack.c.l.b16 %v4768
      %v5012 = vunpack.c.l.b16 %v4770
      %v5013 = vpack.c.b16 %v4998, %v4997
      %v5014 = vpack.c.b16 %v5000, %v4999
      %v5015 = vpack.c.b16 %v5002, %v5001
      %v5016 = vpack.c.b16 %v5004, %v5003
      %v5017 = vpack.c.b16 %v5006, %v5005
      %v5018 = vpack.c.b16 %v5008, %v5007
      %v5019 = vpack.c.b16 %v5010, %v5009
      %v5020 = vpack.c.b16 %v5012, %v5011
      %5029 = vmatpush.bf16.msra.mxu0 %v5020
      %5030 = vmatpush.bf16.msra.mxu0 %v5019
      %5031 = vmatpush.bf16.msra.mxu0 %v5018
      %5032 = vmatpush.bf16.msra.mxu0 %v5017
      %5033 = vmatpush.bf16.msra.mxu0 %v5016
      %5034 = vmatpush.bf16.msra.mxu0 %v5015
      %5035 = vmatpush.bf16.msra.mxu0 %v5014
      %5036 = vmatpush.bf16.msra.mxu0 %v5013
      %5037 = vmatmul.bf16.gmra.mxu0 %v1462
      %v5038 = vpop.f32.mrf.mxu0
      %v5039 = vadd.f32 0.0, %v5038
      %v5040 = vpop.f32.mrf.mxu0
      %v5041 = vadd.f32 0.0, %v5040
      %5042 = vmatmul.bf16.gmra.mxu0 %v1463
      %v5043 = vpop.f32.mrf.mxu0
      %v5044 = vadd.f32 0.0, %v5043
      %v5045 = vpop.f32.mrf.mxu0
      %v5046 = vadd.f32 0.0, %v5045
      %5047 = vmatmul.bf16.gmra.mxu0 %v1464
      %v5048 = vpop.f32.mrf.mxu0
      %v5049 = vadd.f32 0.0, %v5048
      %v5050 = vpop.f32.mrf.mxu0
      %v5051 = vadd.f32 0.0, %v5050
      %5052 = vmatmul.bf16.gmra.mxu0 %v1465
      %v5053 = vpop.f32.mrf.mxu0
      %v5054 = vadd.f32 0.0, %v5053
      %v5055 = vpop.f32.mrf.mxu0
      %v5056 = vadd.f32 0.0, %v5055
      %5057 = vmatmul.bf16.gmra.mxu0 %v1466
      %v5058 = vpop.f32.mrf.mxu0
      %v5059 = vadd.f32 0.0, %v5058
      %v5060 = vpop.f32.mrf.mxu0
      %v5061 = vadd.f32 0.0, %v5060
      %5062 = vmatmul.bf16.gmra.mxu0 %v1467
      %v5063 = vpop.f32.mrf.mxu0
      %v5064 = vadd.f32 0.0, %v5063
      %v5065 = vpop.f32.mrf.mxu0
      %v5066 = vadd.f32 0.0, %v5065
      %5067 = vmatmul.bf16.gmra.mxu0 %v1468
      %v5068 = vpop.f32.mrf.mxu0
      %v5069 = vadd.f32 0.0, %v5068
      %v5070 = vpop.f32.mrf.mxu0
      %v5071 = vadd.f32 0.0, %v5070
      %5072 = vmatmul.bf16.gmra.mxu0 %v1469
      %v5073 = vpop.f32.mrf.mxu0
      %v5074 = vadd.f32 0.0, %v5073
      %v5075 = vpop.f32.mrf.mxu0
      %v5076 = vadd.f32 0.0, %v5075
      %5077 = vdwg.mxu0
      %v5078 = vadd.f32 %v4942, %v5039
      %v5079 = vadd.f32 %v4944, %v5041
      %v5080 = vadd.f32 %v4947, %v5044
      %v5081 = vadd.f32 %v4949, %v5046
      %v5082 = vadd.f32 %v4952, %v5049
      %v5083 = vadd.f32 %v4954, %v5051
      %v5084 = vadd.f32 %v4957, %v5054
      %v5085 = vadd.f32 %v4959, %v5056
      %v5086 = vadd.f32 %v4962, %v5059
      %v5087 = vadd.f32 %v4964, %v5061
      %v5088 = vadd.f32 %v4967, %v5064
      %v5089 = vadd.f32 %v4969, %v5066
      %v5090 = vadd.f32 %v4972, %v5069
      %v5091 = vadd.f32 %v4974, %v5071
      %v5092 = vadd.f32 %v4977, %v5074
      %v5093 = vadd.f32 %v4979, %v5076
      %v5110 = vunpack.c.h.b16 %v4771
      %v5111 = vunpack.c.h.b16 %v4773
      %v5112 = vunpack.c.h.b16 %v4775
      %v5113 = vunpack.c.h.b16 %v4777
      %v5114 = vunpack.c.h.b16 %v4779
      %v5115 = vunpack.c.h.b16 %v4781
      %v5116 = vunpack.c.h.b16 %v4783
      %v5117 = vunpack.c.h.b16 %v4785
      %v5118 = vunpack.c.h.b16 %v4787
      %v5119 = vunpack.c.h.b16 %v4789
      %v5120 = vunpack.c.h.b16 %v4791
      %v5121 = vunpack.c.h.b16 %v4793
      %v5122 = vunpack.c.h.b16 %v4795
      %v5123 = vunpack.c.h.b16 %v4797
      %v5124 = vunpack.c.h.b16 %v4799
      %v5125 = vunpack.c.h.b16 %v4801
      %v5126 = vpack.c.b16 %v5111, %v5110
      %v5127 = vpack.c.b16 %v5113, %v5112
      %v5128 = vpack.c.b16 %v5115, %v5114
      %v5129 = vpack.c.b16 %v5117, %v5116
      %v5130 = vpack.c.b16 %v5119, %v5118
      %v5131 = vpack.c.b16 %v5121, %v5120
      %v5132 = vpack.c.b16 %v5123, %v5122
      %v5133 = vpack.c.b16 %v5125, %v5124
      %5142 = vmatpush.bf16.msra.mxu0 %v5133
      %5143 = vmatpush.bf16.msra.mxu0 %v5132
      %5144 = vmatpush.bf16.msra.mxu0 %v5131
      %5145 = vmatpush.bf16.msra.mxu0 %v5130
      %5146 = vmatpush.bf16.msra.mxu0 %v5129
      %5147 = vmatpush.bf16.msra.mxu0 %v5128
      %5148 = vmatpush.bf16.msra.mxu0 %v5127
      %5149 = vmatpush.bf16.msra.mxu0 %v5126
      %5150 = vmatmul.bf16.gmra.mxu0 %v1196
      %v5151 = vpop.f32.mrf.mxu0
      %v5152 = vadd.f32 0.0, %v5151
      %v5153 = vpop.f32.mrf.mxu0
      %v5154 = vadd.f32 0.0, %v5153
      %5155 = vmatmul.bf16.gmra.mxu0 %v1197
      %v5156 = vpop.f32.mrf.mxu0
      %v5157 = vadd.f32 0.0, %v5156
      %v5158 = vpop.f32.mrf.mxu0
      %v5159 = vadd.f32 0.0, %v5158
      %5160 = vmatmul.bf16.gmra.mxu0 %v1198
      %v5161 = vpop.f32.mrf.mxu0
      %v5162 = vadd.f32 0.0, %v5161
      %v5163 = vpop.f32.mrf.mxu0
      %v5164 = vadd.f32 0.0, %v5163
      %5165 = vmatmul.bf16.gmra.mxu0 %v1199
      %v5166 = vpop.f32.mrf.mxu0
      %v5167 = vadd.f32 0.0, %v5166
      %v5168 = vpop.f32.mrf.mxu0
      %v5169 = vadd.f32 0.0, %v5168
      %5170 = vmatmul.bf16.gmra.mxu0 %v1200
      %v5171 = vpop.f32.mrf.mxu0
      %v5172 = vadd.f32 0.0, %v5171
      %v5173 = vpop.f32.mrf.mxu0
      %v5174 = vadd.f32 0.0, %v5173
      %5175 = vmatmul.bf16.gmra.mxu0 %v1201
      %v5176 = vpop.f32.mrf.mxu0
      %v5177 = vadd.f32 0.0, %v5176
      %v5178 = vpop.f32.mrf.mxu0
      %v5179 = vadd.f32 0.0, %v5178
      %5180 = vmatmul.bf16.gmra.mxu0 %v1202
      %v5181 = vpop.f32.mrf.mxu0
      %v5182 = vadd.f32 0.0, %v5181
      %v5183 = vpop.f32.mrf.mxu0
      %v5184 = vadd.f32 0.0, %v5183
      %5185 = vmatmul.bf16.gmra.mxu0 %v1203
      %v5186 = vpop.f32.mrf.mxu0
      %v5187 = vadd.f32 0.0, %v5186
      %v5188 = vpop.f32.mrf.mxu0
      %v5189 = vadd.f32 0.0, %v5188
      %5190 = vdwg.mxu0
      %v5191 = vunpack.c.l.b16 %v4771
      %v5192 = vunpack.c.l.b16 %v4773
      %v5193 = vunpack.c.l.b16 %v4775
      %v5194 = vunpack.c.l.b16 %v4777
      %v5195 = vunpack.c.l.b16 %v4779
      %v5196 = vunpack.c.l.b16 %v4781
      %v5197 = vunpack.c.l.b16 %v4783
      %v5198 = vunpack.c.l.b16 %v4785
      %v5199 = vunpack.c.l.b16 %v4787
      %v5200 = vunpack.c.l.b16 %v4789
      %v5201 = vunpack.c.l.b16 %v4791
      %v5202 = vunpack.c.l.b16 %v4793
      %v5203 = vunpack.c.l.b16 %v4795
      %v5204 = vunpack.c.l.b16 %v4797
      %v5205 = vunpack.c.l.b16 %v4799
      %v5206 = vunpack.c.l.b16 %v4801
      %v5207 = vpack.c.b16 %v5192, %v5191
      %v5208 = vpack.c.b16 %v5194, %v5193
      %v5209 = vpack.c.b16 %v5196, %v5195
      %v5210 = vpack.c.b16 %v5198, %v5197
      %v5211 = vpack.c.b16 %v5200, %v5199
      %v5212 = vpack.c.b16 %v5202, %v5201
      %v5213 = vpack.c.b16 %v5204, %v5203
      %v5214 = vpack.c.b16 %v5206, %v5205
      %5223 = vmatpush.bf16.msra.mxu0 %v5214
      %5224 = vmatpush.bf16.msra.mxu0 %v5213
      %5225 = vmatpush.bf16.msra.mxu0 %v5212
      %5226 = vmatpush.bf16.msra.mxu0 %v5211
      %5227 = vmatpush.bf16.msra.mxu0 %v5210
      %5228 = vmatpush.bf16.msra.mxu0 %v5209
      %5229 = vmatpush.bf16.msra.mxu0 %v5208
      %5230 = vmatpush.bf16.msra.mxu0 %v5207
      %5231 = vmatmul.bf16.gmra.mxu0 %v1357
      %v5232 = vpop.f32.mrf.mxu0
      %v5233 = vadd.f32 %v5152, %v5232
      %v5234 = vpop.f32.mrf.mxu0
      %v5235 = vadd.f32 %v5154, %v5234
      %5236 = vmatmul.bf16.gmra.mxu0 %v1358
      %v5237 = vpop.f32.mrf.mxu0
      %v5238 = vadd.f32 %v5157, %v5237
      %v5239 = vpop.f32.mrf.mxu0
      %v5240 = vadd.f32 %v5159, %v5239
      %5241 = vmatmul.bf16.gmra.mxu0 %v1359
      %v5242 = vpop.f32.mrf.mxu0
      %v5243 = vadd.f32 %v5162, %v5242
      %v5244 = vpop.f32.mrf.mxu0
      %v5245 = vadd.f32 %v5164, %v5244
      %5246 = vmatmul.bf16.gmra.mxu0 %v1360
      %v5247 = vpop.f32.mrf.mxu0
      %v5248 = vadd.f32 %v5167, %v5247
      %v5249 = vpop.f32.mrf.mxu0
      %v5250 = vadd.f32 %v5169, %v5249
      %5251 = vmatmul.bf16.gmra.mxu0 %v1361
      %v5252 = vpop.f32.mrf.mxu0
      %v5253 = vadd.f32 %v5172, %v5252
      %v5254 = vpop.f32.mrf.mxu0
      %v5255 = vadd.f32 %v5174, %v5254
      %5256 = vmatmul.bf16.gmra.mxu0 %v1362
      %v5257 = vpop.f32.mrf.mxu0
      %v5258 = vadd.f32 %v5177, %v5257
      %v5259 = vpop.f32.mrf.mxu0
      %v5260 = vadd.f32 %v5179, %v5259
      %5261 = vmatmul.bf16.gmra.mxu0 %v1363
      %v5262 = vpop.f32.mrf.mxu0
      %v5263 = vadd.f32 %v5182, %v5262
      %v5264 = vpop.f32.mrf.mxu0
      %v5265 = vadd.f32 %v5184, %v5264
      %5266 = vmatmul.bf16.gmra.mxu0 %v1364
      %v5267 = vpop.f32.mrf.mxu0
      %v5268 = vadd.f32 %v5187, %v5267
      %v5269 = vpop.f32.mrf.mxu0
      %v5270 = vadd.f32 %v5189, %v5269
      %5271 = vdwg.mxu0
      %v5288 = vunpack.c.l.b16 %v4772
      %v5289 = vunpack.c.l.b16 %v4774
      %v5290 = vunpack.c.l.b16 %v4776
      %v5291 = vunpack.c.l.b16 %v4778
      %v5292 = vunpack.c.l.b16 %v4780
      %v5293 = vunpack.c.l.b16 %v4782
      %v5294 = vunpack.c.l.b16 %v4784
      %v5295 = vunpack.c.l.b16 %v4786
      %v5296 = vunpack.c.l.b16 %v4788
      %v5297 = vunpack.c.l.b16 %v4790
      %v5298 = vunpack.c.l.b16 %v4792
      %v5299 = vunpack.c.l.b16 %v4794
      %v5300 = vunpack.c.l.b16 %v4796
      %v5301 = vunpack.c.l.b16 %v4798
      %v5302 = vunpack.c.l.b16 %v4800
      %v5303 = vunpack.c.l.b16 %v4802
      %v5304 = vpack.c.b16 %v5289, %v5288
      %v5305 = vpack.c.b16 %v5291, %v5290
      %v5306 = vpack.c.b16 %v5293, %v5292
      %v5307 = vpack.c.b16 %v5295, %v5294
      %v5308 = vpack.c.b16 %v5297, %v5296
      %v5309 = vpack.c.b16 %v5299, %v5298
      %v5310 = vpack.c.b16 %v5301, %v5300
      %v5311 = vpack.c.b16 %v5303, %v5302
      %5320 = vmatpush.bf16.msra.mxu0 %v5311
      %5321 = vmatpush.bf16.msra.mxu0 %v5310
      %5322 = vmatpush.bf16.msra.mxu0 %v5309
      %5323 = vmatpush.bf16.msra.mxu0 %v5308
      %5324 = vmatpush.bf16.msra.mxu0 %v5307
      %5325 = vmatpush.bf16.msra.mxu0 %v5306
      %5326 = vmatpush.bf16.msra.mxu0 %v5305
      %5327 = vmatpush.bf16.msra.mxu0 %v5304
      %5328 = vmatmul.bf16.gmra.mxu0 %v1462
      %v5329 = vpop.f32.mrf.mxu0
      %v5330 = vadd.f32 0.0, %v5329
      %v5331 = vpop.f32.mrf.mxu0
      %v5332 = vadd.f32 0.0, %v5331
      %5333 = vmatmul.bf16.gmra.mxu0 %v1463
      %v5334 = vpop.f32.mrf.mxu0
      %v5335 = vadd.f32 0.0, %v5334
      %v5336 = vpop.f32.mrf.mxu0
      %v5337 = vadd.f32 0.0, %v5336
      %5338 = vmatmul.bf16.gmra.mxu0 %v1464
      %v5339 = vpop.f32.mrf.mxu0
      %v5340 = vadd.f32 0.0, %v5339
      %v5341 = vpop.f32.mrf.mxu0
      %v5342 = vadd.f32 0.0, %v5341
      %5343 = vmatmul.bf16.gmra.mxu0 %v1465
      %v5344 = vpop.f32.mrf.mxu0
      %v5345 = vadd.f32 0.0, %v5344
      %v5346 = vpop.f32.mrf.mxu0
      %v5347 = vadd.f32 0.0, %v5346
      %5348 = vmatmul.bf16.gmra.mxu0 %v1466
      %v5349 = vpop.f32.mrf.mxu0
      %v5350 = vadd.f32 0.0, %v5349
      %v5351 = vpop.f32.mrf.mxu0
      %v5352 = vadd.f32 0.0, %v5351
      %5353 = vmatmul.bf16.gmra.mxu0 %v1467
      %v5354 = vpop.f32.mrf.mxu0
      %v5355 = vadd.f32 0.0, %v5354
      %v5356 = vpop.f32.mrf.mxu0
      %v5357 = vadd.f32 0.0, %v5356
      %5358 = vmatmul.bf16.gmra.mxu0 %v1468
      %v5359 = vpop.f32.mrf.mxu0
      %v5360 = vadd.f32 0.0, %v5359
      %v5361 = vpop.f32.mrf.mxu0
      %v5362 = vadd.f32 0.0, %v5361
      %5363 = vmatmul.bf16.gmra.mxu0 %v1469
      %v5364 = vpop.f32.mrf.mxu0
      %v5365 = vadd.f32 0.0, %v5364
      %v5366 = vpop.f32.mrf.mxu0
      %v5367 = vadd.f32 0.0, %v5366
      %5368 = vdwg.mxu0
      %v5369 = vadd.f32 %v5233, %v5330
      %v5370 = vadd.f32 %v5235, %v5332
      %v5371 = vadd.f32 %v5238, %v5335
      %v5372 = vadd.f32 %v5240, %v5337
      %v5373 = vadd.f32 %v5243, %v5340
      %v5374 = vadd.f32 %v5245, %v5342
      %v5375 = vadd.f32 %v5248, %v5345
      %v5376 = vadd.f32 %v5250, %v5347
      %v5377 = vadd.f32 %v5253, %v5350
      %v5378 = vadd.f32 %v5255, %v5352
      %v5379 = vadd.f32 %v5258, %v5355
      %v5380 = vadd.f32 %v5260, %v5357
      %v5381 = vadd.f32 %v5263, %v5360
      %v5382 = vadd.f32 %v5265, %v5362
      %v5383 = vadd.f32 %v5268, %v5365
      %v5384 = vadd.f32 %v5270, %v5367
      %v5385 = vld [vmem:[%s11] sm:$0xff]
      %v5386 = vadd.f32 %v5078, %v5385
      %v5387 = vadd.f32 %v5079, %v5385
      %v5388 = vadd.f32 %v5080, %v5385
      %v5389 = vadd.f32 %v5081, %v5385
      %v5390 = vadd.f32 %v5082, %v5385
      %v5391 = vadd.f32 %v5083, %v5385
      %v5392 = vadd.f32 %v5084, %v5385
      %v5393 = vadd.f32 %v5085, %v5385
      %v5394 = vadd.f32 %v5086, %v5385
      %v5395 = vadd.f32 %v5087, %v5385
      %v5396 = vadd.f32 %v5088, %v5385
      %v5397 = vadd.f32 %v5089, %v5385
      %v5398 = vadd.f32 %v5090, %v5385
      %v5399 = vadd.f32 %v5091, %v5385
      %v5400 = vadd.f32 %v5092, %v5385
      %v5401 = vadd.f32 %v5093, %v5385
      %v5402 = vadd.f32 %v5369, %v5385
      %v5403 = vadd.f32 %v5370, %v5385
      %v5404 = vadd.f32 %v5371, %v5385
      %v5405 = vadd.f32 %v5372, %v5385
      %v5406 = vadd.f32 %v5373, %v5385
      %v5407 = vadd.f32 %v5374, %v5385
      %v5408 = vadd.f32 %v5375, %v5385
      %v5409 = vadd.f32 %v5376, %v5385
      %v5410 = vadd.f32 %v5377, %v5385
      %v5411 = vadd.f32 %v5378, %v5385
      %v5412 = vadd.f32 %v5379, %v5385
      %v5413 = vadd.f32 %v5380, %v5385
      %v5414 = vadd.f32 %v5381, %v5385
      %v5415 = vadd.f32 %v5382, %v5385
      %v5416 = vadd.f32 %v5383, %v5385
      %v5417 = vadd.f32 %v5384, %v5385
      %v5418 = vmax.f32 %v5386, 0.0
      %v5419 = vmax.f32 %v5387, 0.0
      %v5420 = vmax.f32 %v5388, 0.0
      %v5421 = vmax.f32 %v5389, 0.0
      %v5422 = vmax.f32 %v5390, 0.0
      %v5423 = vmax.f32 %v5391, 0.0
      %v5424 = vmax.f32 %v5392, 0.0
      %v5425 = vmax.f32 %v5393, 0.0
      %v5426 = vmax.f32 %v5394, 0.0
      %v5427 = vmax.f32 %v5395, 0.0
      %v5428 = vmax.f32 %v5396, 0.0
      %v5429 = vmax.f32 %v5397, 0.0
      %v5430 = vmax.f32 %v5398, 0.0
      %v5431 = vmax.f32 %v5399, 0.0
      %v5432 = vmax.f32 %v5400, 0.0
      %v5433 = vmax.f32 %v5401, 0.0
      %v5434 = vmax.f32 %v5402, 0.0
      %v5435 = vmax.f32 %v5403, 0.0
      %v5436 = vmax.f32 %v5404, 0.0
      %v5437 = vmax.f32 %v5405, 0.0
      %v5438 = vmax.f32 %v5406, 0.0
      %v5439 = vmax.f32 %v5407, 0.0
      %v5440 = vmax.f32 %v5408, 0.0
      %v5441 = vmax.f32 %v5409, 0.0
      %v5442 = vmax.f32 %v5410, 0.0
      %v5443 = vmax.f32 %v5411, 0.0
      %v5444 = vmax.f32 %v5412, 0.0
      %v5445 = vmax.f32 %v5413, 0.0
      %v5446 = vmax.f32 %v5414, 0.0
      %v5447 = vmax.f32 %v5415, 0.0
      %v5448 = vmax.f32 %v5416, 0.0
      %v5449 = vmax.f32 %v5417, 0.0
      %5450 = vst [vmem:[#allocation3] sm:$0xff] 0.0
      %5451 = vst [vmem:[#allocation3 + $0x8] sm:$0xff] 0.0
      %5452 = vst [vmem:[#allocation3 + $0x10] sm:$0xff] 0.0
      %5453 = vst [vmem:[#allocation3 + $0x18] sm:$0xff] 0.0
      %5454 = vst [vmem:[#allocation3 + $0xc0] sm:$0xff] 0.0
      %5455 = vst [vmem:[#allocation3 + $0xc8] sm:$0xff] 0.0
      %5456 = vst [vmem:[#allocation3 + $0xd0] sm:$0xff] 0.0
      %5457 = vst [vmem:[#allocation3 + $0xd8] sm:$0xff] 0.0
      %5458 = vst [vmem:[#allocation3 + $0xa0] sm:$0xff] 0.0
      %5459 = vst [vmem:[#allocation3 + $0xa8] sm:$0xff] 0.0
      %5460 = vst [vmem:[#allocation3 + $0xb0] sm:$0xff] 0.0
      %5461 = vst [vmem:[#allocation3 + $0xb8] sm:$0xff] 0.0
      %5462 = vst [vmem:[#allocation3 + $0x160] sm:$0xff] 0.0
      %5463 = vst [vmem:[#allocation3 + $0x168] sm:$0xff] 0.0
      %5464 = vst [vmem:[#allocation3 + $0x170] sm:$0xff] 0.0
      %5465 = vst [vmem:[#allocation3 + $0x178] sm:$0xff] 0.0
      %5466 = vst [vmem:[#allocation3 + $0x20] sm:$0xff] %v5418
      %5467 = vst [vmem:[#allocation3 + $0x28] sm:$0xff] %v5419
      %5468 = vst [vmem:[#allocation3 + $0x30] sm:$0xff] %v5420
      %5469 = vst [vmem:[#allocation3 + $0x38] sm:$0xff] %v5421
      %5470 = vst [vmem:[#allocation3 + $0x40] sm:$0xff] %v5422
      %5471 = vst [vmem:[#allocation3 + $0x48] sm:$0xff] %v5423
      %5472 = vst [vmem:[#allocation3 + $0x50] sm:$0xff] %v5424
      %5473 = vst [vmem:[#allocation3 + $0x58] sm:$0xff] %v5425
      %5474 = vst [vmem:[#allocation3 + $0x60] sm:$0xff] %v5426
      %5475 = vst [vmem:[#allocation3 + $0x68] sm:$0xff] %v5427
      %5476 = vst [vmem:[#allocation3 + $0x70] sm:$0xff] %v5428
      %5477 = vst [vmem:[#allocation3 + $0x78] sm:$0xff] %v5429
      %5478 = vst [vmem:[#allocation3 + $0x80] sm:$0xff] %v5430
      %5479 = vst [vmem:[#allocation3 + $0x88] sm:$0xff] %v5431
      %5480 = vst [vmem:[#allocation3 + $0x90] sm:$0xff] %v5432
      %5481 = vst [vmem:[#allocation3 + $0x98] sm:$0xff] %v5433
      %5482 = vst [vmem:[#allocation3 + $0xe0] sm:$0xff] %v5434
      %5483 = vst [vmem:[#allocation3 + $0xe8] sm:$0xff] %v5435
      %5484 = vst [vmem:[#allocation3 + $0xf0] sm:$0xff] %v5436
      %5485 = vst [vmem:[#allocation3 + $0xf8] sm:$0xff] %v5437
      %5486 = vst [vmem:[#allocation3 + $0x100] sm:$0xff] %v5438
      %5487 = vst [vmem:[#allocation3 + $0x108] sm:$0xff] %v5439
      %5488 = vst [vmem:[#allocation3 + $0x110] sm:$0xff] %v5440
      %5489 = vst [vmem:[#allocation3 + $0x118] sm:$0xff] %v5441
      %5490 = vst [vmem:[#allocation3 + $0x120] sm:$0xff] %v5442
      %5491 = vst [vmem:[#allocation3 + $0x128] sm:$0xff] %v5443
      %5492 = vst [vmem:[#allocation3 + $0x130] sm:$0xff] %v5444
      %5493 = vst [vmem:[#allocation3 + $0x138] sm:$0xff] %v5445
      %5494 = vst [vmem:[#allocation3 + $0x140] sm:$0xff] %v5446
      %5495 = vst [vmem:[#allocation3 + $0x148] sm:$0xff] %v5447
      %5496 = vst [vmem:[#allocation3 + $0x150] sm:$0xff] %v5448
      %5497 = vst [vmem:[#allocation3 + $0x158] sm:$0xff] %v5449
      %v5498 = vld [vmem:[#allocation3] sm:$0xff]
      %v5499 = vld [vmem:[#allocation3 + $0x8] sm:$0xff]
      %v5500 = vld [vmem:[#allocation3 + $0x10] sm:$0xff]
      %v5501 = vld [vmem:[#allocation3 + $0x18] sm:$0xff]
      %v5502 = vld [vmem:[#allocation3 + $0x20] sm:$0xff]
      %v5503 = vld [vmem:[#allocation3 + $0x28] sm:$0xff]
      %v5504 = vld [vmem:[#allocation3 + $0x30] sm:$0xff]
      %v5505 = vld [vmem:[#allocation3 + $0x38] sm:$0xff]
      %v5506 = vld [vmem:[#allocation3 + $0x40] sm:$0xff]
      %v5507 = vld [vmem:[#allocation3 + $0x48] sm:$0xff]
      %v5508 = vld [vmem:[#allocation3 + $0x50] sm:$0xff]
      %v5509 = vld [vmem:[#allocation3 + $0x58] sm:$0xff]
      %v5510 = vld [vmem:[#allocation3 + $0x60] sm:$0xff]
      %v5511 = vld [vmem:[#allocation3 + $0x68] sm:$0xff]
      %v5512 = vld [vmem:[#allocation3 + $0x70] sm:$0xff]
      %v5513 = vld [vmem:[#allocation3 + $0x78] sm:$0xff]
      %v5514 = vld [vmem:[#allocation3 + $0xc0] sm:$0xff]
      %v5515 = vld [vmem:[#allocation3 + $0xc8] sm:$0xff]
      %v5516 = vld [vmem:[#allocation3 + $0xd0] sm:$0xff]
      %v5517 = vld [vmem:[#allocation3 + $0xd8] sm:$0xff]
      %v5518 = vld [vmem:[#allocation3 + $0xe0] sm:$0xff]
      %v5519 = vld [vmem:[#allocation3 + $0xe8] sm:$0xff]
      %v5520 = vld [vmem:[#allocation3 + $0xf0] sm:$0xff]
      %v5521 = vld [vmem:[#allocation3 + $0xf8] sm:$0xff]
      %v5522 = vld [vmem:[#allocation3 + $0x100] sm:$0xff]
      %v5523 = vld [vmem:[#allocation3 + $0x108] sm:$0xff]
      %v5524 = vld [vmem:[#allocation3 + $0x110] sm:$0xff]
      %v5525 = vld [vmem:[#allocation3 + $0x118] sm:$0xff]
      %v5526 = vld [vmem:[#allocation3 + $0x120] sm:$0xff]
      %v5527 = vld [vmem:[#allocation3 + $0x128] sm:$0xff]
      %v5528 = vld [vmem:[#allocation3 + $0x130] sm:$0xff]
      %v5529 = vld [vmem:[#allocation3 + $0x138] sm:$0xff]
      %v5530 = vpack.c.bf16 %v5499, %v5498
      %v5531 = vpack.c.bf16 %v5501, %v5500
      %v5532 = vpack.c.bf16 %v5503, %v5502
      %v5533 = vpack.c.bf16 %v5505, %v5504
      %v5534 = vpack.c.bf16 %v5507, %v5506
      %v5535 = vpack.c.bf16 %v5509, %v5508
      %v5536 = vpack.c.bf16 %v5511, %v5510
      %v5537 = vpack.c.bf16 %v5513, %v5512
      %v5538 = vpack.c.bf16 %v5515, %v5514
      %v5539 = vpack.c.bf16 %v5517, %v5516
      %v5540 = vpack.c.bf16 %v5519, %v5518
      %v5541 = vpack.c.bf16 %v5521, %v5520
      %v5542 = vpack.c.bf16 %v5523, %v5522
      %v5543 = vpack.c.bf16 %v5525, %v5524
      %v5544 = vpack.c.bf16 %v5527, %v5526
      %v5545 = vpack.c.bf16 %v5529, %v5528
      %v5546 = vld [vmem:[%s12] sm:$0xf]
      %v5547 = vld [vmem:[%s12 + $0x4] sm:$0xf]
      %v5548 = vld [vmem:[%s12 + $0x8] sm:$0xf]
      %v5549 = vld [vmem:[%s12 + $0xc] sm:$0xf]
      %v5550 = vld [vmem:[%s12 + $0x10] sm:$0xf]
      %v5551 = vld [vmem:[%s12 + $0x14] sm:$0xf]
      %v5552 = vld [vmem:[%s12 + $0x18] sm:$0xf]
      %v5553 = vld [vmem:[%s12 + $0x1c] sm:$0xf]
      %v5554 = vld [vmem:[%s12 + $0x20] sm:$0xf]
      %v5555 = vld [vmem:[%s12 + $0x24] sm:$0xf]
      %v5556 = vld [vmem:[%s12 + $0x28] sm:$0xf]
      %v5557 = vld [vmem:[%s12 + $0x2c] sm:$0xf]
      %v5558 = vld [vmem:[%s12 + $0x30] sm:$0xf]
      %v5559 = vld [vmem:[%s12 + $0x34] sm:$0xf]
      %v5560 = vld [vmem:[%s12 + $0x38] sm:$0xf]
      %v5561 = vld [vmem:[%s12 + $0x3c] sm:$0xf]
      %v5562 = vld [vmem:[#allocation3 + $0x80] sm:$0xff]
      %v5563 = vld [vmem:[#allocation3 + $0x140] sm:$0xff]
      %v5564 = vpack.c.bf16 %v5500, %v5499
      %v5565 = vpack.c.bf16 %v5502, %v5501
      %v5566 = vpack.c.bf16 %v5504, %v5503
      %v5567 = vpack.c.bf16 %v5506, %v5505
      %v5568 = vpack.c.bf16 %v5508, %v5507
      %v5569 = vpack.c.bf16 %v5510, %v5509
      %v5570 = vpack.c.bf16 %v5512, %v5511
      %v5571 = vpack.c.bf16 %v5562, %v5513
      %v5572 = vpack.c.bf16 %v5516, %v5515
      %v5573 = vpack.c.bf16 %v5518, %v5517
      %v5574 = vpack.c.bf16 %v5520, %v5519
      %v5575 = vpack.c.bf16 %v5522, %v5521
      %v5576 = vpack.c.bf16 %v5524, %v5523
      %v5577 = vpack.c.bf16 %v5526, %v5525
      %v5578 = vpack.c.bf16 %v5528, %v5527
      %v5579 = vpack.c.bf16 %v5563, %v5529
      %v5580 = vld [vmem:[%s12 + $0x40] sm:$0xf]
      %v5581 = vld [vmem:[%s12 + $0x44] sm:$0xf]
      %v5582 = vld [vmem:[%s12 + $0x48] sm:$0xf]
      %v5583 = vld [vmem:[%s12 + $0x4c] sm:$0xf]
      %v5584 = vld [vmem:[%s12 + $0x50] sm:$0xf]
      %v5585 = vld [vmem:[%s12 + $0x54] sm:$0xf]
      %v5586 = vld [vmem:[%s12 + $0x58] sm:$0xf]
      %v5587 = vld [vmem:[%s12 + $0x5c] sm:$0xf]
      %v5588 = vld [vmem:[%s12 + $0x60] sm:$0xf]
      %v5589 = vld [vmem:[%s12 + $0x64] sm:$0xf]
      %v5590 = vld [vmem:[%s12 + $0x68] sm:$0xf]
      %v5591 = vld [vmem:[%s12 + $0x6c] sm:$0xf]
      %v5592 = vld [vmem:[%s12 + $0x70] sm:$0xf]
      %v5593 = vld [vmem:[%s12 + $0x74] sm:$0xf]
      %v5594 = vld [vmem:[%s12 + $0x78] sm:$0xf]
      %v5595 = vld [vmem:[%s12 + $0x7c] sm:$0xf]
      %v5612 = vunpack.c.l.b16 %v5580
      %v5613 = vunpack.c.l.b16 %v5581
      %v5614 = vunpack.c.l.b16 %v5582
      %v5615 = vunpack.c.l.b16 %v5583
      %v5616 = vunpack.c.l.b16 %v5584
      %v5617 = vunpack.c.l.b16 %v5585
      %v5618 = vunpack.c.l.b16 %v5586
      %v5619 = vunpack.c.l.b16 %v5587
      %v5620 = vunpack.c.l.b16 %v5588
      %v5621 = vunpack.c.l.b16 %v5589
      %v5622 = vunpack.c.l.b16 %v5590
      %v5623 = vunpack.c.l.b16 %v5591
      %v5624 = vunpack.c.l.b16 %v5592
      %v5625 = vunpack.c.l.b16 %v5593
      %v5626 = vunpack.c.l.b16 %v5594
      %v5627 = vunpack.c.l.b16 %v5595
      %v5628 = vpack.c.b16 %v5613, %v5612
      %v5629 = vpack.c.b16 %v5615, %v5614
      %v5630 = vpack.c.b16 %v5617, %v5616
      %v5631 = vpack.c.b16 %v5619, %v5618
      %v5632 = vpack.c.b16 %v5621, %v5620
      %v5633 = vpack.c.b16 %v5623, %v5622
      %v5634 = vpack.c.b16 %v5625, %v5624
      %v5635 = vpack.c.b16 %v5627, %v5626
      %5644 = vmatpush.bf16.msra.mxu0 %v5635
      %5645 = vmatpush.bf16.msra.mxu0 %v5634
      %5646 = vmatpush.bf16.msra.mxu0 %v5633
      %5647 = vmatpush.bf16.msra.mxu0 %v5632
      %5648 = vmatpush.bf16.msra.mxu0 %v5631
      %5649 = vmatpush.bf16.msra.mxu0 %v5630
      %5650 = vmatpush.bf16.msra.mxu0 %v5629
      %5651 = vmatpush.bf16.msra.mxu0 %v5628
      %5652 = vmatmul.bf16.gmra.mxu0 %v5564
      %v5653 = vpop.f32.mrf.mxu0
      %v5654 = vadd.f32 0.0, %v5653
      %v5655 = vpop.f32.mrf.mxu0
      %v5656 = vadd.f32 0.0, %v5655
      %5657 = vmatmul.bf16.gmra.mxu0 %v5565
      %v5658 = vpop.f32.mrf.mxu0
      %v5659 = vadd.f32 0.0, %v5658
      %v5660 = vpop.f32.mrf.mxu0
      %v5661 = vadd.f32 0.0, %v5660
      %5662 = vmatmul.bf16.gmra.mxu0 %v5566
      %v5663 = vpop.f32.mrf.mxu0
      %v5664 = vadd.f32 0.0, %v5663
      %v5665 = vpop.f32.mrf.mxu0
      %v5666 = vadd.f32 0.0, %v5665
      %5667 = vmatmul.bf16.gmra.mxu0 %v5567
      %v5668 = vpop.f32.mrf.mxu0
      %v5669 = vadd.f32 0.0, %v5668
      %v5670 = vpop.f32.mrf.mxu0
      %v5671 = vadd.f32 0.0, %v5670
      %5672 = vmatmul.bf16.gmra.mxu0 %v5568
      %v5673 = vpop.f32.mrf.mxu0
      %v5674 = vadd.f32 0.0, %v5673
      %v5675 = vpop.f32.mrf.mxu0
      %v5676 = vadd.f32 0.0, %v5675
      %5677 = vmatmul.bf16.gmra.mxu0 %v5569
      %v5678 = vpop.f32.mrf.mxu0
      %v5679 = vadd.f32 0.0, %v5678
      %v5680 = vpop.f32.mrf.mxu0
      %v5681 = vadd.f32 0.0, %v5680
      %5682 = vmatmul.bf16.gmra.mxu0 %v5570
      %v5683 = vpop.f32.mrf.mxu0
      %v5684 = vadd.f32 0.0, %v5683
      %v5685 = vpop.f32.mrf.mxu0
      %v5686 = vadd.f32 0.0, %v5685
      %5687 = vmatmul.bf16.gmra.mxu0 %v5571
      %v5688 = vpop.f32.mrf.mxu0
      %v5689 = vadd.f32 0.0, %v5688
      %v5690 = vpop.f32.mrf.mxu0
      %v5691 = vadd.f32 0.0, %v5690
      %5692 = vmatmul.bf16.gmra.mxu0 %v5572
      %v5693 = vpop.f32.mrf.mxu0
      %v5694 = vadd.f32 0.0, %v5693
      %v5695 = vpop.f32.mrf.mxu0
      %v5696 = vadd.f32 0.0, %v5695
      %5697 = vmatmul.bf16.gmra.mxu0 %v5573
      %v5698 = vpop.f32.mrf.mxu0
      %v5699 = vadd.f32 0.0, %v5698
      %v5700 = vpop.f32.mrf.mxu0
      %v5701 = vadd.f32 0.0, %v5700
      %5702 = vmatmul.bf16.gmra.mxu0 %v5574
      %v5703 = vpop.f32.mrf.mxu0
      %v5704 = vadd.f32 0.0, %v5703
      %v5705 = vpop.f32.mrf.mxu0
      %v5706 = vadd.f32 0.0, %v5705
      %5707 = vmatmul.bf16.gmra.mxu0 %v5575
      %v5708 = vpop.f32.mrf.mxu0
      %v5709 = vadd.f32 0.0, %v5708
      %v5710 = vpop.f32.mrf.mxu0
      %v5711 = vadd.f32 0.0, %v5710
      %5712 = vmatmul.bf16.gmra.mxu0 %v5576
      %v5713 = vpop.f32.mrf.mxu0
      %v5714 = vadd.f32 0.0, %v5713
      %v5715 = vpop.f32.mrf.mxu0
      %v5716 = vadd.f32 0.0, %v5715
      %5717 = vmatmul.bf16.gmra.mxu0 %v5577
      %v5718 = vpop.f32.mrf.mxu0
      %v5719 = vadd.f32 0.0, %v5718
      %v5720 = vpop.f32.mrf.mxu0
      %v5721 = vadd.f32 0.0, %v5720
      %5722 = vmatmul.bf16.gmra.mxu0 %v5578
      %v5723 = vpop.f32.mrf.mxu0
      %v5724 = vadd.f32 0.0, %v5723
      %v5725 = vpop.f32.mrf.mxu0
      %v5726 = vadd.f32 0.0, %v5725
      %5727 = vmatmul.bf16.gmra.mxu0 %v5579
      %v5728 = vpop.f32.mrf.mxu0
      %v5729 = vadd.f32 0.0, %v5728
      %v5730 = vpop.f32.mrf.mxu0
      %v5731 = vadd.f32 0.0, %v5730
      %5732 = vdwg.mxu0
      %v5749 = vunpack.c.l.b16 %v5546
      %v5750 = vunpack.c.l.b16 %v5547
      %v5751 = vunpack.c.l.b16 %v5548
      %v5752 = vunpack.c.l.b16 %v5549
      %v5753 = vunpack.c.l.b16 %v5550
      %v5754 = vunpack.c.l.b16 %v5551
      %v5755 = vunpack.c.l.b16 %v5552
      %v5756 = vunpack.c.l.b16 %v5553
      %v5757 = vunpack.c.l.b16 %v5554
      %v5758 = vunpack.c.l.b16 %v5555
      %v5759 = vunpack.c.l.b16 %v5556
      %v5760 = vunpack.c.l.b16 %v5557
      %v5761 = vunpack.c.l.b16 %v5558
      %v5762 = vunpack.c.l.b16 %v5559
      %v5763 = vunpack.c.l.b16 %v5560
      %v5764 = vunpack.c.l.b16 %v5561
      %v5765 = vpack.c.b16 %v5750, %v5749
      %v5766 = vpack.c.b16 %v5752, %v5751
      %v5767 = vpack.c.b16 %v5754, %v5753
      %v5768 = vpack.c.b16 %v5756, %v5755
      %v5769 = vpack.c.b16 %v5758, %v5757
      %v5770 = vpack.c.b16 %v5760, %v5759
      %v5771 = vpack.c.b16 %v5762, %v5761
      %v5772 = vpack.c.b16 %v5764, %v5763
      %5781 = vmatpush.bf16.msra.mxu0 %v5772
      %5782 = vmatpush.bf16.msra.mxu0 %v5771
      %5783 = vmatpush.bf16.msra.mxu0 %v5770
      %5784 = vmatpush.bf16.msra.mxu0 %v5769
      %5785 = vmatpush.bf16.msra.mxu0 %v5768
      %5786 = vmatpush.bf16.msra.mxu0 %v5767
      %5787 = vmatpush.bf16.msra.mxu0 %v5766
      %5788 = vmatpush.bf16.msra.mxu0 %v5765
      %5789 = vmatmul.bf16.gmra.mxu0 %v5530
      %v5790 = vpop.f32.mrf.mxu0
      %v5791 = vadd.f32 %v5654, %v5790
      %v5792 = vpop.f32.mrf.mxu0
      %v5793 = vadd.f32 %v5656, %v5792
      %5794 = vmatmul.bf16.gmra.mxu0 %v5531
      %v5795 = vpop.f32.mrf.mxu0
      %v5796 = vadd.f32 %v5659, %v5795
      %v5797 = vpop.f32.mrf.mxu0
      %v5798 = vadd.f32 %v5661, %v5797
      %5799 = vmatmul.bf16.gmra.mxu0 %v5532
      %v5800 = vpop.f32.mrf.mxu0
      %v5801 = vadd.f32 %v5664, %v5800
      %v5802 = vpop.f32.mrf.mxu0
      %v5803 = vadd.f32 %v5666, %v5802
      %5804 = vmatmul.bf16.gmra.mxu0 %v5533
      %v5805 = vpop.f32.mrf.mxu0
      %v5806 = vadd.f32 %v5669, %v5805
      %v5807 = vpop.f32.mrf.mxu0
      %v5808 = vadd.f32 %v5671, %v5807
      %5809 = vmatmul.bf16.gmra.mxu0 %v5534
      %v5810 = vpop.f32.mrf.mxu0
      %v5811 = vadd.f32 %v5674, %v5810
      %v5812 = vpop.f32.mrf.mxu0
      %v5813 = vadd.f32 %v5676, %v5812
      %5814 = vmatmul.bf16.gmra.mxu0 %v5535
      %v5815 = vpop.f32.mrf.mxu0
      %v5816 = vadd.f32 %v5679, %v5815
      %v5817 = vpop.f32.mrf.mxu0
      %v5818 = vadd.f32 %v5681, %v5817
      %5819 = vmatmul.bf16.gmra.mxu0 %v5536
      %v5820 = vpop.f32.mrf.mxu0
      %v5821 = vadd.f32 %v5684, %v5820
      %v5822 = vpop.f32.mrf.mxu0
      %v5823 = vadd.f32 %v5686, %v5822
      %5824 = vmatmul.bf16.gmra.mxu0 %v5537
      %v5825 = vpop.f32.mrf.mxu0
      %v5826 = vadd.f32 %v5689, %v5825
      %v5827 = vpop.f32.mrf.mxu0
      %v5828 = vadd.f32 %v5691, %v5827
      %5829 = vmatmul.bf16.gmra.mxu0 %v5538
      %v5830 = vpop.f32.mrf.mxu0
      %v5831 = vadd.f32 %v5694, %v5830
      %v5832 = vpop.f32.mrf.mxu0
      %v5833 = vadd.f32 %v5696, %v5832
      %5834 = vmatmul.bf16.gmra.mxu0 %v5539
      %v5835 = vpop.f32.mrf.mxu0
      %v5836 = vadd.f32 %v5699, %v5835
      %v5837 = vpop.f32.mrf.mxu0
      %v5838 = vadd.f32 %v5701, %v5837
      %5839 = vmatmul.bf16.gmra.mxu0 %v5540
      %v5840 = vpop.f32.mrf.mxu0
      %v5841 = vadd.f32 %v5704, %v5840
      %v5842 = vpop.f32.mrf.mxu0
      %v5843 = vadd.f32 %v5706, %v5842
      %5844 = vmatmul.bf16.gmra.mxu0 %v5541
      %v5845 = vpop.f32.mrf.mxu0
      %v5846 = vadd.f32 %v5709, %v5845
      %v5847 = vpop.f32.mrf.mxu0
      %v5848 = vadd.f32 %v5711, %v5847
      %5849 = vmatmul.bf16.gmra.mxu0 %v5542
      %v5850 = vpop.f32.mrf.mxu0
      %v5851 = vadd.f32 %v5714, %v5850
      %v5852 = vpop.f32.mrf.mxu0
      %v5853 = vadd.f32 %v5716, %v5852
      %5854 = vmatmul.bf16.gmra.mxu0 %v5543
      %v5855 = vpop.f32.mrf.mxu0
      %v5856 = vadd.f32 %v5719, %v5855
      %v5857 = vpop.f32.mrf.mxu0
      %v5858 = vadd.f32 %v5721, %v5857
      %5859 = vmatmul.bf16.gmra.mxu0 %v5544
      %v5860 = vpop.f32.mrf.mxu0
      %v5861 = vadd.f32 %v5724, %v5860
      %v5862 = vpop.f32.mrf.mxu0
      %v5863 = vadd.f32 %v5726, %v5862
      %5864 = vmatmul.bf16.gmra.mxu0 %v5545
      %v5865 = vpop.f32.mrf.mxu0
      %v5866 = vadd.f32 %v5729, %v5865
      %v5867 = vpop.f32.mrf.mxu0
      %v5868 = vadd.f32 %v5731, %v5867
      %5869 = vdwg.mxu0
      %v5870 = vld [vmem:[#allocation3 + $0x10] sm:$0xff]
      %v5871 = vld [vmem:[#allocation3 + $0x18] sm:$0xff]
      %v5872 = vld [vmem:[#allocation3 + $0x20] sm:$0xff]
      %v5873 = vld [vmem:[#allocation3 + $0x28] sm:$0xff]
      %v5874 = vld [vmem:[#allocation3 + $0x30] sm:$0xff]
      %v5875 = vld [vmem:[#allocation3 + $0x38] sm:$0xff]
      %v5876 = vld [vmem:[#allocation3 + $0x40] sm:$0xff]
      %v5877 = vld [vmem:[#allocation3 + $0x48] sm:$0xff]
      %v5878 = vld [vmem:[#allocation3 + $0x50] sm:$0xff]
      %v5879 = vld [vmem:[#allocation3 + $0x58] sm:$0xff]
      %v5880 = vld [vmem:[#allocation3 + $0x60] sm:$0xff]
      %v5881 = vld [vmem:[#allocation3 + $0x68] sm:$0xff]
      %v5882 = vld [vmem:[#allocation3 + $0x70] sm:$0xff]
      %v5883 = vld [vmem:[#allocation3 + $0x78] sm:$0xff]
      %v5884 = vld [vmem:[#allocation3 + $0x80] sm:$0xff]
      %v5885 = vld [vmem:[#allocation3 + $0x88] sm:$0xff]
      %v5886 = vld [vmem:[#allocation3 + $0xd0] sm:$0xff]
      %v5887 = vld [vmem:[#allocation3 + $0xd8] sm:$0xff]
      %v5888 = vld [vmem:[#allocation3 + $0xe0] sm:$0xff]
      %v5889 = vld [vmem:[#allocation3 + $0xe8] sm:$0xff]
      %v5890 = vld [vmem:[#allocation3 + $0xf0] sm:$0xff]
      %v5891 = vld [vmem:[#allocation3 + $0xf8] sm:$0xff]
      %v5892 = vld [vmem:[#allocation3 + $0x100] sm:$0xff]
      %v5893 = vld [vmem:[#allocation3 + $0x108] sm:$0xff]
      %v5894 = vld [vmem:[#allocation3 + $0x110] sm:$0xff]
      %v5895 = vld [vmem:[#allocation3 + $0x118] sm:$0xff]
      %v5896 = vld [vmem:[#allocation3 + $0x120] sm:$0xff]
      %v5897 = vld [vmem:[#allocation3 + $0x128] sm:$0xff]
      %v5898 = vld [vmem:[#allocation3 + $0x130] sm:$0xff]
      %v5899 = vld [vmem:[#allocation3 + $0x138] sm:$0xff]
      %v5900 = vld [vmem:[#allocation3 + $0x140] sm:$0xff]
      %v5901 = vld [vmem:[#allocation3 + $0x148] sm:$0xff]
      %v5902 = vpack.c.bf16 %v5871, %v5870
      %v5903 = vpack.c.bf16 %v5873, %v5872
      %v5904 = vpack.c.bf16 %v5875, %v5874
      %v5905 = vpack.c.bf16 %v5877, %v5876
      %v5906 = vpack.c.bf16 %v5879, %v5878
      %v5907 = vpack.c.bf16 %v5881, %v5880
      %v5908 = vpack.c.bf16 %v5883, %v5882
      %v5909 = vpack.c.bf16 %v5885, %v5884
      %v5910 = vpack.c.bf16 %v5887, %v5886
      %v5911 = vpack.c.bf16 %v5889, %v5888
      %v5912 = vpack.c.bf16 %v5891, %v5890
      %v5913 = vpack.c.bf16 %v5893, %v5892
      %v5914 = vpack.c.bf16 %v5895, %v5894
      %v5915 = vpack.c.bf16 %v5897, %v5896
      %v5916 = vpack.c.bf16 %v5899, %v5898
      %v5917 = vpack.c.bf16 %v5901, %v5900
      %v5918 = vld [vmem:[%s12 + $0x80] sm:$0xf]
      %v5919 = vld [vmem:[%s12 + $0x84] sm:$0xf]
      %v5920 = vld [vmem:[%s12 + $0x88] sm:$0xf]
      %v5921 = vld [vmem:[%s12 + $0x8c] sm:$0xf]
      %v5922 = vld [vmem:[%s12 + $0x90] sm:$0xf]
      %v5923 = vld [vmem:[%s12 + $0x94] sm:$0xf]
      %v5924 = vld [vmem:[%s12 + $0x98] sm:$0xf]
      %v5925 = vld [vmem:[%s12 + $0x9c] sm:$0xf]
      %v5926 = vld [vmem:[%s12 + $0xa0] sm:$0xf]
      %v5927 = vld [vmem:[%s12 + $0xa4] sm:$0xf]
      %v5928 = vld [vmem:[%s12 + $0xa8] sm:$0xf]
      %v5929 = vld [vmem:[%s12 + $0xac] sm:$0xf]
      %v5930 = vld [vmem:[%s12 + $0xb0] sm:$0xf]
      %v5931 = vld [vmem:[%s12 + $0xb4] sm:$0xf]
      %v5932 = vld [vmem:[%s12 + $0xb8] sm:$0xf]
      %v5933 = vld [vmem:[%s12 + $0xbc] sm:$0xf]
      %v5950 = vunpack.c.l.b16 %v5918
      %v5951 = vunpack.c.l.b16 %v5919
      %v5952 = vunpack.c.l.b16 %v5920
      %v5953 = vunpack.c.l.b16 %v5921
      %v5954 = vunpack.c.l.b16 %v5922
      %v5955 = vunpack.c.l.b16 %v5923
      %v5956 = vunpack.c.l.b16 %v5924
      %v5957 = vunpack.c.l.b16 %v5925
      %v5958 = vunpack.c.l.b16 %v5926
      %v5959 = vunpack.c.l.b16 %v5927
      %v5960 = vunpack.c.l.b16 %v5928
      %v5961 = vunpack.c.l.b16 %v5929
      %v5962 = vunpack.c.l.b16 %v5930
      %v5963 = vunpack.c.l.b16 %v5931
      %v5964 = vunpack.c.l.b16 %v5932
      %v5965 = vunpack.c.l.b16 %v5933
      %v5966 = vpack.c.b16 %v5951, %v5950
      %v5967 = vpack.c.b16 %v5953, %v5952
      %v5968 = vpack.c.b16 %v5955, %v5954
      %v5969 = vpack.c.b16 %v5957, %v5956
      %v5970 = vpack.c.b16 %v5959, %v5958
      %v5971 = vpack.c.b16 %v5961, %v5960
      %v5972 = vpack.c.b16 %v5963, %v5962
      %v5973 = vpack.c.b16 %v5965, %v5964
      %5982 = vmatpush.bf16.msra.mxu0 %v5973
      %5983 = vmatpush.bf16.msra.mxu0 %v5972
      %5984 = vmatpush.bf16.msra.mxu0 %v5971
      %5985 = vmatpush.bf16.msra.mxu0 %v5970
      %5986 = vmatpush.bf16.msra.mxu0 %v5969
      %5987 = vmatpush.bf16.msra.mxu0 %v5968
      %5988 = vmatpush.bf16.msra.mxu0 %v5967
      %5989 = vmatpush.bf16.msra.mxu0 %v5966
      %5990 = vmatmul.bf16.gmra.mxu0 %v5902
      %v5991 = vpop.f32.mrf.mxu0
      %v5992 = vadd.f32 0.0, %v5991
      %v5993 = vpop.f32.mrf.mxu0
      %v5994 = vadd.f32 0.0, %v5993
      %5995 = vmatmul.bf16.gmra.mxu0 %v5903
      %v5996 = vpop.f32.mrf.mxu0
      %v5997 = vadd.f32 0.0, %v5996
      %v5998 = vpop.f32.mrf.mxu0
      %v5999 = vadd.f32 0.0, %v5998
      %6000 = vmatmul.bf16.gmra.mxu0 %v5904
      %v6001 = vpop.f32.mrf.mxu0
      %v6002 = vadd.f32 0.0, %v6001
      %v6003 = vpop.f32.mrf.mxu0
      %v6004 = vadd.f32 0.0, %v6003
      %6005 = vmatmul.bf16.gmra.mxu0 %v5905
      %v6006 = vpop.f32.mrf.mxu0
      %v6007 = vadd.f32 0.0, %v6006
      %v6008 = vpop.f32.mrf.mxu0
      %v6009 = vadd.f32 0.0, %v6008
      %6010 = vmatmul.bf16.gmra.mxu0 %v5906
      %v6011 = vpop.f32.mrf.mxu0
      %v6012 = vadd.f32 0.0, %v6011
      %v6013 = vpop.f32.mrf.mxu0
      %v6014 = vadd.f32 0.0, %v6013
      %6015 = vmatmul.bf16.gmra.mxu0 %v5907
      %v6016 = vpop.f32.mrf.mxu0
      %v6017 = vadd.f32 0.0, %v6016
      %v6018 = vpop.f32.mrf.mxu0
      %v6019 = vadd.f32 0.0, %v6018
      %6020 = vmatmul.bf16.gmra.mxu0 %v5908
      %v6021 = vpop.f32.mrf.mxu0
      %v6022 = vadd.f32 0.0, %v6021
      %v6023 = vpop.f32.mrf.mxu0
      %v6024 = vadd.f32 0.0, %v6023
      %6025 = vmatmul.bf16.gmra.mxu0 %v5909
      %v6026 = vpop.f32.mrf.mxu0
      %v6027 = vadd.f32 0.0, %v6026
      %v6028 = vpop.f32.mrf.mxu0
      %v6029 = vadd.f32 0.0, %v6028
      %6030 = vmatmul.bf16.gmra.mxu0 %v5910
      %v6031 = vpop.f32.mrf.mxu0
      %v6032 = vadd.f32 0.0, %v6031
      %v6033 = vpop.f32.mrf.mxu0
      %v6034 = vadd.f32 0.0, %v6033
      %6035 = vmatmul.bf16.gmra.mxu0 %v5911
      %v6036 = vpop.f32.mrf.mxu0
      %v6037 = vadd.f32 0.0, %v6036
      %v6038 = vpop.f32.mrf.mxu0
      %v6039 = vadd.f32 0.0, %v6038
      %6040 = vmatmul.bf16.gmra.mxu0 %v5912
      %v6041 = vpop.f32.mrf.mxu0
      %v6042 = vadd.f32 0.0, %v6041
      %v6043 = vpop.f32.mrf.mxu0
      %v6044 = vadd.f32 0.0, %v6043
      %6045 = vmatmul.bf16.gmra.mxu0 %v5913
      %v6046 = vpop.f32.mrf.mxu0
      %v6047 = vadd.f32 0.0, %v6046
      %v6048 = vpop.f32.mrf.mxu0
      %v6049 = vadd.f32 0.0, %v6048
      %6050 = vmatmul.bf16.gmra.mxu0 %v5914
      %v6051 = vpop.f32.mrf.mxu0
      %v6052 = vadd.f32 0.0, %v6051
      %v6053 = vpop.f32.mrf.mxu0
      %v6054 = vadd.f32 0.0, %v6053
      %6055 = vmatmul.bf16.gmra.mxu0 %v5915
      %v6056 = vpop.f32.mrf.mxu0
      %v6057 = vadd.f32 0.0, %v6056
      %v6058 = vpop.f32.mrf.mxu0
      %v6059 = vadd.f32 0.0, %v6058
      %6060 = vmatmul.bf16.gmra.mxu0 %v5916
      %v6061 = vpop.f32.mrf.mxu0
      %v6062 = vadd.f32 0.0, %v6061
      %v6063 = vpop.f32.mrf.mxu0
      %v6064 = vadd.f32 0.0, %v6063
      %6065 = vmatmul.bf16.gmra.mxu0 %v5917
      %v6066 = vpop.f32.mrf.mxu0
      %v6067 = vadd.f32 0.0, %v6066
      %v6068 = vpop.f32.mrf.mxu0
      %v6069 = vadd.f32 0.0, %v6068
      %6070 = vdwg.mxu0
      %v6071 = vadd.f32 %v5791, %v5992
      %v6072 = vadd.f32 %v5793, %v5994
      %v6073 = vadd.f32 %v5796, %v5997
      %v6074 = vadd.f32 %v5798, %v5999
      %v6075 = vadd.f32 %v5801, %v6002
      %v6076 = vadd.f32 %v5803, %v6004
      %v6077 = vadd.f32 %v5806, %v6007
      %v6078 = vadd.f32 %v5808, %v6009
      %v6079 = vadd.f32 %v5811, %v6012
      %v6080 = vadd.f32 %v5813, %v6014
      %v6081 = vadd.f32 %v5816, %v6017
      %v6082 = vadd.f32 %v5818, %v6019
      %v6083 = vadd.f32 %v5821, %v6022
      %v6084 = vadd.f32 %v5823, %v6024
      %v6085 = vadd.f32 %v5826, %v6027
      %v6086 = vadd.f32 %v5828, %v6029
      %v6087 = vadd.f32 %v5831, %v6032
      %v6088 = vadd.f32 %v5833, %v6034
      %v6089 = vadd.f32 %v5836, %v6037
      %v6090 = vadd.f32 %v5838, %v6039
      %v6091 = vadd.f32 %v5841, %v6042
      %v6092 = vadd.f32 %v5843, %v6044
      %v6093 = vadd.f32 %v5846, %v6047
      %v6094 = vadd.f32 %v5848, %v6049
      %v6095 = vadd.f32 %v5851, %v6052
      %v6096 = vadd.f32 %v5853, %v6054
      %v6097 = vadd.f32 %v5856, %v6057
      %v6098 = vadd.f32 %v5858, %v6059
      %v6099 = vadd.f32 %v5861, %v6062
      %v6100 = vadd.f32 %v5863, %v6064
      %v6101 = vadd.f32 %v5866, %v6067
      %v6102 = vadd.f32 %v5868, %v6069
      %v6103 = vld [vmem:[#allocation3 + $0x18] sm:$0xff]
      %v6104 = vld [vmem:[#allocation3 + $0x20] sm:$0xff]
      %v6105 = vld [vmem:[#allocation3 + $0x28] sm:$0xff]
      %v6106 = vld [vmem:[#allocation3 + $0x30] sm:$0xff]
      %v6107 = vld [vmem:[#allocation3 + $0x38] sm:$0xff]
      %v6108 = vld [vmem:[#allocation3 + $0x40] sm:$0xff]
      %v6109 = vld [vmem:[#allocation3 + $0x48] sm:$0xff]
      %v6110 = vld [vmem:[#allocation3 + $0x50] sm:$0xff]
      %v6111 = vld [vmem:[#allocation3 + $0x58] sm:$0xff]
      %v6112 = vld [vmem:[#allocation3 + $0x60] sm:$0xff]
      %v6113 = vld [vmem:[#allocation3 + $0x68] sm:$0xff]
      %v6114 = vld [vmem:[#allocation3 + $0x70] sm:$0xff]
      %v6115 = vld [vmem:[#allocation3 + $0x78] sm:$0xff]
      %v6116 = vld [vmem:[#allocation3 + $0x80] sm:$0xff]
      %v6117 = vld [vmem:[#allocation3 + $0x88] sm:$0xff]
      %v6118 = vld [vmem:[#allocation3 + $0x90] sm:$0xff]
      %v6119 = vld [vmem:[#allocation3 + $0xd8] sm:$0xff]
      %v6120 = vld [vmem:[#allocation3 + $0xe0] sm:$0xff]
      %v6121 = vld [vmem:[#allocation3 + $0xe8] sm:$0xff]
      %v6122 = vld [vmem:[#allocation3 + $0xf0] sm:$0xff]
      %v6123 = vld [vmem:[#allocation3 + $0xf8] sm:$0xff]
      %v6124 = vld [vmem:[#allocation3 + $0x100] sm:$0xff]
      %v6125 = vld [vmem:[#allocation3 + $0x108] sm:$0xff]
      %v6126 = vld [vmem:[#allocation3 + $0x110] sm:$0xff]
      %v6127 = vld [vmem:[#allocation3 + $0x118] sm:$0xff]
      %v6128 = vld [vmem:[#allocation3 + $0x120] sm:$0xff]
      %v6129 = vld [vmem:[#allocation3 + $0x128] sm:$0xff]
      %v6130 = vld [vmem:[#allocation3 + $0x130] sm:$0xff]
      %v6131 = vld [vmem:[#allocation3 + $0x138] sm:$0xff]
      %v6132 = vld [vmem:[#allocation3 + $0x140] sm:$0xff]
      %v6133 = vld [vmem:[#allocation3 + $0x148] sm:$0xff]
      %v6134 = vld [vmem:[#allocation3 + $0x150] sm:$0xff]
      %v6135 = vpack.c.bf16 %v6104, %v6103
      %v6136 = vpack.c.bf16 %v6106, %v6105
      %v6137 = vpack.c.bf16 %v6108, %v6107
      %v6138 = vpack.c.bf16 %v6110, %v6109
      %v6139 = vpack.c.bf16 %v6112, %v6111
      %v6140 = vpack.c.bf16 %v6114, %v6113
      %v6141 = vpack.c.bf16 %v6116, %v6115
      %v6142 = vpack.c.bf16 %v6118, %v6117
      %v6143 = vpack.c.bf16 %v6120, %v6119
      %v6144 = vpack.c.bf16 %v6122, %v6121
      %v6145 = vpack.c.bf16 %v6124, %v6123
      %v6146 = vpack.c.bf16 %v6126, %v6125
      %v6147 = vpack.c.bf16 %v6128, %v6127
      %v6148 = vpack.c.bf16 %v6130, %v6129
      %v6149 = vpack.c.bf16 %v6132, %v6131
      %v6150 = vpack.c.bf16 %v6134, %v6133
      %v6151 = vld [vmem:[%s12 + $0xc0] sm:$0xf]
      %v6152 = vld [vmem:[%s12 + $0xc4] sm:$0xf]
      %v6153 = vld [vmem:[%s12 + $0xc8] sm:$0xf]
      %v6154 = vld [vmem:[%s12 + $0xcc] sm:$0xf]
      %v6155 = vld [vmem:[%s12 + $0xd0] sm:$0xf]
      %v6156 = vld [vmem:[%s12 + $0xd4] sm:$0xf]
      %v6157 = vld [vmem:[%s12 + $0xd8] sm:$0xf]
      %v6158 = vld [vmem:[%s12 + $0xdc] sm:$0xf]
      %v6159 = vld [vmem:[%s12 + $0xe0] sm:$0xf]
      %v6160 = vld [vmem:[%s12 + $0xe4] sm:$0xf]
      %v6161 = vld [vmem:[%s12 + $0xe8] sm:$0xf]
      %v6162 = vld [vmem:[%s12 + $0xec] sm:$0xf]
      %v6163 = vld [vmem:[%s12 + $0xf0] sm:$0xf]
      %v6164 = vld [vmem:[%s12 + $0xf4] sm:$0xf]
      %v6165 = vld [vmem:[%s12 + $0xf8] sm:$0xf]
      %v6166 = vld [vmem:[%s12 + $0xfc] sm:$0xf]
      %v6183 = vunpack.c.l.b16 %v6151
      %v6184 = vunpack.c.l.b16 %v6152
      %v6185 = vunpack.c.l.b16 %v6153
      %v6186 = vunpack.c.l.b16 %v6154
      %v6187 = vunpack.c.l.b16 %v6155
      %v6188 = vunpack.c.l.b16 %v6156
      %v6189 = vunpack.c.l.b16 %v6157
      %v6190 = vunpack.c.l.b16 %v6158
      %v6191 = vunpack.c.l.b16 %v6159
      %v6192 = vunpack.c.l.b16 %v6160
      %v6193 = vunpack.c.l.b16 %v6161
      %v6194 = vunpack.c.l.b16 %v6162
      %v6195 = vunpack.c.l.b16 %v6163
      %v6196 = vunpack.c.l.b16 %v6164
      %v6197 = vunpack.c.l.b16 %v6165
      %v6198 = vunpack.c.l.b16 %v6166
      %v6199 = vpack.c.b16 %v6184, %v6183
      %v6200 = vpack.c.b16 %v6186, %v6185
      %v6201 = vpack.c.b16 %v6188, %v6187
      %v6202 = vpack.c.b16 %v6190, %v6189
      %v6203 = vpack.c.b16 %v6192, %v6191
      %v6204 = vpack.c.b16 %v6194, %v6193
      %v6205 = vpack.c.b16 %v6196, %v6195
      %v6206 = vpack.c.b16 %v6198, %v6197
      %6215 = vmatpush.bf16.msra.mxu0 %v6206
      %6216 = vmatpush.bf16.msra.mxu0 %v6205
      %6217 = vmatpush.bf16.msra.mxu0 %v6204
      %6218 = vmatpush.bf16.msra.mxu0 %v6203
      %6219 = vmatpush.bf16.msra.mxu0 %v6202
      %6220 = vmatpush.bf16.msra.mxu0 %v6201
      %6221 = vmatpush.bf16.msra.mxu0 %v6200
      %6222 = vmatpush.bf16.msra.mxu0 %v6199
      %6223 = vmatmul.bf16.gmra.mxu0 %v6135
      %v6224 = vpop.f32.mrf.mxu0
      %v6225 = vadd.f32 0.0, %v6224
      %v6226 = vpop.f32.mrf.mxu0
      %v6227 = vadd.f32 0.0, %v6226
      %6228 = vmatmul.bf16.gmra.mxu0 %v6136
      %v6229 = vpop.f32.mrf.mxu0
      %v6230 = vadd.f32 0.0, %v6229
      %v6231 = vpop.f32.mrf.mxu0
      %v6232 = vadd.f32 0.0, %v6231
      %6233 = vmatmul.bf16.gmra.mxu0 %v6137
      %v6234 = vpop.f32.mrf.mxu0
      %v6235 = vadd.f32 0.0, %v6234
      %v6236 = vpop.f32.mrf.mxu0
      %v6237 = vadd.f32 0.0, %v6236
      %6238 = vmatmul.bf16.gmra.mxu0 %v6138
      %v6239 = vpop.f32.mrf.mxu0
      %v6240 = vadd.f32 0.0, %v6239
      %v6241 = vpop.f32.mrf.mxu0
      %v6242 = vadd.f32 0.0, %v6241
      %6243 = vmatmul.bf16.gmra.mxu0 %v6139
      %v6244 = vpop.f32.mrf.mxu0
      %v6245 = vadd.f32 0.0, %v6244
      %v6246 = vpop.f32.mrf.mxu0
      %v6247 = vadd.f32 0.0, %v6246
      %6248 = vmatmul.bf16.gmra.mxu0 %v6140
      %v6249 = vpop.f32.mrf.mxu0
      %v6250 = vadd.f32 0.0, %v6249
      %v6251 = vpop.f32.mrf.mxu0
      %v6252 = vadd.f32 0.0, %v6251
      %6253 = vmatmul.bf16.gmra.mxu0 %v6141
      %v6254 = vpop.f32.mrf.mxu0
      %v6255 = vadd.f32 0.0, %v6254
      %v6256 = vpop.f32.mrf.mxu0
      %v6257 = vadd.f32 0.0, %v6256
      %6258 = vmatmul.bf16.gmra.mxu0 %v6142
      %v6259 = vpop.f32.mrf.mxu0
      %v6260 = vadd.f32 0.0, %v6259
      %v6261 = vpop.f32.mrf.mxu0
      %v6262 = vadd.f32 0.0, %v6261
      %6263 = vmatmul.bf16.gmra.mxu0 %v6143
      %v6264 = vpop.f32.mrf.mxu0
      %v6265 = vadd.f32 0.0, %v6264
      %v6266 = vpop.f32.mrf.mxu0
      %v6267 = vadd.f32 0.0, %v6266
      %6268 = vmatmul.bf16.gmra.mxu0 %v6144
      %v6269 = vpop.f32.mrf.mxu0
      %v6270 = vadd.f32 0.0, %v6269
      %v6271 = vpop.f32.mrf.mxu0
      %v6272 = vadd.f32 0.0, %v6271
      %6273 = vmatmul.bf16.gmra.mxu0 %v6145
      %v6274 = vpop.f32.mrf.mxu0
      %v6275 = vadd.f32 0.0, %v6274
      %v6276 = vpop.f32.mrf.mxu0
      %v6277 = vadd.f32 0.0, %v6276
      %6278 = vmatmul.bf16.gmra.mxu0 %v6146
      %v6279 = vpop.f32.mrf.mxu0
      %v6280 = vadd.f32 0.0, %v6279
      %v6281 = vpop.f32.mrf.mxu0
      %v6282 = vadd.f32 0.0, %v6281
      %6283 = vmatmul.bf16.gmra.mxu0 %v6147
      %v6284 = vpop.f32.mrf.mxu0
      %v6285 = vadd.f32 0.0, %v6284
      %v6286 = vpop.f32.mrf.mxu0
      %v6287 = vadd.f32 0.0, %v6286
      %6288 = vmatmul.bf16.gmra.mxu0 %v6148
      %v6289 = vpop.f32.mrf.mxu0
      %v6290 = vadd.f32 0.0, %v6289
      %v6291 = vpop.f32.mrf.mxu0
      %v6292 = vadd.f32 0.0, %v6291
      %6293 = vmatmul.bf16.gmra.mxu0 %v6149
      %v6294 = vpop.f32.mrf.mxu0
      %v6295 = vadd.f32 0.0, %v6294
      %v6296 = vpop.f32.mrf.mxu0
      %v6297 = vadd.f32 0.0, %v6296
      %6298 = vmatmul.bf16.gmra.mxu0 %v6150
      %v6299 = vpop.f32.mrf.mxu0
      %v6300 = vadd.f32 0.0, %v6299
      %v6301 = vpop.f32.mrf.mxu0
      %v6302 = vadd.f32 0.0, %v6301
      %6303 = vdwg.mxu0
      %v6304 = vadd.f32 %v6071, %v6225
      %v6305 = vadd.f32 %v6072, %v6227
      %v6306 = vadd.f32 %v6073, %v6230
      %v6307 = vadd.f32 %v6074, %v6232
      %v6308 = vadd.f32 %v6075, %v6235
      %v6309 = vadd.f32 %v6076, %v6237
      %v6310 = vadd.f32 %v6077, %v6240
      %v6311 = vadd.f32 %v6078, %v6242
      %v6312 = vadd.f32 %v6079, %v6245
      %v6313 = vadd.f32 %v6080, %v6247
      %v6314 = vadd.f32 %v6081, %v6250
      %v6315 = vadd.f32 %v6082, %v6252
      %v6316 = vadd.f32 %v6083, %v6255
      %v6317 = vadd.f32 %v6084, %v6257
      %v6318 = vadd.f32 %v6085, %v6260
      %v6319 = vadd.f32 %v6086, %v6262
      %v6320 = vadd.f32 %v6087, %v6265
      %v6321 = vadd.f32 %v6088, %v6267
      %v6322 = vadd.f32 %v6089, %v6270
      %v6323 = vadd.f32 %v6090, %v6272
      %v6324 = vadd.f32 %v6091, %v6275
      %v6325 = vadd.f32 %v6092, %v6277
      %v6326 = vadd.f32 %v6093, %v6280
      %v6327 = vadd.f32 %v6094, %v6282
      %v6328 = vadd.f32 %v6095, %v6285
      %v6329 = vadd.f32 %v6096, %v6287
      %v6330 = vadd.f32 %v6097, %v6290
      %v6331 = vadd.f32 %v6098, %v6292
      %v6332 = vadd.f32 %v6099, %v6295
      %v6333 = vadd.f32 %v6100, %v6297
      %v6334 = vadd.f32 %v6101, %v6300
      %v6335 = vadd.f32 %v6102, %v6302
      %v6336 = vld [vmem:[#allocation3 + $0x20] sm:$0xff]
      %v6337 = vld [vmem:[#allocation3 + $0x28] sm:$0xff]
      %v6338 = vld [vmem:[#allocation3 + $0x30] sm:$0xff]
      %v6339 = vld [vmem:[#allocation3 + $0x38] sm:$0xff]
      %v6340 = vld [vmem:[#allocation3 + $0x40] sm:$0xff]
      %v6341 = vld [vmem:[#allocation3 + $0x48] sm:$0xff]
      %v6342 = vld [vmem:[#allocation3 + $0x50] sm:$0xff]
      %v6343 = vld [vmem:[#allocation3 + $0x58] sm:$0xff]
      %v6344 = vld [vmem:[#allocation3 + $0x60] sm:$0xff]
      %v6345 = vld [vmem:[#allocation3 + $0x68] sm:$0xff]
      %v6346 = vld [vmem:[#allocation3 + $0x70] sm:$0xff]
      %v6347 = vld [vmem:[#allocation3 + $0x78] sm:$0xff]
      %v6348 = vld [vmem:[#allocation3 + $0x80] sm:$0xff]
      %v6349 = vld [vmem:[#allocation3 + $0x88] sm:$0xff]
      %v6350 = vld [vmem:[#allocation3 + $0x90] sm:$0xff]
      %v6351 = vld [vmem:[#allocation3 + $0x98] sm:$0xff]
      %v6352 = vld [vmem:[#allocation3 + $0xe0] sm:$0xff]
      %v6353 = vld [vmem:[#allocation3 + $0xe8] sm:$0xff]
      %v6354 = vld [vmem:[#allocation3 + $0xf0] sm:$0xff]
      %v6355 = vld [vmem:[#allocation3 + $0xf8] sm:$0xff]
      %v6356 = vld [vmem:[#allocation3 + $0x100] sm:$0xff]
      %v6357 = vld [vmem:[#allocation3 + $0x108] sm:$0xff]
      %v6358 = vld [vmem:[#allocation3 + $0x110] sm:$0xff]
      %v6359 = vld [vmem:[#allocation3 + $0x118] sm:$0xff]
      %v6360 = vld [vmem:[#allocation3 + $0x120] sm:$0xff]
      %v6361 = vld [vmem:[#allocation3 + $0x128] sm:$0xff]
      %v6362 = vld [vmem:[#allocation3 + $0x130] sm:$0xff]
      %v6363 = vld [vmem:[#allocation3 + $0x138] sm:$0xff]
      %v6364 = vld [vmem:[#allocation3 + $0x140] sm:$0xff]
      %v6365 = vld [vmem:[#allocation3 + $0x148] sm:$0xff]
      %v6366 = vld [vmem:[#allocation3 + $0x150] sm:$0xff]
      %v6367 = vld [vmem:[#allocation3 + $0x158] sm:$0xff]
      %v6368 = vpack.c.bf16 %v6337, %v6336
      %v6369 = vpack.c.bf16 %v6339, %v6338
      %v6370 = vpack.c.bf16 %v6341, %v6340
      %v6371 = vpack.c.bf16 %v6343, %v6342
      %v6372 = vpack.c.bf16 %v6345, %v6344
      %v6373 = vpack.c.bf16 %v6347, %v6346
      %v6374 = vpack.c.bf16 %v6349, %v6348
      %v6375 = vpack.c.bf16 %v6351, %v6350
      %v6376 = vpack.c.bf16 %v6353, %v6352
      %v6377 = vpack.c.bf16 %v6355, %v6354
      %v6378 = vpack.c.bf16 %v6357, %v6356
      %v6379 = vpack.c.bf16 %v6359, %v6358
      %v6380 = vpack.c.bf16 %v6361, %v6360
      %v6381 = vpack.c.bf16 %v6363, %v6362
      %v6382 = vpack.c.bf16 %v6365, %v6364
      %v6383 = vpack.c.bf16 %v6367, %v6366
      %v6384 = vld [vmem:[%s12 + $0x100] sm:$0xf]
      %v6385 = vld [vmem:[%s12 + $0x104] sm:$0xf]
      %v6386 = vld [vmem:[%s12 + $0x108] sm:$0xf]
      %v6387 = vld [vmem:[%s12 + $0x10c] sm:$0xf]
      %v6388 = vld [vmem:[%s12 + $0x110] sm:$0xf]
      %v6389 = vld [vmem:[%s12 + $0x114] sm:$0xf]
      %v6390 = vld [vmem:[%s12 + $0x118] sm:$0xf]
      %v6391 = vld [vmem:[%s12 + $0x11c] sm:$0xf]
      %v6392 = vld [vmem:[%s12 + $0x120] sm:$0xf]
      %v6393 = vld [vmem:[%s12 + $0x124] sm:$0xf]
      %v6394 = vld [vmem:[%s12 + $0x128] sm:$0xf]
      %v6395 = vld [vmem:[%s12 + $0x12c] sm:$0xf]
      %v6396 = vld [vmem:[%s12 + $0x130] sm:$0xf]
      %v6397 = vld [vmem:[%s12 + $0x134] sm:$0xf]
      %v6398 = vld [vmem:[%s12 + $0x138] sm:$0xf]
      %v6399 = vld [vmem:[%s12 + $0x13c] sm:$0xf]
      %v6416 = vunpack.c.l.b16 %v6384
      %v6417 = vunpack.c.l.b16 %v6385
      %v6418 = vunpack.c.l.b16 %v6386
      %v6419 = vunpack.c.l.b16 %v6387
      %v6420 = vunpack.c.l.b16 %v6388
      %v6421 = vunpack.c.l.b16 %v6389
      %v6422 = vunpack.c.l.b16 %v6390
      %v6423 = vunpack.c.l.b16 %v6391
      %v6424 = vunpack.c.l.b16 %v6392
      %v6425 = vunpack.c.l.b16 %v6393
      %v6426 = vunpack.c.l.b16 %v6394
      %v6427 = vunpack.c.l.b16 %v6395
      %v6428 = vunpack.c.l.b16 %v6396
      %v6429 = vunpack.c.l.b16 %v6397
      %v6430 = vunpack.c.l.b16 %v6398
      %v6431 = vunpack.c.l.b16 %v6399
      %v6432 = vpack.c.b16 %v6417, %v6416
      %v6433 = vpack.c.b16 %v6419, %v6418
      %v6434 = vpack.c.b16 %v6421, %v6420
      %v6435 = vpack.c.b16 %v6423, %v6422
      %v6436 = vpack.c.b16 %v6425, %v6424
      %v6437 = vpack.c.b16 %v6427, %v6426
      %v6438 = vpack.c.b16 %v6429, %v6428
      %v6439 = vpack.c.b16 %v6431, %v6430
      %6448 = vmatpush.bf16.msra.mxu0 %v6439
      %6449 = vmatpush.bf16.msra.mxu0 %v6438
      %6450 = vmatpush.bf16.msra.mxu0 %v6437
      %6451 = vmatpush.bf16.msra.mxu0 %v6436
      %6452 = vmatpush.bf16.msra.mxu0 %v6435
      %6453 = vmatpush.bf16.msra.mxu0 %v6434
      %6454 = vmatpush.bf16.msra.mxu0 %v6433
      %6455 = vmatpush.bf16.msra.mxu0 %v6432
      %6456 = vmatmul.bf16.gmra.mxu0 %v6368
      %v6457 = vpop.f32.mrf.mxu0
      %v6458 = vadd.f32 0.0, %v6457
      %v6459 = vpop.f32.mrf.mxu0
      %v6460 = vadd.f32 0.0, %v6459
      %6461 = vmatmul.bf16.gmra.mxu0 %v6369
      %v6462 = vpop.f32.mrf.mxu0
      %v6463 = vadd.f32 0.0, %v6462
      %v6464 = vpop.f32.mrf.mxu0
      %v6465 = vadd.f32 0.0, %v6464
      %6466 = vmatmul.bf16.gmra.mxu0 %v6370
      %v6467 = vpop.f32.mrf.mxu0
      %v6468 = vadd.f32 0.0, %v6467
      %v6469 = vpop.f32.mrf.mxu0
      %v6470 = vadd.f32 0.0, %v6469
      %6471 = vmatmul.bf16.gmra.mxu0 %v6371
      %v6472 = vpop.f32.mrf.mxu0
      %v6473 = vadd.f32 0.0, %v6472
      %v6474 = vpop.f32.mrf.mxu0
      %v6475 = vadd.f32 0.0, %v6474
      %6476 = vmatmul.bf16.gmra.mxu0 %v6372
      %v6477 = vpop.f32.mrf.mxu0
      %v6478 = vadd.f32 0.0, %v6477
      %v6479 = vpop.f32.mrf.mxu0
      %v6480 = vadd.f32 0.0, %v6479
      %6481 = vmatmul.bf16.gmra.mxu0 %v6373
      %v6482 = vpop.f32.mrf.mxu0
      %v6483 = vadd.f32 0.0, %v6482
      %v6484 = vpop.f32.mrf.mxu0
      %v6485 = vadd.f32 0.0, %v6484
      %6486 = vmatmul.bf16.gmra.mxu0 %v6374
      %v6487 = vpop.f32.mrf.mxu0
      %v6488 = vadd.f32 0.0, %v6487
      %v6489 = vpop.f32.mrf.mxu0
      %v6490 = vadd.f32 0.0, %v6489
      %6491 = vmatmul.bf16.gmra.mxu0 %v6375
      %v6492 = vpop.f32.mrf.mxu0
      %v6493 = vadd.f32 0.0, %v6492
      %v6494 = vpop.f32.mrf.mxu0
      %v6495 = vadd.f32 0.0, %v6494
      %6496 = vmatmul.bf16.gmra.mxu0 %v6376
      %v6497 = vpop.f32.mrf.mxu0
      %v6498 = vadd.f32 0.0, %v6497
      %v6499 = vpop.f32.mrf.mxu0
      %v6500 = vadd.f32 0.0, %v6499
      %6501 = vmatmul.bf16.gmra.mxu0 %v6377
      %v6502 = vpop.f32.mrf.mxu0
      %v6503 = vadd.f32 0.0, %v6502
      %v6504 = vpop.f32.mrf.mxu0
      %v6505 = vadd.f32 0.0, %v6504
      %6506 = vmatmul.bf16.gmra.mxu0 %v6378
      %v6507 = vpop.f32.mrf.mxu0
      %v6508 = vadd.f32 0.0, %v6507
      %v6509 = vpop.f32.mrf.mxu0
      %v6510 = vadd.f32 0.0, %v6509
      %6511 = vmatmul.bf16.gmra.mxu0 %v6379
      %v6512 = vpop.f32.mrf.mxu0
      %v6513 = vadd.f32 0.0, %v6512
      %v6514 = vpop.f32.mrf.mxu0
      %v6515 = vadd.f32 0.0, %v6514
      %6516 = vmatmul.bf16.gmra.mxu0 %v6380
      %v6517 = vpop.f32.mrf.mxu0
      %v6518 = vadd.f32 0.0, %v6517
      %v6519 = vpop.f32.mrf.mxu0
      %v6520 = vadd.f32 0.0, %v6519
      %6521 = vmatmul.bf16.gmra.mxu0 %v6381
      %v6522 = vpop.f32.mrf.mxu0
      %v6523 = vadd.f32 0.0, %v6522
      %v6524 = vpop.f32.mrf.mxu0
      %v6525 = vadd.f32 0.0, %v6524
      %6526 = vmatmul.bf16.gmra.mxu0 %v6382
      %v6527 = vpop.f32.mrf.mxu0
      %v6528 = vadd.f32 0.0, %v6527
      %v6529 = vpop.f32.mrf.mxu0
      %v6530 = vadd.f32 0.0, %v6529
      %6531 = vmatmul.bf16.gmra.mxu0 %v6383
      %v6532 = vpop.f32.mrf.mxu0
      %v6533 = vadd.f32 0.0, %v6532
      %v6534 = vpop.f32.mrf.mxu0
      %v6535 = vadd.f32 0.0, %v6534
      %6536 = vdwg.mxu0
      %v6537 = vadd.f32 %v6304, %v6458
      %v6538 = vadd.f32 %v6305, %v6460
      %v6539 = vadd.f32 %v6306, %v6463
      %v6540 = vadd.f32 %v6307, %v6465
      %v6541 = vadd.f32 %v6308, %v6468
      %v6542 = vadd.f32 %v6309, %v6470
      %v6543 = vadd.f32 %v6310, %v6473
      %v6544 = vadd.f32 %v6311, %v6475
      %v6545 = vadd.f32 %v6312, %v6478
      %v6546 = vadd.f32 %v6313, %v6480
      %v6547 = vadd.f32 %v6314, %v6483
      %v6548 = vadd.f32 %v6315, %v6485
      %v6549 = vadd.f32 %v6316, %v6488
      %v6550 = vadd.f32 %v6317, %v6490
      %v6551 = vadd.f32 %v6318, %v6493
      %v6552 = vadd.f32 %v6319, %v6495
      %v6553 = vadd.f32 %v6320, %v6498
      %v6554 = vadd.f32 %v6321, %v6500
      %v6555 = vadd.f32 %v6322, %v6503
      %v6556 = vadd.f32 %v6323, %v6505
      %v6557 = vadd.f32 %v6324, %v6508
      %v6558 = vadd.f32 %v6325, %v6510
      %v6559 = vadd.f32 %v6326, %v6513
      %v6560 = vadd.f32 %v6327, %v6515
      %v6561 = vadd.f32 %v6328, %v6518
      %v6562 = vadd.f32 %v6329, %v6520
      %v6563 = vadd.f32 %v6330, %v6523
      %v6564 = vadd.f32 %v6331, %v6525
      %v6565 = vadd.f32 %v6332, %v6528
      %v6566 = vadd.f32 %v6333, %v6530
      %v6567 = vadd.f32 %v6334, %v6533
      %v6568 = vadd.f32 %v6335, %v6535
      %v6569 = vld [vmem:[#allocation3 + $0x28] sm:$0xff]
      %v6570 = vld [vmem:[#allocation3 + $0x30] sm:$0xff]
      %v6571 = vld [vmem:[#allocation3 + $0x38] sm:$0xff]
      %v6572 = vld [vmem:[#allocation3 + $0x40] sm:$0xff]
      %v6573 = vld [vmem:[#allocation3 + $0x48] sm:$0xff]
      %v6574 = vld [vmem:[#allocation3 + $0x50] sm:$0xff]
      %v6575 = vld [vmem:[#allocation3 + $0x58] sm:$0xff]
      %v6576 = vld [vmem:[#allocation3 + $0x60] sm:$0xff]
      %v6577 = vld [vmem:[#allocation3 + $0x68] sm:$0xff]
      %v6578 = vld [vmem:[#allocation3 + $0x70] sm:$0xff]
      %v6579 = vld [vmem:[#allocation3 + $0x78] sm:$0xff]
      %v6580 = vld [vmem:[#allocation3 + $0x80] sm:$0xff]
      %v6581 = vld [vmem:[#allocation3 + $0x88] sm:$0xff]
      %v6582 = vld [vmem:[#allocation3 + $0x90] sm:$0xff]
      %v6583 = vld [vmem:[#allocation3 + $0x98] sm:$0xff]
      %v6584 = vld [vmem:[#allocation3 + $0xa0] sm:$0xff]
      %v6585 = vld [vmem:[#allocation3 + $0xe8] sm:$0xff]
      %v6586 = vld [vmem:[#allocation3 + $0xf0] sm:$0xff]
      %v6587 = vld [vmem:[#allocation3 + $0xf8] sm:$0xff]
      %v6588 = vld [vmem:[#allocation3 + $0x100] sm:$0xff]
      %v6589 = vld [vmem:[#allocation3 + $0x108] sm:$0xff]
      %v6590 = vld [vmem:[#allocation3 + $0x110] sm:$0xff]
      %v6591 = vld [vmem:[#allocation3 + $0x118] sm:$0xff]
      %v6592 = vld [vmem:[#allocation3 + $0x120] sm:$0xff]
      %v6593 = vld [vmem:[#allocation3 + $0x128] sm:$0xff]
      %v6594 = vld [vmem:[#allocation3 + $0x130] sm:$0xff]
      %v6595 = vld [vmem:[#allocation3 + $0x138] sm:$0xff]
      %v6596 = vld [vmem:[#allocation3 + $0x140] sm:$0xff]
      %v6597 = vld [vmem:[#allocation3 + $0x148] sm:$0xff]
      %v6598 = vld [vmem:[#allocation3 + $0x150] sm:$0xff]
      %v6599 = vld [vmem:[#allocation3 + $0x158] sm:$0xff]
      %v6600 = vld [vmem:[#allocation3 + $0x160] sm:$0xff]
      %v6601 = vpack.c.bf16 %v6570, %v6569
      %v6602 = vpack.c.bf16 %v6572, %v6571
      %v6603 = vpack.c.bf16 %v6574, %v6573
      %v6604 = vpack.c.bf16 %v6576, %v6575
      %v6605 = vpack.c.bf16 %v6578, %v6577
      %v6606 = vpack.c.bf16 %v6580, %v6579
      %v6607 = vpack.c.bf16 %v6582, %v6581
      %v6608 = vpack.c.bf16 %v6584, %v6583
      %v6609 = vpack.c.bf16 %v6586, %v6585
      %v6610 = vpack.c.bf16 %v6588, %v6587
      %v6611 = vpack.c.bf16 %v6590, %v6589
      %v6612 = vpack.c.bf16 %v6592, %v6591
      %v6613 = vpack.c.bf16 %v6594, %v6593
      %v6614 = vpack.c.bf16 %v6596, %v6595
      %v6615 = vpack.c.bf16 %v6598, %v6597
      %v6616 = vpack.c.bf16 %v6600, %v6599
      %v6617 = vld [vmem:[%s12 + $0x140] sm:$0xf]
      %v6618 = vld [vmem:[%s12 + $0x144] sm:$0xf]
      %v6619 = vld [vmem:[%s12 + $0x148] sm:$0xf]
      %v6620 = vld [vmem:[%s12 + $0x14c] sm:$0xf]
      %v6621 = vld [vmem:[%s12 + $0x150] sm:$0xf]
      %v6622 = vld [vmem:[%s12 + $0x154] sm:$0xf]
      %v6623 = vld [vmem:[%s12 + $0x158] sm:$0xf]
      %v6624 = vld [vmem:[%s12 + $0x15c] sm:$0xf]
      %v6625 = vld [vmem:[%s12 + $0x160] sm:$0xf]
      %v6626 = vld [vmem:[%s12 + $0x164] sm:$0xf]
      %v6627 = vld [vmem:[%s12 + $0x168] sm:$0xf]
      %v6628 = vld [vmem:[%s12 + $0x16c] sm:$0xf]
      %v6629 = vld [vmem:[%s12 + $0x170] sm:$0xf]
      %v6630 = vld [vmem:[%s12 + $0x174] sm:$0xf]
      %v6631 = vld [vmem:[%s12 + $0x178] sm:$0xf]
      %v6632 = vld [vmem:[%s12 + $0x17c] sm:$0xf]
      %v6649 = vunpack.c.l.b16 %v6617
      %v6650 = vunpack.c.l.b16 %v6618
      %v6651 = vunpack.c.l.b16 %v6619
      %v6652 = vunpack.c.l.b16 %v6620
      %v6653 = vunpack.c.l.b16 %v6621
      %v6654 = vunpack.c.l.b16 %v6622
      %v6655 = vunpack.c.l.b16 %v6623
      %v6656 = vunpack.c.l.b16 %v6624
      %v6657 = vunpack.c.l.b16 %v6625
      %v6658 = vunpack.c.l.b16 %v6626
      %v6659 = vunpack.c.l.b16 %v6627
      %v6660 = vunpack.c.l.b16 %v6628
      %v6661 = vunpack.c.l.b16 %v6629
      %v6662 = vunpack.c.l.b16 %v6630
      %v6663 = vunpack.c.l.b16 %v6631
      %v6664 = vunpack.c.l.b16 %v6632
      %v6665 = vpack.c.b16 %v6650, %v6649
      %v6666 = vpack.c.b16 %v6652, %v6651
      %v6667 = vpack.c.b16 %v6654, %v6653
      %v6668 = vpack.c.b16 %v6656, %v6655
      %v6669 = vpack.c.b16 %v6658, %v6657
      %v6670 = vpack.c.b16 %v6660, %v6659
      %v6671 = vpack.c.b16 %v6662, %v6661
      %v6672 = vpack.c.b16 %v6664, %v6663
      %6681 = vmatpush.bf16.msra.mxu0 %v6672
      %6682 = vmatpush.bf16.msra.mxu0 %v6671
      %6683 = vmatpush.bf16.msra.mxu0 %v6670
      %6684 = vmatpush.bf16.msra.mxu0 %v6669
      %6685 = vmatpush.bf16.msra.mxu0 %v6668
      %6686 = vmatpush.bf16.msra.mxu0 %v6667
      %6687 = vmatpush.bf16.msra.mxu0 %v6666
      %6688 = vmatpush.bf16.msra.mxu0 %v6665
      %6689 = vmatmul.bf16.gmra.mxu0 %v6601
      %v6690 = vpop.f32.mrf.mxu0
      %v6691 = vadd.f32 0.0, %v6690
      %v6692 = vpop.f32.mrf.mxu0
      %v6693 = vadd.f32 0.0, %v6692
      %6694 = vmatmul.bf16.gmra.mxu0 %v6602
      %v6695 = vpop.f32.mrf.mxu0
      %v6696 = vadd.f32 0.0, %v6695
      %v6697 = vpop.f32.mrf.mxu0
      %v6698 = vadd.f32 0.0, %v6697
      %6699 = vmatmul.bf16.gmra.mxu0 %v6603
      %v6700 = vpop.f32.mrf.mxu0
      %v6701 = vadd.f32 0.0, %v6700
      %v6702 = vpop.f32.mrf.mxu0
      %v6703 = vadd.f32 0.0, %v6702
      %6704 = vmatmul.bf16.gmra.mxu0 %v6604
      %v6705 = vpop.f32.mrf.mxu0
      %v6706 = vadd.f32 0.0, %v6705
      %v6707 = vpop.f32.mrf.mxu0
      %v6708 = vadd.f32 0.0, %v6707
      %6709 = vmatmul.bf16.gmra.mxu0 %v6605
      %v6710 = vpop.f32.mrf.mxu0
      %v6711 = vadd.f32 0.0, %v6710
      %v6712 = vpop.f32.mrf.mxu0
      %v6713 = vadd.f32 0.0, %v6712
      %6714 = vmatmul.bf16.gmra.mxu0 %v6606
      %v6715 = vpop.f32.mrf.mxu0
      %v6716 = vadd.f32 0.0, %v6715
      %v6717 = vpop.f32.mrf.mxu0
      %v6718 = vadd.f32 0.0, %v6717
      %6719 = vmatmul.bf16.gmra.mxu0 %v6607
      %v6720 = vpop.f32.mrf.mxu0
      %v6721 = vadd.f32 0.0, %v6720
      %v6722 = vpop.f32.mrf.mxu0
      %v6723 = vadd.f32 0.0, %v6722
      %6724 = vmatmul.bf16.gmra.mxu0 %v6608
      %v6725 = vpop.f32.mrf.mxu0
      %v6726 = vadd.f32 0.0, %v6725
      %v6727 = vpop.f32.mrf.mxu0
      %v6728 = vadd.f32 0.0, %v6727
      %6729 = vmatmul.bf16.gmra.mxu0 %v6609
      %v6730 = vpop.f32.mrf.mxu0
      %v6731 = vadd.f32 0.0, %v6730
      %v6732 = vpop.f32.mrf.mxu0
      %v6733 = vadd.f32 0.0, %v6732
      %6734 = vmatmul.bf16.gmra.mxu0 %v6610
      %v6735 = vpop.f32.mrf.mxu0
      %v6736 = vadd.f32 0.0, %v6735
      %v6737 = vpop.f32.mrf.mxu0
      %v6738 = vadd.f32 0.0, %v6737
      %6739 = vmatmul.bf16.gmra.mxu0 %v6611
      %v6740 = vpop.f32.mrf.mxu0
      %v6741 = vadd.f32 0.0, %v6740
      %v6742 = vpop.f32.mrf.mxu0
      %v6743 = vadd.f32 0.0, %v6742
      %6744 = vmatmul.bf16.gmra.mxu0 %v6612
      %v6745 = vpop.f32.mrf.mxu0
      %v6746 = vadd.f32 0.0, %v6745
      %v6747 = vpop.f32.mrf.mxu0
      %v6748 = vadd.f32 0.0, %v6747
      %6749 = vmatmul.bf16.gmra.mxu0 %v6613
      %v6750 = vpop.f32.mrf.mxu0
      %v6751 = vadd.f32 0.0, %v6750
      %v6752 = vpop.f32.mrf.mxu0
      %v6753 = vadd.f32 0.0, %v6752
      %6754 = vmatmul.bf16.gmra.mxu0 %v6614
      %v6755 = vpop.f32.mrf.mxu0
      %v6756 = vadd.f32 0.0, %v6755
      %v6757 = vpop.f32.mrf.mxu0
      %v6758 = vadd.f32 0.0, %v6757
      %6759 = vmatmul.bf16.gmra.mxu0 %v6615
      %v6760 = vpop.f32.mrf.mxu0
      %v6761 = vadd.f32 0.0, %v6760
      %v6762 = vpop.f32.mrf.mxu0
      %v6763 = vadd.f32 0.0, %v6762
      %6764 = vmatmul.bf16.gmra.mxu0 %v6616
      %v6765 = vpop.f32.mrf.mxu0
      %v6766 = vadd.f32 0.0, %v6765
      %v6767 = vpop.f32.mrf.mxu0
      %v6768 = vadd.f32 0.0, %v6767
      %6769 = vdwg.mxu0
      %v6770 = vadd.f32 %v6537, %v6691
      %v6771 = vadd.f32 %v6538, %v6693
      %v6772 = vadd.f32 %v6539, %v6696
      %v6773 = vadd.f32 %v6540, %v6698
      %v6774 = vadd.f32 %v6541, %v6701
      %v6775 = vadd.f32 %v6542, %v6703
      %v6776 = vadd.f32 %v6543, %v6706
      %v6777 = vadd.f32 %v6544, %v6708
      %v6778 = vadd.f32 %v6545, %v6711
      %v6779 = vadd.f32 %v6546, %v6713
      %v6780 = vadd.f32 %v6547, %v6716
      %v6781 = vadd.f32 %v6548, %v6718
      %v6782 = vadd.f32 %v6549, %v6721
      %v6783 = vadd.f32 %v6550, %v6723
      %v6784 = vadd.f32 %v6551, %v6726
      %v6785 = vadd.f32 %v6552, %v6728
      %v6786 = vadd.f32 %v6553, %v6731
      %v6787 = vadd.f32 %v6554, %v6733
      %v6788 = vadd.f32 %v6555, %v6736
      %v6789 = vadd.f32 %v6556, %v6738
      %v6790 = vadd.f32 %v6557, %v6741
      %v6791 = vadd.f32 %v6558, %v6743
      %v6792 = vadd.f32 %v6559, %v6746
      %v6793 = vadd.f32 %v6560, %v6748
      %v6794 = vadd.f32 %v6561, %v6751
      %v6795 = vadd.f32 %v6562, %v6753
      %v6796 = vadd.f32 %v6563, %v6756
      %v6797 = vadd.f32 %v6564, %v6758
      %v6798 = vadd.f32 %v6565, %v6761
      %v6799 = vadd.f32 %v6566, %v6763
      %v6800 = vadd.f32 %v6567, %v6766
      %v6801 = vadd.f32 %v6568, %v6768
      %v6802 = vld [vmem:[#allocation3 + $0x30] sm:$0xff]
      %v6803 = vld [vmem:[#allocation3 + $0x38] sm:$0xff]
      %v6804 = vld [vmem:[#allocation3 + $0x40] sm:$0xff]
      %v6805 = vld [vmem:[#allocation3 + $0x48] sm:$0xff]
      %v6806 = vld [vmem:[#allocation3 + $0x50] sm:$0xff]
      %v6807 = vld [vmem:[#allocation3 + $0x58] sm:$0xff]
      %v6808 = vld [vmem:[#allocation3 + $0x60] sm:$0xff]
      %v6809 = vld [vmem:[#allocation3 + $0x68] sm:$0xff]
      %v6810 = vld [vmem:[#allocation3 + $0x70] sm:$0xff]
      %v6811 = vld [vmem:[#allocation3 + $0x78] sm:$0xff]
      %v6812 = vld [vmem:[#allocation3 + $0x80] sm:$0xff]
      %v6813 = vld [vmem:[#allocation3 + $0x88] sm:$0xff]
      %v6814 = vld [vmem:[#allocation3 + $0x90] sm:$0xff]
      %v6815 = vld [vmem:[#allocation3 + $0x98] sm:$0xff]
      %v6816 = vld [vmem:[#allocation3 + $0xa0] sm:$0xff]
      %v6817 = vld [vmem:[#allocation3 + $0xa8] sm:$0xff]
      %v6818 = vld [vmem:[#allocation3 + $0xf0] sm:$0xff]
      %v6819 = vld [vmem:[#allocation3 + $0xf8] sm:$0xff]
      %v6820 = vld [vmem:[#allocation3 + $0x100] sm:$0xff]
      %v6821 = vld [vmem:[#allocation3 + $0x108] sm:$0xff]
      %v6822 = vld [vmem:[#allocation3 + $0x110] sm:$0xff]
      %v6823 = vld [vmem:[#allocation3 + $0x118] sm:$0xff]
      %v6824 = vld [vmem:[#allocation3 + $0x120] sm:$0xff]
      %v6825 = vld [vmem:[#allocation3 + $0x128] sm:$0xff]
      %v6826 = vld [vmem:[#allocation3 + $0x130] sm:$0xff]
      %v6827 = vld [vmem:[#allocation3 + $0x138] sm:$0xff]
      %v6828 = vld [vmem:[#allocation3 + $0x140] sm:$0xff]
      %v6829 = vld [vmem:[#allocation3 + $0x148] sm:$0xff]
      %v6830 = vld [vmem:[#allocation3 + $0x150] sm:$0xff]
      %v6831 = vld [vmem:[#allocation3 + $0x158] sm:$0xff]
      %v6832 = vld [vmem:[#allocation3 + $0x160] sm:$0xff]
      %v6833 = vld [vmem:[#allocation3 + $0x168] sm:$0xff]
      %v6834 = vpack.c.bf16 %v6803, %v6802
      %v6835 = vpack.c.bf16 %v6805, %v6804
      %v6836 = vpack.c.bf16 %v6807, %v6806
      %v6837 = vpack.c.bf16 %v6809, %v6808
      %v6838 = vpack.c.bf16 %v6811, %v6810
      %v6839 = vpack.c.bf16 %v6813, %v6812
      %v6840 = vpack.c.bf16 %v6815, %v6814
      %v6841 = vpack.c.bf16 %v6817, %v6816
      %v6842 = vpack.c.bf16 %v6819, %v6818
      %v6843 = vpack.c.bf16 %v6821, %v6820
      %v6844 = vpack.c.bf16 %v6823, %v6822
      %v6845 = vpack.c.bf16 %v6825, %v6824
      %v6846 = vpack.c.bf16 %v6827, %v6826
      %v6847 = vpack.c.bf16 %v6829, %v6828
      %v6848 = vpack.c.bf16 %v6831, %v6830
      %v6849 = vpack.c.bf16 %v6833, %v6832
      %v6850 = vld [vmem:[%s12 + $0x180] sm:$0xf]
      %v6851 = vld [vmem:[%s12 + $0x184] sm:$0xf]
      %v6852 = vld [vmem:[%s12 + $0x188] sm:$0xf]
      %v6853 = vld [vmem:[%s12 + $0x18c] sm:$0xf]
      %v6854 = vld [vmem:[%s12 + $0x190] sm:$0xf]
      %v6855 = vld [vmem:[%s12 + $0x194] sm:$0xf]
      %v6856 = vld [vmem:[%s12 + $0x198] sm:$0xf]
      %v6857 = vld [vmem:[%s12 + $0x19c] sm:$0xf]
      %v6858 = vld [vmem:[%s12 + $0x1a0] sm:$0xf]
      %v6859 = vld [vmem:[%s12 + $0x1a4] sm:$0xf]
      %v6860 = vld [vmem:[%s12 + $0x1a8] sm:$0xf]
      %v6861 = vld [vmem:[%s12 + $0x1ac] sm:$0xf]
      %v6862 = vld [vmem:[%s12 + $0x1b0] sm:$0xf]
      %v6863 = vld [vmem:[%s12 + $0x1b4] sm:$0xf]
      %v6864 = vld [vmem:[%s12 + $0x1b8] sm:$0xf]
      %v6865 = vld [vmem:[%s12 + $0x1bc] sm:$0xf]
      %v6882 = vunpack.c.l.b16 %v6850
      %v6883 = vunpack.c.l.b16 %v6851
      %v6884 = vunpack.c.l.b16 %v6852
      %v6885 = vunpack.c.l.b16 %v6853
      %v6886 = vunpack.c.l.b16 %v6854
      %v6887 = vunpack.c.l.b16 %v6855
      %v6888 = vunpack.c.l.b16 %v6856
      %v6889 = vunpack.c.l.b16 %v6857
      %v6890 = vunpack.c.l.b16 %v6858
      %v6891 = vunpack.c.l.b16 %v6859
      %v6892 = vunpack.c.l.b16 %v6860
      %v6893 = vunpack.c.l.b16 %v6861
      %v6894 = vunpack.c.l.b16 %v6862
      %v6895 = vunpack.c.l.b16 %v6863
      %v6896 = vunpack.c.l.b16 %v6864
      %v6897 = vunpack.c.l.b16 %v6865
      %v6898 = vpack.c.b16 %v6883, %v6882
      %v6899 = vpack.c.b16 %v6885, %v6884
      %v6900 = vpack.c.b16 %v6887, %v6886
      %v6901 = vpack.c.b16 %v6889, %v6888
      %v6902 = vpack.c.b16 %v6891, %v6890
      %v6903 = vpack.c.b16 %v6893, %v6892
      %v6904 = vpack.c.b16 %v6895, %v6894
      %v6905 = vpack.c.b16 %v6897, %v6896
      %6914 = vmatpush.bf16.msra.mxu0 %v6905
      %6915 = vmatpush.bf16.msra.mxu0 %v6904
      %6916 = vmatpush.bf16.msra.mxu0 %v6903
      %6917 = vmatpush.bf16.msra.mxu0 %v6902
      %6918 = vmatpush.bf16.msra.mxu0 %v6901
      %6919 = vmatpush.bf16.msra.mxu0 %v6900
      %6920 = vmatpush.bf16.msra.mxu0 %v6899
      %6921 = vmatpush.bf16.msra.mxu0 %v6898
      %6922 = vmatmul.bf16.gmra.mxu0 %v6834
      %v6923 = vpop.f32.mrf.mxu0
      %v6924 = vadd.f32 0.0, %v6923
      %v6925 = vpop.f32.mrf.mxu0
      %v6926 = vadd.f32 0.0, %v6925
      %6927 = vmatmul.bf16.gmra.mxu0 %v6835
      %v6928 = vpop.f32.mrf.mxu0
      %v6929 = vadd.f32 0.0, %v6928
      %v6930 = vpop.f32.mrf.mxu0
      %v6931 = vadd.f32 0.0, %v6930
      %6932 = vmatmul.bf16.gmra.mxu0 %v6836
      %v6933 = vpop.f32.mrf.mxu0
      %v6934 = vadd.f32 0.0, %v6933
      %v6935 = vpop.f32.mrf.mxu0
      %v6936 = vadd.f32 0.0, %v6935
      %6937 = vmatmul.bf16.gmra.mxu0 %v6837
      %v6938 = vpop.f32.mrf.mxu0
      %v6939 = vadd.f32 0.0, %v6938
      %v6940 = vpop.f32.mrf.mxu0
      %v6941 = vadd.f32 0.0, %v6940
      %6942 = vmatmul.bf16.gmra.mxu0 %v6838
      %v6943 = vpop.f32.mrf.mxu0
      %v6944 = vadd.f32 0.0, %v6943
      %v6945 = vpop.f32.mrf.mxu0
      %v6946 = vadd.f32 0.0, %v6945
      %6947 = vmatmul.bf16.gmra.mxu0 %v6839
      %v6948 = vpop.f32.mrf.mxu0
      %v6949 = vadd.f32 0.0, %v6948
      %v6950 = vpop.f32.mrf.mxu0
      %v6951 = vadd.f32 0.0, %v6950
      %6952 = vmatmul.bf16.gmra.mxu0 %v6840
      %v6953 = vpop.f32.mrf.mxu0
      %v6954 = vadd.f32 0.0, %v6953
      %v6955 = vpop.f32.mrf.mxu0
      %v6956 = vadd.f32 0.0, %v6955
      %6957 = vmatmul.bf16.gmra.mxu0 %v6841
      %v6958 = vpop.f32.mrf.mxu0
      %v6959 = vadd.f32 0.0, %v6958
      %v6960 = vpop.f32.mrf.mxu0
      %v6961 = vadd.f32 0.0, %v6960
      %6962 = vmatmul.bf16.gmra.mxu0 %v6842
      %v6963 = vpop.f32.mrf.mxu0
      %v6964 = vadd.f32 0.0, %v6963
      %v6965 = vpop.f32.mrf.mxu0
      %v6966 = vadd.f32 0.0, %v6965
      %6967 = vmatmul.bf16.gmra.mxu0 %v6843
      %v6968 = vpop.f32.mrf.mxu0
      %v6969 = vadd.f32 0.0, %v6968
      %v6970 = vpop.f32.mrf.mxu0
      %v6971 = vadd.f32 0.0, %v6970
      %6972 = vmatmul.bf16.gmra.mxu0 %v6844
      %v6973 = vpop.f32.mrf.mxu0
      %v6974 = vadd.f32 0.0, %v6973
      %v6975 = vpop.f32.mrf.mxu0
      %v6976 = vadd.f32 0.0, %v6975
      %6977 = vmatmul.bf16.gmra.mxu0 %v6845
      %v6978 = vpop.f32.mrf.mxu0
      %v6979 = vadd.f32 0.0, %v6978
      %v6980 = vpop.f32.mrf.mxu0
      %v6981 = vadd.f32 0.0, %v6980
      %6982 = vmatmul.bf16.gmra.mxu0 %v6846
      %v6983 = vpop.f32.mrf.mxu0
      %v6984 = vadd.f32 0.0, %v6983
      %v6985 = vpop.f32.mrf.mxu0
      %v6986 = vadd.f32 0.0, %v6985
      %6987 = vmatmul.bf16.gmra.mxu0 %v6847
      %v6988 = vpop.f32.mrf.mxu0
      %v6989 = vadd.f32 0.0, %v6988
      %v6990 = vpop.f32.mrf.mxu0
      %v6991 = vadd.f32 0.0, %v6990
      %6992 = vmatmul.bf16.gmra.mxu0 %v6848
      %v6993 = vpop.f32.mrf.mxu0
      %v6994 = vadd.f32 0.0, %v6993
      %v6995 = vpop.f32.mrf.mxu0
      %v6996 = vadd.f32 0.0, %v6995
      %6997 = vmatmul.bf16.gmra.mxu0 %v6849
      %v6998 = vpop.f32.mrf.mxu0
      %v6999 = vadd.f32 0.0, %v6998
      %v7000 = vpop.f32.mrf.mxu0
      %v7001 = vadd.f32 0.0, %v7000
      %7002 = vdwg.mxu0
      %v7003 = vadd.f32 %v6770, %v6924
      %v7004 = vadd.f32 %v6771, %v6926
      %v7005 = vadd.f32 %v6772, %v6929
      %v7006 = vadd.f32 %v6773, %v6931
      %v7007 = vadd.f32 %v6774, %v6934
      %v7008 = vadd.f32 %v6775, %v6936
      %v7009 = vadd.f32 %v6776, %v6939
      %v7010 = vadd.f32 %v6777, %v6941
      %v7011 = vadd.f32 %v6778, %v6944
      %v7012 = vadd.f32 %v6779, %v6946
      %v7013 = vadd.f32 %v6780, %v6949
      %v7014 = vadd.f32 %v6781, %v6951
      %v7015 = vadd.f32 %v6782, %v6954
      %v7016 = vadd.f32 %v6783, %v6956
      %v7017 = vadd.f32 %v6784, %v6959
      %v7018 = vadd.f32 %v6785, %v6961
      %v7019 = vadd.f32 %v6786, %v6964
      %v7020 = vadd.f32 %v6787, %v6966
      %v7021 = vadd.f32 %v6788, %v6969
      %v7022 = vadd.f32 %v6789, %v6971
      %v7023 = vadd.f32 %v6790, %v6974
      %v7024 = vadd.f32 %v6791, %v6976
      %v7025 = vadd.f32 %v6792, %v6979
      %v7026 = vadd.f32 %v6793, %v6981
      %v7027 = vadd.f32 %v6794, %v6984
      %v7028 = vadd.f32 %v6795, %v6986
      %v7029 = vadd.f32 %v6796, %v6989
      %v7030 = vadd.f32 %v6797, %v6991
      %v7031 = vadd.f32 %v6798, %v6994
      %v7032 = vadd.f32 %v6799, %v6996
      %v7033 = vadd.f32 %v6800, %v6999
      %v7034 = vadd.f32 %v6801, %v7001
      %v7035 = vld [vmem:[#allocation3 + $0x38] sm:$0xff]
      %v7036 = vld [vmem:[#allocation3 + $0x40] sm:$0xff]
      %v7037 = vld [vmem:[#allocation3 + $0x48] sm:$0xff]
      %v7038 = vld [vmem:[#allocation3 + $0x50] sm:$0xff]
      %v7039 = vld [vmem:[#allocation3 + $0x58] sm:$0xff]
      %v7040 = vld [vmem:[#allocation3 + $0x60] sm:$0xff]
      %v7041 = vld [vmem:[#allocation3 + $0x68] sm:$0xff]
      %v7042 = vld [vmem:[#allocation3 + $0x70] sm:$0xff]
      %v7043 = vld [vmem:[#allocation3 + $0x78] sm:$0xff]
      %v7044 = vld [vmem:[#allocation3 + $0x80] sm:$0xff]
      %v7045 = vld [vmem:[#allocation3 + $0x88] sm:$0xff]
      %v7046 = vld [vmem:[#allocation3 + $0x90] sm:$0xff]
      %v7047 = vld [vmem:[#allocation3 + $0x98] sm:$0xff]
      %v7048 = vld [vmem:[#allocation3 + $0xa0] sm:$0xff]
      %v7049 = vld [vmem:[#allocation3 + $0xa8] sm:$0xff]
      %v7050 = vld [vmem:[#allocation3 + $0xb0] sm:$0xff]
      %v7051 = vld [vmem:[#allocation3 + $0xf8] sm:$0xff]
      %v7052 = vld [vmem:[#allocation3 + $0x100] sm:$0xff]
      %v7053 = vld [vmem:[#allocation3 + $0x108] sm:$0xff]
      %v7054 = vld [vmem:[#allocation3 + $0x110] sm:$0xff]
      %v7055 = vld [vmem:[#allocation3 + $0x118] sm:$0xff]
      %v7056 = vld [vmem:[#allocation3 + $0x120] sm:$0xff]
      %v7057 = vld [vmem:[#allocation3 + $0x128] sm:$0xff]
      %v7058 = vld [vmem:[#allocation3 + $0x130] sm:$0xff]
      %v7059 = vld [vmem:[#allocation3 + $0x138] sm:$0xff]
      %v7060 = vld [vmem:[#allocation3 + $0x140] sm:$0xff]
      %v7061 = vld [vmem:[#allocation3 + $0x148] sm:$0xff]
      %v7062 = vld [vmem:[#allocation3 + $0x150] sm:$0xff]
      %v7063 = vld [vmem:[#allocation3 + $0x158] sm:$0xff]
      %v7064 = vld [vmem:[#allocation3 + $0x160] sm:$0xff]
      %v7065 = vld [vmem:[#allocation3 + $0x168] sm:$0xff]
      %v7066 = vld [vmem:[#allocation3 + $0x170] sm:$0xff]
      %v7067 = vpack.c.bf16 %v7036, %v7035
      %v7068 = vpack.c.bf16 %v7038, %v7037
      %v7069 = vpack.c.bf16 %v7040, %v7039
      %v7070 = vpack.c.bf16 %v7042, %v7041
      %v7071 = vpack.c.bf16 %v7044, %v7043
      %v7072 = vpack.c.bf16 %v7046, %v7045
      %v7073 = vpack.c.bf16 %v7048, %v7047
      %v7074 = vpack.c.bf16 %v7050, %v7049
      %v7075 = vpack.c.bf16 %v7052, %v7051
      %v7076 = vpack.c.bf16 %v7054, %v7053
      %v7077 = vpack.c.bf16 %v7056, %v7055
      %v7078 = vpack.c.bf16 %v7058, %v7057
      %v7079 = vpack.c.bf16 %v7060, %v7059
      %v7080 = vpack.c.bf16 %v7062, %v7061
      %v7081 = vpack.c.bf16 %v7064, %v7063
      %v7082 = vpack.c.bf16 %v7066, %v7065
      %v7083 = vld [vmem:[%s12 + $0x1c0] sm:$0xf]
      %v7084 = vld [vmem:[%s12 + $0x1c4] sm:$0xf]
      %v7085 = vld [vmem:[%s12 + $0x1c8] sm:$0xf]
      %v7086 = vld [vmem:[%s12 + $0x1cc] sm:$0xf]
      %v7087 = vld [vmem:[%s12 + $0x1d0] sm:$0xf]
      %v7088 = vld [vmem:[%s12 + $0x1d4] sm:$0xf]
      %v7089 = vld [vmem:[%s12 + $0x1d8] sm:$0xf]
      %v7090 = vld [vmem:[%s12 + $0x1dc] sm:$0xf]
      %v7091 = vld [vmem:[%s12 + $0x1e0] sm:$0xf]
      %v7092 = vld [vmem:[%s12 + $0x1e4] sm:$0xf]
      %v7093 = vld [vmem:[%s12 + $0x1e8] sm:$0xf]
      %v7094 = vld [vmem:[%s12 + $0x1ec] sm:$0xf]
      %v7095 = vld [vmem:[%s12 + $0x1f0] sm:$0xf]
      %v7096 = vld [vmem:[%s12 + $0x1f4] sm:$0xf]
      %v7097 = vld [vmem:[%s12 + $0x1f8] sm:$0xf]
      %v7098 = vld [vmem:[%s12 + $0x1fc] sm:$0xf]
      %v7115 = vunpack.c.l.b16 %v7083
      %v7116 = vunpack.c.l.b16 %v7084
      %v7117 = vunpack.c.l.b16 %v7085
      %v7118 = vunpack.c.l.b16 %v7086
      %v7119 = vunpack.c.l.b16 %v7087
      %v7120 = vunpack.c.l.b16 %v7088
      %v7121 = vunpack.c.l.b16 %v7089
      %v7122 = vunpack.c.l.b16 %v7090
      %v7123 = vunpack.c.l.b16 %v7091
      %v7124 = vunpack.c.l.b16 %v7092
      %v7125 = vunpack.c.l.b16 %v7093
      %v7126 = vunpack.c.l.b16 %v7094
      %v7127 = vunpack.c.l.b16 %v7095
      %v7128 = vunpack.c.l.b16 %v7096
      %v7129 = vunpack.c.l.b16 %v7097
      %v7130 = vunpack.c.l.b16 %v7098
      %v7131 = vpack.c.b16 %v7116, %v7115
      %v7132 = vpack.c.b16 %v7118, %v7117
      %v7133 = vpack.c.b16 %v7120, %v7119
      %v7134 = vpack.c.b16 %v7122, %v7121
      %v7135 = vpack.c.b16 %v7124, %v7123
      %v7136 = vpack.c.b16 %v7126, %v7125
      %v7137 = vpack.c.b16 %v7128, %v7127
      %v7138 = vpack.c.b16 %v7130, %v7129
      %7147 = vmatpush.bf16.msra.mxu0 %v7138
      %7148 = vmatpush.bf16.msra.mxu0 %v7137
      %7149 = vmatpush.bf16.msra.mxu0 %v7136
      %7150 = vmatpush.bf16.msra.mxu0 %v7135
      %7151 = vmatpush.bf16.msra.mxu0 %v7134
      %7152 = vmatpush.bf16.msra.mxu0 %v7133
      %7153 = vmatpush.bf16.msra.mxu0 %v7132
      %7154 = vmatpush.bf16.msra.mxu0 %v7131
      %7155 = vmatmul.bf16.gmra.mxu0 %v7067
      %v7156 = vpop.f32.mrf.mxu0
      %v7157 = vadd.f32 0.0, %v7156
      %v7158 = vpop.f32.mrf.mxu0
      %v7159 = vadd.f32 0.0, %v7158
      %7160 = vmatmul.bf16.gmra.mxu0 %v7068
      %v7161 = vpop.f32.mrf.mxu0
      %v7162 = vadd.f32 0.0, %v7161
      %v7163 = vpop.f32.mrf.mxu0
      %v7164 = vadd.f32 0.0, %v7163
      %7165 = vmatmul.bf16.gmra.mxu0 %v7069
      %v7166 = vpop.f32.mrf.mxu0
      %v7167 = vadd.f32 0.0, %v7166
      %v7168 = vpop.f32.mrf.mxu0
      %v7169 = vadd.f32 0.0, %v7168
      %7170 = vmatmul.bf16.gmra.mxu0 %v7070
      %v7171 = vpop.f32.mrf.mxu0
      %v7172 = vadd.f32 0.0, %v7171
      %v7173 = vpop.f32.mrf.mxu0
      %v7174 = vadd.f32 0.0, %v7173
      %7175 = vmatmul.bf16.gmra.mxu0 %v7071
      %v7176 = vpop.f32.mrf.mxu0
      %v7177 = vadd.f32 0.0, %v7176
      %v7178 = vpop.f32.mrf.mxu0
      %v7179 = vadd.f32 0.0, %v7178
      %7180 = vmatmul.bf16.gmra.mxu0 %v7072
      %v7181 = vpop.f32.mrf.mxu0
      %v7182 = vadd.f32 0.0, %v7181
      %v7183 = vpop.f32.mrf.mxu0
      %v7184 = vadd.f32 0.0, %v7183
      %7185 = vmatmul.bf16.gmra.mxu0 %v7073
      %v7186 = vpop.f32.mrf.mxu0
      %v7187 = vadd.f32 0.0, %v7186
      %v7188 = vpop.f32.mrf.mxu0
      %v7189 = vadd.f32 0.0, %v7188
      %7190 = vmatmul.bf16.gmra.mxu0 %v7074
      %v7191 = vpop.f32.mrf.mxu0
      %v7192 = vadd.f32 0.0, %v7191
      %v7193 = vpop.f32.mrf.mxu0
      %v7194 = vadd.f32 0.0, %v7193
      %7195 = vmatmul.bf16.gmra.mxu0 %v7075
      %v7196 = vpop.f32.mrf.mxu0
      %v7197 = vadd.f32 0.0, %v7196
      %v7198 = vpop.f32.mrf.mxu0
      %v7199 = vadd.f32 0.0, %v7198
      %7200 = vmatmul.bf16.gmra.mxu0 %v7076
      %v7201 = vpop.f32.mrf.mxu0
      %v7202 = vadd.f32 0.0, %v7201
      %v7203 = vpop.f32.mrf.mxu0
      %v7204 = vadd.f32 0.0, %v7203
      %7205 = vmatmul.bf16.gmra.mxu0 %v7077
      %v7206 = vpop.f32.mrf.mxu0
      %v7207 = vadd.f32 0.0, %v7206
      %v7208 = vpop.f32.mrf.mxu0
      %v7209 = vadd.f32 0.0, %v7208
      %7210 = vmatmul.bf16.gmra.mxu0 %v7078
      %v7211 = vpop.f32.mrf.mxu0
      %v7212 = vadd.f32 0.0, %v7211
      %v7213 = vpop.f32.mrf.mxu0
      %v7214 = vadd.f32 0.0, %v7213
      %7215 = vmatmul.bf16.gmra.mxu0 %v7079
      %v7216 = vpop.f32.mrf.mxu0
      %v7217 = vadd.f32 0.0, %v7216
      %v7218 = vpop.f32.mrf.mxu0
      %v7219 = vadd.f32 0.0, %v7218
      %7220 = vmatmul.bf16.gmra.mxu0 %v7080
      %v7221 = vpop.f32.mrf.mxu0
      %v7222 = vadd.f32 0.0, %v7221
      %v7223 = vpop.f32.mrf.mxu0
      %v7224 = vadd.f32 0.0, %v7223
      %7225 = vmatmul.bf16.gmra.mxu0 %v7081
      %v7226 = vpop.f32.mrf.mxu0
      %v7227 = vadd.f32 0.0, %v7226
      %v7228 = vpop.f32.mrf.mxu0
      %v7229 = vadd.f32 0.0, %v7228
      %7230 = vmatmul.bf16.gmra.mxu0 %v7082
      %v7231 = vpop.f32.mrf.mxu0
      %v7232 = vadd.f32 0.0, %v7231
      %v7233 = vpop.f32.mrf.mxu0
      %v7234 = vadd.f32 0.0, %v7233
      %7235 = vdwg.mxu0
      %v7236 = vadd.f32 %v7003, %v7157
      %v7237 = vadd.f32 %v7004, %v7159
      %v7238 = vadd.f32 %v7005, %v7162
      %v7239 = vadd.f32 %v7006, %v7164
      %v7240 = vadd.f32 %v7007, %v7167
      %v7241 = vadd.f32 %v7008, %v7169
      %v7242 = vadd.f32 %v7009, %v7172
      %v7243 = vadd.f32 %v7010, %v7174
      %v7244 = vadd.f32 %v7011, %v7177
      %v7245 = vadd.f32 %v7012, %v7179
      %v7246 = vadd.f32 %v7013, %v7182
      %v7247 = vadd.f32 %v7014, %v7184
      %v7248 = vadd.f32 %v7015, %v7187
      %v7249 = vadd.f32 %v7016, %v7189
      %v7250 = vadd.f32 %v7017, %v7192
      %v7251 = vadd.f32 %v7018, %v7194
      %v7252 = vadd.f32 %v7019, %v7197
      %v7253 = vadd.f32 %v7020, %v7199
      %v7254 = vadd.f32 %v7021, %v7202
      %v7255 = vadd.f32 %v7022, %v7204
      %v7256 = vadd.f32 %v7023, %v7207
      %v7257 = vadd.f32 %v7024, %v7209
      %v7258 = vadd.f32 %v7025, %v7212
      %v7259 = vadd.f32 %v7026, %v7214
      %v7260 = vadd.f32 %v7027, %v7217
      %v7261 = vadd.f32 %v7028, %v7219
      %v7262 = vadd.f32 %v7029, %v7222
      %v7263 = vadd.f32 %v7030, %v7224
      %v7264 = vadd.f32 %v7031, %v7227
      %v7265 = vadd.f32 %v7032, %v7229
      %v7266 = vadd.f32 %v7033, %v7232
      %v7267 = vadd.f32 %v7034, %v7234
      %v7268 = vld [vmem:[#allocation3 + $0x40] sm:$0xff]
      %v7269 = vld [vmem:[#allocation3 + $0x48] sm:$0xff]
      %v7270 = vld [vmem:[#allocation3 + $0x50] sm:$0xff]
      %v7271 = vld [vmem:[#allocation3 + $0x58] sm:$0xff]
      %v7272 = vld [vmem:[#allocation3 + $0x60] sm:$0xff]
      %v7273 = vld [vmem:[#allocation3 + $0x68] sm:$0xff]
      %v7274 = vld [vmem:[#allocation3 + $0x70] sm:$0xff]
      %v7275 = vld [vmem:[#allocation3 + $0x78] sm:$0xff]
      %v7276 = vld [vmem:[#allocation3 + $0x80] sm:$0xff]
      %v7277 = vld [vmem:[#allocation3 + $0x88] sm:$0xff]
      %v7278 = vld [vmem:[#allocation3 + $0x90] sm:$0xff]
      %v7279 = vld [vmem:[#allocation3 + $0x98] sm:$0xff]
      %v7280 = vld [vmem:[#allocation3 + $0xa0] sm:$0xff]
      %v7281 = vld [vmem:[#allocation3 + $0xa8] sm:$0xff]
      %v7282 = vld [vmem:[#allocation3 + $0xb0] sm:$0xff]
      %v7283 = vld [vmem:[#allocation3 + $0xb8] sm:$0xff]
      %v7284 = vld [vmem:[#allocation3 + $0x100] sm:$0xff]
      %v7285 = vld [vmem:[#allocation3 + $0x108] sm:$0xff]
      %v7286 = vld [vmem:[#allocation3 + $0x110] sm:$0xff]
      %v7287 = vld [vmem:[#allocation3 + $0x118] sm:$0xff]
      %v7288 = vld [vmem:[#allocation3 + $0x120] sm:$0xff]
      %v7289 = vld [vmem:[#allocation3 + $0x128] sm:$0xff]
      %v7290 = vld [vmem:[#allocation3 + $0x130] sm:$0xff]
      %v7291 = vld [vmem:[#allocation3 + $0x138] sm:$0xff]
      %v7292 = vld [vmem:[#allocation3 + $0x140] sm:$0xff]
      %v7293 = vld [vmem:[#allocation3 + $0x148] sm:$0xff]
      %v7294 = vld [vmem:[#allocation3 + $0x150] sm:$0xff]
      %v7295 = vld [vmem:[#allocation3 + $0x158] sm:$0xff]
      %v7296 = vld [vmem:[#allocation3 + $0x160] sm:$0xff]
      %v7297 = vld [vmem:[#allocation3 + $0x168] sm:$0xff]
      %v7298 = vld [vmem:[#allocation3 + $0x170] sm:$0xff]
      %v7299 = vld [vmem:[#allocation3 + $0x178] sm:$0xff]
      %v7300 = vpack.c.bf16 %v7269, %v7268
      %v7301 = vpack.c.bf16 %v7271, %v7270
      %v7302 = vpack.c.bf16 %v7273, %v7272
      %v7303 = vpack.c.bf16 %v7275, %v7274
      %v7304 = vpack.c.bf16 %v7277, %v7276
      %v7305 = vpack.c.bf16 %v7279, %v7278
      %v7306 = vpack.c.bf16 %v7281, %v7280
      %v7307 = vpack.c.bf16 %v7283, %v7282
      %v7308 = vpack.c.bf16 %v7285, %v7284
      %v7309 = vpack.c.bf16 %v7287, %v7286
      %v7310 = vpack.c.bf16 %v7289, %v7288
      %v7311 = vpack.c.bf16 %v7291, %v7290
      %v7312 = vpack.c.bf16 %v7293, %v7292
      %v7313 = vpack.c.bf16 %v7295, %v7294
      %v7314 = vpack.c.bf16 %v7297, %v7296
      %v7315 = vpack.c.bf16 %v7299, %v7298
      %v7316 = vld [vmem:[%s12 + $0x200] sm:$0xf]
      %v7317 = vld [vmem:[%s12 + $0x204] sm:$0xf]
      %v7318 = vld [vmem:[%s12 + $0x208] sm:$0xf]
      %v7319 = vld [vmem:[%s12 + $0x20c] sm:$0xf]
      %v7320 = vld [vmem:[%s12 + $0x210] sm:$0xf]
      %v7321 = vld [vmem:[%s12 + $0x214] sm:$0xf]
      %v7322 = vld [vmem:[%s12 + $0x218] sm:$0xf]
      %v7323 = vld [vmem:[%s12 + $0x21c] sm:$0xf]
      %v7324 = vld [vmem:[%s12 + $0x220] sm:$0xf]
      %v7325 = vld [vmem:[%s12 + $0x224] sm:$0xf]
      %v7326 = vld [vmem:[%s12 + $0x228] sm:$0xf]
      %v7327 = vld [vmem:[%s12 + $0x22c] sm:$0xf]
      %v7328 = vld [vmem:[%s12 + $0x230] sm:$0xf]
      %v7329 = vld [vmem:[%s12 + $0x234] sm:$0xf]
      %v7330 = vld [vmem:[%s12 + $0x238] sm:$0xf]
      %v7331 = vld [vmem:[%s12 + $0x23c] sm:$0xf]
      %v7348 = vunpack.c.l.b16 %v7316
      %v7349 = vunpack.c.l.b16 %v7317
      %v7350 = vunpack.c.l.b16 %v7318
      %v7351 = vunpack.c.l.b16 %v7319
      %v7352 = vunpack.c.l.b16 %v7320
      %v7353 = vunpack.c.l.b16 %v7321
      %v7354 = vunpack.c.l.b16 %v7322
      %v7355 = vunpack.c.l.b16 %v7323
      %v7356 = vunpack.c.l.b16 %v7324
      %v7357 = vunpack.c.l.b16 %v7325
      %v7358 = vunpack.c.l.b16 %v7326
      %v7359 = vunpack.c.l.b16 %v7327
      %v7360 = vunpack.c.l.b16 %v7328
      %v7361 = vunpack.c.l.b16 %v7329
      %v7362 = vunpack.c.l.b16 %v7330
      %v7363 = vunpack.c.l.b16 %v7331
      %v7364 = vpack.c.b16 %v7349, %v7348
      %v7365 = vpack.c.b16 %v7351, %v7350
      %v7366 = vpack.c.b16 %v7353, %v7352
      %v7367 = vpack.c.b16 %v7355, %v7354
      %v7368 = vpack.c.b16 %v7357, %v7356
      %v7369 = vpack.c.b16 %v7359, %v7358
      %v7370 = vpack.c.b16 %v7361, %v7360
      %v7371 = vpack.c.b16 %v7363, %v7362
      %7380 = vmatpush.bf16.msra.mxu0 %v7371
      %7381 = vmatpush.bf16.msra.mxu0 %v7370
      %7382 = vmatpush.bf16.msra.mxu0 %v7369
      %7383 = vmatpush.bf16.msra.mxu0 %v7368
      %7384 = vmatpush.bf16.msra.mxu0 %v7367
      %7385 = vmatpush.bf16.msra.mxu0 %v7366
      %7386 = vmatpush.bf16.msra.mxu0 %v7365
      %7387 = vmatpush.bf16.msra.mxu0 %v7364
      %7388 = vmatmul.bf16.gmra.mxu0 %v7300
      %v7389 = vpop.f32.mrf.mxu0
      %v7390 = vadd.f32 0.0, %v7389
      %v7391 = vpop.f32.mrf.mxu0
      %v7392 = vadd.f32 0.0, %v7391
      %7393 = vmatmul.bf16.gmra.mxu0 %v7301
      %v7394 = vpop.f32.mrf.mxu0
      %v7395 = vadd.f32 0.0, %v7394
      %v7396 = vpop.f32.mrf.mxu0
      %v7397 = vadd.f32 0.0, %v7396
      %7398 = vmatmul.bf16.gmra.mxu0 %v7302
      %v7399 = vpop.f32.mrf.mxu0
      %v7400 = vadd.f32 0.0, %v7399
      %v7401 = vpop.f32.mrf.mxu0
      %v7402 = vadd.f32 0.0, %v7401
      %7403 = vmatmul.bf16.gmra.mxu0 %v7303
      %v7404 = vpop.f32.mrf.mxu0
      %v7405 = vadd.f32 0.0, %v7404
      %v7406 = vpop.f32.mrf.mxu0
      %v7407 = vadd.f32 0.0, %v7406
      %7408 = vmatmul.bf16.gmra.mxu0 %v7304
      %v7409 = vpop.f32.mrf.mxu0
      %v7410 = vadd.f32 0.0, %v7409
      %v7411 = vpop.f32.mrf.mxu0
      %v7412 = vadd.f32 0.0, %v7411
      %7413 = vmatmul.bf16.gmra.mxu0 %v7305
      %v7414 = vpop.f32.mrf.mxu0
      %v7415 = vadd.f32 0.0, %v7414
      %v7416 = vpop.f32.mrf.mxu0
      %v7417 = vadd.f32 0.0, %v7416
      %7418 = vmatmul.bf16.gmra.mxu0 %v7306
      %v7419 = vpop.f32.mrf.mxu0
      %v7420 = vadd.f32 0.0, %v7419
      %v7421 = vpop.f32.mrf.mxu0
      %v7422 = vadd.f32 0.0, %v7421
      %7423 = vmatmul.bf16.gmra.mxu0 %v7307
      %v7424 = vpop.f32.mrf.mxu0
      %v7425 = vadd.f32 0.0, %v7424
      %v7426 = vpop.f32.mrf.mxu0
      %v7427 = vadd.f32 0.0, %v7426
      %7428 = vmatmul.bf16.gmra.mxu0 %v7308
      %v7429 = vpop.f32.mrf.mxu0
      %v7430 = vadd.f32 0.0, %v7429
      %v7431 = vpop.f32.mrf.mxu0
      %v7432 = vadd.f32 0.0, %v7431
      %7433 = vmatmul.bf16.gmra.mxu0 %v7309
      %v7434 = vpop.f32.mrf.mxu0
      %v7435 = vadd.f32 0.0, %v7434
      %v7436 = vpop.f32.mrf.mxu0
      %v7437 = vadd.f32 0.0, %v7436
      %7438 = vmatmul.bf16.gmra.mxu0 %v7310
      %v7439 = vpop.f32.mrf.mxu0
      %v7440 = vadd.f32 0.0, %v7439
      %v7441 = vpop.f32.mrf.mxu0
      %v7442 = vadd.f32 0.0, %v7441
      %7443 = vmatmul.bf16.gmra.mxu0 %v7311
      %v7444 = vpop.f32.mrf.mxu0
      %v7445 = vadd.f32 0.0, %v7444
      %v7446 = vpop.f32.mrf.mxu0
      %v7447 = vadd.f32 0.0, %v7446
      %7448 = vmatmul.bf16.gmra.mxu0 %v7312
      %v7449 = vpop.f32.mrf.mxu0
      %v7450 = vadd.f32 0.0, %v7449
      %v7451 = vpop.f32.mrf.mxu0
      %v7452 = vadd.f32 0.0, %v7451
      %7453 = vmatmul.bf16.gmra.mxu0 %v7313
      %v7454 = vpop.f32.mrf.mxu0
      %v7455 = vadd.f32 0.0, %v7454
      %v7456 = vpop.f32.mrf.mxu0
      %v7457 = vadd.f32 0.0, %v7456
      %7458 = vmatmul.bf16.gmra.mxu0 %v7314
      %v7459 = vpop.f32.mrf.mxu0
      %v7460 = vadd.f32 0.0, %v7459
      %v7461 = vpop.f32.mrf.mxu0
      %v7462 = vadd.f32 0.0, %v7461
      %7463 = vmatmul.bf16.gmra.mxu0 %v7315
      %v7464 = vpop.f32.mrf.mxu0
      %v7465 = vadd.f32 0.0, %v7464
      %v7466 = vpop.f32.mrf.mxu0
      %v7467 = vadd.f32 0.0, %v7466
      %7468 = vdwg.mxu0
      %v7469 = vadd.f32 %v7236, %v7390
      %v7470 = vadd.f32 %v7237, %v7392
      %v7471 = vadd.f32 %v7238, %v7395
      %v7472 = vadd.f32 %v7239, %v7397
      %v7473 = vadd.f32 %v7240, %v7400
      %v7474 = vadd.f32 %v7241, %v7402
      %v7475 = vadd.f32 %v7242, %v7405
      %v7476 = vadd.f32 %v7243, %v7407
      %v7477 = vadd.f32 %v7244, %v7410
      %v7478 = vadd.f32 %v7245, %v7412
      %v7479 = vadd.f32 %v7246, %v7415
      %v7480 = vadd.f32 %v7247, %v7417
      %v7481 = vadd.f32 %v7248, %v7420
      %v7482 = vadd.f32 %v7249, %v7422
      %v7483 = vadd.f32 %v7250, %v7425
      %v7484 = vadd.f32 %v7251, %v7427
      %v7485 = vadd.f32 %v7252, %v7430
      %v7486 = vadd.f32 %v7253, %v7432
      %v7487 = vadd.f32 %v7254, %v7435
      %v7488 = vadd.f32 %v7255, %v7437
      %v7489 = vadd.f32 %v7256, %v7440
      %v7490 = vadd.f32 %v7257, %v7442
      %v7491 = vadd.f32 %v7258, %v7445
      %v7492 = vadd.f32 %v7259, %v7447
      %v7493 = vadd.f32 %v7260, %v7450
      %v7494 = vadd.f32 %v7261, %v7452
      %v7495 = vadd.f32 %v7262, %v7455
      %v7496 = vadd.f32 %v7263, %v7457
      %v7497 = vadd.f32 %v7264, %v7460
      %v7498 = vadd.f32 %v7265, %v7462
      %v7499 = vadd.f32 %v7266, %v7465
      %v7500 = vadd.f32 %v7267, %v7467
      %v7501 = vld [vmem:[%s13] sm:$0x1]
      %v7503 = vperm.slane %v7501, 0
      %v7505 = vadd.f32 %v7469, %v7503
      %v7506 = vadd.f32 %v7470, %v7503
      %v7507 = vadd.f32 %v7471, %v7503
      %v7508 = vadd.f32 %v7472, %v7503
      %v7509 = vadd.f32 %v7473, %v7503
      %v7510 = vadd.f32 %v7474, %v7503
      %v7511 = vadd.f32 %v7475, %v7503
      %v7512 = vadd.f32 %v7476, %v7503
      %v7513 = vadd.f32 %v7477, %v7503
      %v7514 = vadd.f32 %v7478, %v7503
      %v7515 = vadd.f32 %v7479, %v7503
      %v7516 = vadd.f32 %v7480, %v7503
      %v7517 = vadd.f32 %v7481, %v7503
      %v7518 = vadd.f32 %v7482, %v7503
      %v7519 = vadd.f32 %v7483, %v7503
      %v7520 = vadd.f32 %v7484, %v7503
      %v7521 = vadd.f32 %v7485, %v7503
      %v7522 = vadd.f32 %v7486, %v7503
      %v7523 = vadd.f32 %v7487, %v7503
      %v7524 = vadd.f32 %v7488, %v7503
      %v7525 = vadd.f32 %v7489, %v7503
      %v7526 = vadd.f32 %v7490, %v7503
      %v7527 = vadd.f32 %v7491, %v7503
      %v7528 = vadd.f32 %v7492, %v7503
      %v7529 = vadd.f32 %v7493, %v7503
      %v7530 = vadd.f32 %v7494, %v7503
      %v7531 = vadd.f32 %v7495, %v7503
      %v7532 = vadd.f32 %v7496, %v7503
      %v7533 = vadd.f32 %v7497, %v7503
      %v7534 = vadd.f32 %v7498, %v7503
      %v7535 = vadd.f32 %v7499, %v7503
      %v7536 = vadd.f32 %v7500, %v7503
      %v7537 = vadd.f32 %v7505, %v4313
      %v7538 = vadd.f32 %v7506, %v4315
      %v7539 = vadd.f32 %v7507, %v4318
      %v7540 = vadd.f32 %v7508, %v4320
      %v7541 = vadd.f32 %v7509, %v4323
      %v7542 = vadd.f32 %v7510, %v4325
      %v7543 = vadd.f32 %v7511, %v4328
      %v7544 = vadd.f32 %v7512, %v4330
      %v7545 = vadd.f32 %v7513, %v4333
      %v7546 = vadd.f32 %v7514, %v4335
      %v7547 = vadd.f32 %v7515, %v4338
      %v7548 = vadd.f32 %v7516, %v4340
      %v7549 = vadd.f32 %v7517, %v4343
      %v7550 = vadd.f32 %v7518, %v4345
      %v7551 = vadd.f32 %v7519, %v4348
      %v7552 = vadd.f32 %v7520, %v4350
      %v7553 = vadd.f32 %v7521, %v4353
      %v7554 = vadd.f32 %v7522, %v4355
      %v7555 = vadd.f32 %v7523, %v4358
      %v7556 = vadd.f32 %v7524, %v4360
      %v7557 = vadd.f32 %v7525, %v4363
      %v7558 = vadd.f32 %v7526, %v4365
      %v7559 = vadd.f32 %v7527, %v4368
      %v7560 = vadd.f32 %v7528, %v4370
      %v7561 = vadd.f32 %v7529, %v4373
      %v7562 = vadd.f32 %v7530, %v4375
      %v7563 = vadd.f32 %v7531, %v4378
      %v7564 = vadd.f32 %v7532, %v4380
      %v7565 = vadd.f32 %v7533, %v4383
      %v7566 = vadd.f32 %v7534, %v4385
      %v7567 = vadd.f32 %v7535, %v4388
      %v7568 = vadd.f32 %v7536, %v4390
      %v7569 = vmax.f32 %v7537, 0.0
      %v7570 = vmax.f32 %v7538, 0.0
      %v7571 = vmax.f32 %v7539, 0.0
      %v7572 = vmax.f32 %v7540, 0.0
      %v7573 = vmax.f32 %v7541, 0.0
      %v7574 = vmax.f32 %v7542, 0.0
      %v7575 = vmax.f32 %v7543, 0.0
      %v7576 = vmax.f32 %v7544, 0.0
      %v7577 = vmax.f32 %v7545, 0.0
      %v7578 = vmax.f32 %v7546, 0.0
      %v7579 = vmax.f32 %v7547, 0.0
      %v7580 = vmax.f32 %v7548, 0.0
      %v7581 = vmax.f32 %v7549, 0.0
      %v7582 = vmax.f32 %v7550, 0.0
      %v7583 = vmax.f32 %v7551, 0.0
      %v7584 = vmax.f32 %v7552, 0.0
      %v7585 = vmax.f32 %v7553, 0.0
      %v7586 = vmax.f32 %v7554, 0.0
      %v7587 = vmax.f32 %v7555, 0.0
      %v7588 = vmax.f32 %v7556, 0.0
      %v7589 = vmax.f32 %v7557, 0.0
      %v7590 = vmax.f32 %v7558, 0.0
      %v7591 = vmax.f32 %v7559, 0.0
      %v7592 = vmax.f32 %v7560, 0.0
      %v7593 = vmax.f32 %v7561, 0.0
      %v7594 = vmax.f32 %v7562, 0.0
      %v7595 = vmax.f32 %v7563, 0.0
      %v7596 = vmax.f32 %v7564, 0.0
      %v7597 = vmax.f32 %v7565, 0.0
      %v7598 = vmax.f32 %v7566, 0.0
      %v7599 = vmax.f32 %v7567, 0.0
      %v7600 = vmax.f32 %v7568, 0.0
      %v7601 = vpack.c.bf16 %v7570, %v7569
      %v7602 = vpack.c.bf16 %v7572, %v7571
      %v7603 = vpack.c.bf16 %v7574, %v7573
      %v7604 = vpack.c.bf16 %v7576, %v7575
      %v7605 = vpack.c.bf16 %v7578, %v7577
      %v7606 = vpack.c.bf16 %v7580, %v7579
      %v7607 = vpack.c.bf16 %v7582, %v7581
      %v7608 = vpack.c.bf16 %v7584, %v7583
      %v7609 = vpack.c.bf16 %v7586, %v7585
      %v7610 = vpack.c.bf16 %v7588, %v7587
      %v7611 = vpack.c.bf16 %v7590, %v7589
      %v7612 = vpack.c.bf16 %v7592, %v7591
      %v7613 = vpack.c.bf16 %v7594, %v7593
      %v7614 = vpack.c.bf16 %v7596, %v7595
      %v7615 = vpack.c.bf16 %v7598, %v7597
      %v7616 = vpack.c.bf16 %v7600, %v7599
      %v7617 = vld [vmem:[%s16] sm:$0xff]
      %v7618 = vld [vmem:[%s16 + $0x8] sm:$0xf]
      %v7619 = vld [vmem:[%s16 + $0xc] sm:$0xff]
      %v7620 = vld [vmem:[%s16 + $0x14] sm:$0xf]
      %v7621 = vld [vmem:[%s16 + $0x18] sm:$0xff]
      %v7622 = vld [vmem:[%s16 + $0x20] sm:$0xf]
      %v7623 = vld [vmem:[%s16 + $0x24] sm:$0xff]
      %v7624 = vld [vmem:[%s16 + $0x2c] sm:$0xf]
      %v7625 = vld [vmem:[%s16 + $0x30] sm:$0xff]
      %v7626 = vld [vmem:[%s16 + $0x38] sm:$0xf]
      %v7627 = vld [vmem:[%s16 + $0x3c] sm:$0xff]
      %v7628 = vld [vmem:[%s16 + $0x44] sm:$0xf]
      %v7629 = vld [vmem:[%s16 + $0x48] sm:$0xff]
      %v7630 = vld [vmem:[%s16 + $0x50] sm:$0xf]
      %v7631 = vld [vmem:[%s16 + $0x54] sm:$0xff]
      %v7632 = vld [vmem:[%s16 + $0x5c] sm:$0xf]
      %v7633 = vld [vmem:[%s16 + $0x60] sm:$0xff]
      %v7634 = vld [vmem:[%s16 + $0x68] sm:$0xf]
      %v7635 = vld [vmem:[%s16 + $0x6c] sm:$0xff]
      %v7636 = vld [vmem:[%s16 + $0x74] sm:$0xf]
      %v7637 = vld [vmem:[%s16 + $0x78] sm:$0xff]
      %v7638 = vld [vmem:[%s16 + $0x80] sm:$0xf]
      %v7639 = vld [vmem:[%s16 + $0x84] sm:$0xff]
      %v7640 = vld [vmem:[%s16 + $0x8c] sm:$0xf]
      %v7641 = vld [vmem:[%s16 + $0x90] sm:$0xff]
      %v7642 = vld [vmem:[%s16 + $0x98] sm:$0xf]
      %v7643 = vld [vmem:[%s16 + $0x9c] sm:$0xff]
      %v7644 = vld [vmem:[%s16 + $0xa4] sm:$0xf]
      %v7645 = vld [vmem:[%s16 + $0xa8] sm:$0xff]
      %v7646 = vld [vmem:[%s16 + $0xb0] sm:$0xf]
      %v7647 = vld [vmem:[%s16 + $0xb4] sm:$0xff]
      %v7648 = vld [vmem:[%s16 + $0xbc] sm:$0xf]
      %v7681 = vunpack.c.l.b16 %v7617
      %v7682 = vunpack.c.h.b16 %v7617
      %v7683 = vunpack.c.l.b16 %v7618
      %v7684 = vunpack.c.l.b16 %v7619
      %v7685 = vunpack.c.h.b16 %v7619
      %v7686 = vunpack.c.l.b16 %v7620
      %v7687 = vunpack.c.l.b16 %v7621
      %v7688 = vunpack.c.h.b16 %v7621
      %v7689 = vunpack.c.l.b16 %v7622
      %v7690 = vunpack.c.l.b16 %v7623
      %v7691 = vunpack.c.h.b16 %v7623
      %v7692 = vunpack.c.l.b16 %v7624
      %v7693 = vunpack.c.l.b16 %v7625
      %v7694 = vunpack.c.h.b16 %v7625
      %v7695 = vunpack.c.l.b16 %v7626
      %v7696 = vunpack.c.l.b16 %v7627
      %v7697 = vunpack.c.h.b16 %v7627
      %v7698 = vunpack.c.l.b16 %v7628
      %v7699 = vunpack.c.l.b16 %v7629
      %v7700 = vunpack.c.h.b16 %v7629
      %v7701 = vunpack.c.l.b16 %v7630
      %v7702 = vunpack.c.l.b16 %v7631
      %v7703 = vunpack.c.h.b16 %v7631
      %v7704 = vunpack.c.l.b16 %v7632
      %v7705 = vunpack.c.l.b16 %v7633
      %v7706 = vunpack.c.h.b16 %v7633
      %v7707 = vunpack.c.l.b16 %v7634
      %v7708 = vunpack.c.l.b16 %v7635
      %v7709 = vunpack.c.h.b16 %v7635
      %v7710 = vunpack.c.l.b16 %v7636
      %v7711 = vunpack.c.l.b16 %v7637
      %v7712 = vunpack.c.h.b16 %v7637
      %v7713 = vunpack.c.l.b16 %v7638
      %v7714 = vunpack.c.l.b16 %v7639
      %v7715 = vunpack.c.h.b16 %v7639
      %v7716 = vunpack.c.l.b16 %v7640
      %v7717 = vunpack.c.l.b16 %v7641
      %v7718 = vunpack.c.h.b16 %v7641
      %v7719 = vunpack.c.l.b16 %v7642
      %v7720 = vunpack.c.l.b16 %v7643
      %v7721 = vunpack.c.h.b16 %v7643
      %v7722 = vunpack.c.l.b16 %v7644
      %v7723 = vunpack.c.l.b16 %v7645
      %v7724 = vunpack.c.h.b16 %v7645
      %v7725 = vunpack.c.l.b16 %v7646
      %v7726 = vunpack.c.l.b16 %v7647
      %v7727 = vunpack.c.h.b16 %v7647
      %v7728 = vunpack.c.l.b16 %v7648
      %v7729 = vpack.c.b16 %v7684, %v7681
      %v7730 = vpack.c.b16 %v7685, %v7682
      %v7731 = vpack.c.b16 %v7686, %v7683
      %v7732 = vpack.c.b16 %v7690, %v7687
      %v7733 = vpack.c.b16 %v7691, %v7688
      %v7734 = vpack.c.b16 %v7692, %v7689
      %v7735 = vpack.c.b16 %v7696, %v7693
      %v7736 = vpack.c.b16 %v7697, %v7694
      %v7737 = vpack.c.b16 %v7698, %v7695
      %v7738 = vpack.c.b16 %v7702, %v7699
      %v7739 = vpack.c.b16 %v7703, %v7700
      %v7740 = vpack.c.b16 %v7704, %v7701
      %v7741 = vpack.c.b16 %v7708, %v7705
      %v7742 = vpack.c.b16 %v7709, %v7706
      %v7743 = vpack.c.b16 %v7710, %v7707
      %v7744 = vpack.c.b16 %v7714, %v7711
      %v7745 = vpack.c.b16 %v7715, %v7712
      %v7746 = vpack.c.b16 %v7716, %v7713
      %v7747 = vpack.c.b16 %v7720, %v7717
      %v7748 = vpack.c.b16 %v7721, %v7718
      %v7749 = vpack.c.b16 %v7722, %v7719
      %v7750 = vpack.c.b16 %v7726, %v7723
      %v7751 = vpack.c.b16 %v7727, %v7724
      %v7752 = vpack.c.b16 %v7728, %v7725
      %7777 = vmatpush.bf16.msra.mxu0 %v7750
      %7778 = vmatpush.bf16.msra.mxu0 %v7747
      %7779 = vmatpush.bf16.msra.mxu0 %v7744
      %7780 = vmatpush.bf16.msra.mxu0 %v7741
      %7781 = vmatpush.bf16.msra.mxu0 %v7738
      %7782 = vmatpush.bf16.msra.mxu0 %v7735
      %7783 = vmatpush.bf16.msra.mxu0 %v7732
      %7784 = vmatpush.bf16.msra.mxu0 %v7729
      %7785 = vmatmul.bf16.gmra.mxu0 %v7601
      %v7786 = vpop.f32.mrf.mxu0
      %v7787 = vadd.f32 0.0, %v7786
      %v7788 = vpop.f32.mrf.mxu0
      %v7789 = vadd.f32 0.0, %v7788
      %7790 = vmatmul.bf16.gmra.mxu0 %v7602
      %v7791 = vpop.f32.mrf.mxu0
      %v7792 = vadd.f32 0.0, %v7791
      %v7793 = vpop.f32.mrf.mxu0
      %v7794 = vadd.f32 0.0, %v7793
      %7795 = vmatmul.bf16.gmra.mxu0 %v7603
      %v7796 = vpop.f32.mrf.mxu0
      %v7797 = vadd.f32 0.0, %v7796
      %v7798 = vpop.f32.mrf.mxu0
      %v7799 = vadd.f32 0.0, %v7798
      %7800 = vmatmul.bf16.gmra.mxu0 %v7604
      %v7801 = vpop.f32.mrf.mxu0
      %v7802 = vadd.f32 0.0, %v7801
      %v7803 = vpop.f32.mrf.mxu0
      %v7804 = vadd.f32 0.0, %v7803
      %7805 = vmatmul.bf16.gmra.mxu0 %v7605
      %v7806 = vpop.f32.mrf.mxu0
      %v7807 = vadd.f32 0.0, %v7806
      %v7808 = vpop.f32.mrf.mxu0
      %v7809 = vadd.f32 0.0, %v7808
      %7810 = vmatmul.bf16.gmra.mxu0 %v7606
      %v7811 = vpop.f32.mrf.mxu0
      %v7812 = vadd.f32 0.0, %v7811
      %v7813 = vpop.f32.mrf.mxu0
      %v7814 = vadd.f32 0.0, %v7813
      %7815 = vmatmul.bf16.gmra.mxu0 %v7607
      %v7816 = vpop.f32.mrf.mxu0
      %v7817 = vadd.f32 0.0, %v7816
      %v7818 = vpop.f32.mrf.mxu0
      %v7819 = vadd.f32 0.0, %v7818
      %7820 = vmatmul.bf16.gmra.mxu0 %v7608
      %v7821 = vpop.f32.mrf.mxu0
      %v7822 = vadd.f32 0.0, %v7821
      %v7823 = vpop.f32.mrf.mxu0
      %v7824 = vadd.f32 0.0, %v7823
      %7825 = vmatmul.bf16.gmra.mxu0 %v7609
      %v7826 = vpop.f32.mrf.mxu0
      %v7827 = vadd.f32 0.0, %v7826
      %v7828 = vpop.f32.mrf.mxu0
      %v7829 = vadd.f32 0.0, %v7828
      %7830 = vmatmul.bf16.gmra.mxu0 %v7610
      %v7831 = vpop.f32.mrf.mxu0
      %v7832 = vadd.f32 0.0, %v7831
      %v7833 = vpop.f32.mrf.mxu0
      %v7834 = vadd.f32 0.0, %v7833
      %7835 = vmatmul.bf16.gmra.mxu0 %v7611
      %v7836 = vpop.f32.mrf.mxu0
      %v7837 = vadd.f32 0.0, %v7836
      %v7838 = vpop.f32.mrf.mxu0
      %v7839 = vadd.f32 0.0, %v7838
      %7840 = vmatmul.bf16.gmra.mxu0 %v7612
      %v7841 = vpop.f32.mrf.mxu0
      %v7842 = vadd.f32 0.0, %v7841
      %v7843 = vpop.f32.mrf.mxu0
      %v7844 = vadd.f32 0.0, %v7843
      %7845 = vmatmul.bf16.gmra.mxu0 %v7613
      %v7846 = vpop.f32.mrf.mxu0
      %v7847 = vadd.f32 0.0, %v7846
      %v7848 = vpop.f32.mrf.mxu0
      %v7849 = vadd.f32 0.0, %v7848
      %7850 = vmatmul.bf16.gmra.mxu0 %v7614
      %v7851 = vpop.f32.mrf.mxu0
      %v7852 = vadd.f32 0.0, %v7851
      %v7853 = vpop.f32.mrf.mxu0
      %v7854 = vadd.f32 0.0, %v7853
      %7855 = vmatmul.bf16.gmra.mxu0 %v7615
      %v7856 = vpop.f32.mrf.mxu0
      %v7857 = vadd.f32 0.0, %v7856
      %v7858 = vpop.f32.mrf.mxu0
      %v7859 = vadd.f32 0.0, %v7858
      %7860 = vmatmul.bf16.gmra.mxu0 %v7616
      %v7861 = vpop.f32.mrf.mxu0
      %v7862 = vadd.f32 0.0, %v7861
      %v7863 = vpop.f32.mrf.mxu0
      %v7864 = vadd.f32 0.0, %v7863
      %7865 = vdwg.mxu0
      %7866 = vmatpush.bf16.msra.mxu0 %v7751
      %7867 = vmatpush.bf16.msra.mxu0 %v7748
      %7868 = vmatpush.bf16.msra.mxu0 %v7745
      %7869 = vmatpush.bf16.msra.mxu0 %v7742
      %7870 = vmatpush.bf16.msra.mxu0 %v7739
      %7871 = vmatpush.bf16.msra.mxu0 %v7736
      %7872 = vmatpush.bf16.msra.mxu0 %v7733
      %7873 = vmatpush.bf16.msra.mxu0 %v7730
      %7874 = vmatmul.bf16.gmra.mxu0 %v7601
      %v7875 = vpop.f32.mrf.mxu0
      %v7876 = vadd.f32 0.0, %v7875
      %v7877 = vpop.f32.mrf.mxu0
      %v7878 = vadd.f32 0.0, %v7877
      %7879 = vmatmul.bf16.gmra.mxu0 %v7602
      %v7880 = vpop.f32.mrf.mxu0
      %v7881 = vadd.f32 0.0, %v7880
      %v7882 = vpop.f32.mrf.mxu0
      %v7883 = vadd.f32 0.0, %v7882
      %7884 = vmatmul.bf16.gmra.mxu0 %v7603
      %v7885 = vpop.f32.mrf.mxu0
      %v7886 = vadd.f32 0.0, %v7885
      %v7887 = vpop.f32.mrf.mxu0
      %v7888 = vadd.f32 0.0, %v7887
      %7889 = vmatmul.bf16.gmra.mxu0 %v7604
      %v7890 = vpop.f32.mrf.mxu0
      %v7891 = vadd.f32 0.0, %v7890
      %v7892 = vpop.f32.mrf.mxu0
      %v7893 = vadd.f32 0.0, %v7892
      %7894 = vmatmul.bf16.gmra.mxu0 %v7605
      %v7895 = vpop.f32.mrf.mxu0
      %v7896 = vadd.f32 0.0, %v7895
      %v7897 = vpop.f32.mrf.mxu0
      %v7898 = vadd.f32 0.0, %v7897
      %7899 = vmatmul.bf16.gmra.mxu0 %v7606
      %v7900 = vpop.f32.mrf.mxu0
      %v7901 = vadd.f32 0.0, %v7900
      %v7902 = vpop.f32.mrf.mxu0
      %v7903 = vadd.f32 0.0, %v7902
      %7904 = vmatmul.bf16.gmra.mxu0 %v7607
      %v7905 = vpop.f32.mrf.mxu0
      %v7906 = vadd.f32 0.0, %v7905
      %v7907 = vpop.f32.mrf.mxu0
      %v7908 = vadd.f32 0.0, %v7907
      %7909 = vmatmul.bf16.gmra.mxu0 %v7608
      %v7910 = vpop.f32.mrf.mxu0
      %v7911 = vadd.f32 0.0, %v7910
      %v7912 = vpop.f32.mrf.mxu0
      %v7913 = vadd.f32 0.0, %v7912
      %7914 = vmatmul.bf16.gmra.mxu0 %v7609
      %v7915 = vpop.f32.mrf.mxu0
      %v7916 = vadd.f32 0.0, %v7915
      %v7917 = vpop.f32.mrf.mxu0
      %v7918 = vadd.f32 0.0, %v7917
      %7919 = vmatmul.bf16.gmra.mxu0 %v7610
      %v7920 = vpop.f32.mrf.mxu0
      %v7921 = vadd.f32 0.0, %v7920
      %v7922 = vpop.f32.mrf.mxu0
      %v7923 = vadd.f32 0.0, %v7922
      %7924 = vmatmul.bf16.gmra.mxu0 %v7611
      %v7925 = vpop.f32.mrf.mxu0
      %v7926 = vadd.f32 0.0, %v7925
      %v7927 = vpop.f32.mrf.mxu0
      %v7928 = vadd.f32 0.0, %v7927
      %7929 = vmatmul.bf16.gmra.mxu0 %v7612
      %v7930 = vpop.f32.mrf.mxu0
      %v7931 = vadd.f32 0.0, %v7930
      %v7932 = vpop.f32.mrf.mxu0
      %v7933 = vadd.f32 0.0, %v7932
      %7934 = vmatmul.bf16.gmra.mxu0 %v7613
      %v7935 = vpop.f32.mrf.mxu0
      %v7936 = vadd.f32 0.0, %v7935
      %v7937 = vpop.f32.mrf.mxu0
      %v7938 = vadd.f32 0.0, %v7937
      %7939 = vmatmul.bf16.gmra.mxu0 %v7614
      %v7940 = vpop.f32.mrf.mxu0
      %v7941 = vadd.f32 0.0, %v7940
      %v7942 = vpop.f32.mrf.mxu0
      %v7943 = vadd.f32 0.0, %v7942
      %7944 = vmatmul.bf16.gmra.mxu0 %v7615
      %v7945 = vpop.f32.mrf.mxu0
      %v7946 = vadd.f32 0.0, %v7945
      %v7947 = vpop.f32.mrf.mxu0
      %v7948 = vadd.f32 0.0, %v7947
      %7949 = vmatmul.bf16.gmra.mxu0 %v7616
      %v7950 = vpop.f32.mrf.mxu0
      %v7951 = vadd.f32 0.0, %v7950
      %v7952 = vpop.f32.mrf.mxu0
      %v7953 = vadd.f32 0.0, %v7952
      %7954 = vdwg.mxu0
      %7955 = vmatpush.bf16.msra.mxu0 %v7752
      %7956 = vmatpush.bf16.msra.mxu0 %v7749
      %7957 = vmatpush.bf16.msra.mxu0 %v7746
      %7958 = vmatpush.bf16.msra.mxu0 %v7743
      %7959 = vmatpush.bf16.msra.mxu0 %v7740
      %7960 = vmatpush.bf16.msra.mxu0 %v7737
      %7961 = vmatpush.bf16.msra.mxu0 %v7734
      %7962 = vmatpush.bf16.msra.mxu0 %v7731
      %7963 = vmatmul.bf16.gmra.mxu0 %v7601
      %v7964 = vpop.f32.mrf.mxu0
      %v7965 = vadd.f32 0.0, %v7964
      %v7966 = vpop.f32.mrf.mxu0
      %v7967 = vadd.f32 0.0, %v7966
      %7968 = vmatmul.bf16.gmra.mxu0 %v7602
      %v7969 = vpop.f32.mrf.mxu0
      %v7970 = vadd.f32 0.0, %v7969
      %v7971 = vpop.f32.mrf.mxu0
      %v7972 = vadd.f32 0.0, %v7971
      %7973 = vmatmul.bf16.gmra.mxu0 %v7603
      %v7974 = vpop.f32.mrf.mxu0
      %v7975 = vadd.f32 0.0, %v7974
      %v7976 = vpop.f32.mrf.mxu0
      %v7977 = vadd.f32 0.0, %v7976
      %7978 = vmatmul.bf16.gmra.mxu0 %v7604
      %v7979 = vpop.f32.mrf.mxu0
      %v7980 = vadd.f32 0.0, %v7979
      %v7981 = vpop.f32.mrf.mxu0
      %v7982 = vadd.f32 0.0, %v7981
      %7983 = vmatmul.bf16.gmra.mxu0 %v7605
      %v7984 = vpop.f32.mrf.mxu0
      %v7985 = vadd.f32 0.0, %v7984
      %v7986 = vpop.f32.mrf.mxu0
      %v7987 = vadd.f32 0.0, %v7986
      %7988 = vmatmul.bf16.gmra.mxu0 %v7606
      %v7989 = vpop.f32.mrf.mxu0
      %v7990 = vadd.f32 0.0, %v7989
      %v7991 = vpop.f32.mrf.mxu0
      %v7992 = vadd.f32 0.0, %v7991
      %7993 = vmatmul.bf16.gmra.mxu0 %v7607
      %v7994 = vpop.f32.mrf.mxu0
      %v7995 = vadd.f32 0.0, %v7994
      %v7996 = vpop.f32.mrf.mxu0
      %v7997 = vadd.f32 0.0, %v7996
      %7998 = vmatmul.bf16.gmra.mxu0 %v7608
      %v7999 = vpop.f32.mrf.mxu0
      %v8000 = vadd.f32 0.0, %v7999
      %v8001 = vpop.f32.mrf.mxu0
      %v8002 = vadd.f32 0.0, %v8001
      %8003 = vmatmul.bf16.gmra.mxu0 %v7609
      %v8004 = vpop.f32.mrf.mxu0
      %v8005 = vadd.f32 0.0, %v8004
      %v8006 = vpop.f32.mrf.mxu0
      %v8007 = vadd.f32 0.0, %v8006
      %8008 = vmatmul.bf16.gmra.mxu0 %v7610
      %v8009 = vpop.f32.mrf.mxu0
      %v8010 = vadd.f32 0.0, %v8009
      %v8011 = vpop.f32.mrf.mxu0
      %v8012 = vadd.f32 0.0, %v8011
      %8013 = vmatmul.bf16.gmra.mxu0 %v7611
      %v8014 = vpop.f32.mrf.mxu0
      %v8015 = vadd.f32 0.0, %v8014
      %v8016 = vpop.f32.mrf.mxu0
      %v8017 = vadd.f32 0.0, %v8016
      %8018 = vmatmul.bf16.gmra.mxu0 %v7612
      %v8019 = vpop.f32.mrf.mxu0
      %v8020 = vadd.f32 0.0, %v8019
      %v8021 = vpop.f32.mrf.mxu0
      %v8022 = vadd.f32 0.0, %v8021
      %8023 = vmatmul.bf16.gmra.mxu0 %v7613
      %v8024 = vpop.f32.mrf.mxu0
      %v8025 = vadd.f32 0.0, %v8024
      %v8026 = vpop.f32.mrf.mxu0
      %v8027 = vadd.f32 0.0, %v8026
      %8028 = vmatmul.bf16.gmra.mxu0 %v7614
      %v8029 = vpop.f32.mrf.mxu0
      %v8030 = vadd.f32 0.0, %v8029
      %v8031 = vpop.f32.mrf.mxu0
      %v8032 = vadd.f32 0.0, %v8031
      %8033 = vmatmul.bf16.gmra.mxu0 %v7615
      %v8034 = vpop.f32.mrf.mxu0
      %v8035 = vadd.f32 0.0, %v8034
      %v8036 = vpop.f32.mrf.mxu0
      %v8037 = vadd.f32 0.0, %v8036
      %8038 = vmatmul.bf16.gmra.mxu0 %v7616
      %v8039 = vpop.f32.mrf.mxu0
      %v8040 = vadd.f32 0.0, %v8039
      %v8041 = vpop.f32.mrf.mxu0
      %v8042 = vadd.f32 0.0, %v8041
      %8043 = vdwg.mxu0
      %v8044 = vpack.c.bf16 %v7876, %v7787
      %v8045 = vpack.c.bf16 %v7965, %v7965
      %v8046 = vpack.c.bf16 %v7878, %v7789
      %v8047 = vpack.c.bf16 %v7967, %v7967
      %v8048 = vpack.c.bf16 %v7881, %v7792
      %v8049 = vpack.c.bf16 %v7970, %v7970
      %v8050 = vpack.c.bf16 %v7883, %v7794
      %v8051 = vpack.c.bf16 %v7972, %v7972
      %v8052 = vpack.c.bf16 %v7886, %v7797
      %v8053 = vpack.c.bf16 %v7975, %v7975
      %v8054 = vpack.c.bf16 %v7888, %v7799
      %v8055 = vpack.c.bf16 %v7977, %v7977
      %v8056 = vpack.c.bf16 %v7891, %v7802
      %v8057 = vpack.c.bf16 %v7980, %v7980
      %v8058 = vpack.c.bf16 %v7893, %v7804
      %v8059 = vpack.c.bf16 %v7982, %v7982
      %v8060 = vpack.c.bf16 %v7896, %v7807
      %v8061 = vpack.c.bf16 %v7985, %v7985
      %v8062 = vpack.c.bf16 %v7898, %v7809
      %v8063 = vpack.c.bf16 %v7987, %v7987
      %v8064 = vpack.c.bf16 %v7901, %v7812
      %v8065 = vpack.c.bf16 %v7990, %v7990
      %v8066 = vpack.c.bf16 %v7903, %v7814
      %v8067 = vpack.c.bf16 %v7992, %v7992
      %v8068 = vpack.c.bf16 %v7906, %v7817
      %v8069 = vpack.c.bf16 %v7995, %v7995
      %v8070 = vpack.c.bf16 %v7908, %v7819
      %v8071 = vpack.c.bf16 %v7997, %v7997
      %v8072 = vpack.c.bf16 %v7911, %v7822
      %v8073 = vpack.c.bf16 %v8000, %v8000
      %v8074 = vpack.c.bf16 %v7913, %v7824
      %v8075 = vpack.c.bf16 %v8002, %v8002
      %v8076 = vpack.c.bf16 %v7916, %v7827
      %v8077 = vpack.c.bf16 %v8005, %v8005
      %v8078 = vpack.c.bf16 %v7918, %v7829
      %v8079 = vpack.c.bf16 %v8007, %v8007
      %v8080 = vpack.c.bf16 %v7921, %v7832
      %v8081 = vpack.c.bf16 %v8010, %v8010
      %v8082 = vpack.c.bf16 %v7923, %v7834
      %v8083 = vpack.c.bf16 %v8012, %v8012
      %v8084 = vpack.c.bf16 %v7926, %v7837
      %v8085 = vpack.c.bf16 %v8015, %v8015
      %v8086 = vpack.c.bf16 %v7928, %v7839
      %v8087 = vpack.c.bf16 %v8017, %v8017
      %v8088 = vpack.c.bf16 %v7931, %v7842
      %v8089 = vpack.c.bf16 %v8020, %v8020
      %v8090 = vpack.c.bf16 %v7933, %v7844
      %v8091 = vpack.c.bf16 %v8022, %v8022
      %v8092 = vpack.c.bf16 %v7936, %v7847
      %v8093 = vpack.c.bf16 %v8025, %v8025
      %v8094 = vpack.c.bf16 %v7938, %v7849
      %v8095 = vpack.c.bf16 %v8027, %v8027
      %v8096 = vpack.c.bf16 %v7941, %v7852
      %v8097 = vpack.c.bf16 %v8030, %v8030
      %v8098 = vpack.c.bf16 %v7943, %v7854
      %v8099 = vpack.c.bf16 %v8032, %v8032
      %v8100 = vpack.c.bf16 %v7946, %v7857
      %v8101 = vpack.c.bf16 %v8035, %v8035
      %v8102 = vpack.c.bf16 %v7948, %v7859
      %v8103 = vpack.c.bf16 %v8037, %v8037
      %v8104 = vpack.c.bf16 %v7951, %v7862
      %v8105 = vpack.c.bf16 %v8040, %v8040
      %v8106 = vpack.c.bf16 %v7953, %v7864
      %v8107 = vpack.c.bf16 %v8042, %v8042
      %v8124 = vunpack.c.h.b16 %v8044
      %v8125 = vunpack.c.h.b16 %v8046
      %v8126 = vunpack.c.h.b16 %v8048
      %v8127 = vunpack.c.h.b16 %v8050
      %v8128 = vunpack.c.h.b16 %v8052
      %v8129 = vunpack.c.h.b16 %v8054
      %v8130 = vunpack.c.h.b16 %v8056
      %v8131 = vunpack.c.h.b16 %v8058
      %v8132 = vunpack.c.h.b16 %v8060
      %v8133 = vunpack.c.h.b16 %v8062
      %v8134 = vunpack.c.h.b16 %v8064
      %v8135 = vunpack.c.h.b16 %v8066
      %v8136 = vunpack.c.h.b16 %v8068
      %v8137 = vunpack.c.h.b16 %v8070
      %v8138 = vunpack.c.h.b16 %v8072
      %v8139 = vunpack.c.h.b16 %v8074
      %v8140 = vpack.c.b16 %v8125, %v8124
      %v8141 = vpack.c.b16 %v8127, %v8126
      %v8142 = vpack.c.b16 %v8129, %v8128
      %v8143 = vpack.c.b16 %v8131, %v8130
      %v8144 = vpack.c.b16 %v8133, %v8132
      %v8145 = vpack.c.b16 %v8135, %v8134
      %v8146 = vpack.c.b16 %v8137, %v8136
      %v8147 = vpack.c.b16 %v8139, %v8138
      %8156 = vmatpush.bf16.msra.mxu0 %v8147
      %8157 = vmatpush.bf16.msra.mxu0 %v8146
      %8158 = vmatpush.bf16.msra.mxu0 %v8145
      %8159 = vmatpush.bf16.msra.mxu0 %v8144
      %8160 = vmatpush.bf16.msra.mxu0 %v8143
      %8161 = vmatpush.bf16.msra.mxu0 %v8142
      %8162 = vmatpush.bf16.msra.mxu0 %v8141
      %8163 = vmatpush.bf16.msra.mxu0 %v8140
      %8164 = vmatmul.bf16.gmra.mxu0 %v1196
      %v8165 = vpop.f32.mrf.mxu0
      %v8166 = vadd.f32 0.0, %v8165
      %v8167 = vpop.f32.mrf.mxu0
      %v8168 = vadd.f32 0.0, %v8167
      %8169 = vmatmul.bf16.gmra.mxu0 %v1197
      %v8170 = vpop.f32.mrf.mxu0
      %v8171 = vadd.f32 0.0, %v8170
      %v8172 = vpop.f32.mrf.mxu0
      %v8173 = vadd.f32 0.0, %v8172
      %8174 = vmatmul.bf16.gmra.mxu0 %v1198
      %v8175 = vpop.f32.mrf.mxu0
      %v8176 = vadd.f32 0.0, %v8175
      %v8177 = vpop.f32.mrf.mxu0
      %v8178 = vadd.f32 0.0, %v8177
      %8179 = vmatmul.bf16.gmra.mxu0 %v1199
      %v8180 = vpop.f32.mrf.mxu0
      %v8181 = vadd.f32 0.0, %v8180
      %v8182 = vpop.f32.mrf.mxu0
      %v8183 = vadd.f32 0.0, %v8182
      %8184 = vmatmul.bf16.gmra.mxu0 %v1200
      %v8185 = vpop.f32.mrf.mxu0
      %v8186 = vadd.f32 0.0, %v8185
      %v8187 = vpop.f32.mrf.mxu0
      %v8188 = vadd.f32 0.0, %v8187
      %8189 = vmatmul.bf16.gmra.mxu0 %v1201
      %v8190 = vpop.f32.mrf.mxu0
      %v8191 = vadd.f32 0.0, %v8190
      %v8192 = vpop.f32.mrf.mxu0
      %v8193 = vadd.f32 0.0, %v8192
      %8194 = vmatmul.bf16.gmra.mxu0 %v1202
      %v8195 = vpop.f32.mrf.mxu0
      %v8196 = vadd.f32 0.0, %v8195
      %v8197 = vpop.f32.mrf.mxu0
      %v8198 = vadd.f32 0.0, %v8197
      %8199 = vmatmul.bf16.gmra.mxu0 %v1203
      %v8200 = vpop.f32.mrf.mxu0
      %v8201 = vadd.f32 0.0, %v8200
      %v8202 = vpop.f32.mrf.mxu0
      %v8203 = vadd.f32 0.0, %v8202
      %8204 = vdwg.mxu0
      %v8205 = vunpack.c.l.b16 %v8044
      %v8206 = vunpack.c.l.b16 %v8046
      %v8207 = vunpack.c.l.b16 %v8048
      %v8208 = vunpack.c.l.b16 %v8050
      %v8209 = vunpack.c.l.b16 %v8052
      %v8210 = vunpack.c.l.b16 %v8054
      %v8211 = vunpack.c.l.b16 %v8056
      %v8212 = vunpack.c.l.b16 %v8058
      %v8213 = vunpack.c.l.b16 %v8060
      %v8214 = vunpack.c.l.b16 %v8062
      %v8215 = vunpack.c.l.b16 %v8064
      %v8216 = vunpack.c.l.b16 %v8066
      %v8217 = vunpack.c.l.b16 %v8068
      %v8218 = vunpack.c.l.b16 %v8070
      %v8219 = vunpack.c.l.b16 %v8072
      %v8220 = vunpack.c.l.b16 %v8074
      %v8221 = vpack.c.b16 %v8206, %v8205
      %v8222 = vpack.c.b16 %v8208, %v8207
      %v8223 = vpack.c.b16 %v8210, %v8209
      %v8224 = vpack.c.b16 %v8212, %v8211
      %v8225 = vpack.c.b16 %v8214, %v8213
      %v8226 = vpack.c.b16 %v8216, %v8215
      %v8227 = vpack.c.b16 %v8218, %v8217
      %v8228 = vpack.c.b16 %v8220, %v8219
      %8237 = vmatpush.bf16.msra.mxu0 %v8228
      %8238 = vmatpush.bf16.msra.mxu0 %v8227
      %8239 = vmatpush.bf16.msra.mxu0 %v8226
      %8240 = vmatpush.bf16.msra.mxu0 %v8225
      %8241 = vmatpush.bf16.msra.mxu0 %v8224
      %8242 = vmatpush.bf16.msra.mxu0 %v8223
      %8243 = vmatpush.bf16.msra.mxu0 %v8222
      %8244 = vmatpush.bf16.msra.mxu0 %v8221
      %8245 = vmatmul.bf16.gmra.mxu0 %v1357
      %v8246 = vpop.f32.mrf.mxu0
      %v8247 = vadd.f32 %v8166, %v8246
      %v8248 = vpop.f32.mrf.mxu0
      %v8249 = vadd.f32 %v8168, %v8248
      %8250 = vmatmul.bf16.gmra.mxu0 %v1358
      %v8251 = vpop.f32.mrf.mxu0
      %v8252 = vadd.f32 %v8171, %v8251
      %v8253 = vpop.f32.mrf.mxu0
      %v8254 = vadd.f32 %v8173, %v8253
      %8255 = vmatmul.bf16.gmra.mxu0 %v1359
      %v8256 = vpop.f32.mrf.mxu0
      %v8257 = vadd.f32 %v8176, %v8256
      %v8258 = vpop.f32.mrf.mxu0
      %v8259 = vadd.f32 %v8178, %v8258
      %8260 = vmatmul.bf16.gmra.mxu0 %v1360
      %v8261 = vpop.f32.mrf.mxu0
      %v8262 = vadd.f32 %v8181, %v8261
      %v8263 = vpop.f32.mrf.mxu0
      %v8264 = vadd.f32 %v8183, %v8263
      %8265 = vmatmul.bf16.gmra.mxu0 %v1361
      %v8266 = vpop.f32.mrf.mxu0
      %v8267 = vadd.f32 %v8186, %v8266
      %v8268 = vpop.f32.mrf.mxu0
      %v8269 = vadd.f32 %v8188, %v8268
      %8270 = vmatmul.bf16.gmra.mxu0 %v1362
      %v8271 = vpop.f32.mrf.mxu0
      %v8272 = vadd.f32 %v8191, %v8271
      %v8273 = vpop.f32.mrf.mxu0
      %v8274 = vadd.f32 %v8193, %v8273
      %8275 = vmatmul.bf16.gmra.mxu0 %v1363
      %v8276 = vpop.f32.mrf.mxu0
      %v8277 = vadd.f32 %v8196, %v8276
      %v8278 = vpop.f32.mrf.mxu0
      %v8279 = vadd.f32 %v8198, %v8278
      %8280 = vmatmul.bf16.gmra.mxu0 %v1364
      %v8281 = vpop.f32.mrf.mxu0
      %v8282 = vadd.f32 %v8201, %v8281
      %v8283 = vpop.f32.mrf.mxu0
      %v8284 = vadd.f32 %v8203, %v8283
      %8285 = vdwg.mxu0
      %v8302 = vunpack.c.l.b16 %v8045
      %v8303 = vunpack.c.l.b16 %v8047
      %v8304 = vunpack.c.l.b16 %v8049
      %v8305 = vunpack.c.l.b16 %v8051
      %v8306 = vunpack.c.l.b16 %v8053
      %v8307 = vunpack.c.l.b16 %v8055
      %v8308 = vunpack.c.l.b16 %v8057
      %v8309 = vunpack.c.l.b16 %v8059
      %v8310 = vunpack.c.l.b16 %v8061
      %v8311 = vunpack.c.l.b16 %v8063
      %v8312 = vunpack.c.l.b16 %v8065
      %v8313 = vunpack.c.l.b16 %v8067
      %v8314 = vunpack.c.l.b16 %v8069
      %v8315 = vunpack.c.l.b16 %v8071
      %v8316 = vunpack.c.l.b16 %v8073
      %v8317 = vunpack.c.l.b16 %v8075
      %v8318 = vpack.c.b16 %v8303, %v8302
      %v8319 = vpack.c.b16 %v8305, %v8304
      %v8320 = vpack.c.b16 %v8307, %v8306
      %v8321 = vpack.c.b16 %v8309, %v8308
      %v8322 = vpack.c.b16 %v8311, %v8310
      %v8323 = vpack.c.b16 %v8313, %v8312
      %v8324 = vpack.c.b16 %v8315, %v8314
      %v8325 = vpack.c.b16 %v8317, %v8316
      %8334 = vmatpush.bf16.msra.mxu0 %v8325
      %8335 = vmatpush.bf16.msra.mxu0 %v8324
      %8336 = vmatpush.bf16.msra.mxu0 %v8323
      %8337 = vmatpush.bf16.msra.mxu0 %v8322
      %8338 = vmatpush.bf16.msra.mxu0 %v8321
      %8339 = vmatpush.bf16.msra.mxu0 %v8320
      %8340 = vmatpush.bf16.msra.mxu0 %v8319
      %8341 = vmatpush.bf16.msra.mxu0 %v8318
      %8342 = vmatmul.bf16.gmra.mxu0 %v1462
      %v8343 = vpop.f32.mrf.mxu0
      %v8344 = vadd.f32 0.0, %v8343
      %v8345 = vpop.f32.mrf.mxu0
      %v8346 = vadd.f32 0.0, %v8345
      %8347 = vmatmul.bf16.gmra.mxu0 %v1463
      %v8348 = vpop.f32.mrf.mxu0
      %v8349 = vadd.f32 0.0, %v8348
      %v8350 = vpop.f32.mrf.mxu0
      %v8351 = vadd.f32 0.0, %v8350
      %8352 = vmatmul.bf16.gmra.mxu0 %v1464
      %v8353 = vpop.f32.mrf.mxu0
      %v8354 = vadd.f32 0.0, %v8353
      %v8355 = vpop.f32.mrf.mxu0
      %v8356 = vadd.f32 0.0, %v8355
      %8357 = vmatmul.bf16.gmra.mxu0 %v1465
      %v8358 = vpop.f32.mrf.mxu0
      %v8359 = vadd.f32 0.0, %v8358
      %v8360 = vpop.f32.mrf.mxu0
      %v8361 = vadd.f32 0.0, %v8360
      %8362 = vmatmul.bf16.gmra.mxu0 %v1466
      %v8363 = vpop.f32.mrf.mxu0
      %v8364 = vadd.f32 0.0, %v8363
      %v8365 = vpop.f32.mrf.mxu0
      %v8366 = vadd.f32 0.0, %v8365
      %8367 = vmatmul.bf16.gmra.mxu0 %v1467
      %v8368 = vpop.f32.mrf.mxu0
      %v8369 = vadd.f32 0.0, %v8368
      %v8370 = vpop.f32.mrf.mxu0
      %v8371 = vadd.f32 0.0, %v8370
      %8372 = vmatmul.bf16.gmra.mxu0 %v1468
      %v8373 = vpop.f32.mrf.mxu0
      %v8374 = vadd.f32 0.0, %v8373
      %v8375 = vpop.f32.mrf.mxu0
      %v8376 = vadd.f32 0.0, %v8375
      %8377 = vmatmul.bf16.gmra.mxu0 %v1469
      %v8378 = vpop.f32.mrf.mxu0
      %v8379 = vadd.f32 0.0, %v8378
      %v8380 = vpop.f32.mrf.mxu0
      %v8381 = vadd.f32 0.0, %v8380
      %8382 = vdwg.mxu0
      %v8383 = vadd.f32 %v8247, %v8344
      %v8384 = vadd.f32 %v8249, %v8346
      %v8385 = vadd.f32 %v8252, %v8349
      %v8386 = vadd.f32 %v8254, %v8351
      %v8387 = vadd.f32 %v8257, %v8354
      %v8388 = vadd.f32 %v8259, %v8356
      %v8389 = vadd.f32 %v8262, %v8359
      %v8390 = vadd.f32 %v8264, %v8361
      %v8391 = vadd.f32 %v8267, %v8364
      %v8392 = vadd.f32 %v8269, %v8366
      %v8393 = vadd.f32 %v8272, %v8369
      %v8394 = vadd.f32 %v8274, %v8371
      %v8395 = vadd.f32 %v8277, %v8374
      %v8396 = vadd.f32 %v8279, %v8376
      %v8397 = vadd.f32 %v8282, %v8379
      %v8398 = vadd.f32 %v8284, %v8381
      %v8415 = vunpack.c.h.b16 %v8076
      %v8416 = vunpack.c.h.b16 %v8078
      %v8417 = vunpack.c.h.b16 %v8080
      %v8418 = vunpack.c.h.b16 %v8082
      %v8419 = vunpack.c.h.b16 %v8084
      %v8420 = vunpack.c.h.b16 %v8086
      %v8421 = vunpack.c.h.b16 %v8088
      %v8422 = vunpack.c.h.b16 %v8090
      %v8423 = vunpack.c.h.b16 %v8092
      %v8424 = vunpack.c.h.b16 %v8094
      %v8425 = vunpack.c.h.b16 %v8096
      %v8426 = vunpack.c.h.b16 %v8098
      %v8427 = vunpack.c.h.b16 %v8100
      %v8428 = vunpack.c.h.b16 %v8102
      %v8429 = vunpack.c.h.b16 %v8104
      %v8430 = vunpack.c.h.b16 %v8106
      %v8431 = vpack.c.b16 %v8416, %v8415
      %v8432 = vpack.c.b16 %v8418, %v8417
      %v8433 = vpack.c.b16 %v8420, %v8419
      %v8434 = vpack.c.b16 %v8422, %v8421
      %v8435 = vpack.c.b16 %v8424, %v8423
      %v8436 = vpack.c.b16 %v8426, %v8425
      %v8437 = vpack.c.b16 %v8428, %v8427
      %v8438 = vpack.c.b16 %v8430, %v8429
      %8447 = vmatpush.bf16.msra.mxu0 %v8438
      %8448 = vmatpush.bf16.msra.mxu0 %v8437
      %8449 = vmatpush.bf16.msra.mxu0 %v8436
      %8450 = vmatpush.bf16.msra.mxu0 %v8435
      %8451 = vmatpush.bf16.msra.mxu0 %v8434
      %8452 = vmatpush.bf16.msra.mxu0 %v8433
      %8453 = vmatpush.bf16.msra.mxu0 %v8432
      %8454 = vmatpush.bf16.msra.mxu0 %v8431
      %8455 = vmatmul.bf16.gmra.mxu0 %v1196
      %v8456 = vpop.f32.mrf.mxu0
      %v8457 = vadd.f32 0.0, %v8456
      %v8458 = vpop.f32.mrf.mxu0
      %v8459 = vadd.f32 0.0, %v8458
      %8460 = vmatmul.bf16.gmra.mxu0 %v1197
      %v8461 = vpop.f32.mrf.mxu0
      %v8462 = vadd.f32 0.0, %v8461
      %v8463 = vpop.f32.mrf.mxu0
      %v8464 = vadd.f32 0.0, %v8463
      %8465 = vmatmul.bf16.gmra.mxu0 %v1198
      %v8466 = vpop.f32.mrf.mxu0
      %v8467 = vadd.f32 0.0, %v8466
      %v8468 = vpop.f32.mrf.mxu0
      %v8469 = vadd.f32 0.0, %v8468
      %8470 = vmatmul.bf16.gmra.mxu0 %v1199
      %v8471 = vpop.f32.mrf.mxu0
      %v8472 = vadd.f32 0.0, %v8471
      %v8473 = vpop.f32.mrf.mxu0
      %v8474 = vadd.f32 0.0, %v8473
      %8475 = vmatmul.bf16.gmra.mxu0 %v1200
      %v8476 = vpop.f32.mrf.mxu0
      %v8477 = vadd.f32 0.0, %v8476
      %v8478 = vpop.f32.mrf.mxu0
      %v8479 = vadd.f32 0.0, %v8478
      %8480 = vmatmul.bf16.gmra.mxu0 %v1201
      %v8481 = vpop.f32.mrf.mxu0
      %v8482 = vadd.f32 0.0, %v8481
      %v8483 = vpop.f32.mrf.mxu0
      %v8484 = vadd.f32 0.0, %v8483
      %8485 = vmatmul.bf16.gmra.mxu0 %v1202
      %v8486 = vpop.f32.mrf.mxu0
      %v8487 = vadd.f32 0.0, %v8486
      %v8488 = vpop.f32.mrf.mxu0
      %v8489 = vadd.f32 0.0, %v8488
      %8490 = vmatmul.bf16.gmra.mxu0 %v1203
      %v8491 = vpop.f32.mrf.mxu0
      %v8492 = vadd.f32 0.0, %v8491
      %v8493 = vpop.f32.mrf.mxu0
      %v8494 = vadd.f32 0.0, %v8493
      %8495 = vdwg.mxu0
      %v8496 = vunpack.c.l.b16 %v8076
      %v8497 = vunpack.c.l.b16 %v8078
      %v8498 = vunpack.c.l.b16 %v8080
      %v8499 = vunpack.c.l.b16 %v8082
      %v8500 = vunpack.c.l.b16 %v8084
      %v8501 = vunpack.c.l.b16 %v8086
      %v8502 = vunpack.c.l.b16 %v8088
      %v8503 = vunpack.c.l.b16 %v8090
      %v8504 = vunpack.c.l.b16 %v8092
      %v8505 = vunpack.c.l.b16 %v8094
      %v8506 = vunpack.c.l.b16 %v8096
      %v8507 = vunpack.c.l.b16 %v8098
      %v8508 = vunpack.c.l.b16 %v8100
      %v8509 = vunpack.c.l.b16 %v8102
      %v8510 = vunpack.c.l.b16 %v8104
      %v8511 = vunpack.c.l.b16 %v8106
      %v8512 = vpack.c.b16 %v8497, %v8496
      %v8513 = vpack.c.b16 %v8499, %v8498
      %v8514 = vpack.c.b16 %v8501, %v8500
      %v8515 = vpack.c.b16 %v8503, %v8502
      %v8516 = vpack.c.b16 %v8505, %v8504
      %v8517 = vpack.c.b16 %v8507, %v8506
      %v8518 = vpack.c.b16 %v8509, %v8508
      %v8519 = vpack.c.b16 %v8511, %v8510
      %8528 = vmatpush.bf16.msra.mxu0 %v8519
      %8529 = vmatpush.bf16.msra.mxu0 %v8518
      %8530 = vmatpush.bf16.msra.mxu0 %v8517
      %8531 = vmatpush.bf16.msra.mxu0 %v8516
      %8532 = vmatpush.bf16.msra.mxu0 %v8515
      %8533 = vmatpush.bf16.msra.mxu0 %v8514
      %8534 = vmatpush.bf16.msra.mxu0 %v8513
      %8535 = vmatpush.bf16.msra.mxu0 %v8512
      %8536 = vmatmul.bf16.gmra.mxu0 %v1357
      %v8537 = vpop.f32.mrf.mxu0
      %v8538 = vadd.f32 %v8457, %v8537
      %v8539 = vpop.f32.mrf.mxu0
      %v8540 = vadd.f32 %v8459, %v8539
      %8541 = vmatmul.bf16.gmra.mxu0 %v1358
      %v8542 = vpop.f32.mrf.mxu0
      %v8543 = vadd.f32 %v8462, %v8542
      %v8544 = vpop.f32.mrf.mxu0
      %v8545 = vadd.f32 %v8464, %v8544
      %8546 = vmatmul.bf16.gmra.mxu0 %v1359
      %v8547 = vpop.f32.mrf.mxu0
      %v8548 = vadd.f32 %v8467, %v8547
      %v8549 = vpop.f32.mrf.mxu0
      %v8550 = vadd.f32 %v8469, %v8549
      %8551 = vmatmul.bf16.gmra.mxu0 %v1360
      %v8552 = vpop.f32.mrf.mxu0
      %v8553 = vadd.f32 %v8472, %v8552
      %v8554 = vpop.f32.mrf.mxu0
      %v8555 = vadd.f32 %v8474, %v8554
      %8556 = vmatmul.bf16.gmra.mxu0 %v1361
      %v8557 = vpop.f32.mrf.mxu0
      %v8558 = vadd.f32 %v8477, %v8557
      %v8559 = vpop.f32.mrf.mxu0
      %v8560 = vadd.f32 %v8479, %v8559
      %8561 = vmatmul.bf16.gmra.mxu0 %v1362
      %v8562 = vpop.f32.mrf.mxu0
      %v8563 = vadd.f32 %v8482, %v8562
      %v8564 = vpop.f32.mrf.mxu0
      %v8565 = vadd.f32 %v8484, %v8564
      %8566 = vmatmul.bf16.gmra.mxu0 %v1363
      %v8567 = vpop.f32.mrf.mxu0
      %v8568 = vadd.f32 %v8487, %v8567
      %v8569 = vpop.f32.mrf.mxu0
      %v8570 = vadd.f32 %v8489, %v8569
      %8571 = vmatmul.bf16.gmra.mxu0 %v1364
      %v8572 = vpop.f32.mrf.mxu0
      %v8573 = vadd.f32 %v8492, %v8572
      %v8574 = vpop.f32.mrf.mxu0
      %v8575 = vadd.f32 %v8494, %v8574
      %8576 = vdwg.mxu0
      %v8593 = vunpack.c.l.b16 %v8077
      %v8594 = vunpack.c.l.b16 %v8079
      %v8595 = vunpack.c.l.b16 %v8081
      %v8596 = vunpack.c.l.b16 %v8083
      %v8597 = vunpack.c.l.b16 %v8085
      %v8598 = vunpack.c.l.b16 %v8087
      %v8599 = vunpack.c.l.b16 %v8089
      %v8600 = vunpack.c.l.b16 %v8091
      %v8601 = vunpack.c.l.b16 %v8093
      %v8602 = vunpack.c.l.b16 %v8095
      %v8603 = vunpack.c.l.b16 %v8097
      %v8604 = vunpack.c.l.b16 %v8099
      %v8605 = vunpack.c.l.b16 %v8101
      %v8606 = vunpack.c.l.b16 %v8103
      %v8607 = vunpack.c.l.b16 %v8105
      %v8608 = vunpack.c.l.b16 %v8107
      %v8609 = vpack.c.b16 %v8594, %v8593
      %v8610 = vpack.c.b16 %v8596, %v8595
      %v8611 = vpack.c.b16 %v8598, %v8597
      %v8612 = vpack.c.b16 %v8600, %v8599
      %v8613 = vpack.c.b16 %v8602, %v8601
      %v8614 = vpack.c.b16 %v8604, %v8603
      %v8615 = vpack.c.b16 %v8606, %v8605
      %v8616 = vpack.c.b16 %v8608, %v8607
      %8625 = vmatpush.bf16.msra.mxu0 %v8616
      %8626 = vmatpush.bf16.msra.mxu0 %v8615
      %8627 = vmatpush.bf16.msra.mxu0 %v8614
      %8628 = vmatpush.bf16.msra.mxu0 %v8613
      %8629 = vmatpush.bf16.msra.mxu0 %v8612
      %8630 = vmatpush.bf16.msra.mxu0 %v8611
      %8631 = vmatpush.bf16.msra.mxu0 %v8610
      %8632 = vmatpush.bf16.msra.mxu0 %v8609
      %8633 = vmatmul.bf16.gmra.mxu0 %v1462
      %v8634 = vpop.f32.mrf.mxu0
      %v8635 = vadd.f32 0.0, %v8634
      %v8636 = vpop.f32.mrf.mxu0
      %v8637 = vadd.f32 0.0, %v8636
      %8638 = vmatmul.bf16.gmra.mxu0 %v1463
      %v8639 = vpop.f32.mrf.mxu0
      %v8640 = vadd.f32 0.0, %v8639
      %v8641 = vpop.f32.mrf.mxu0
      %v8642 = vadd.f32 0.0, %v8641
      %8643 = vmatmul.bf16.gmra.mxu0 %v1464
      %v8644 = vpop.f32.mrf.mxu0
      %v8645 = vadd.f32 0.0, %v8644
      %v8646 = vpop.f32.mrf.mxu0
      %v8647 = vadd.f32 0.0, %v8646
      %8648 = vmatmul.bf16.gmra.mxu0 %v1465
      %v8649 = vpop.f32.mrf.mxu0
      %v8650 = vadd.f32 0.0, %v8649
      %v8651 = vpop.f32.mrf.mxu0
      %v8652 = vadd.f32 0.0, %v8651
      %8653 = vmatmul.bf16.gmra.mxu0 %v1466
      %v8654 = vpop.f32.mrf.mxu0
      %v8655 = vadd.f32 0.0, %v8654
      %v8656 = vpop.f32.mrf.mxu0
      %v8657 = vadd.f32 0.0, %v8656
      %8658 = vmatmul.bf16.gmra.mxu0 %v1467
      %v8659 = vpop.f32.mrf.mxu0
      %v8660 = vadd.f32 0.0, %v8659
      %v8661 = vpop.f32.mrf.mxu0
      %v8662 = vadd.f32 0.0, %v8661
      %8663 = vmatmul.bf16.gmra.mxu0 %v1468
      %v8664 = vpop.f32.mrf.mxu0
      %v8665 = vadd.f32 0.0, %v8664
      %v8666 = vpop.f32.mrf.mxu0
      %v8667 = vadd.f32 0.0, %v8666
      %8668 = vmatmul.bf16.gmra.mxu0 %v1469
      %v8669 = vpop.f32.mrf.mxu0
      %v8670 = vadd.f32 0.0, %v8669
      %v8671 = vpop.f32.mrf.mxu0
      %v8672 = vadd.f32 0.0, %v8671
      %8673 = vdwg.mxu0
      %v8674 = vadd.f32 %v8538, %v8635
      %v8675 = vadd.f32 %v8540, %v8637
      %v8676 = vadd.f32 %v8543, %v8640
      %v8677 = vadd.f32 %v8545, %v8642
      %v8678 = vadd.f32 %v8548, %v8645
      %v8679 = vadd.f32 %v8550, %v8647
      %v8680 = vadd.f32 %v8553, %v8650
      %v8681 = vadd.f32 %v8555, %v8652
      %v8682 = vadd.f32 %v8558, %v8655
      %v8683 = vadd.f32 %v8560, %v8657
      %v8684 = vadd.f32 %v8563, %v8660
      %v8685 = vadd.f32 %v8565, %v8662
      %v8686 = vadd.f32 %v8568, %v8665
      %v8687 = vadd.f32 %v8570, %v8667
      %v8688 = vadd.f32 %v8573, %v8670
      %v8689 = vadd.f32 %v8575, %v8672
      %v8690 = vld [vmem:[%s17] sm:$0xff]
      %v8691 = vadd.f32 %v8383, %v8690
      %v8692 = vadd.f32 %v8384, %v8690
      %v8693 = vadd.f32 %v8385, %v8690
      %v8694 = vadd.f32 %v8386, %v8690
      %v8695 = vadd.f32 %v8387, %v8690
      %v8696 = vadd.f32 %v8388, %v8690
      %v8697 = vadd.f32 %v8389, %v8690
      %v8698 = vadd.f32 %v8390, %v8690
      %v8699 = vadd.f32 %v8391, %v8690
      %v8700 = vadd.f32 %v8392, %v8690
      %v8701 = vadd.f32 %v8393, %v8690
      %v8702 = vadd.f32 %v8394, %v8690
      %v8703 = vadd.f32 %v8395, %v8690
      %v8704 = vadd.f32 %v8396, %v8690
      %v8705 = vadd.f32 %v8397, %v8690
      %v8706 = vadd.f32 %v8398, %v8690
      %v8707 = vadd.f32 %v8674, %v8690
      %v8708 = vadd.f32 %v8675, %v8690
      %v8709 = vadd.f32 %v8676, %v8690
      %v8710 = vadd.f32 %v8677, %v8690
      %v8711 = vadd.f32 %v8678, %v8690
      %v8712 = vadd.f32 %v8679, %v8690
      %v8713 = vadd.f32 %v8680, %v8690
      %v8714 = vadd.f32 %v8681, %v8690
      %v8715 = vadd.f32 %v8682, %v8690
      %v8716 = vadd.f32 %v8683, %v8690
      %v8717 = vadd.f32 %v8684, %v8690
      %v8718 = vadd.f32 %v8685, %v8690
      %v8719 = vadd.f32 %v8686, %v8690
      %v8720 = vadd.f32 %v8687, %v8690
      %v8721 = vadd.f32 %v8688, %v8690
      %v8722 = vadd.f32 %v8689, %v8690
      %v8723 = vmax.f32 %v8691, 0.0
      %v8724 = vmax.f32 %v8692, 0.0
      %v8725 = vmax.f32 %v8693, 0.0
      %v8726 = vmax.f32 %v8694, 0.0
      %v8727 = vmax.f32 %v8695, 0.0
      %v8728 = vmax.f32 %v8696, 0.0
      %v8729 = vmax.f32 %v8697, 0.0
      %v8730 = vmax.f32 %v8698, 0.0
      %v8731 = vmax.f32 %v8699, 0.0
      %v8732 = vmax.f32 %v8700, 0.0
      %v8733 = vmax.f32 %v8701, 0.0
      %v8734 = vmax.f32 %v8702, 0.0
      %v8735 = vmax.f32 %v8703, 0.0
      %v8736 = vmax.f32 %v8704, 0.0
      %v8737 = vmax.f32 %v8705, 0.0
      %v8738 = vmax.f32 %v8706, 0.0
      %v8739 = vmax.f32 %v8707, 0.0
      %v8740 = vmax.f32 %v8708, 0.0
      %v8741 = vmax.f32 %v8709, 0.0
      %v8742 = vmax.f32 %v8710, 0.0
      %v8743 = vmax.f32 %v8711, 0.0
      %v8744 = vmax.f32 %v8712, 0.0
      %v8745 = vmax.f32 %v8713, 0.0
      %v8746 = vmax.f32 %v8714, 0.0
      %v8747 = vmax.f32 %v8715, 0.0
      %v8748 = vmax.f32 %v8716, 0.0
      %v8749 = vmax.f32 %v8717, 0.0
      %v8750 = vmax.f32 %v8718, 0.0
      %v8751 = vmax.f32 %v8719, 0.0
      %v8752 = vmax.f32 %v8720, 0.0
      %v8753 = vmax.f32 %v8721, 0.0
      %v8754 = vmax.f32 %v8722, 0.0
      %8755 = vst [vmem:[#allocation3 + $0x20] sm:$0xff] %v8723
      %8756 = vst [vmem:[#allocation3 + $0x28] sm:$0xff] %v8724
      %8757 = vst [vmem:[#allocation3 + $0x30] sm:$0xff] %v8725
      %8758 = vst [vmem:[#allocation3 + $0x38] sm:$0xff] %v8726
      %8759 = vst [vmem:[#allocation3 + $0x40] sm:$0xff] %v8727
      %8760 = vst [vmem:[#allocation3 + $0x48] sm:$0xff] %v8728
      %8761 = vst [vmem:[#allocation3 + $0x50] sm:$0xff] %v8729
      %8762 = vst [vmem:[#allocation3 + $0x58] sm:$0xff] %v8730
      %8763 = vst [vmem:[#allocation3 + $0x60] sm:$0xff] %v8731
      %8764 = vst [vmem:[#allocation3 + $0x68] sm:$0xff] %v8732
      %8765 = vst [vmem:[#allocation3 + $0x70] sm:$0xff] %v8733
      %8766 = vst [vmem:[#allocation3 + $0x78] sm:$0xff] %v8734
      %8767 = vst [vmem:[#allocation3 + $0x80] sm:$0xff] %v8735
      %8768 = vst [vmem:[#allocation3 + $0x88] sm:$0xff] %v8736
      %8769 = vst [vmem:[#allocation3 + $0x90] sm:$0xff] %v8737
      %8770 = vst [vmem:[#allocation3 + $0x98] sm:$0xff] %v8738
      %8771 = vst [vmem:[#allocation3 + $0xe0] sm:$0xff] %v8739
      %8772 = vst [vmem:[#allocation3 + $0xe8] sm:$0xff] %v8740
      %8773 = vst [vmem:[#allocation3 + $0xf0] sm:$0xff] %v8741
      %8774 = vst [vmem:[#allocation3 + $0xf8] sm:$0xff] %v8742
      %8775 = vst [vmem:[#allocation3 + $0x100] sm:$0xff] %v8743
      %8776 = vst [vmem:[#allocation3 + $0x108] sm:$0xff] %v8744
      %8777 = vst [vmem:[#allocation3 + $0x110] sm:$0xff] %v8745
      %8778 = vst [vmem:[#allocation3 + $0x118] sm:$0xff] %v8746
      %8779 = vst [vmem:[#allocation3 + $0x120] sm:$0xff] %v8747
      %8780 = vst [vmem:[#allocation3 + $0x128] sm:$0xff] %v8748
      %8781 = vst [vmem:[#allocation3 + $0x130] sm:$0xff] %v8749
      %8782 = vst [vmem:[#allocation3 + $0x138] sm:$0xff] %v8750
      %8783 = vst [vmem:[#allocation3 + $0x140] sm:$0xff] %v8751
      %8784 = vst [vmem:[#allocation3 + $0x148] sm:$0xff] %v8752
      %8785 = vst [vmem:[#allocation3 + $0x150] sm:$0xff] %v8753
      %8786 = vst [vmem:[#allocation3 + $0x158] sm:$0xff] %v8754
      %v8787 = vld [vmem:[#allocation3] sm:$0xff]
      %v8788 = vld [vmem:[#allocation3 + $0x8] sm:$0xff]
      %v8789 = vld [vmem:[#allocation3 + $0x10] sm:$0xff]
      %v8790 = vld [vmem:[#allocation3 + $0x18] sm:$0xff]
      %v8791 = vld [vmem:[#allocation3 + $0x20] sm:$0xff]
      %v8792 = vld [vmem:[#allocation3 + $0x28] sm:$0xff]
      %v8793 = vld [vmem:[#allocation3 + $0x30] sm:$0xff]
      %v8794 = vld [vmem:[#allocation3 + $0x38] sm:$0xff]
      %v8795 = vld [vmem:[#allocation3 + $0x40] sm:$0xff]
      %v8796 = vld [vmem:[#allocation3 + $0x48] sm:$0xff]
      %v8797 = vld [vmem:[#allocation3 + $0x50] sm:$0xff]
      %v8798 = vld [vmem:[#allocation3 + $0x58] sm:$0xff]
      %v8799 = vld [vmem:[#allocation3 + $0x60] sm:$0xff]
      %v8800 = vld [vmem:[#allocation3 + $0x68] sm:$0xff]
      %v8801 = vld [vmem:[#allocation3 + $0x70] sm:$0xff]
      %v8802 = vld [vmem:[#allocation3 + $0x78] sm:$0xff]
      %v8803 = vld [vmem:[#allocation3 + $0xc0] sm:$0xff]
      %v8804 = vld [vmem:[#allocation3 + $0xc8] sm:$0xff]
      %v8805 = vld [vmem:[#allocation3 + $0xd0] sm:$0xff]
      %v8806 = vld [vmem:[#allocation3 + $0xd8] sm:$0xff]
      %v8807 = vld [vmem:[#allocation3 + $0xe0] sm:$0xff]
      %v8808 = vld [vmem:[#allocation3 + $0xe8] sm:$0xff]
      %v8809 = vld [vmem:[#allocation3 + $0xf0] sm:$0xff]
      %v8810 = vld [vmem:[#allocation3 + $0xf8] sm:$0xff]
      %v8811 = vld [vmem:[#allocation3 + $0x100] sm:$0xff]
      %v8812 = vld [vmem:[#allocation3 + $0x108] sm:$0xff]
      %v8813 = vld [vmem:[#allocation3 + $0x110] sm:$0xff]
      %v8814 = vld [vmem:[#allocation3 + $0x118] sm:$0xff]
      %v8815 = vld [vmem:[#allocation3 + $0x120] sm:$0xff]
      %v8816 = vld [vmem:[#allocation3 + $0x128] sm:$0xff]
      %v8817 = vld [vmem:[#allocation3 + $0x130] sm:$0xff]
      %v8818 = vld [vmem:[#allocation3 + $0x138] sm:$0xff]
      %v8819 = vpack.c.bf16 %v8788, %v8787
      %v8820 = vpack.c.bf16 %v8790, %v8789
      %v8821 = vpack.c.bf16 %v8792, %v8791
      %v8822 = vpack.c.bf16 %v8794, %v8793
      %v8823 = vpack.c.bf16 %v8796, %v8795
      %v8824 = vpack.c.bf16 %v8798, %v8797
      %v8825 = vpack.c.bf16 %v8800, %v8799
      %v8826 = vpack.c.bf16 %v8802, %v8801
      %v8827 = vpack.c.bf16 %v8804, %v8803
      %v8828 = vpack.c.bf16 %v8806, %v8805
      %v8829 = vpack.c.bf16 %v8808, %v8807
      %v8830 = vpack.c.bf16 %v8810, %v8809
      %v8831 = vpack.c.bf16 %v8812, %v8811
      %v8832 = vpack.c.bf16 %v8814, %v8813
      %v8833 = vpack.c.bf16 %v8816, %v8815
      %v8834 = vpack.c.bf16 %v8818, %v8817
      %v8835 = vld [vmem:[%s18] sm:$0xf]
      %v8836 = vld [vmem:[%s18 + $0x4] sm:$0xf]
      %v8837 = vld [vmem:[%s18 + $0x8] sm:$0xf]
      %v8838 = vld [vmem:[%s18 + $0xc] sm:$0xf]
      %v8839 = vld [vmem:[%s18 + $0x10] sm:$0xf]
      %v8840 = vld [vmem:[%s18 + $0x14] sm:$0xf]
      %v8841 = vld [vmem:[%s18 + $0x18] sm:$0xf]
      %v8842 = vld [vmem:[%s18 + $0x1c] sm:$0xf]
      %v8843 = vld [vmem:[%s18 + $0x20] sm:$0xf]
      %v8844 = vld [vmem:[%s18 + $0x24] sm:$0xf]
      %v8845 = vld [vmem:[%s18 + $0x28] sm:$0xf]
      %v8846 = vld [vmem:[%s18 + $0x2c] sm:$0xf]
      %v8847 = vld [vmem:[%s18 + $0x30] sm:$0xf]
      %v8848 = vld [vmem:[%s18 + $0x34] sm:$0xf]
      %v8849 = vld [vmem:[%s18 + $0x38] sm:$0xf]
      %v8850 = vld [vmem:[%s18 + $0x3c] sm:$0xf]
      %v8851 = vld [vmem:[#allocation3 + $0x80] sm:$0xff]
      %v8852 = vld [vmem:[#allocation3 + $0x140] sm:$0xff]
      %v8853 = vpack.c.bf16 %v8789, %v8788
      %v8854 = vpack.c.bf16 %v8791, %v8790
      %v8855 = vpack.c.bf16 %v8793, %v8792
      %v8856 = vpack.c.bf16 %v8795, %v8794
      %v8857 = vpack.c.bf16 %v8797, %v8796
      %v8858 = vpack.c.bf16 %v8799, %v8798
      %v8859 = vpack.c.bf16 %v8801, %v8800
      %v8860 = vpack.c.bf16 %v8851, %v8802
      %v8861 = vpack.c.bf16 %v8805, %v8804
      %v8862 = vpack.c.bf16 %v8807, %v8806
      %v8863 = vpack.c.bf16 %v8809, %v8808
      %v8864 = vpack.c.bf16 %v8811, %v8810
      %v8865 = vpack.c.bf16 %v8813, %v8812
      %v8866 = vpack.c.bf16 %v8815, %v8814
      %v8867 = vpack.c.bf16 %v8817, %v8816
      %v8868 = vpack.c.bf16 %v8852, %v8818
      %v8869 = vld [vmem:[%s18 + $0x40] sm:$0xf]
      %v8870 = vld [vmem:[%s18 + $0x44] sm:$0xf]
      %v8871 = vld [vmem:[%s18 + $0x48] sm:$0xf]
      %v8872 = vld [vmem:[%s18 + $0x4c] sm:$0xf]
      %v8873 = vld [vmem:[%s18 + $0x50] sm:$0xf]
      %v8874 = vld [vmem:[%s18 + $0x54] sm:$0xf]
      %v8875 = vld [vmem:[%s18 + $0x58] sm:$0xf]
      %v8876 = vld [vmem:[%s18 + $0x5c] sm:$0xf]
      %v8877 = vld [vmem:[%s18 + $0x60] sm:$0xf]
      %v8878 = vld [vmem:[%s18 + $0x64] sm:$0xf]
      %v8879 = vld [vmem:[%s18 + $0x68] sm:$0xf]
      %v8880 = vld [vmem:[%s18 + $0x6c] sm:$0xf]
      %v8881 = vld [vmem:[%s18 + $0x70] sm:$0xf]
      %v8882 = vld [vmem:[%s18 + $0x74] sm:$0xf]
      %v8883 = vld [vmem:[%s18 + $0x78] sm:$0xf]
      %v8884 = vld [vmem:[%s18 + $0x7c] sm:$0xf]
      %v8901 = vunpack.c.l.b16 %v8869
      %v8902 = vunpack.c.l.b16 %v8870
      %v8903 = vunpack.c.l.b16 %v8871
      %v8904 = vunpack.c.l.b16 %v8872
      %v8905 = vunpack.c.l.b16 %v8873
      %v8906 = vunpack.c.l.b16 %v8874
      %v8907 = vunpack.c.l.b16 %v8875
      %v8908 = vunpack.c.l.b16 %v8876
      %v8909 = vunpack.c.l.b16 %v8877
      %v8910 = vunpack.c.l.b16 %v8878
      %v8911 = vunpack.c.l.b16 %v8879
      %v8912 = vunpack.c.l.b16 %v8880
      %v8913 = vunpack.c.l.b16 %v8881
      %v8914 = vunpack.c.l.b16 %v8882
      %v8915 = vunpack.c.l.b16 %v8883
      %v8916 = vunpack.c.l.b16 %v8884
      %v8917 = vpack.c.b16 %v8902, %v8901
      %v8918 = vpack.c.b16 %v8904, %v8903
      %v8919 = vpack.c.b16 %v8906, %v8905
      %v8920 = vpack.c.b16 %v8908, %v8907
      %v8921 = vpack.c.b16 %v8910, %v8909
      %v8922 = vpack.c.b16 %v8912, %v8911
      %v8923 = vpack.c.b16 %v8914, %v8913
      %v8924 = vpack.c.b16 %v8916, %v8915
      %8933 = vmatpush.bf16.msra.mxu0 %v8924
      %8934 = vmatpush.bf16.msra.mxu0 %v8923
      %8935 = vmatpush.bf16.msra.mxu0 %v8922
      %8936 = vmatpush.bf16.msra.mxu0 %v8921
      %8937 = vmatpush.bf16.msra.mxu0 %v8920
      %8938 = vmatpush.bf16.msra.mxu0 %v8919
      %8939 = vmatpush.bf16.msra.mxu0 %v8918
      %8940 = vmatpush.bf16.msra.mxu0 %v8917
      %8941 = vmatmul.bf16.gmra.mxu0 %v8853
      %v8942 = vpop.f32.mrf.mxu0
      %v8943 = vadd.f32 0.0, %v8942
      %v8944 = vpop.f32.mrf.mxu0
      %v8945 = vadd.f32 0.0, %v8944
      %8946 = vmatmul.bf16.gmra.mxu0 %v8854
      %v8947 = vpop.f32.mrf.mxu0
      %v8948 = vadd.f32 0.0, %v8947
      %v8949 = vpop.f32.mrf.mxu0
      %v8950 = vadd.f32 0.0, %v8949
      %8951 = vmatmul.bf16.gmra.mxu0 %v8855
      %v8952 = vpop.f32.mrf.mxu0
      %v8953 = vadd.f32 0.0, %v8952
      %v8954 = vpop.f32.mrf.mxu0
      %v8955 = vadd.f32 0.0, %v8954
      %8956 = vmatmul.bf16.gmra.mxu0 %v8856
      %v8957 = vpop.f32.mrf.mxu0
      %v8958 = vadd.f32 0.0, %v8957
      %v8959 = vpop.f32.mrf.mxu0
      %v8960 = vadd.f32 0.0, %v8959
      %8961 = vmatmul.bf16.gmra.mxu0 %v8857
      %v8962 = vpop.f32.mrf.mxu0
      %v8963 = vadd.f32 0.0, %v8962
      %v8964 = vpop.f32.mrf.mxu0
      %v8965 = vadd.f32 0.0, %v8964
      %8966 = vmatmul.bf16.gmra.mxu0 %v8858
      %v8967 = vpop.f32.mrf.mxu0
      %v8968 = vadd.f32 0.0, %v8967
      %v8969 = vpop.f32.mrf.mxu0
      %v8970 = vadd.f32 0.0, %v8969
      %8971 = vmatmul.bf16.gmra.mxu0 %v8859
      %v8972 = vpop.f32.mrf.mxu0
      %v8973 = vadd.f32 0.0, %v8972
      %v8974 = vpop.f32.mrf.mxu0
      %v8975 = vadd.f32 0.0, %v8974
      %8976 = vmatmul.bf16.gmra.mxu0 %v8860
      %v8977 = vpop.f32.mrf.mxu0
      %v8978 = vadd.f32 0.0, %v8977
      %v8979 = vpop.f32.mrf.mxu0
      %v8980 = vadd.f32 0.0, %v8979
      %8981 = vmatmul.bf16.gmra.mxu0 %v8861
      %v8982 = vpop.f32.mrf.mxu0
      %v8983 = vadd.f32 0.0, %v8982
      %v8984 = vpop.f32.mrf.mxu0
      %v8985 = vadd.f32 0.0, %v8984
      %8986 = vmatmul.bf16.gmra.mxu0 %v8862
      %v8987 = vpop.f32.mrf.mxu0
      %v8988 = vadd.f32 0.0, %v8987
      %v8989 = vpop.f32.mrf.mxu0
      %v8990 = vadd.f32 0.0, %v8989
      %8991 = vmatmul.bf16.gmra.mxu0 %v8863
      %v8992 = vpop.f32.mrf.mxu0
      %v8993 = vadd.f32 0.0, %v8992
      %v8994 = vpop.f32.mrf.mxu0
      %v8995 = vadd.f32 0.0, %v8994
      %8996 = vmatmul.bf16.gmra.mxu0 %v8864
      %v8997 = vpop.f32.mrf.mxu0
      %v8998 = vadd.f32 0.0, %v8997
      %v8999 = vpop.f32.mrf.mxu0
      %v9000 = vadd.f32 0.0, %v8999
      %9001 = vmatmul.bf16.gmra.mxu0 %v8865
      %v9002 = vpop.f32.mrf.mxu0
      %v9003 = vadd.f32 0.0, %v9002
      %v9004 = vpop.f32.mrf.mxu0
      %v9005 = vadd.f32 0.0, %v9004
      %9006 = vmatmul.bf16.gmra.mxu0 %v8866
      %v9007 = vpop.f32.mrf.mxu0
      %v9008 = vadd.f32 0.0, %v9007
      %v9009 = vpop.f32.mrf.mxu0
      %v9010 = vadd.f32 0.0, %v9009
      %9011 = vmatmul.bf16.gmra.mxu0 %v8867
      %v9012 = vpop.f32.mrf.mxu0
      %v9013 = vadd.f32 0.0, %v9012
      %v9014 = vpop.f32.mrf.mxu0
      %v9015 = vadd.f32 0.0, %v9014
      %9016 = vmatmul.bf16.gmra.mxu0 %v8868
      %v9017 = vpop.f32.mrf.mxu0
      %v9018 = vadd.f32 0.0, %v9017
      %v9019 = vpop.f32.mrf.mxu0
      %v9020 = vadd.f32 0.0, %v9019
      %9021 = vdwg.mxu0
      %v9038 = vunpack.c.l.b16 %v8835
      %v9039 = vunpack.c.l.b16 %v8836
      %v9040 = vunpack.c.l.b16 %v8837
      %v9041 = vunpack.c.l.b16 %v8838
      %v9042 = vunpack.c.l.b16 %v8839
      %v9043 = vunpack.c.l.b16 %v8840
      %v9044 = vunpack.c.l.b16 %v8841
      %v9045 = vunpack.c.l.b16 %v8842
      %v9046 = vunpack.c.l.b16 %v8843
      %v9047 = vunpack.c.l.b16 %v8844
      %v9048 = vunpack.c.l.b16 %v8845
      %v9049 = vunpack.c.l.b16 %v8846
      %v9050 = vunpack.c.l.b16 %v8847
      %v9051 = vunpack.c.l.b16 %v8848
      %v9052 = vunpack.c.l.b16 %v8849
      %v9053 = vunpack.c.l.b16 %v8850
      %v9054 = vpack.c.b16 %v9039, %v9038
      %v9055 = vpack.c.b16 %v9041, %v9040
      %v9056 = vpack.c.b16 %v9043, %v9042
      %v9057 = vpack.c.b16 %v9045, %v9044
      %v9058 = vpack.c.b16 %v9047, %v9046
      %v9059 = vpack.c.b16 %v9049, %v9048
      %v9060 = vpack.c.b16 %v9051, %v9050
      %v9061 = vpack.c.b16 %v9053, %v9052
      %9070 = vmatpush.bf16.msra.mxu0 %v9061
      %9071 = vmatpush.bf16.msra.mxu0 %v9060
      %9072 = vmatpush.bf16.msra.mxu0 %v9059
      %9073 = vmatpush.bf16.msra.mxu0 %v9058
      %9074 = vmatpush.bf16.msra.mxu0 %v9057
      %9075 = vmatpush.bf16.msra.mxu0 %v9056
      %9076 = vmatpush.bf16.msra.mxu0 %v9055
      %9077 = vmatpush.bf16.msra.mxu0 %v9054
      %9078 = vmatmul.bf16.gmra.mxu0 %v8819
      %v9079 = vpop.f32.mrf.mxu0
      %v9080 = vadd.f32 %v8943, %v9079
      %v9081 = vpop.f32.mrf.mxu0
      %v9082 = vadd.f32 %v8945, %v9081
      %9083 = vmatmul.bf16.gmra.mxu0 %v8820
      %v9084 = vpop.f32.mrf.mxu0
      %v9085 = vadd.f32 %v8948, %v9084
      %v9086 = vpop.f32.mrf.mxu0
      %v9087 = vadd.f32 %v8950, %v9086
      %9088 = vmatmul.bf16.gmra.mxu0 %v8821
      %v9089 = vpop.f32.mrf.mxu0
      %v9090 = vadd.f32 %v8953, %v9089
      %v9091 = vpop.f32.mrf.mxu0
      %v9092 = vadd.f32 %v8955, %v9091
      %9093 = vmatmul.bf16.gmra.mxu0 %v8822
      %v9094 = vpop.f32.mrf.mxu0
      %v9095 = vadd.f32 %v8958, %v9094
      %v9096 = vpop.f32.mrf.mxu0
      %v9097 = vadd.f32 %v8960, %v9096
      %9098 = vmatmul.bf16.gmra.mxu0 %v8823
      %v9099 = vpop.f32.mrf.mxu0
      %v9100 = vadd.f32 %v8963, %v9099
      %v9101 = vpop.f32.mrf.mxu0
      %v9102 = vadd.f32 %v8965, %v9101
      %9103 = vmatmul.bf16.gmra.mxu0 %v8824
      %v9104 = vpop.f32.mrf.mxu0
      %v9105 = vadd.f32 %v8968, %v9104
      %v9106 = vpop.f32.mrf.mxu0
      %v9107 = vadd.f32 %v8970, %v9106
      %9108 = vmatmul.bf16.gmra.mxu0 %v8825
      %v9109 = vpop.f32.mrf.mxu0
      %v9110 = vadd.f32 %v8973, %v9109
      %v9111 = vpop.f32.mrf.mxu0
      %v9112 = vadd.f32 %v8975, %v9111
      %9113 = vmatmul.bf16.gmra.mxu0 %v8826
      %v9114 = vpop.f32.mrf.mxu0
      %v9115 = vadd.f32 %v8978, %v9114
      %v9116 = vpop.f32.mrf.mxu0
      %v9117 = vadd.f32 %v8980, %v9116
      %9118 = vmatmul.bf16.gmra.mxu0 %v8827
      %v9119 = vpop.f32.mrf.mxu0
      %v9120 = vadd.f32 %v8983, %v9119
      %v9121 = vpop.f32.mrf.mxu0
      %v9122 = vadd.f32 %v8985, %v9121
      %9123 = vmatmul.bf16.gmra.mxu0 %v8828
      %v9124 = vpop.f32.mrf.mxu0
      %v9125 = vadd.f32 %v8988, %v9124
      %v9126 = vpop.f32.mrf.mxu0
      %v9127 = vadd.f32 %v8990, %v9126
      %9128 = vmatmul.bf16.gmra.mxu0 %v8829
      %v9129 = vpop.f32.mrf.mxu0
      %v9130 = vadd.f32 %v8993, %v9129
      %v9131 = vpop.f32.mrf.mxu0
      %v9132 = vadd.f32 %v8995, %v9131
      %9133 = vmatmul.bf16.gmra.mxu0 %v8830
      %v9134 = vpop.f32.mrf.mxu0
      %v9135 = vadd.f32 %v8998, %v9134
      %v9136 = vpop.f32.mrf.mxu0
      %v9137 = vadd.f32 %v9000, %v9136
      %9138 = vmatmul.bf16.gmra.mxu0 %v8831
      %v9139 = vpop.f32.mrf.mxu0
      %v9140 = vadd.f32 %v9003, %v9139
      %v9141 = vpop.f32.mrf.mxu0
      %v9142 = vadd.f32 %v9005, %v9141
      %9143 = vmatmul.bf16.gmra.mxu0 %v8832
      %v9144 = vpop.f32.mrf.mxu0
      %v9145 = vadd.f32 %v9008, %v9144
      %v9146 = vpop.f32.mrf.mxu0
      %v9147 = vadd.f32 %v9010, %v9146
      %9148 = vmatmul.bf16.gmra.mxu0 %v8833
      %v9149 = vpop.f32.mrf.mxu0
      %v9150 = vadd.f32 %v9013, %v9149
      %v9151 = vpop.f32.mrf.mxu0
      %v9152 = vadd.f32 %v9015, %v9151
      %9153 = vmatmul.bf16.gmra.mxu0 %v8834
      %v9154 = vpop.f32.mrf.mxu0
      %v9155 = vadd.f32 %v9018, %v9154
      %v9156 = vpop.f32.mrf.mxu0
      %v9157 = vadd.f32 %v9020, %v9156
      %9158 = vdwg.mxu0
      %v9159 = vld [vmem:[#allocation3 + $0x10] sm:$0xff]
      %v9160 = vld [vmem:[#allocation3 + $0x18] sm:$0xff]
      %v9161 = vld [vmem:[#allocation3 + $0x20] sm:$0xff]
      %v9162 = vld [vmem:[#allocation3 + $0x28] sm:$0xff]
      %v9163 = vld [vmem:[#allocation3 + $0x30] sm:$0xff]
      %v9164 = vld [vmem:[#allocation3 + $0x38] sm:$0xff]
      %v9165 = vld [vmem:[#allocation3 + $0x40] sm:$0xff]
      %v9166 = vld [vmem:[#allocation3 + $0x48] sm:$0xff]
      %v9167 = vld [vmem:[#allocation3 + $0x50] sm:$0xff]
      %v9168 = vld [vmem:[#allocation3 + $0x58] sm:$0xff]
      %v9169 = vld [vmem:[#allocation3 + $0x60] sm:$0xff]
      %v9170 = vld [vmem:[#allocation3 + $0x68] sm:$0xff]
      %v9171 = vld [vmem:[#allocation3 + $0x70] sm:$0xff]
      %v9172 = vld [vmem:[#allocation3 + $0x78] sm:$0xff]
      %v9173 = vld [vmem:[#allocation3 + $0x80] sm:$0xff]
      %v9174 = vld [vmem:[#allocation3 + $0x88] sm:$0xff]
      %v9175 = vld [vmem:[#allocation3 + $0xd0] sm:$0xff]
      %v9176 = vld [vmem:[#allocation3 + $0xd8] sm:$0xff]
      %v9177 = vld [vmem:[#allocation3 + $0xe0] sm:$0xff]
      %v9178 = vld [vmem:[#allocation3 + $0xe8] sm:$0xff]
      %v9179 = vld [vmem:[#allocation3 + $0xf0] sm:$0xff]
      %v9180 = vld [vmem:[#allocation3 + $0xf8] sm:$0xff]
      %v9181 = vld [vmem:[#allocation3 + $0x100] sm:$0xff]
      %v9182 = vld [vmem:[#allocation3 + $0x108] sm:$0xff]
      %v9183 = vld [vmem:[#allocation3 + $0x110] sm:$0xff]
      %v9184 = vld [vmem:[#allocation3 + $0x118] sm:$0xff]
      %v9185 = vld [vmem:[#allocation3 + $0x120] sm:$0xff]
      %v9186 = vld [vmem:[#allocation3 + $0x128] sm:$0xff]
      %v9187 = vld [vmem:[#allocation3 + $0x130] sm:$0xff]
      %v9188 = vld [vmem:[#allocation3 + $0x138] sm:$0xff]
      %v9189 = vld [vmem:[#allocation3 + $0x140] sm:$0xff]
      %v9190 = vld [vmem:[#allocation3 + $0x148] sm:$0xff]
      %v9191 = vpack.c.bf16 %v9160, %v9159
      %v9192 = vpack.c.bf16 %v9162, %v9161
      %v9193 = vpack.c.bf16 %v9164, %v9163
      %v9194 = vpack.c.bf16 %v9166, %v9165
      %v9195 = vpack.c.bf16 %v9168, %v9167
      %v9196 = vpack.c.bf16 %v9170, %v9169
      %v9197 = vpack.c.bf16 %v9172, %v9171
      %v9198 = vpack.c.bf16 %v9174, %v9173
      %v9199 = vpack.c.bf16 %v9176, %v9175
      %v9200 = vpack.c.bf16 %v9178, %v9177
      %v9201 = vpack.c.bf16 %v9180, %v9179
      %v9202 = vpack.c.bf16 %v9182, %v9181
      %v9203 = vpack.c.bf16 %v9184, %v9183
      %v9204 = vpack.c.bf16 %v9186, %v9185
      %v9205 = vpack.c.bf16 %v9188, %v9187
      %v9206 = vpack.c.bf16 %v9190, %v9189
      %v9207 = vld [vmem:[%s18 + $0x80] sm:$0xf]
      %v9208 = vld [vmem:[%s18 + $0x84] sm:$0xf]
      %v9209 = vld [vmem:[%s18 + $0x88] sm:$0xf]
      %v9210 = vld [vmem:[%s18 + $0x8c] sm:$0xf]
      %v9211 = vld [vmem:[%s18 + $0x90] sm:$0xf]
      %v9212 = vld [vmem:[%s18 + $0x94] sm:$0xf]
      %v9213 = vld [vmem:[%s18 + $0x98] sm:$0xf]
      %v9214 = vld [vmem:[%s18 + $0x9c] sm:$0xf]
      %v9215 = vld [vmem:[%s18 + $0xa0] sm:$0xf]
      %v9216 = vld [vmem:[%s18 + $0xa4] sm:$0xf]
      %v9217 = vld [vmem:[%s18 + $0xa8] sm:$0xf]
      %v9218 = vld [vmem:[%s18 + $0xac] sm:$0xf]
      %v9219 = vld [vmem:[%s18 + $0xb0] sm:$0xf]
      %v9220 = vld [vmem:[%s18 + $0xb4] sm:$0xf]
      %v9221 = vld [vmem:[%s18 + $0xb8] sm:$0xf]
      %v9222 = vld [vmem:[%s18 + $0xbc] sm:$0xf]
      %v9239 = vunpack.c.l.b16 %v9207
      %v9240 = vunpack.c.l.b16 %v9208
      %v9241 = vunpack.c.l.b16 %v9209
      %v9242 = vunpack.c.l.b16 %v9210
      %v9243 = vunpack.c.l.b16 %v9211
      %v9244 = vunpack.c.l.b16 %v9212
      %v9245 = vunpack.c.l.b16 %v9213
      %v9246 = vunpack.c.l.b16 %v9214
      %v9247 = vunpack.c.l.b16 %v9215
      %v9248 = vunpack.c.l.b16 %v9216
      %v9249 = vunpack.c.l.b16 %v9217
      %v9250 = vunpack.c.l.b16 %v9218
      %v9251 = vunpack.c.l.b16 %v9219
      %v9252 = vunpack.c.l.b16 %v9220
      %v9253 = vunpack.c.l.b16 %v9221
      %v9254 = vunpack.c.l.b16 %v9222
      %v9255 = vpack.c.b16 %v9240, %v9239
      %v9256 = vpack.c.b16 %v9242, %v9241
      %v9257 = vpack.c.b16 %v9244, %v9243
      %v9258 = vpack.c.b16 %v9246, %v9245
      %v9259 = vpack.c.b16 %v9248, %v9247
      %v9260 = vpack.c.b16 %v9250, %v9249
      %v9261 = vpack.c.b16 %v9252, %v9251
      %v9262 = vpack.c.b16 %v9254, %v9253
      %9271 = vmatpush.bf16.msra.mxu0 %v9262
      %9272 = vmatpush.bf16.msra.mxu0 %v9261
      %9273 = vmatpush.bf16.msra.mxu0 %v9260
      %9274 = vmatpush.bf16.msra.mxu0 %v9259
      %9275 = vmatpush.bf16.msra.mxu0 %v9258
      %9276 = vmatpush.bf16.msra.mxu0 %v9257
      %9277 = vmatpush.bf16.msra.mxu0 %v9256
      %9278 = vmatpush.bf16.msra.mxu0 %v9255
      %9279 = vmatmul.bf16.gmra.mxu0 %v9191
      %v9280 = vpop.f32.mrf.mxu0
      %v9281 = vadd.f32 0.0, %v9280
      %v9282 = vpop.f32.mrf.mxu0
      %v9283 = vadd.f32 0.0, %v9282
      %9284 = vmatmul.bf16.gmra.mxu0 %v9192
      %v9285 = vpop.f32.mrf.mxu0
      %v9286 = vadd.f32 0.0, %v9285
      %v9287 = vpop.f32.mrf.mxu0
      %v9288 = vadd.f32 0.0, %v9287
      %9289 = vmatmul.bf16.gmra.mxu0 %v9193
      %v9290 = vpop.f32.mrf.mxu0
      %v9291 = vadd.f32 0.0, %v9290
      %v9292 = vpop.f32.mrf.mxu0
      %v9293 = vadd.f32 0.0, %v9292
      %9294 = vmatmul.bf16.gmra.mxu0 %v9194
      %v9295 = vpop.f32.mrf.mxu0
      %v9296 = vadd.f32 0.0, %v9295
      %v9297 = vpop.f32.mrf.mxu0
      %v9298 = vadd.f32 0.0, %v9297
      %9299 = vmatmul.bf16.gmra.mxu0 %v9195
      %v9300 = vpop.f32.mrf.mxu0
      %v9301 = vadd.f32 0.0, %v9300
      %v9302 = vpop.f32.mrf.mxu0
      %v9303 = vadd.f32 0.0, %v9302
      %9304 = vmatmul.bf16.gmra.mxu0 %v9196
      %v9305 = vpop.f32.mrf.mxu0
      %v9306 = vadd.f32 0.0, %v9305
      %v9307 = vpop.f32.mrf.mxu0
      %v9308 = vadd.f32 0.0, %v9307
      %9309 = vmatmul.bf16.gmra.mxu0 %v9197
      %v9310 = vpop.f32.mrf.mxu0
      %v9311 = vadd.f32 0.0, %v9310
      %v9312 = vpop.f32.mrf.mxu0
      %v9313 = vadd.f32 0.0, %v9312
      %9314 = vmatmul.bf16.gmra.mxu0 %v9198
      %v9315 = vpop.f32.mrf.mxu0
      %v9316 = vadd.f32 0.0, %v9315
      %v9317 = vpop.f32.mrf.mxu0
      %v9318 = vadd.f32 0.0, %v9317
      %9319 = vmatmul.bf16.gmra.mxu0 %v9199
      %v9320 = vpop.f32.mrf.mxu0
      %v9321 = vadd.f32 0.0, %v9320
      %v9322 = vpop.f32.mrf.mxu0
      %v9323 = vadd.f32 0.0, %v9322
      %9324 = vmatmul.bf16.gmra.mxu0 %v9200
      %v9325 = vpop.f32.mrf.mxu0
      %v9326 = vadd.f32 0.0, %v9325
      %v9327 = vpop.f32.mrf.mxu0
      %v9328 = vadd.f32 0.0, %v9327
      %9329 = vmatmul.bf16.gmra.mxu0 %v9201
      %v9330 = vpop.f32.mrf.mxu0
      %v9331 = vadd.f32 0.0, %v9330
      %v9332 = vpop.f32.mrf.mxu0
      %v9333 = vadd.f32 0.0, %v9332
      %9334 = vmatmul.bf16.gmra.mxu0 %v9202
      %v9335 = vpop.f32.mrf.mxu0
      %v9336 = vadd.f32 0.0, %v9335
      %v9337 = vpop.f32.mrf.mxu0
      %v9338 = vadd.f32 0.0, %v9337
      %9339 = vmatmul.bf16.gmra.mxu0 %v9203
      %v9340 = vpop.f32.mrf.mxu0
      %v9341 = vadd.f32 0.0, %v9340
      %v9342 = vpop.f32.mrf.mxu0
      %v9343 = vadd.f32 0.0, %v9342
      %9344 = vmatmul.bf16.gmra.mxu0 %v9204
      %v9345 = vpop.f32.mrf.mxu0
      %v9346 = vadd.f32 0.0, %v9345
      %v9347 = vpop.f32.mrf.mxu0
      %v9348 = vadd.f32 0.0, %v9347
      %9349 = vmatmul.bf16.gmra.mxu0 %v9205
      %v9350 = vpop.f32.mrf.mxu0
      %v9351 = vadd.f32 0.0, %v9350
      %v9352 = vpop.f32.mrf.mxu0
      %v9353 = vadd.f32 0.0, %v9352
      %9354 = vmatmul.bf16.gmra.mxu0 %v9206
      %v9355 = vpop.f32.mrf.mxu0
      %v9356 = vadd.f32 0.0, %v9355
      %v9357 = vpop.f32.mrf.mxu0
      %v9358 = vadd.f32 0.0, %v9357
      %9359 = vdwg.mxu0
      %v9360 = vadd.f32 %v9080, %v9281
      %v9361 = vadd.f32 %v9082, %v9283
      %v9362 = vadd.f32 %v9085, %v9286
      %v9363 = vadd.f32 %v9087, %v9288
      %v9364 = vadd.f32 %v9090, %v9291
      %v9365 = vadd.f32 %v9092, %v9293
      %v9366 = vadd.f32 %v9095, %v9296
      %v9367 = vadd.f32 %v9097, %v9298
      %v9368 = vadd.f32 %v9100, %v9301
      %v9369 = vadd.f32 %v9102, %v9303
      %v9370 = vadd.f32 %v9105, %v9306
      %v9371 = vadd.f32 %v9107, %v9308
      %v9372 = vadd.f32 %v9110, %v9311
      %v9373 = vadd.f32 %v9112, %v9313
      %v9374 = vadd.f32 %v9115, %v9316
      %v9375 = vadd.f32 %v9117, %v9318
      %v9376 = vadd.f32 %v9120, %v9321
      %v9377 = vadd.f32 %v9122, %v9323
      %v9378 = vadd.f32 %v9125, %v9326
      %v9379 = vadd.f32 %v9127, %v9328
      %v9380 = vadd.f32 %v9130, %v9331
      %v9381 = vadd.f32 %v9132, %v9333
      %v9382 = vadd.f32 %v9135, %v9336
      %v9383 = vadd.f32 %v9137, %v9338
      %v9384 = vadd.f32 %v9140, %v9341
      %v9385 = vadd.f32 %v9142, %v9343
      %v9386 = vadd.f32 %v9145, %v9346
      %v9387 = vadd.f32 %v9147, %v9348
      %v9388 = vadd.f32 %v9150, %v9351
      %v9389 = vadd.f32 %v9152, %v9353
      %v9390 = vadd.f32 %v9155, %v9356
      %v9391 = vadd.f32 %v9157, %v9358
      %v9392 = vld [vmem:[#allocation3 + $0x18] sm:$0xff]
      %v9393 = vld [vmem:[#allocation3 + $0x20] sm:$0xff]
      %v9394 = vld [vmem:[#allocation3 + $0x28] sm:$0xff]
      %v9395 = vld [vmem:[#allocation3 + $0x30] sm:$0xff]
      %v9396 = vld [vmem:[#allocation3 + $0x38] sm:$0xff]
      %v9397 = vld [vmem:[#allocation3 + $0x40] sm:$0xff]
      %v9398 = vld [vmem:[#allocation3 + $0x48] sm:$0xff]
      %v9399 = vld [vmem:[#allocation3 + $0x50] sm:$0xff]
      %v9400 = vld [vmem:[#allocation3 + $0x58] sm:$0xff]
      %v9401 = vld [vmem:[#allocation3 + $0x60] sm:$0xff]
      %v9402 = vld [vmem:[#allocation3 + $0x68] sm:$0xff]
      %v9403 = vld [vmem:[#allocation3 + $0x70] sm:$0xff]
      %v9404 = vld [vmem:[#allocation3 + $0x78] sm:$0xff]
      %v9405 = vld [vmem:[#allocation3 + $0x80] sm:$0xff]
      %v9406 = vld [vmem:[#allocation3 + $0x88] sm:$0xff]
      %v9407 = vld [vmem:[#allocation3 + $0x90] sm:$0xff]
      %v9408 = vld [vmem:[#allocation3 + $0xd8] sm:$0xff]
      %v9409 = vld [vmem:[#allocation3 + $0xe0] sm:$0xff]
      %v9410 = vld [vmem:[#allocation3 + $0xe8] sm:$0xff]
      %v9411 = vld [vmem:[#allocation3 + $0xf0] sm:$0xff]
      %v9412 = vld [vmem:[#allocation3 + $0xf8] sm:$0xff]
      %v9413 = vld [vmem:[#allocation3 + $0x100] sm:$0xff]
      %v9414 = vld [vmem:[#allocation3 + $0x108] sm:$0xff]
      %v9415 = vld [vmem:[#allocation3 + $0x110] sm:$0xff]
      %v9416 = vld [vmem:[#allocation3 + $0x118] sm:$0xff]
      %v9417 = vld [vmem:[#allocation3 + $0x120] sm:$0xff]
      %v9418 = vld [vmem:[#allocation3 + $0x128] sm:$0xff]
      %v9419 = vld [vmem:[#allocation3 + $0x130] sm:$0xff]
      %v9420 = vld [vmem:[#allocation3 + $0x138] sm:$0xff]
      %v9421 = vld [vmem:[#allocation3 + $0x140] sm:$0xff]
      %v9422 = vld [vmem:[#allocation3 + $0x148] sm:$0xff]
      %v9423 = vld [vmem:[#allocation3 + $0x150] sm:$0xff]
      %v9424 = vpack.c.bf16 %v9393, %v9392
      %v9425 = vpack.c.bf16 %v9395, %v9394
      %v9426 = vpack.c.bf16 %v9397, %v9396
      %v9427 = vpack.c.bf16 %v9399, %v9398
      %v9428 = vpack.c.bf16 %v9401, %v9400
      %v9429 = vpack.c.bf16 %v9403, %v9402
      %v9430 = vpack.c.bf16 %v9405, %v9404
      %v9431 = vpack.c.bf16 %v9407, %v9406
      %v9432 = vpack.c.bf16 %v9409, %v9408
      %v9433 = vpack.c.bf16 %v9411, %v9410
      %v9434 = vpack.c.bf16 %v9413, %v9412
      %v9435 = vpack.c.bf16 %v9415, %v9414
      %v9436 = vpack.c.bf16 %v9417, %v9416
      %v9437 = vpack.c.bf16 %v9419, %v9418
      %v9438 = vpack.c.bf16 %v9421, %v9420
      %v9439 = vpack.c.bf16 %v9423, %v9422
      %v9440 = vld [vmem:[%s18 + $0xc0] sm:$0xf]
      %v9441 = vld [vmem:[%s18 + $0xc4] sm:$0xf]
      %v9442 = vld [vmem:[%s18 + $0xc8] sm:$0xf]
      %v9443 = vld [vmem:[%s18 + $0xcc] sm:$0xf]
      %v9444 = vld [vmem:[%s18 + $0xd0] sm:$0xf]
      %v9445 = vld [vmem:[%s18 + $0xd4] sm:$0xf]
      %v9446 = vld [vmem:[%s18 + $0xd8] sm:$0xf]
      %v9447 = vld [vmem:[%s18 + $0xdc] sm:$0xf]
      %v9448 = vld [vmem:[%s18 + $0xe0] sm:$0xf]
      %v9449 = vld [vmem:[%s18 + $0xe4] sm:$0xf]
      %v9450 = vld [vmem:[%s18 + $0xe8] sm:$0xf]
      %v9451 = vld [vmem:[%s18 + $0xec] sm:$0xf]
      %v9452 = vld [vmem:[%s18 + $0xf0] sm:$0xf]
      %v9453 = vld [vmem:[%s18 + $0xf4] sm:$0xf]
      %v9454 = vld [vmem:[%s18 + $0xf8] sm:$0xf]
      %v9455 = vld [vmem:[%s18 + $0xfc] sm:$0xf]
      %v9472 = vunpack.c.l.b16 %v9440
      %v9473 = vunpack.c.l.b16 %v9441
      %v9474 = vunpack.c.l.b16 %v9442
      %v9475 = vunpack.c.l.b16 %v9443
      %v9476 = vunpack.c.l.b16 %v9444
      %v9477 = vunpack.c.l.b16 %v9445
      %v9478 = vunpack.c.l.b16 %v9446
      %v9479 = vunpack.c.l.b16 %v9447
      %v9480 = vunpack.c.l.b16 %v9448
      %v9481 = vunpack.c.l.b16 %v9449
      %v9482 = vunpack.c.l.b16 %v9450
      %v9483 = vunpack.c.l.b16 %v9451
      %v9484 = vunpack.c.l.b16 %v9452
      %v9485 = vunpack.c.l.b16 %v9453
      %v9486 = vunpack.c.l.b16 %v9454
      %v9487 = vunpack.c.l.b16 %v9455
      %v9488 = vpack.c.b16 %v9473, %v9472
      %v9489 = vpack.c.b16 %v9475, %v9474
      %v9490 = vpack.c.b16 %v9477, %v9476
      %v9491 = vpack.c.b16 %v9479, %v9478
      %v9492 = vpack.c.b16 %v9481, %v9480
      %v9493 = vpack.c.b16 %v9483, %v9482
      %v9494 = vpack.c.b16 %v9485, %v9484
      %v9495 = vpack.c.b16 %v9487, %v9486
      %9504 = vmatpush.bf16.msra.mxu0 %v9495
      %9505 = vmatpush.bf16.msra.mxu0 %v9494
      %9506 = vmatpush.bf16.msra.mxu0 %v9493
      %9507 = vmatpush.bf16.msra.mxu0 %v9492
      %9508 = vmatpush.bf16.msra.mxu0 %v9491
      %9509 = vmatpush.bf16.msra.mxu0 %v9490
      %9510 = vmatpush.bf16.msra.mxu0 %v9489
      %9511 = vmatpush.bf16.msra.mxu0 %v9488
      %9512 = vmatmul.bf16.gmra.mxu0 %v9424
      %v9513 = vpop.f32.mrf.mxu0
      %v9514 = vadd.f32 0.0, %v9513
      %v9515 = vpop.f32.mrf.mxu0
      %v9516 = vadd.f32 0.0, %v9515
      %9517 = vmatmul.bf16.gmra.mxu0 %v9425
      %v9518 = vpop.f32.mrf.mxu0
      %v9519 = vadd.f32 0.0, %v9518
      %v9520 = vpop.f32.mrf.mxu0
      %v9521 = vadd.f32 0.0, %v9520
      %9522 = vmatmul.bf16.gmra.mxu0 %v9426
      %v9523 = vpop.f32.mrf.mxu0
      %v9524 = vadd.f32 0.0, %v9523
      %v9525 = vpop.f32.mrf.mxu0
      %v9526 = vadd.f32 0.0, %v9525
      %9527 = vmatmul.bf16.gmra.mxu0 %v9427
      %v9528 = vpop.f32.mrf.mxu0
      %v9529 = vadd.f32 0.0, %v9528
      %v9530 = vpop.f32.mrf.mxu0
      %v9531 = vadd.f32 0.0, %v9530
      %9532 = vmatmul.bf16.gmra.mxu0 %v9428
      %v9533 = vpop.f32.mrf.mxu0
      %v9534 = vadd.f32 0.0, %v9533
      %v9535 = vpop.f32.mrf.mxu0
      %v9536 = vadd.f32 0.0, %v9535
      %9537 = vmatmul.bf16.gmra.mxu0 %v9429
      %v9538 = vpop.f32.mrf.mxu0
      %v9539 = vadd.f32 0.0, %v9538
      %v9540 = vpop.f32.mrf.mxu0
      %v9541 = vadd.f32 0.0, %v9540
      %9542 = vmatmul.bf16.gmra.mxu0 %v9430
      %v9543 = vpop.f32.mrf.mxu0
      %v9544 = vadd.f32 0.0, %v9543
      %v9545 = vpop.f32.mrf.mxu0
      %v9546 = vadd.f32 0.0, %v9545
      %9547 = vmatmul.bf16.gmra.mxu0 %v9431
      %v9548 = vpop.f32.mrf.mxu0
      %v9549 = vadd.f32 0.0, %v9548
      %v9550 = vpop.f32.mrf.mxu0
      %v9551 = vadd.f32 0.0, %v9550
      %9552 = vmatmul.bf16.gmra.mxu0 %v9432
      %v9553 = vpop.f32.mrf.mxu0
      %v9554 = vadd.f32 0.0, %v9553
      %v9555 = vpop.f32.mrf.mxu0
      %v9556 = vadd.f32 0.0, %v9555
      %9557 = vmatmul.bf16.gmra.mxu0 %v9433
      %v9558 = vpop.f32.mrf.mxu0
      %v9559 = vadd.f32 0.0, %v9558
      %v9560 = vpop.f32.mrf.mxu0
      %v9561 = vadd.f32 0.0, %v9560
      %9562 = vmatmul.bf16.gmra.mxu0 %v9434
      %v9563 = vpop.f32.mrf.mxu0
      %v9564 = vadd.f32 0.0, %v9563
      %v9565 = vpop.f32.mrf.mxu0
      %v9566 = vadd.f32 0.0, %v9565
      %9567 = vmatmul.bf16.gmra.mxu0 %v9435
      %v9568 = vpop.f32.mrf.mxu0
      %v9569 = vadd.f32 0.0, %v9568
      %v9570 = vpop.f32.mrf.mxu0
      %v9571 = vadd.f32 0.0, %v9570
      %9572 = vmatmul.bf16.gmra.mxu0 %v9436
      %v9573 = vpop.f32.mrf.mxu0
      %v9574 = vadd.f32 0.0, %v9573
      %v9575 = vpop.f32.mrf.mxu0
      %v9576 = vadd.f32 0.0, %v9575
      %9577 = vmatmul.bf16.gmra.mxu0 %v9437
      %v9578 = vpop.f32.mrf.mxu0
      %v9579 = vadd.f32 0.0, %v9578
      %v9580 = vpop.f32.mrf.mxu0
      %v9581 = vadd.f32 0.0, %v9580
      %9582 = vmatmul.bf16.gmra.mxu0 %v9438
      %v9583 = vpop.f32.mrf.mxu0
      %v9584 = vadd.f32 0.0, %v9583
      %v9585 = vpop.f32.mrf.mxu0
      %v9586 = vadd.f32 0.0, %v9585
      %9587 = vmatmul.bf16.gmra.mxu0 %v9439
      %v9588 = vpop.f32.mrf.mxu0
      %v9589 = vadd.f32 0.0, %v9588
      %v9590 = vpop.f32.mrf.mxu0
      %v9591 = vadd.f32 0.0, %v9590
      %9592 = vdwg.mxu0
      %v9593 = vadd.f32 %v9360, %v9514
      %v9594 = vadd.f32 %v9361, %v9516
      %v9595 = vadd.f32 %v9362, %v9519
      %v9596 = vadd.f32 %v9363, %v9521
      %v9597 = vadd.f32 %v9364, %v9524
      %v9598 = vadd.f32 %v9365, %v9526
      %v9599 = vadd.f32 %v9366, %v9529
      %v9600 = vadd.f32 %v9367, %v9531
      %v9601 = vadd.f32 %v9368, %v9534
      %v9602 = vadd.f32 %v9369, %v9536
      %v9603 = vadd.f32 %v9370, %v9539
      %v9604 = vadd.f32 %v9371, %v9541
      %v9605 = vadd.f32 %v9372, %v9544
      %v9606 = vadd.f32 %v9373, %v9546
      %v9607 = vadd.f32 %v9374, %v9549
      %v9608 = vadd.f32 %v9375, %v9551
      %v9609 = vadd.f32 %v9376, %v9554
      %v9610 = vadd.f32 %v9377, %v9556
      %v9611 = vadd.f32 %v9378, %v9559
      %v9612 = vadd.f32 %v9379, %v9561
      %v9613 = vadd.f32 %v9380, %v9564
      %v9614 = vadd.f32 %v9381, %v9566
      %v9615 = vadd.f32 %v9382, %v9569
      %v9616 = vadd.f32 %v9383, %v9571
      %v9617 = vadd.f32 %v9384, %v9574
      %v9618 = vadd.f32 %v9385, %v9576
      %v9619 = vadd.f32 %v9386, %v9579
      %v9620 = vadd.f32 %v9387, %v9581
      %v9621 = vadd.f32 %v9388, %v9584
      %v9622 = vadd.f32 %v9389, %v9586
      %v9623 = vadd.f32 %v9390, %v9589
      %v9624 = vadd.f32 %v9391, %v9591
      %v9625 = vld [vmem:[#allocation3 + $0x20] sm:$0xff]
      %v9626 = vld [vmem:[#allocation3 + $0x28] sm:$0xff]
      %v9627 = vld [vmem:[#allocation3 + $0x30] sm:$0xff]
      %v9628 = vld [vmem:[#allocation3 + $0x38] sm:$0xff]
      %v9629 = vld [vmem:[#allocation3 + $0x40] sm:$0xff]
      %v9630 = vld [vmem:[#allocation3 + $0x48] sm:$0xff]
      %v9631 = vld [vmem:[#allocation3 + $0x50] sm:$0xff]
      %v9632 = vld [vmem:[#allocation3 + $0x58] sm:$0xff]
      %v9633 = vld [vmem:[#allocation3 + $0x60] sm:$0xff]
      %v9634 = vld [vmem:[#allocation3 + $0x68] sm:$0xff]
      %v9635 = vld [vmem:[#allocation3 + $0x70] sm:$0xff]
      %v9636 = vld [vmem:[#allocation3 + $0x78] sm:$0xff]
      %v9637 = vld [vmem:[#allocation3 + $0x80] sm:$0xff]
      %v9638 = vld [vmem:[#allocation3 + $0x88] sm:$0xff]
      %v9639 = vld [vmem:[#allocation3 + $0x90] sm:$0xff]
      %v9640 = vld [vmem:[#allocation3 + $0x98] sm:$0xff]
      %v9641 = vld [vmem:[#allocation3 + $0xe0] sm:$0xff]
      %v9642 = vld [vmem:[#allocation3 + $0xe8] sm:$0xff]
      %v9643 = vld [vmem:[#allocation3 + $0xf0] sm:$0xff]
      %v9644 = vld [vmem:[#allocation3 + $0xf8] sm:$0xff]
      %v9645 = vld [vmem:[#allocation3 + $0x100] sm:$0xff]
      %v9646 = vld [vmem:[#allocation3 + $0x108] sm:$0xff]
      %v9647 = vld [vmem:[#allocation3 + $0x110] sm:$0xff]
      %v9648 = vld [vmem:[#allocation3 + $0x118] sm:$0xff]
      %v9649 = vld [vmem:[#allocation3 + $0x120] sm:$0xff]
      %v9650 = vld [vmem:[#allocation3 + $0x128] sm:$0xff]
      %v9651 = vld [vmem:[#allocation3 + $0x130] sm:$0xff]
      %v9652 = vld [vmem:[#allocation3 + $0x138] sm:$0xff]
      %v9653 = vld [vmem:[#allocation3 + $0x140] sm:$0xff]
      %v9654 = vld [vmem:[#allocation3 + $0x148] sm:$0xff]
      %v9655 = vld [vmem:[#allocation3 + $0x150] sm:$0xff]
      %v9656 = vld [vmem:[#allocation3 + $0x158] sm:$0xff]
      %v9657 = vpack.c.bf16 %v9626, %v9625
      %v9658 = vpack.c.bf16 %v9628, %v9627
      %v9659 = vpack.c.bf16 %v9630, %v9629
      %v9660 = vpack.c.bf16 %v9632, %v9631
      %v9661 = vpack.c.bf16 %v9634, %v9633
      %v9662 = vpack.c.bf16 %v9636, %v9635
      %v9663 = vpack.c.bf16 %v9638, %v9637
      %v9664 = vpack.c.bf16 %v9640, %v9639
      %v9665 = vpack.c.bf16 %v9642, %v9641
      %v9666 = vpack.c.bf16 %v9644, %v9643
      %v9667 = vpack.c.bf16 %v9646, %v9645
      %v9668 = vpack.c.bf16 %v9648, %v9647
      %v9669 = vpack.c.bf16 %v9650, %v9649
      %v9670 = vpack.c.bf16 %v9652, %v9651
      %v9671 = vpack.c.bf16 %v9654, %v9653
      %v9672 = vpack.c.bf16 %v9656, %v9655
      %v9673 = vld [vmem:[%s18 + $0x100] sm:$0xf]
      %v9674 = vld [vmem:[%s18 + $0x104] sm:$0xf]
      %v9675 = vld [vmem:[%s18 + $0x108] sm:$0xf]
      %v9676 = vld [vmem:[%s18 + $0x10c] sm:$0xf]
      %v9677 = vld [vmem:[%s18 + $0x110] sm:$0xf]
      %v9678 = vld [vmem:[%s18 + $0x114] sm:$0xf]
      %v9679 = vld [vmem:[%s18 + $0x118] sm:$0xf]
      %v9680 = vld [vmem:[%s18 + $0x11c] sm:$0xf]
      %v9681 = vld [vmem:[%s18 + $0x120] sm:$0xf]
      %v9682 = vld [vmem:[%s18 + $0x124] sm:$0xf]
      %v9683 = vld [vmem:[%s18 + $0x128] sm:$0xf]
      %v9684 = vld [vmem:[%s18 + $0x12c] sm:$0xf]
      %v9685 = vld [vmem:[%s18 + $0x130] sm:$0xf]
      %v9686 = vld [vmem:[%s18 + $0x134] sm:$0xf]
      %v9687 = vld [vmem:[%s18 + $0x138] sm:$0xf]
      %v9688 = vld [vmem:[%s18 + $0x13c] sm:$0xf]
      %v9705 = vunpack.c.l.b16 %v9673
      %v9706 = vunpack.c.l.b16 %v9674
      %v9707 = vunpack.c.l.b16 %v9675
      %v9708 = vunpack.c.l.b16 %v9676
      %v9709 = vunpack.c.l.b16 %v9677
      %v9710 = vunpack.c.l.b16 %v9678
      %v9711 = vunpack.c.l.b16 %v9679
      %v9712 = vunpack.c.l.b16 %v9680
      %v9713 = vunpack.c.l.b16 %v9681
      %v9714 = vunpack.c.l.b16 %v9682
      %v9715 = vunpack.c.l.b16 %v9683
      %v9716 = vunpack.c.l.b16 %v9684
      %v9717 = vunpack.c.l.b16 %v9685
      %v9718 = vunpack.c.l.b16 %v9686
      %v9719 = vunpack.c.l.b16 %v9687
      %v9720 = vunpack.c.l.b16 %v9688
      %v9721 = vpack.c.b16 %v9706, %v9705
      %v9722 = vpack.c.b16 %v9708, %v9707
      %v9723 = vpack.c.b16 %v9710, %v9709
      %v9724 = vpack.c.b16 %v9712, %v9711
      %v9725 = vpack.c.b16 %v9714, %v9713
      %v9726 = vpack.c.b16 %v9716, %v9715
      %v9727 = vpack.c.b16 %v9718, %v9717
      %v9728 = vpack.c.b16 %v9720, %v9719
      %9737 = vmatpush.bf16.msra.mxu0 %v9728
      %9738 = vmatpush.bf16.msra.mxu0 %v9727
      %9739 = vmatpush.bf16.msra.mxu0 %v9726
      %9740 = vmatpush.bf16.msra.mxu0 %v9725
      %9741 = vmatpush.bf16.msra.mxu0 %v9724
      %9742 = vmatpush.bf16.msra.mxu0 %v9723
      %9743 = vmatpush.bf16.msra.mxu0 %v9722
      %9744 = vmatpush.bf16.msra.mxu0 %v9721
      %9745 = vmatmul.bf16.gmra.mxu0 %v9657
      %v9746 = vpop.f32.mrf.mxu0
      %v9747 = vadd.f32 0.0, %v9746
      %v9748 = vpop.f32.mrf.mxu0
      %v9749 = vadd.f32 0.0, %v9748
      %9750 = vmatmul.bf16.gmra.mxu0 %v9658
      %v9751 = vpop.f32.mrf.mxu0
      %v9752 = vadd.f32 0.0, %v9751
      %v9753 = vpop.f32.mrf.mxu0
      %v9754 = vadd.f32 0.0, %v9753
      %9755 = vmatmul.bf16.gmra.mxu0 %v9659
      %v9756 = vpop.f32.mrf.mxu0
      %v9757 = vadd.f32 0.0, %v9756
      %v9758 = vpop.f32.mrf.mxu0
      %v9759 = vadd.f32 0.0, %v9758
      %9760 = vmatmul.bf16.gmra.mxu0 %v9660
      %v9761 = vpop.f32.mrf.mxu0
      %v9762 = vadd.f32 0.0, %v9761
      %v9763 = vpop.f32.mrf.mxu0
      %v9764 = vadd.f32 0.0, %v9763
      %9765 = vmatmul.bf16.gmra.mxu0 %v9661
      %v9766 = vpop.f32.mrf.mxu0
      %v9767 = vadd.f32 0.0, %v9766
      %v9768 = vpop.f32.mrf.mxu0
      %v9769 = vadd.f32 0.0, %v9768
      %9770 = vmatmul.bf16.gmra.mxu0 %v9662
      %v9771 = vpop.f32.mrf.mxu0
      %v9772 = vadd.f32 0.0, %v9771
      %v9773 = vpop.f32.mrf.mxu0
      %v9774 = vadd.f32 0.0, %v9773
      %9775 = vmatmul.bf16.gmra.mxu0 %v9663
      %v9776 = vpop.f32.mrf.mxu0
      %v9777 = vadd.f32 0.0, %v9776
      %v9778 = vpop.f32.mrf.mxu0
      %v9779 = vadd.f32 0.0, %v9778
      %9780 = vmatmul.bf16.gmra.mxu0 %v9664
      %v9781 = vpop.f32.mrf.mxu0
      %v9782 = vadd.f32 0.0, %v9781
      %v9783 = vpop.f32.mrf.mxu0
      %v9784 = vadd.f32 0.0, %v9783
      %9785 = vmatmul.bf16.gmra.mxu0 %v9665
      %v9786 = vpop.f32.mrf.mxu0
      %v9787 = vadd.f32 0.0, %v9786
      %v9788 = vpop.f32.mrf.mxu0
      %v9789 = vadd.f32 0.0, %v9788
      %9790 = vmatmul.bf16.gmra.mxu0 %v9666
      %v9791 = vpop.f32.mrf.mxu0
      %v9792 = vadd.f32 0.0, %v9791
      %v9793 = vpop.f32.mrf.mxu0
      %v9794 = vadd.f32 0.0, %v9793
      %9795 = vmatmul.bf16.gmra.mxu0 %v9667
      %v9796 = vpop.f32.mrf.mxu0
      %v9797 = vadd.f32 0.0, %v9796
      %v9798 = vpop.f32.mrf.mxu0
      %v9799 = vadd.f32 0.0, %v9798
      %9800 = vmatmul.bf16.gmra.mxu0 %v9668
      %v9801 = vpop.f32.mrf.mxu0
      %v9802 = vadd.f32 0.0, %v9801
      %v9803 = vpop.f32.mrf.mxu0
      %v9804 = vadd.f32 0.0, %v9803
      %9805 = vmatmul.bf16.gmra.mxu0 %v9669
      %v9806 = vpop.f32.mrf.mxu0
      %v9807 = vadd.f32 0.0, %v9806
      %v9808 = vpop.f32.mrf.mxu0
      %v9809 = vadd.f32 0.0, %v9808
      %9810 = vmatmul.bf16.gmra.mxu0 %v9670
      %v9811 = vpop.f32.mrf.mxu0
      %v9812 = vadd.f32 0.0, %v9811
      %v9813 = vpop.f32.mrf.mxu0
      %v9814 = vadd.f32 0.0, %v9813
      %9815 = vmatmul.bf16.gmra.mxu0 %v9671
      %v9816 = vpop.f32.mrf.mxu0
      %v9817 = vadd.f32 0.0, %v9816
      %v9818 = vpop.f32.mrf.mxu0
      %v9819 = vadd.f32 0.0, %v9818
      %9820 = vmatmul.bf16.gmra.mxu0 %v9672
      %v9821 = vpop.f32.mrf.mxu0
      %v9822 = vadd.f32 0.0, %v9821
      %v9823 = vpop.f32.mrf.mxu0
      %v9824 = vadd.f32 0.0, %v9823
      %9825 = vdwg.mxu0
      %v9826 = vadd.f32 %v9593, %v9747
      %v9827 = vadd.f32 %v9594, %v9749
      %v9828 = vadd.f32 %v9595, %v9752
      %v9829 = vadd.f32 %v9596, %v9754
      %v9830 = vadd.f32 %v9597, %v9757
      %v9831 = vadd.f32 %v9598, %v9759
      %v9832 = vadd.f32 %v9599, %v9762
      %v9833 = vadd.f32 %v9600, %v9764
      %v9834 = vadd.f32 %v9601, %v9767
      %v9835 = vadd.f32 %v9602, %v9769
      %v9836 = vadd.f32 %v9603, %v9772
      %v9837 = vadd.f32 %v9604, %v9774
      %v9838 = vadd.f32 %v9605, %v9777
      %v9839 = vadd.f32 %v9606, %v9779
      %v9840 = vadd.f32 %v9607, %v9782
      %v9841 = vadd.f32 %v9608, %v9784
      %v9842 = vadd.f32 %v9609, %v9787
      %v9843 = vadd.f32 %v9610, %v9789
      %v9844 = vadd.f32 %v9611, %v9792
      %v9845 = vadd.f32 %v9612, %v9794
      %v9846 = vadd.f32 %v9613, %v9797
      %v9847 = vadd.f32 %v9614, %v9799
      %v9848 = vadd.f32 %v9615, %v9802
      %v9849 = vadd.f32 %v9616, %v9804
      %v9850 = vadd.f32 %v9617, %v9807
      %v9851 = vadd.f32 %v9618, %v9809
      %v9852 = vadd.f32 %v9619, %v9812
      %v9853 = vadd.f32 %v9620, %v9814
      %v9854 = vadd.f32 %v9621, %v9817
      %v9855 = vadd.f32 %v9622, %v9819
      %v9856 = vadd.f32 %v9623, %v9822
      %v9857 = vadd.f32 %v9624, %v9824
      %v9858 = vld [vmem:[#allocation3 + $0x28] sm:$0xff]
      %v9859 = vld [vmem:[#allocation3 + $0x30] sm:$0xff]
      %v9860 = vld [vmem:[#allocation3 + $0x38] sm:$0xff]
      %v9861 = vld [vmem:[#allocation3 + $0x40] sm:$0xff]
      %v9862 = vld [vmem:[#allocation3 + $0x48] sm:$0xff]
      %v9863 = vld [vmem:[#allocation3 + $0x50] sm:$0xff]
      %v9864 = vld [vmem:[#allocation3 + $0x58] sm:$0xff]
      %v9865 = vld [vmem:[#allocation3 + $0x60] sm:$0xff]
      %v9866 = vld [vmem:[#allocation3 + $0x68] sm:$0xff]
      %v9867 = vld [vmem:[#allocation3 + $0x70] sm:$0xff]
      %v9868 = vld [vmem:[#allocation3 + $0x78] sm:$0xff]
      %v9869 = vld [vmem:[#allocation3 + $0x80] sm:$0xff]
      %v9870 = vld [vmem:[#allocation3 + $0x88] sm:$0xff]
      %v9871 = vld [vmem:[#allocation3 + $0x90] sm:$0xff]
      %v9872 = vld [vmem:[#allocation3 + $0x98] sm:$0xff]
      %v9873 = vld [vmem:[#allocation3 + $0xa0] sm:$0xff]
      %v9874 = vld [vmem:[#allocation3 + $0xe8] sm:$0xff]
      %v9875 = vld [vmem:[#allocation3 + $0xf0] sm:$0xff]
      %v9876 = vld [vmem:[#allocation3 + $0xf8] sm:$0xff]
      %v9877 = vld [vmem:[#allocation3 + $0x100] sm:$0xff]
      %v9878 = vld [vmem:[#allocation3 + $0x108] sm:$0xff]
      %v9879 = vld [vmem:[#allocation3 + $0x110] sm:$0xff]
      %v9880 = vld [vmem:[#allocation3 + $0x118] sm:$0xff]
      %v9881 = vld [vmem:[#allocation3 + $0x120] sm:$0xff]
      %v9882 = vld [vmem:[#allocation3 + $0x128] sm:$0xff]
      %v9883 = vld [vmem:[#allocation3 + $0x130] sm:$0xff]
      %v9884 = vld [vmem:[#allocation3 + $0x138] sm:$0xff]
      %v9885 = vld [vmem:[#allocation3 + $0x140] sm:$0xff]
      %v9886 = vld [vmem:[#allocation3 + $0x148] sm:$0xff]
      %v9887 = vld [vmem:[#allocation3 + $0x150] sm:$0xff]
      %v9888 = vld [vmem:[#allocation3 + $0x158] sm:$0xff]
      %v9889 = vld [vmem:[#allocation3 + $0x160] sm:$0xff]
      %v9890 = vpack.c.bf16 %v9859, %v9858
      %v9891 = vpack.c.bf16 %v9861, %v9860
      %v9892 = vpack.c.bf16 %v9863, %v9862
      %v9893 = vpack.c.bf16 %v9865, %v9864
      %v9894 = vpack.c.bf16 %v9867, %v9866
      %v9895 = vpack.c.bf16 %v9869, %v9868
      %v9896 = vpack.c.bf16 %v9871, %v9870
      %v9897 = vpack.c.bf16 %v9873, %v9872
      %v9898 = vpack.c.bf16 %v9875, %v9874
      %v9899 = vpack.c.bf16 %v9877, %v9876
      %v9900 = vpack.c.bf16 %v9879, %v9878
      %v9901 = vpack.c.bf16 %v9881, %v9880
      %v9902 = vpack.c.bf16 %v9883, %v9882
      %v9903 = vpack.c.bf16 %v9885, %v9884
      %v9904 = vpack.c.bf16 %v9887, %v9886
      %v9905 = vpack.c.bf16 %v9889, %v9888
      %v9906 = vld [vmem:[%s18 + $0x140] sm:$0xf]
      %v9907 = vld [vmem:[%s18 + $0x144] sm:$0xf]
      %v9908 = vld [vmem:[%s18 + $0x148] sm:$0xf]
      %v9909 = vld [vmem:[%s18 + $0x14c] sm:$0xf]
      %v9910 = vld [vmem:[%s18 + $0x150] sm:$0xf]
      %v9911 = vld [vmem:[%s18 + $0x154] sm:$0xf]
      %v9912 = vld [vmem:[%s18 + $0x158] sm:$0xf]
      %v9913 = vld [vmem:[%s18 + $0x15c] sm:$0xf]
      %v9914 = vld [vmem:[%s18 + $0x160] sm:$0xf]
      %v9915 = vld [vmem:[%s18 + $0x164] sm:$0xf]
      %v9916 = vld [vmem:[%s18 + $0x168] sm:$0xf]
      %v9917 = vld [vmem:[%s18 + $0x16c] sm:$0xf]
      %v9918 = vld [vmem:[%s18 + $0x170] sm:$0xf]
      %v9919 = vld [vmem:[%s18 + $0x174] sm:$0xf]
      %v9920 = vld [vmem:[%s18 + $0x178] sm:$0xf]
      %v9921 = vld [vmem:[%s18 + $0x17c] sm:$0xf]
      %v9938 = vunpack.c.l.b16 %v9906
      %v9939 = vunpack.c.l.b16 %v9907
      %v9940 = vunpack.c.l.b16 %v9908
      %v9941 = vunpack.c.l.b16 %v9909
      %v9942 = vunpack.c.l.b16 %v9910
      %v9943 = vunpack.c.l.b16 %v9911
      %v9944 = vunpack.c.l.b16 %v9912
      %v9945 = vunpack.c.l.b16 %v9913
      %v9946 = vunpack.c.l.b16 %v9914
      %v9947 = vunpack.c.l.b16 %v9915
      %v9948 = vunpack.c.l.b16 %v9916
      %v9949 = vunpack.c.l.b16 %v9917
      %v9950 = vunpack.c.l.b16 %v9918
      %v9951 = vunpack.c.l.b16 %v9919
      %v9952 = vunpack.c.l.b16 %v9920
      %v9953 = vunpack.c.l.b16 %v9921
      %v9954 = vpack.c.b16 %v9939, %v9938
      %v9955 = vpack.c.b16 %v9941, %v9940
      %v9956 = vpack.c.b16 %v9943, %v9942
      %v9957 = vpack.c.b16 %v9945, %v9944
      %v9958 = vpack.c.b16 %v9947, %v9946
      %v9959 = vpack.c.b16 %v9949, %v9948
      %v9960 = vpack.c.b16 %v9951, %v9950
      %v9961 = vpack.c.b16 %v9953, %v9952
      %9970 = vmatpush.bf16.msra.mxu0 %v9961
      %9971 = vmatpush.bf16.msra.mxu0 %v9960
      %9972 = vmatpush.bf16.msra.mxu0 %v9959
      %9973 = vmatpush.bf16.msra.mxu0 %v9958
      %9974 = vmatpush.bf16.msra.mxu0 %v9957
      %9975 = vmatpush.bf16.msra.mxu0 %v9956
      %9976 = vmatpush.bf16.msra.mxu0 %v9955
      %9977 = vmatpush.bf16.msra.mxu0 %v9954
      %9978 = vmatmul.bf16.gmra.mxu0 %v9890
      %v9979 = vpop.f32.mrf.mxu0
      %v9980 = vadd.f32 0.0, %v9979
      %v9981 = vpop.f32.mrf.mxu0
      %v9982 = vadd.f32 0.0, %v9981
      %9983 = vmatmul.bf16.gmra.mxu0 %v9891
      %v9984 = vpop.f32.mrf.mxu0
      %v9985 = vadd.f32 0.0, %v9984
      %v9986 = vpop.f32.mrf.mxu0
      %v9987 = vadd.f32 0.0, %v9986
      %9988 = vmatmul.bf16.gmra.mxu0 %v9892
      %v9989 = vpop.f32.mrf.mxu0
      %v9990 = vadd.f32 0.0, %v9989
      %v9991 = vpop.f32.mrf.mxu0
      %v9992 = vadd.f32 0.0, %v9991
      %9993 = vmatmul.bf16.gmra.mxu0 %v9893
      %v9994 = vpop.f32.mrf.mxu0
      %v9995 = vadd.f32 0.0, %v9994
      %v9996 = vpop.f32.mrf.mxu0
      %v9997 = vadd.f32 0.0, %v9996
      %9998 = vmatmul.bf16.gmra.mxu0 %v9894
      %v9999 = vpop.f32.mrf.mxu0
      %v10000 = vadd.f32 0.0, %v9999
      %v10001 = vpop.f32.mrf.mxu0
      %v10002 = vadd.f32 0.0, %v10001
      %10003 = vmatmul.bf16.gmra.mxu0 %v9895
      %v10004 = vpop.f32.mrf.mxu0
      %v10005 = vadd.f32 0.0, %v10004
      %v10006 = vpop.f32.mrf.mxu0
      %v10007 = vadd.f32 0.0, %v10006
      %10008 = vmatmul.bf16.gmra.mxu0 %v9896
      %v10009 = vpop.f32.mrf.mxu0
      %v10010 = vadd.f32 0.0, %v10009
      %v10011 = vpop.f32.mrf.mxu0
      %v10012 = vadd.f32 0.0, %v10011
      %10013 = vmatmul.bf16.gmra.mxu0 %v9897
      %v10014 = vpop.f32.mrf.mxu0
      %v10015 = vadd.f32 0.0, %v10014
      %v10016 = vpop.f32.mrf.mxu0
      %v10017 = vadd.f32 0.0, %v10016
      %10018 = vmatmul.bf16.gmra.mxu0 %v9898
      %v10019 = vpop.f32.mrf.mxu0
      %v10020 = vadd.f32 0.0, %v10019
      %v10021 = vpop.f32.mrf.mxu0
      %v10022 = vadd.f32 0.0, %v10021
      %10023 = vmatmul.bf16.gmra.mxu0 %v9899
      %v10024 = vpop.f32.mrf.mxu0
      %v10025 = vadd.f32 0.0, %v10024
      %v10026 = vpop.f32.mrf.mxu0
      %v10027 = vadd.f32 0.0, %v10026
      %10028 = vmatmul.bf16.gmra.mxu0 %v9900
      %v10029 = vpop.f32.mrf.mxu0
      %v10030 = vadd.f32 0.0, %v10029
      %v10031 = vpop.f32.mrf.mxu0
      %v10032 = vadd.f32 0.0, %v10031
      %10033 = vmatmul.bf16.gmra.mxu0 %v9901
      %v10034 = vpop.f32.mrf.mxu0
      %v10035 = vadd.f32 0.0, %v10034
      %v10036 = vpop.f32.mrf.mxu0
      %v10037 = vadd.f32 0.0, %v10036
      %10038 = vmatmul.bf16.gmra.mxu0 %v9902
      %v10039 = vpop.f32.mrf.mxu0
      %v10040 = vadd.f32 0.0, %v10039
      %v10041 = vpop.f32.mrf.mxu0
      %v10042 = vadd.f32 0.0, %v10041
      %10043 = vmatmul.bf16.gmra.mxu0 %v9903
      %v10044 = vpop.f32.mrf.mxu0
      %v10045 = vadd.f32 0.0, %v10044
      %v10046 = vpop.f32.mrf.mxu0
      %v10047 = vadd.f32 0.0, %v10046
      %10048 = vmatmul.bf16.gmra.mxu0 %v9904
      %v10049 = vpop.f32.mrf.mxu0
      %v10050 = vadd.f32 0.0, %v10049
      %v10051 = vpop.f32.mrf.mxu0
      %v10052 = vadd.f32 0.0, %v10051
      %10053 = vmatmul.bf16.gmra.mxu0 %v9905
      %v10054 = vpop.f32.mrf.mxu0
      %v10055 = vadd.f32 0.0, %v10054
      %v10056 = vpop.f32.mrf.mxu0
      %v10057 = vadd.f32 0.0, %v10056
      %10058 = vdwg.mxu0
      %v10059 = vadd.f32 %v9826, %v9980
      %v10060 = vadd.f32 %v9827, %v9982
      %v10061 = vadd.f32 %v9828, %v9985
      %v10062 = vadd.f32 %v9829, %v9987
      %v10063 = vadd.f32 %v9830, %v9990
      %v10064 = vadd.f32 %v9831, %v9992
      %v10065 = vadd.f32 %v9832, %v9995
      %v10066 = vadd.f32 %v9833, %v9997
      %v10067 = vadd.f32 %v9834, %v10000
      %v10068 = vadd.f32 %v9835, %v10002
      %v10069 = vadd.f32 %v9836, %v10005
      %v10070 = vadd.f32 %v9837, %v10007
      %v10071 = vadd.f32 %v9838, %v10010
      %v10072 = vadd.f32 %v9839, %v10012
      %v10073 = vadd.f32 %v9840, %v10015
      %v10074 = vadd.f32 %v9841, %v10017
      %v10075 = vadd.f32 %v9842, %v10020
      %v10076 = vadd.f32 %v9843, %v10022
      %v10077 = vadd.f32 %v9844, %v10025
      %v10078 = vadd.f32 %v9845, %v10027
      %v10079 = vadd.f32 %v9846, %v10030
      %v10080 = vadd.f32 %v9847, %v10032
      %v10081 = vadd.f32 %v9848, %v10035
      %v10082 = vadd.f32 %v9849, %v10037
      %v10083 = vadd.f32 %v9850, %v10040
      %v10084 = vadd.f32 %v9851, %v10042
      %v10085 = vadd.f32 %v9852, %v10045
      %v10086 = vadd.f32 %v9853, %v10047
      %v10087 = vadd.f32 %v9854, %v10050
      %v10088 = vadd.f32 %v9855, %v10052
      %v10089 = vadd.f32 %v9856, %v10055
      %v10090 = vadd.f32 %v9857, %v10057
      %v10091 = vld [vmem:[#allocation3 + $0x30] sm:$0xff]
      %v10092 = vld [vmem:[#allocation3 + $0x38] sm:$0xff]
      %v10093 = vld [vmem:[#allocation3 + $0x40] sm:$0xff]
      %v10094 = vld [vmem:[#allocation3 + $0x48] sm:$0xff]
      %v10095 = vld [vmem:[#allocation3 + $0x50] sm:$0xff]
      %v10096 = vld [vmem:[#allocation3 + $0x58] sm:$0xff]
      %v10097 = vld [vmem:[#allocation3 + $0x60] sm:$0xff]
      %v10098 = vld [vmem:[#allocation3 + $0x68] sm:$0xff]
      %v10099 = vld [vmem:[#allocation3 + $0x70] sm:$0xff]
      %v10100 = vld [vmem:[#allocation3 + $0x78] sm:$0xff]
      %v10101 = vld [vmem:[#allocation3 + $0x80] sm:$0xff]
      %v10102 = vld [vmem:[#allocation3 + $0x88] sm:$0xff]
      %v10103 = vld [vmem:[#allocation3 + $0x90] sm:$0xff]
      %v10104 = vld [vmem:[#allocation3 + $0x98] sm:$0xff]
      %v10105 = vld [vmem:[#allocation3 + $0xa0] sm:$0xff]
      %v10106 = vld [vmem:[#allocation3 + $0xa8] sm:$0xff]
      %v10107 = vld [vmem:[#allocation3 + $0xf0] sm:$0xff]
      %v10108 = vld [vmem:[#allocation3 + $0xf8] sm:$0xff]
      %v10109 = vld [vmem:[#allocation3 + $0x100] sm:$0xff]
      %v10110 = vld [vmem:[#allocation3 + $0x108] sm:$0xff]
      %v10111 = vld [vmem:[#allocation3 + $0x110] sm:$0xff]
      %v10112 = vld [vmem:[#allocation3 + $0x118] sm:$0xff]
      %v10113 = vld [vmem:[#allocation3 + $0x120] sm:$0xff]
      %v10114 = vld [vmem:[#allocation3 + $0x128] sm:$0xff]
      %v10115 = vld [vmem:[#allocation3 + $0x130] sm:$0xff]
      %v10116 = vld [vmem:[#allocation3 + $0x138] sm:$0xff]
      %v10117 = vld [vmem:[#allocation3 + $0x140] sm:$0xff]
      %v10118 = vld [vmem:[#allocation3 + $0x148] sm:$0xff]
      %v10119 = vld [vmem:[#allocation3 + $0x150] sm:$0xff]
      %v10120 = vld [vmem:[#allocation3 + $0x158] sm:$0xff]
      %v10121 = vld [vmem:[#allocation3 + $0x160] sm:$0xff]
      %v10122 = vld [vmem:[#allocation3 + $0x168] sm:$0xff]
      %v10123 = vpack.c.bf16 %v10092, %v10091
      %v10124 = vpack.c.bf16 %v10094, %v10093
      %v10125 = vpack.c.bf16 %v10096, %v10095
      %v10126 = vpack.c.bf16 %v10098, %v10097
      %v10127 = vpack.c.bf16 %v10100, %v10099
      %v10128 = vpack.c.bf16 %v10102, %v10101
      %v10129 = vpack.c.bf16 %v10104, %v10103
      %v10130 = vpack.c.bf16 %v10106, %v10105
      %v10131 = vpack.c.bf16 %v10108, %v10107
      %v10132 = vpack.c.bf16 %v10110, %v10109
      %v10133 = vpack.c.bf16 %v10112, %v10111
      %v10134 = vpack.c.bf16 %v10114, %v10113
      %v10135 = vpack.c.bf16 %v10116, %v10115
      %v10136 = vpack.c.bf16 %v10118, %v10117
      %v10137 = vpack.c.bf16 %v10120, %v10119
      %v10138 = vpack.c.bf16 %v10122, %v10121
      %v10139 = vld [vmem:[%s18 + $0x180] sm:$0xf]
      %v10140 = vld [vmem:[%s18 + $0x184] sm:$0xf]
      %v10141 = vld [vmem:[%s18 + $0x188] sm:$0xf]
      %v10142 = vld [vmem:[%s18 + $0x18c] sm:$0xf]
      %v10143 = vld [vmem:[%s18 + $0x190] sm:$0xf]
      %v10144 = vld [vmem:[%s18 + $0x194] sm:$0xf]
      %v10145 = vld [vmem:[%s18 + $0x198] sm:$0xf]
      %v10146 = vld [vmem:[%s18 + $0x19c] sm:$0xf]
      %v10147 = vld [vmem:[%s18 + $0x1a0] sm:$0xf]
      %v10148 = vld [vmem:[%s18 + $0x1a4] sm:$0xf]
      %v10149 = vld [vmem:[%s18 + $0x1a8] sm:$0xf]
      %v10150 = vld [vmem:[%s18 + $0x1ac] sm:$0xf]
      %v10151 = vld [vmem:[%s18 + $0x1b0] sm:$0xf]
      %v10152 = vld [vmem:[%s18 + $0x1b4] sm:$0xf]
      %v10153 = vld [vmem:[%s18 + $0x1b8] sm:$0xf]
      %v10154 = vld [vmem:[%s18 + $0x1bc] sm:$0xf]
      %v10171 = vunpack.c.l.b16 %v10139
      %v10172 = vunpack.c.l.b16 %v10140
      %v10173 = vunpack.c.l.b16 %v10141
      %v10174 = vunpack.c.l.b16 %v10142
      %v10175 = vunpack.c.l.b16 %v10143
      %v10176 = vunpack.c.l.b16 %v10144
      %v10177 = vunpack.c.l.b16 %v10145
      %v10178 = vunpack.c.l.b16 %v10146
      %v10179 = vunpack.c.l.b16 %v10147
      %v10180 = vunpack.c.l.b16 %v10148
      %v10181 = vunpack.c.l.b16 %v10149
      %v10182 = vunpack.c.l.b16 %v10150
      %v10183 = vunpack.c.l.b16 %v10151
      %v10184 = vunpack.c.l.b16 %v10152
      %v10185 = vunpack.c.l.b16 %v10153
      %v10186 = vunpack.c.l.b16 %v10154
      %v10187 = vpack.c.b16 %v10172, %v10171
      %v10188 = vpack.c.b16 %v10174, %v10173
      %v10189 = vpack.c.b16 %v10176, %v10175
      %v10190 = vpack.c.b16 %v10178, %v10177
      %v10191 = vpack.c.b16 %v10180, %v10179
      %v10192 = vpack.c.b16 %v10182, %v10181
      %v10193 = vpack.c.b16 %v10184, %v10183
      %v10194 = vpack.c.b16 %v10186, %v10185
      %10203 = vmatpush.bf16.msra.mxu0 %v10194
      %10204 = vmatpush.bf16.msra.mxu0 %v10193
      %10205 = vmatpush.bf16.msra.mxu0 %v10192
      %10206 = vmatpush.bf16.msra.mxu0 %v10191
      %10207 = vmatpush.bf16.msra.mxu0 %v10190
      %10208 = vmatpush.bf16.msra.mxu0 %v10189
      %10209 = vmatpush.bf16.msra.mxu0 %v10188
      %10210 = vmatpush.bf16.msra.mxu0 %v10187
      %10211 = vmatmul.bf16.gmra.mxu0 %v10123
      %v10212 = vpop.f32.mrf.mxu0
      %v10213 = vadd.f32 0.0, %v10212
      %v10214 = vpop.f32.mrf.mxu0
      %v10215 = vadd.f32 0.0, %v10214
      %10216 = vmatmul.bf16.gmra.mxu0 %v10124
      %v10217 = vpop.f32.mrf.mxu0
      %v10218 = vadd.f32 0.0, %v10217
      %v10219 = vpop.f32.mrf.mxu0
      %v10220 = vadd.f32 0.0, %v10219
      %10221 = vmatmul.bf16.gmra.mxu0 %v10125
      %v10222 = vpop.f32.mrf.mxu0
      %v10223 = vadd.f32 0.0, %v10222
      %v10224 = vpop.f32.mrf.mxu0
      %v10225 = vadd.f32 0.0, %v10224
      %10226 = vmatmul.bf16.gmra.mxu0 %v10126
      %v10227 = vpop.f32.mrf.mxu0
      %v10228 = vadd.f32 0.0, %v10227
      %v10229 = vpop.f32.mrf.mxu0
      %v10230 = vadd.f32 0.0, %v10229
      %10231 = vmatmul.bf16.gmra.mxu0 %v10127
      %v10232 = vpop.f32.mrf.mxu0
      %v10233 = vadd.f32 0.0, %v10232
      %v10234 = vpop.f32.mrf.mxu0
      %v10235 = vadd.f32 0.0, %v10234
      %10236 = vmatmul.bf16.gmra.mxu0 %v10128
      %v10237 = vpop.f32.mrf.mxu0
      %v10238 = vadd.f32 0.0, %v10237
      %v10239 = vpop.f32.mrf.mxu0
      %v10240 = vadd.f32 0.0, %v10239
      %10241 = vmatmul.bf16.gmra.mxu0 %v10129
      %v10242 = vpop.f32.mrf.mxu0
      %v10243 = vadd.f32 0.0, %v10242
      %v10244 = vpop.f32.mrf.mxu0
      %v10245 = vadd.f32 0.0, %v10244
      %10246 = vmatmul.bf16.gmra.mxu0 %v10130
      %v10247 = vpop.f32.mrf.mxu0
      %v10248 = vadd.f32 0.0, %v10247
      %v10249 = vpop.f32.mrf.mxu0
      %v10250 = vadd.f32 0.0, %v10249
      %10251 = vmatmul.bf16.gmra.mxu0 %v10131
      %v10252 = vpop.f32.mrf.mxu0
      %v10253 = vadd.f32 0.0, %v10252
      %v10254 = vpop.f32.mrf.mxu0
      %v10255 = vadd.f32 0.0, %v10254
      %10256 = vmatmul.bf16.gmra.mxu0 %v10132
      %v10257 = vpop.f32.mrf.mxu0
      %v10258 = vadd.f32 0.0, %v10257
      %v10259 = vpop.f32.mrf.mxu0
      %v10260 = vadd.f32 0.0, %v10259
      %10261 = vmatmul.bf16.gmra.mxu0 %v10133
      %v10262 = vpop.f32.mrf.mxu0
      %v10263 = vadd.f32 0.0, %v10262
      %v10264 = vpop.f32.mrf.mxu0
      %v10265 = vadd.f32 0.0, %v10264
      %10266 = vmatmul.bf16.gmra.mxu0 %v10134
      %v10267 = vpop.f32.mrf.mxu0
      %v10268 = vadd.f32 0.0, %v10267
      %v10269 = vpop.f32.mrf.mxu0
      %v10270 = vadd.f32 0.0, %v10269
      %10271 = vmatmul.bf16.gmra.mxu0 %v10135
      %v10272 = vpop.f32.mrf.mxu0
      %v10273 = vadd.f32 0.0, %v10272
      %v10274 = vpop.f32.mrf.mxu0
      %v10275 = vadd.f32 0.0, %v10274
      %10276 = vmatmul.bf16.gmra.mxu0 %v10136
      %v10277 = vpop.f32.mrf.mxu0
      %v10278 = vadd.f32 0.0, %v10277
      %v10279 = vpop.f32.mrf.mxu0
      %v10280 = vadd.f32 0.0, %v10279
      %10281 = vmatmul.bf16.gmra.mxu0 %v10137
      %v10282 = vpop.f32.mrf.mxu0
      %v10283 = vadd.f32 0.0, %v10282
      %v10284 = vpop.f32.mrf.mxu0
      %v10285 = vadd.f32 0.0, %v10284
      %10286 = vmatmul.bf16.gmra.mxu0 %v10138
      %v10287 = vpop.f32.mrf.mxu0
      %v10288 = vadd.f32 0.0, %v10287
      %v10289 = vpop.f32.mrf.mxu0
      %v10290 = vadd.f32 0.0, %v10289
      %10291 = vdwg.mxu0
      %v10292 = vadd.f32 %v10059, %v10213
      %v10293 = vadd.f32 %v10060, %v10215
      %v10294 = vadd.f32 %v10061, %v10218
      %v10295 = vadd.f32 %v10062, %v10220
      %v10296 = vadd.f32 %v10063, %v10223
      %v10297 = vadd.f32 %v10064, %v10225
      %v10298 = vadd.f32 %v10065, %v10228
      %v10299 = vadd.f32 %v10066, %v10230
      %v10300 = vadd.f32 %v10067, %v10233
      %v10301 = vadd.f32 %v10068, %v10235
      %v10302 = vadd.f32 %v10069, %v10238
      %v10303 = vadd.f32 %v10070, %v10240
      %v10304 = vadd.f32 %v10071, %v10243
      %v10305 = vadd.f32 %v10072, %v10245
      %v10306 = vadd.f32 %v10073, %v10248
      %v10307 = vadd.f32 %v10074, %v10250
      %v10308 = vadd.f32 %v10075, %v10253
      %v10309 = vadd.f32 %v10076, %v10255
      %v10310 = vadd.f32 %v10077, %v10258
      %v10311 = vadd.f32 %v10078, %v10260
      %v10312 = vadd.f32 %v10079, %v10263
      %v10313 = vadd.f32 %v10080, %v10265
      %v10314 = vadd.f32 %v10081, %v10268
      %v10315 = vadd.f32 %v10082, %v10270
      %v10316 = vadd.f32 %v10083, %v10273
      %v10317 = vadd.f32 %v10084, %v10275
      %v10318 = vadd.f32 %v10085, %v10278
      %v10319 = vadd.f32 %v10086, %v10280
      %v10320 = vadd.f32 %v10087, %v10283
      %v10321 = vadd.f32 %v10088, %v10285
      %v10322 = vadd.f32 %v10089, %v10288
      %v10323 = vadd.f32 %v10090, %v10290
      %v10324 = vld [vmem:[#allocation3 + $0x38] sm:$0xff]
      %v10325 = vld [vmem:[#allocation3 + $0x40] sm:$0xff]
      %v10326 = vld [vmem:[#allocation3 + $0x48] sm:$0xff]
      %v10327 = vld [vmem:[#allocation3 + $0x50] sm:$0xff]
      %v10328 = vld [vmem:[#allocation3 + $0x58] sm:$0xff]
      %v10329 = vld [vmem:[#allocation3 + $0x60] sm:$0xff]
      %v10330 = vld [vmem:[#allocation3 + $0x68] sm:$0xff]
      %v10331 = vld [vmem:[#allocation3 + $0x70] sm:$0xff]
      %v10332 = vld [vmem:[#allocation3 + $0x78] sm:$0xff]
      %v10333 = vld [vmem:[#allocation3 + $0x80] sm:$0xff]
      %v10334 = vld [vmem:[#allocation3 + $0x88] sm:$0xff]
      %v10335 = vld [vmem:[#allocation3 + $0x90] sm:$0xff]
      %v10336 = vld [vmem:[#allocation3 + $0x98] sm:$0xff]
      %v10337 = vld [vmem:[#allocation3 + $0xa0] sm:$0xff]
      %v10338 = vld [vmem:[#allocation3 + $0xa8] sm:$0xff]
      %v10339 = vld [vmem:[#allocation3 + $0xb0] sm:$0xff]
      %v10340 = vld [vmem:[#allocation3 + $0xf8] sm:$0xff]
      %v10341 = vld [vmem:[#allocation3 + $0x100] sm:$0xff]
      %v10342 = vld [vmem:[#allocation3 + $0x108] sm:$0xff]
      %v10343 = vld [vmem:[#allocation3 + $0x110] sm:$0xff]
      %v10344 = vld [vmem:[#allocation3 + $0x118] sm:$0xff]
      %v10345 = vld [vmem:[#allocation3 + $0x120] sm:$0xff]
      %v10346 = vld [vmem:[#allocation3 + $0x128] sm:$0xff]
      %v10347 = vld [vmem:[#allocation3 + $0x130] sm:$0xff]
      %v10348 = vld [vmem:[#allocation3 + $0x138] sm:$0xff]
      %v10349 = vld [vmem:[#allocation3 + $0x140] sm:$0xff]
      %v10350 = vld [vmem:[#allocation3 + $0x148] sm:$0xff]
      %v10351 = vld [vmem:[#allocation3 + $0x150] sm:$0xff]
      %v10352 = vld [vmem:[#allocation3 + $0x158] sm:$0xff]
      %v10353 = vld [vmem:[#allocation3 + $0x160] sm:$0xff]
      %v10354 = vld [vmem:[#allocation3 + $0x168] sm:$0xff]
      %v10355 = vld [vmem:[#allocation3 + $0x170] sm:$0xff]
      %v10356 = vpack.c.bf16 %v10325, %v10324
      %v10357 = vpack.c.bf16 %v10327, %v10326
      %v10358 = vpack.c.bf16 %v10329, %v10328
      %v10359 = vpack.c.bf16 %v10331, %v10330
      %v10360 = vpack.c.bf16 %v10333, %v10332
      %v10361 = vpack.c.bf16 %v10335, %v10334
      %v10362 = vpack.c.bf16 %v10337, %v10336
      %v10363 = vpack.c.bf16 %v10339, %v10338
      %v10364 = vpack.c.bf16 %v10341, %v10340
      %v10365 = vpack.c.bf16 %v10343, %v10342
      %v10366 = vpack.c.bf16 %v10345, %v10344
      %v10367 = vpack.c.bf16 %v10347, %v10346
      %v10368 = vpack.c.bf16 %v10349, %v10348
      %v10369 = vpack.c.bf16 %v10351, %v10350
      %v10370 = vpack.c.bf16 %v10353, %v10352
      %v10371 = vpack.c.bf16 %v10355, %v10354
      %v10372 = vld [vmem:[%s18 + $0x1c0] sm:$0xf]
      %v10373 = vld [vmem:[%s18 + $0x1c4] sm:$0xf]
      %v10374 = vld [vmem:[%s18 + $0x1c8] sm:$0xf]
      %v10375 = vld [vmem:[%s18 + $0x1cc] sm:$0xf]
      %v10376 = vld [vmem:[%s18 + $0x1d0] sm:$0xf]
      %v10377 = vld [vmem:[%s18 + $0x1d4] sm:$0xf]
      %v10378 = vld [vmem:[%s18 + $0x1d8] sm:$0xf]
      %v10379 = vld [vmem:[%s18 + $0x1dc] sm:$0xf]
      %v10380 = vld [vmem:[%s18 + $0x1e0] sm:$0xf]
      %v10381 = vld [vmem:[%s18 + $0x1e4] sm:$0xf]
      %v10382 = vld [vmem:[%s18 + $0x1e8] sm:$0xf]
      %v10383 = vld [vmem:[%s18 + $0x1ec] sm:$0xf]
      %v10384 = vld [vmem:[%s18 + $0x1f0] sm:$0xf]
      %v10385 = vld [vmem:[%s18 + $0x1f4] sm:$0xf]
      %v10386 = vld [vmem:[%s18 + $0x1f8] sm:$0xf]
      %v10387 = vld [vmem:[%s18 + $0x1fc] sm:$0xf]
      %v10404 = vunpack.c.l.b16 %v10372
      %v10405 = vunpack.c.l.b16 %v10373
      %v10406 = vunpack.c.l.b16 %v10374
      %v10407 = vunpack.c.l.b16 %v10375
      %v10408 = vunpack.c.l.b16 %v10376
      %v10409 = vunpack.c.l.b16 %v10377
      %v10410 = vunpack.c.l.b16 %v10378
      %v10411 = vunpack.c.l.b16 %v10379
      %v10412 = vunpack.c.l.b16 %v10380
      %v10413 = vunpack.c.l.b16 %v10381
      %v10414 = vunpack.c.l.b16 %v10382
      %v10415 = vunpack.c.l.b16 %v10383
      %v10416 = vunpack.c.l.b16 %v10384
      %v10417 = vunpack.c.l.b16 %v10385
      %v10418 = vunpack.c.l.b16 %v10386
      %v10419 = vunpack.c.l.b16 %v10387
      %v10420 = vpack.c.b16 %v10405, %v10404
      %v10421 = vpack.c.b16 %v10407, %v10406
      %v10422 = vpack.c.b16 %v10409, %v10408
      %v10423 = vpack.c.b16 %v10411, %v10410
      %v10424 = vpack.c.b16 %v10413, %v10412
      %v10425 = vpack.c.b16 %v10415, %v10414
      %v10426 = vpack.c.b16 %v10417, %v10416
      %v10427 = vpack.c.b16 %v10419, %v10418
      %10436 = vmatpush.bf16.msra.mxu0 %v10427
      %10437 = vmatpush.bf16.msra.mxu0 %v10426
      %10438 = vmatpush.bf16.msra.mxu0 %v10425
      %10439 = vmatpush.bf16.msra.mxu0 %v10424
      %10440 = vmatpush.bf16.msra.mxu0 %v10423
      %10441 = vmatpush.bf16.msra.mxu0 %v10422
      %10442 = vmatpush.bf16.msra.mxu0 %v10421
      %10443 = vmatpush.bf16.msra.mxu0 %v10420
      %10444 = vmatmul.bf16.gmra.mxu0 %v10356
      %v10445 = vpop.f32.mrf.mxu0
      %v10446 = vadd.f32 0.0, %v10445
      %v10447 = vpop.f32.mrf.mxu0
      %v10448 = vadd.f32 0.0, %v10447
      %10449 = vmatmul.bf16.gmra.mxu0 %v10357
      %v10450 = vpop.f32.mrf.mxu0
      %v10451 = vadd.f32 0.0, %v10450
      %v10452 = vpop.f32.mrf.mxu0
      %v10453 = vadd.f32 0.0, %v10452
      %10454 = vmatmul.bf16.gmra.mxu0 %v10358
      %v10455 = vpop.f32.mrf.mxu0
      %v10456 = vadd.f32 0.0, %v10455
      %v10457 = vpop.f32.mrf.mxu0
      %v10458 = vadd.f32 0.0, %v10457
      %10459 = vmatmul.bf16.gmra.mxu0 %v10359
      %v10460 = vpop.f32.mrf.mxu0
      %v10461 = vadd.f32 0.0, %v10460
      %v10462 = vpop.f32.mrf.mxu0
      %v10463 = vadd.f32 0.0, %v10462
      %10464 = vmatmul.bf16.gmra.mxu0 %v10360
      %v10465 = vpop.f32.mrf.mxu0
      %v10466 = vadd.f32 0.0, %v10465
      %v10467 = vpop.f32.mrf.mxu0
      %v10468 = vadd.f32 0.0, %v10467
      %10469 = vmatmul.bf16.gmra.mxu0 %v10361
      %v10470 = vpop.f32.mrf.mxu0
      %v10471 = vadd.f32 0.0, %v10470
      %v10472 = vpop.f32.mrf.mxu0
      %v10473 = vadd.f32 0.0, %v10472
      %10474 = vmatmul.bf16.gmra.mxu0 %v10362
      %v10475 = vpop.f32.mrf.mxu0
      %v10476 = vadd.f32 0.0, %v10475
      %v10477 = vpop.f32.mrf.mxu0
      %v10478 = vadd.f32 0.0, %v10477
      %10479 = vmatmul.bf16.gmra.mxu0 %v10363
      %v10480 = vpop.f32.mrf.mxu0
      %v10481 = vadd.f32 0.0, %v10480
      %v10482 = vpop.f32.mrf.mxu0
      %v10483 = vadd.f32 0.0, %v10482
      %10484 = vmatmul.bf16.gmra.mxu0 %v10364
      %v10485 = vpop.f32.mrf.mxu0
      %v10486 = vadd.f32 0.0, %v10485
      %v10487 = vpop.f32.mrf.mxu0
      %v10488 = vadd.f32 0.0, %v10487
      %10489 = vmatmul.bf16.gmra.mxu0 %v10365
      %v10490 = vpop.f32.mrf.mxu0
      %v10491 = vadd.f32 0.0, %v10490
      %v10492 = vpop.f32.mrf.mxu0
      %v10493 = vadd.f32 0.0, %v10492
      %10494 = vmatmul.bf16.gmra.mxu0 %v10366
      %v10495 = vpop.f32.mrf.mxu0
      %v10496 = vadd.f32 0.0, %v10495
      %v10497 = vpop.f32.mrf.mxu0
      %v10498 = vadd.f32 0.0, %v10497
      %10499 = vmatmul.bf16.gmra.mxu0 %v10367
      %v10500 = vpop.f32.mrf.mxu0
      %v10501 = vadd.f32 0.0, %v10500
      %v10502 = vpop.f32.mrf.mxu0
      %v10503 = vadd.f32 0.0, %v10502
      %10504 = vmatmul.bf16.gmra.mxu0 %v10368
      %v10505 = vpop.f32.mrf.mxu0
      %v10506 = vadd.f32 0.0, %v10505
      %v10507 = vpop.f32.mrf.mxu0
      %v10508 = vadd.f32 0.0, %v10507
      %10509 = vmatmul.bf16.gmra.mxu0 %v10369
      %v10510 = vpop.f32.mrf.mxu0
      %v10511 = vadd.f32 0.0, %v10510
      %v10512 = vpop.f32.mrf.mxu0
      %v10513 = vadd.f32 0.0, %v10512
      %10514 = vmatmul.bf16.gmra.mxu0 %v10370
      %v10515 = vpop.f32.mrf.mxu0
      %v10516 = vadd.f32 0.0, %v10515
      %v10517 = vpop.f32.mrf.mxu0
      %v10518 = vadd.f32 0.0, %v10517
      %10519 = vmatmul.bf16.gmra.mxu0 %v10371
      %v10520 = vpop.f32.mrf.mxu0
      %v10521 = vadd.f32 0.0, %v10520
      %v10522 = vpop.f32.mrf.mxu0
      %v10523 = vadd.f32 0.0, %v10522
      %10524 = vdwg.mxu0
      %v10525 = vadd.f32 %v10292, %v10446
      %v10526 = vadd.f32 %v10293, %v10448
      %v10527 = vadd.f32 %v10294, %v10451
      %v10528 = vadd.f32 %v10295, %v10453
      %v10529 = vadd.f32 %v10296, %v10456
      %v10530 = vadd.f32 %v10297, %v10458
      %v10531 = vadd.f32 %v10298, %v10461
      %v10532 = vadd.f32 %v10299, %v10463
      %v10533 = vadd.f32 %v10300, %v10466
      %v10534 = vadd.f32 %v10301, %v10468
      %v10535 = vadd.f32 %v10302, %v10471
      %v10536 = vadd.f32 %v10303, %v10473
      %v10537 = vadd.f32 %v10304, %v10476
      %v10538 = vadd.f32 %v10305, %v10478
      %v10539 = vadd.f32 %v10306, %v10481
      %v10540 = vadd.f32 %v10307, %v10483
      %v10541 = vadd.f32 %v10308, %v10486
      %v10542 = vadd.f32 %v10309, %v10488
      %v10543 = vadd.f32 %v10310, %v10491
      %v10544 = vadd.f32 %v10311, %v10493
      %v10545 = vadd.f32 %v10312, %v10496
      %v10546 = vadd.f32 %v10313, %v10498
      %v10547 = vadd.f32 %v10314, %v10501
      %v10548 = vadd.f32 %v10315, %v10503
      %v10549 = vadd.f32 %v10316, %v10506
      %v10550 = vadd.f32 %v10317, %v10508
      %v10551 = vadd.f32 %v10318, %v10511
      %v10552 = vadd.f32 %v10319, %v10513
      %v10553 = vadd.f32 %v10320, %v10516
      %v10554 = vadd.f32 %v10321, %v10518
      %v10555 = vadd.f32 %v10322, %v10521
      %v10556 = vadd.f32 %v10323, %v10523
      %v10557 = vld [vmem:[#allocation3 + $0x40] sm:$0xff]
      %v10558 = vld [vmem:[#allocation3 + $0x48] sm:$0xff]
      %v10559 = vld [vmem:[#allocation3 + $0x50] sm:$0xff]
      %v10560 = vld [vmem:[#allocation3 + $0x58] sm:$0xff]
      %v10561 = vld [vmem:[#allocation3 + $0x60] sm:$0xff]
      %v10562 = vld [vmem:[#allocation3 + $0x68] sm:$0xff]
      %v10563 = vld [vmem:[#allocation3 + $0x70] sm:$0xff]
      %v10564 = vld [vmem:[#allocation3 + $0x78] sm:$0xff]
      %v10565 = vld [vmem:[#allocation3 + $0x80] sm:$0xff]
      %v10566 = vld [vmem:[#allocation3 + $0x88] sm:$0xff]
      %v10567 = vld [vmem:[#allocation3 + $0x90] sm:$0xff]
      %v10568 = vld [vmem:[#allocation3 + $0x98] sm:$0xff]
      %v10569 = vld [vmem:[#allocation3 + $0xa0] sm:$0xff]
      %v10570 = vld [vmem:[#allocation3 + $0xa8] sm:$0xff]
      %v10571 = vld [vmem:[#allocation3 + $0xb0] sm:$0xff]
      %v10572 = vld [vmem:[#allocation3 + $0xb8] sm:$0xff]
      %v10573 = vld [vmem:[#allocation3 + $0x100] sm:$0xff]
      %v10574 = vld [vmem:[#allocation3 + $0x108] sm:$0xff]
      %v10575 = vld [vmem:[#allocation3 + $0x110] sm:$0xff]
      %v10576 = vld [vmem:[#allocation3 + $0x118] sm:$0xff]
      %v10577 = vld [vmem:[#allocation3 + $0x120] sm:$0xff]
      %v10578 = vld [vmem:[#allocation3 + $0x128] sm:$0xff]
      %v10579 = vld [vmem:[#allocation3 + $0x130] sm:$0xff]
      %v10580 = vld [vmem:[#allocation3 + $0x138] sm:$0xff]
      %v10581 = vld [vmem:[#allocation3 + $0x140] sm:$0xff]
      %v10582 = vld [vmem:[#allocation3 + $0x148] sm:$0xff]
      %v10583 = vld [vmem:[#allocation3 + $0x150] sm:$0xff]
      %v10584 = vld [vmem:[#allocation3 + $0x158] sm:$0xff]
      %v10585 = vld [vmem:[#allocation3 + $0x160] sm:$0xff]
      %v10586 = vld [vmem:[#allocation3 + $0x168] sm:$0xff]
      %v10587 = vld [vmem:[#allocation3 + $0x170] sm:$0xff]
      %v10588 = vld [vmem:[#allocation3 + $0x178] sm:$0xff]
      %v10589 = vpack.c.bf16 %v10558, %v10557
      %v10590 = vpack.c.bf16 %v10560, %v10559
      %v10591 = vpack.c.bf16 %v10562, %v10561
      %v10592 = vpack.c.bf16 %v10564, %v10563
      %v10593 = vpack.c.bf16 %v10566, %v10565
      %v10594 = vpack.c.bf16 %v10568, %v10567
      %v10595 = vpack.c.bf16 %v10570, %v10569
      %v10596 = vpack.c.bf16 %v10572, %v10571
      %v10597 = vpack.c.bf16 %v10574, %v10573
      %v10598 = vpack.c.bf16 %v10576, %v10575
      %v10599 = vpack.c.bf16 %v10578, %v10577
      %v10600 = vpack.c.bf16 %v10580, %v10579
      %v10601 = vpack.c.bf16 %v10582, %v10581
      %v10602 = vpack.c.bf16 %v10584, %v10583
      %v10603 = vpack.c.bf16 %v10586, %v10585
      %v10604 = vpack.c.bf16 %v10588, %v10587
      %v10605 = vld [vmem:[%s18 + $0x200] sm:$0xf]
      %v10606 = vld [vmem:[%s18 + $0x204] sm:$0xf]
      %v10607 = vld [vmem:[%s18 + $0x208] sm:$0xf]
      %v10608 = vld [vmem:[%s18 + $0x20c] sm:$0xf]
      %v10609 = vld [vmem:[%s18 + $0x210] sm:$0xf]
      %v10610 = vld [vmem:[%s18 + $0x214] sm:$0xf]
      %v10611 = vld [vmem:[%s18 + $0x218] sm:$0xf]
      %v10612 = vld [vmem:[%s18 + $0x21c] sm:$0xf]
      %v10613 = vld [vmem:[%s18 + $0x220] sm:$0xf]
      %v10614 = vld [vmem:[%s18 + $0x224] sm:$0xf]
      %v10615 = vld [vmem:[%s18 + $0x228] sm:$0xf]
      %v10616 = vld [vmem:[%s18 + $0x22c] sm:$0xf]
      %v10617 = vld [vmem:[%s18 + $0x230] sm:$0xf]
      %v10618 = vld [vmem:[%s18 + $0x234] sm:$0xf]
      %v10619 = vld [vmem:[%s18 + $0x238] sm:$0xf]
      %v10620 = vld [vmem:[%s18 + $0x23c] sm:$0xf]
      %v10637 = vunpack.c.l.b16 %v10605
      %v10638 = vunpack.c.l.b16 %v10606
      %v10639 = vunpack.c.l.b16 %v10607
      %v10640 = vunpack.c.l.b16 %v10608
      %v10641 = vunpack.c.l.b16 %v10609
      %v10642 = vunpack.c.l.b16 %v10610
      %v10643 = vunpack.c.l.b16 %v10611
      %v10644 = vunpack.c.l.b16 %v10612
      %v10645 = vunpack.c.l.b16 %v10613
      %v10646 = vunpack.c.l.b16 %v10614
      %v10647 = vunpack.c.l.b16 %v10615
      %v10648 = vunpack.c.l.b16 %v10616
      %v10649 = vunpack.c.l.b16 %v10617
      %v10650 = vunpack.c.l.b16 %v10618
      %v10651 = vunpack.c.l.b16 %v10619
      %v10652 = vunpack.c.l.b16 %v10620
      %v10653 = vpack.c.b16 %v10638, %v10637
      %v10654 = vpack.c.b16 %v10640, %v10639
      %v10655 = vpack.c.b16 %v10642, %v10641
      %v10656 = vpack.c.b16 %v10644, %v10643
      %v10657 = vpack.c.b16 %v10646, %v10645
      %v10658 = vpack.c.b16 %v10648, %v10647
      %v10659 = vpack.c.b16 %v10650, %v10649
      %v10660 = vpack.c.b16 %v10652, %v10651
      %10669 = vmatpush.bf16.msra.mxu0 %v10660
      %10670 = vmatpush.bf16.msra.mxu0 %v10659
      %10671 = vmatpush.bf16.msra.mxu0 %v10658
      %10672 = vmatpush.bf16.msra.mxu0 %v10657
      %10673 = vmatpush.bf16.msra.mxu0 %v10656
      %10674 = vmatpush.bf16.msra.mxu0 %v10655
      %10675 = vmatpush.bf16.msra.mxu0 %v10654
      %10676 = vmatpush.bf16.msra.mxu0 %v10653
      %10677 = vmatmul.bf16.gmra.mxu0 %v10589
      %v10678 = vpop.f32.mrf.mxu0
      %v10679 = vadd.f32 0.0, %v10678
      %v10680 = vpop.f32.mrf.mxu0
      %v10681 = vadd.f32 0.0, %v10680
      %10682 = vmatmul.bf16.gmra.mxu0 %v10590
      %v10683 = vpop.f32.mrf.mxu0
      %v10684 = vadd.f32 0.0, %v10683
      %v10685 = vpop.f32.mrf.mxu0
      %v10686 = vadd.f32 0.0, %v10685
      %10687 = vmatmul.bf16.gmra.mxu0 %v10591
      %v10688 = vpop.f32.mrf.mxu0
      %v10689 = vadd.f32 0.0, %v10688
      %v10690 = vpop.f32.mrf.mxu0
      %v10691 = vadd.f32 0.0, %v10690
      %10692 = vmatmul.bf16.gmra.mxu0 %v10592
      %v10693 = vpop.f32.mrf.mxu0
      %v10694 = vadd.f32 0.0, %v10693
      %v10695 = vpop.f32.mrf.mxu0
      %v10696 = vadd.f32 0.0, %v10695
      %10697 = vmatmul.bf16.gmra.mxu0 %v10593
      %v10698 = vpop.f32.mrf.mxu0
      %v10699 = vadd.f32 0.0, %v10698
      %v10700 = vpop.f32.mrf.mxu0
      %v10701 = vadd.f32 0.0, %v10700
      %10702 = vmatmul.bf16.gmra.mxu0 %v10594
      %v10703 = vpop.f32.mrf.mxu0
      %v10704 = vadd.f32 0.0, %v10703
      %v10705 = vpop.f32.mrf.mxu0
      %v10706 = vadd.f32 0.0, %v10705
      %10707 = vmatmul.bf16.gmra.mxu0 %v10595
      %v10708 = vpop.f32.mrf.mxu0
      %v10709 = vadd.f32 0.0, %v10708
      %v10710 = vpop.f32.mrf.mxu0
      %v10711 = vadd.f32 0.0, %v10710
      %10712 = vmatmul.bf16.gmra.mxu0 %v10596
      %v10713 = vpop.f32.mrf.mxu0
      %v10714 = vadd.f32 0.0, %v10713
      %v10715 = vpop.f32.mrf.mxu0
      %v10716 = vadd.f32 0.0, %v10715
      %10717 = vmatmul.bf16.gmra.mxu0 %v10597
      %v10718 = vpop.f32.mrf.mxu0
      %v10719 = vadd.f32 0.0, %v10718
      %v10720 = vpop.f32.mrf.mxu0
      %v10721 = vadd.f32 0.0, %v10720
      %10722 = vmatmul.bf16.gmra.mxu0 %v10598
      %v10723 = vpop.f32.mrf.mxu0
      %v10724 = vadd.f32 0.0, %v10723
      %v10725 = vpop.f32.mrf.mxu0
      %v10726 = vadd.f32 0.0, %v10725
      %10727 = vmatmul.bf16.gmra.mxu0 %v10599
      %v10728 = vpop.f32.mrf.mxu0
      %v10729 = vadd.f32 0.0, %v10728
      %v10730 = vpop.f32.mrf.mxu0
      %v10731 = vadd.f32 0.0, %v10730
      %10732 = vmatmul.bf16.gmra.mxu0 %v10600
      %v10733 = vpop.f32.mrf.mxu0
      %v10734 = vadd.f32 0.0, %v10733
      %v10735 = vpop.f32.mrf.mxu0
      %v10736 = vadd.f32 0.0, %v10735
      %10737 = vmatmul.bf16.gmra.mxu0 %v10601
      %v10738 = vpop.f32.mrf.mxu0
      %v10739 = vadd.f32 0.0, %v10738
      %v10740 = vpop.f32.mrf.mxu0
      %v10741 = vadd.f32 0.0, %v10740
      %10742 = vmatmul.bf16.gmra.mxu0 %v10602
      %v10743 = vpop.f32.mrf.mxu0
      %v10744 = vadd.f32 0.0, %v10743
      %v10745 = vpop.f32.mrf.mxu0
      %v10746 = vadd.f32 0.0, %v10745
      %10747 = vmatmul.bf16.gmra.mxu0 %v10603
      %v10748 = vpop.f32.mrf.mxu0
      %v10749 = vadd.f32 0.0, %v10748
      %v10750 = vpop.f32.mrf.mxu0
      %v10751 = vadd.f32 0.0, %v10750
      %10752 = vmatmul.bf16.gmra.mxu0 %v10604
      %v10753 = vpop.f32.mrf.mxu0
      %v10754 = vadd.f32 0.0, %v10753
      %v10755 = vpop.f32.mrf.mxu0
      %v10756 = vadd.f32 0.0, %v10755
      %10757 = vdwg.mxu0
      %v10758 = vadd.f32 %v10525, %v10679
      %v10759 = vadd.f32 %v10526, %v10681
      %v10760 = vadd.f32 %v10527, %v10684
      %v10761 = vadd.f32 %v10528, %v10686
      %v10762 = vadd.f32 %v10529, %v10689
      %v10763 = vadd.f32 %v10530, %v10691
      %v10764 = vadd.f32 %v10531, %v10694
      %v10765 = vadd.f32 %v10532, %v10696
      %v10766 = vadd.f32 %v10533, %v10699
      %v10767 = vadd.f32 %v10534, %v10701
      %v10768 = vadd.f32 %v10535, %v10704
      %v10769 = vadd.f32 %v10536, %v10706
      %v10770 = vadd.f32 %v10537, %v10709
      %v10771 = vadd.f32 %v10538, %v10711
      %v10772 = vadd.f32 %v10539, %v10714
      %v10773 = vadd.f32 %v10540, %v10716
      %v10774 = vadd.f32 %v10541, %v10719
      %v10775 = vadd.f32 %v10542, %v10721
      %v10776 = vadd.f32 %v10543, %v10724
      %v10777 = vadd.f32 %v10544, %v10726
      %v10778 = vadd.f32 %v10545, %v10729
      %v10779 = vadd.f32 %v10546, %v10731
      %v10780 = vadd.f32 %v10547, %v10734
      %v10781 = vadd.f32 %v10548, %v10736
      %v10782 = vadd.f32 %v10549, %v10739
      %v10783 = vadd.f32 %v10550, %v10741
      %v10784 = vadd.f32 %v10551, %v10744
      %v10785 = vadd.f32 %v10552, %v10746
      %v10786 = vadd.f32 %v10553, %v10749
      %v10787 = vadd.f32 %v10554, %v10751
      %v10788 = vadd.f32 %v10555, %v10754
      %v10789 = vadd.f32 %v10556, %v10756
      %v10790 = vld [vmem:[%s19] sm:$0x1]
      %v10792 = vperm.slane %v10790, 0
      %v10794 = vadd.f32 %v10758, %v10792
      %v10795 = vadd.f32 %v10759, %v10792
      %v10796 = vadd.f32 %v10760, %v10792
      %v10797 = vadd.f32 %v10761, %v10792
      %v10798 = vadd.f32 %v10762, %v10792
      %v10799 = vadd.f32 %v10763, %v10792
      %v10800 = vadd.f32 %v10764, %v10792
      %v10801 = vadd.f32 %v10765, %v10792
      %v10802 = vadd.f32 %v10766, %v10792
      %v10803 = vadd.f32 %v10767, %v10792
      %v10804 = vadd.f32 %v10768, %v10792
      %v10805 = vadd.f32 %v10769, %v10792
      %v10806 = vadd.f32 %v10770, %v10792
      %v10807 = vadd.f32 %v10771, %v10792
      %v10808 = vadd.f32 %v10772, %v10792
      %v10809 = vadd.f32 %v10773, %v10792
      %v10810 = vadd.f32 %v10774, %v10792
      %v10811 = vadd.f32 %v10775, %v10792
      %v10812 = vadd.f32 %v10776, %v10792
      %v10813 = vadd.f32 %v10777, %v10792
      %v10814 = vadd.f32 %v10778, %v10792
      %v10815 = vadd.f32 %v10779, %v10792
      %v10816 = vadd.f32 %v10780, %v10792
      %v10817 = vadd.f32 %v10781, %v10792
      %v10818 = vadd.f32 %v10782, %v10792
      %v10819 = vadd.f32 %v10783, %v10792
      %v10820 = vadd.f32 %v10784, %v10792
      %v10821 = vadd.f32 %v10785, %v10792
      %v10822 = vadd.f32 %v10786, %v10792
      %v10823 = vadd.f32 %v10787, %v10792
      %v10824 = vadd.f32 %v10788, %v10792
      %v10825 = vadd.f32 %v10789, %v10792
      %v10826 = vadd.f32 %v10794, %v7569
      %v10827 = vadd.f32 %v10795, %v7570
      %v10828 = vadd.f32 %v10796, %v7571
      %v10829 = vadd.f32 %v10797, %v7572
      %v10830 = vadd.f32 %v10798, %v7573
      %v10831 = vadd.f32 %v10799, %v7574
      %v10832 = vadd.f32 %v10800, %v7575
      %v10833 = vadd.f32 %v10801, %v7576
      %v10834 = vadd.f32 %v10802, %v7577
      %v10835 = vadd.f32 %v10803, %v7578
      %v10836 = vadd.f32 %v10804, %v7579
      %v10837 = vadd.f32 %v10805, %v7580
      %v10838 = vadd.f32 %v10806, %v7581
      %v10839 = vadd.f32 %v10807, %v7582
      %v10840 = vadd.f32 %v10808, %v7583
      %v10841 = vadd.f32 %v10809, %v7584
      %v10842 = vadd.f32 %v10810, %v7585
      %v10843 = vadd.f32 %v10811, %v7586
      %v10844 = vadd.f32 %v10812, %v7587
      %v10845 = vadd.f32 %v10813, %v7588
      %v10846 = vadd.f32 %v10814, %v7589
      %v10847 = vadd.f32 %v10815, %v7590
      %v10848 = vadd.f32 %v10816, %v7591
      %v10849 = vadd.f32 %v10817, %v7592
      %v10850 = vadd.f32 %v10818, %v7593
      %v10851 = vadd.f32 %v10819, %v7594
      %v10852 = vadd.f32 %v10820, %v7595
      %v10853 = vadd.f32 %v10821, %v7596
      %v10854 = vadd.f32 %v10822, %v7597
      %v10855 = vadd.f32 %v10823, %v7598
      %v10856 = vadd.f32 %v10824, %v7599
      %v10857 = vadd.f32 %v10825, %v7600
      %v10858 = vmax.f32 %v10826, 0.0
      %v10859 = vmax.f32 %v10827, 0.0
      %v10860 = vmax.f32 %v10828, 0.0
      %v10861 = vmax.f32 %v10829, 0.0
      %v10862 = vmax.f32 %v10830, 0.0
      %v10863 = vmax.f32 %v10831, 0.0
      %v10864 = vmax.f32 %v10832, 0.0
      %v10865 = vmax.f32 %v10833, 0.0
      %v10866 = vmax.f32 %v10834, 0.0
      %v10867 = vmax.f32 %v10835, 0.0
      %v10868 = vmax.f32 %v10836, 0.0
      %v10869 = vmax.f32 %v10837, 0.0
      %v10870 = vmax.f32 %v10838, 0.0
      %v10871 = vmax.f32 %v10839, 0.0
      %v10872 = vmax.f32 %v10840, 0.0
      %v10873 = vmax.f32 %v10841, 0.0
      %v10874 = vmax.f32 %v10842, 0.0
      %v10875 = vmax.f32 %v10843, 0.0
      %v10876 = vmax.f32 %v10844, 0.0
      %v10877 = vmax.f32 %v10845, 0.0
      %v10878 = vmax.f32 %v10846, 0.0
      %v10879 = vmax.f32 %v10847, 0.0
      %v10880 = vmax.f32 %v10848, 0.0
      %v10881 = vmax.f32 %v10849, 0.0
      %v10882 = vmax.f32 %v10850, 0.0
      %v10883 = vmax.f32 %v10851, 0.0
      %v10884 = vmax.f32 %v10852, 0.0
      %v10885 = vmax.f32 %v10853, 0.0
      %v10886 = vmax.f32 %v10854, 0.0
      %v10887 = vmax.f32 %v10855, 0.0
      %v10888 = vmax.f32 %v10856, 0.0
      %v10889 = vmax.f32 %v10857, 0.0
      %v10890 = vadd.f32 %v10858, %v10859
      %v10891 = vadd.f32 %v10890, %v10860
      %v10892 = vadd.f32 %v10891, %v10861
      %v10893 = vadd.f32 %v10892, %v10862
      %v10894 = vadd.f32 %v10893, %v10863
      %v10895 = vadd.f32 %v10894, %v10864
      %v10896 = vadd.f32 %v10895, %v10865
      %v10897 = vadd.f32 %v10896, %v10866
      %v10898 = vadd.f32 %v10897, %v10867
      %v10899 = vadd.f32 %v10898, %v10868
      %v10900 = vadd.f32 %v10899, %v10869
      %v10901 = vadd.f32 %v10900, %v10870
      %v10902 = vadd.f32 %v10901, %v10871
      %v10903 = vadd.f32 %v10902, %v10872
      %v10904 = vadd.f32 %v10903, %v10873
      %v10905 = vrot.slane %v10904, 4
      %v10906 = vadd.f32 %v10904, %v10905
      %v10907 = vrot.slane %v10906, 2
      %v10908 = vadd.f32 %v10906, %v10907
      %v10909 = vrot.slane %v10908, 1
      %v10910 = vadd.f32 %v10908, %v10909
      %v10911 = vadd.f32 %v10874, %v10875
      %v10912 = vadd.f32 %v10911, %v10876
      %v10913 = vadd.f32 %v10912, %v10877
      %v10914 = vadd.f32 %v10913, %v10878
      %v10915 = vadd.f32 %v10914, %v10879
      %v10916 = vadd.f32 %v10915, %v10880
      %v10917 = vadd.f32 %v10916, %v10881
      %v10918 = vadd.f32 %v10917, %v10882
      %v10919 = vadd.f32 %v10918, %v10883
      %v10920 = vadd.f32 %v10919, %v10884
      %v10921 = vadd.f32 %v10920, %v10885
      %v10922 = vadd.f32 %v10921, %v10886
      %v10923 = vadd.f32 %v10922, %v10887
      %v10924 = vadd.f32 %v10923, %v10888
      %v10925 = vadd.f32 %v10924, %v10889
      %v10926 = vrot.slane %v10925, 4
      %v10927 = vadd.f32 %v10925, %v10926
      %v10928 = vrot.slane %v10927, 2
      %v10929 = vadd.f32 %v10927, %v10928
      %v10930 = vrot.slane %v10929, 1
      %v10931 = vadd.f32 %v10929, %v10930
      %v10932 = vrcp.pop 128.0
      %v10933 = vmul.f32 128.0, %v10932
      %v10934 = vsub.f32 1.0, %v10933
      %v10935 = vmul.f32 %v10932, %v10934
      %v10936 = vadd.f32 %v10932, %v10935
      %vm10937 = vweird.f32 %v10932
      %v10938 = vsel %vm10937, %v10932, %v10936
      %v10939 = vmul.f32 %v10910, %v10938
      %v10940 = vmul.f32 %v10931, %v10938
      %vm10943 = vcmask 1041409
      %v10944 = vsel %vm10943, %v10940, %v10939
      %10946 = vst [vmem:[%s632] sm:$0x3] %v10944
      %p10947 = scmp.lt.s32.totalorder %s31, 1
      %s10948 = scalar_select %p10947, %s31, 1
      %s10949 = smul.addr %s10948, 2
      %s10950 = scalar_lea.vmem %s20, %s10949
      // Predicated region
      $region101: #{encoder_forward_pallas.1} parent=99 // pred_check
        %p10951 = pneg %p474
      $region102: #{encoder_forward_pallas.1} parent=99 // pred_check_branch
        %10953 = sbr.rel (%p10951) target = $region104
      $region103: #{encoder_forward_pallas.1} parent=99 // pred_region
        _
      $region104: #{encoder_forward_pallas.1} parent=99 // pred_fallthru
        _
    $region100: #{encoder_forward_pallas.1} parent=5 // pred_fallthru
      _
    %p10954 = scmp.le.s32.totalorder 2, %s26
    // Predicated region
    $region105: #{encoder_forward_pallas.1} parent=5 // pred_check
      %p10955 = pneg %p10954
    $region106: #{encoder_forward_pallas.1} parent=5 // pred_check_branch
      %10957 = sbr.rel (%p10955) target = $region108
    $region107: #{encoder_forward_pallas.1} parent=5 // pred_region
      %s10958 = ssub.s32 %s26, 2
      // Predicated region
      $region109: #{encoder_forward_pallas.1} parent=107 // pred_check
        %p10959 = pneg %p480
      $region110: #{encoder_forward_pallas.1} parent=107 // pred_check_branch
        %10961 = sbr.rel (%p10959) target = $region112
      $region111: #{encoder_forward_pallas.1} parent=107 // pred_region
        %p10962 = scmp.lt.s32.totalorder %s32, 1
        %s10963 = scalar_select %p10962, %s32, 1
        %s10964 = smul.addr %s10963, 2
        %s10965 = scalar_lea.vmem %s20, %s10964
      $region112: #{encoder_forward_pallas.1} parent=107 // pred_fallthru
        _
    $region108: #{encoder_forward_pallas.1} parent=5 // pred_fallthru
      _
  $region6: #{encoder_forward_pallas.1} parent=0 // loop_footer
    %s30 = sadd.s32 1, %s26
  $region7: #{encoder_forward_pallas.1} parent=0 // loop_footer_branch
    %25 = sbr.rel target = $region3
  $region8: #{encoder_forward_pallas.1} parent=0 // loop_exit
    _

</llo_original>
